<compile_context>
chip_gen: v5e
topology: v5e:2x2
jax: 0.10.0
libtpu: 0.0.40
codegen_flags: <defaults>
</compile_context>

<pallas_src>
import functools
from itertools import product

import jax
import jax.numpy as jnp
import numpy as np
from jax.experimental import pallas as pl
from jax.experimental.pallas import tpu as pltpu


def _neighborhood_kernel(coord_ref, lyx_ref, vol_ref, wmat_ref, bias_ref, o_ref,
                         *, din, hin, win, c_in, tile_n):
    """One (batch, vertex-tile) grid step.

    coord_ref: (3, Mt)        normalized (x, y, z); lane index m = k*TN + n
    lyx_ref:   (hw, 2)        integer (y, x) of every flat in-plane voxel (f32)
    vol_ref:   (din, C, hw)   volume: z-plane slabs of (channels, H_in*W_in)
    wmat_ref:  (C, 27*C)      fused conv weight, column index = k*C + ci
    bias_ref:  (C, 1)
    o_ref:     (C, TN)        output tile, channel-major
    """
    f32 = jnp.float32
    hw = hin * win
    mt = 27 * tile_n
    cdt = vol_ref.dtype

    coords = coord_ref[...]                              # (3, Mt)
    cx = coords[0:1, :]                                  # x -> W_in axis
    cy = coords[1:2, :]                                  # y -> H_in axis
    cz = coords[2:3, :]                                  # z -> D_in axis

    # align_corners=True unnormalization + padding_mode='border' clamp.
    fx = jnp.clip((cx + 1.0) * (0.5 * (win - 1)), 0.0, float(win - 1))
    fy = jnp.clip((cy + 1.0) * (0.5 * (hin - 1)), 0.0, float(hin - 1))
    fz = jnp.clip((cz + 1.0) * (0.5 * (din - 1)), 0.0, float(din - 1))

    # Separable trilinear "tent" weights: for border-clamped, align_corners
    # sampling the per-axis weight of voxel i at position f is
    #     max(0, 1 - |i - f|)
    # i.e. (1-w) at floor(f), w at floor(f)+1, 0 elsewhere.  Built once per
    # grid step for the in-plane (y, x) axes only (hw x Mt, not S x Mt).
    ly = lyx_ref[:, 0:1]                                  # (hw, 1)
    lx = lyx_ref[:, 1:2]                                  # (hw, 1)
    pyx = (jnp.maximum(0.0, 1.0 - jnp.abs(lx - fx)) *
           jnp.maximum(0.0, 1.0 - jnp.abs(ly - fy))).astype(cdt)   # (hw, Mt)

    # S-chunked sampling: one MXU matmul per z plane; the z factor is a cheap
    # (1, Mt) scale applied AFTER the matmul.  feats[c, m] = trilinear sample.
    def zplane(zi, acc):
        szf = jnp.maximum(0.0, 1.0 - jnp.abs(zi.astype(f32) - fz))   # (1, Mt)
        q = jnp.dot(vol_ref[zi], pyx, preferred_element_type=f32)    # (C, Mt)
        return acc + szf * q

    feats = jax.lax.fori_loop(0, din, zplane,
                              jnp.zeros((c_in, mt), f32),
                              unroll=din <= 8)

    # Conv2d(C, C, kernel=(1, 27)) as ONE fused MXU matmul.
    # Regroup feats (C, 27*TN) -> (27*C, TN) with 27 lane-aligned slices; the
    # row ordering k*C + ci matches wmat's column ordering.
    g = jnp.concatenate(
        [feats[:, k * tile_n:(k + 1) * tile_n] for k in range(27)], axis=0)
    out = jnp.dot(wmat_ref[...], g.astype(wmat_ref.dtype),
                  preferred_element_type=f32)                        # (C, TN)
    o_ref[...] = (out + bias_ref[...]).astype(o_ref.dtype)


def neighborhood_feature_sampling(voxel_features, vertices, img_shape, conv_w, conv_b,
                                  *, tile_n=128, compute_dtype=jnp.bfloat16):
    """voxel_features: (B, C, D_in, H_in, W_in) f32
       vertices:       (B, N, 3) normalized (x, y, z) coords
       img_shape:      (H, W, D) python ints (only used for the shift scale)
       conv_w:         (C, C, 1, 27);  conv_b: (C,)
       returns:        (B, N, C) f32"""
    H, W, D = img_shape
    B, C, din, hin, win = voxel_features.shape
    N = vertices.shape[1]
    hw = hin * win
    assert tile_n % 128 == 0, "tile_n must keep 27*tile_n lane-aligned"
    n_pad = ((N + tile_n - 1) // tile_n) * tile_n
    T = n_pad // tile_n
    Mt = 27 * tile_n

    # 27 neighbourhood shifts, exactly as the PyTorch module builds them
    # (D/W/H scales applied to the x/y/z columns in that literal order).
    triplets = jnp.asarray(list(product((-1, 0, 1), repeat=3)), dtype=jnp.float32)
    scale = jnp.asarray([2.0 / (D - 1), 2.0 / (W - 1), 2.0 / (H - 1)], jnp.float32)
    shift = triplets * scale                                                 # (27, 3)

    # Sample coords (B, 3, T*27*TN); lane index inside a tile is m = k*TN + n
    # so the conv regroup in the kernel is 27 lane-aligned slices.
    verts = jnp.pad(vertices.astype(jnp.float32), ((0, 0), (0, n_pad - N), (0, 0)))
    coords = verts[:, :, None, :] + shift[None, None, :, :]                 # (B, n_pad, 27, 3)
    coords = (coords.reshape(B, T, tile_n, 27, 3)
              .transpose(0, 4, 1, 3, 2)
              .reshape(B, 3, T * Mt))

    # Volume as (B, D_in, C, H_in*W_in): z-plane slabs form the (C, hw) LHS.
    vol = (jnp.transpose(voxel_features, (0, 2, 1, 3, 4))
           .reshape(B, din, C, hw).astype(compute_dtype))

    # Constant (y, x) index of every flat in-plane voxel (replaces the
    # in-kernel iota + f32 divide/floor decomposition entirely).
    yy, xx = jnp.meshgrid(jnp.arange(hin, dtype=jnp.float32),
                          jnp.arange(win, dtype=jnp.float32), indexing="ij")
    lyx = jnp.stack([yy.reshape(-1), xx.reshape(-1)], axis=1)               # (hw, 2)

    # Fused conv weight (C_out, 27*C_in), column index = k*C_in + ci.
    wmat = (jnp.transpose(conv_w[:, :, 0, :], (0, 2, 1))
            .reshape(C, 27 * C).astype(compute_dtype))
    bias = conv_b.reshape(C, 1).astype(jnp.float32)

    kernel = functools.partial(_neighborhood_kernel, din=din, hin=hin, win=win,
                               c_in=C, tile_n=tile_n)

    # VMEM budget ~75% of physical (~48 MB on v7x, ~96 MB on v5e/v6e).
    try:
        cap = int(getattr(pltpu.get_tpu_info(), "vmem_capacity_bytes", 64 << 20))
    except Exception:   # fall back to the smallest (v7x) budget
        cap = 64 << 20
    vmem_limit = max(32 << 20, int(min(cap, 128 << 20) * 0.75))

    S = din * hw
    flops = B * T * (2 * C * S * Mt + 2 * C * (27 * C) * tile_n + 10 * hw * Mt)
    bytes_accessed = (coords.size * 4 + vol.size * vol.dtype.itemsize
                      + wmat.size * wmat.dtype.itemsize + lyx.size * 4
                      + bias.size * 4 + B * C * n_pad * 4)

    out_cn = pl.pallas_call(
        kernel,
        out_shape=jax.ShapeDtypeStruct((B, C, n_pad), jnp.float32),
        grid_spec=pltpu.PrefetchScalarGridSpec(
            num_scalar_prefetch=0,
            grid=(B, T),
            in_specs=[
                pl.BlockSpec((None, 3, Mt), lambda b, t: (b, 0, t)),        # coords
                pl.BlockSpec((hw, 2), lambda b, t: (0, 0)),                 # (y, x) idx
                # Volume block is resident across the vertex-tile axis.
                # TODO(synk): on v7x (64 MiB VMEM) single-buffer this block
                # (pipeline_mode=pl.Buffered(1)) / shrink tile_n for big volumes.
                pl.BlockSpec((None, din, C, hw), lambda b, t: (b, 0, 0, 0)),
                pl.BlockSpec((C, 27 * C), lambda b, t: (0, 0)),             # conv weight
                pl.BlockSpec((C, 1), lambda b, t: (0, 0)),                  # bias
            ],
            out_specs=pl.BlockSpec((None, C, tile_n), lambda b, t: (b, 0, t)),
        ),
        compiler_params=pltpu.CompilerParams(
            dimension_semantics=("parallel", "parallel"),
            vmem_limit_bytes=vmem_limit),
        cost_estimate=pl.CostEstimate(flops=int(flops), transcendentals=0,
                                      bytes_accessed=int(bytes_accessed)),
    )(coords, lyx, vol, wmat, bias)

    # TODO(synk): for large volumes, scalar-prefetch per-vertex-tile (z, y, x)
    # bounding boxes and matmul only against that window instead of every z
    # plane (cuts MXU flops from O(C*S*27*TN) towards O(C*window*27*TN)).
    # TODO(synk): if C >= 128, emit the output block as (TN, C) to drop the
    # wrapper transpose below (extra HBM read+write of the output).
    return out_cn.transpose(0, 2, 1)[:, :N, :]                              # (B, N, C)


def reference_forward(voxel_features, vertices, img_shape, conv_w, conv_b):
    """Pure-JAX reference of the same semantics (gather-based grid_sample)."""
    H, W, D = img_shape
    B, C, din, hin, win = voxel_features.shape
    triplets = jnp.asarray(list(product((-1, 0, 1), repeat=3)), dtype=jnp.float32)
    scale = jnp.asarray([2.0 / (D - 1), 2.0 / (W - 1), 2.0 / (H - 1)], jnp.float32)
    shift = triplets * scale
    coords = vertices[:, :, None, :] + shift[None, None, :, :]              # (B, N, 27, 3)
    x, y, z = coords[..., 0], coords[..., 1], coords[..., 2]
    fx = jnp.clip((x + 1) * 0.5 * (win - 1), 0, win - 1)
    fy = jnp.clip((y + 1) * 0.5 * (hin - 1), 0, hin - 1)
    fz = jnp.clip((z + 1) * 0.5 * (din - 1), 0, din - 1)
    x0f, y0f, z0f = jnp.floor(fx), jnp.floor(fy), jnp.floor(fz)
    wx, wy, wz = fx - x0f, fy - y0f, fz - z0f
    x0, y0, z0 = x0f.astype(jnp.int32), y0f.astype(jnp.int32), z0f.astype(jnp.int32)
    x1 = jnp.minimum(x0 + 1, win - 1)
    y1 = jnp.minimum(y0 + 1, hin - 1)
    z1 = jnp.minimum(z0 + 1, din - 1)

    def sample_batch(vol, z0, z1, y0, y1, x0, x1, wz, wy, wx):
        out = jnp.zeros((C,) + z0.shape, jnp.float32)
        for zi, wzz in ((z0, 1 - wz), (z1, wz)):
            for yi, wyy in ((y0, 1 - wy), (y1, wy)):
                for xi, wxx in ((x0, 1 - wx), (x1, wx)):
                    out = out + vol[:, zi, yi, xi] * (wzz * wyy * wxx)[None]
        return out                                                          # (C, N, 27)

    sampled = jax.vmap(sample_batch)(voxel_features, z0, z1, y0, y1, x0, x1, wz, wy, wx)
    out = jnp.einsum('bcnk,dck->bnd', sampled, conv_w[:, :, 0, :],
                     precision=jax.lax.Precision.HIGHEST) + conv_b[None, None, :]
    return out                                                              # (B, N, C)


if __name__ == "__main__":
    key = jax.random.PRNGKey(0)

    def run_case(case_key, B, C, N, vol_dims, img_shape, compute_dtype, rtol, atol,
                 round_inputs=False):
        din, hin, win = vol_dims
        k1, k2, k3, k4 = jax.random.split(case_key, 4)
        voxel_features = jax.random.normal(k1, (B, C, din, hin, win), dtype=jnp.float32)
        vertices = jax.random.uniform(k2, (B, N, 3), minval=-0.9, maxval=0.9,
                                      dtype=jnp.float32)
        # Conv2d(C, C, kernel_size=(1, 27)) parameters (kaiming-scale weight).
        fan_in = C * 1 * 27
        conv_w = jax.random.normal(k3, (C, C, 1, 27), dtype=jnp.float32) * jnp.sqrt(2.0 / fan_in)
        conv_b = 0.1 * jax.random.normal(k4, (C,), dtype=jnp.float32)

        if round_inputs:
            # For the bf16 path, pre-round the matmul operands so the check
            # isolates kernel correctness from unavoidable bf16 input rounding.
            voxel_features = voxel_features.astype(jnp.bfloat16).astype(jnp.float32)
            conv_w = conv_w.astype(jnp.bfloat16).astype(jnp.float32)

        out = neighborhood_feature_sampling(voxel_features, vertices, img_shape,
                                            conv_w, conv_b,
                                            compute_dtype=compute_dtype)
        out = jax.block_until_ready(out)
        ref = reference_forward(voxel_features, vertices, img_shape, conv_w, conv_b)
        assert out.shape == (B, N, C)
        np.testing.assert_allclose(np.asarray(out), np.asarray(ref),
                                   rtol=rtol, atol=atol)

    k_a, k_b = jax.random.split(key)
    # f32 path, toy shapes from the module (single 128-vertex tile after padding).
    run_case(k_a, B=2, C=4, N=8, vol_dims=(6, 8, 10), img_shape=(6, 8, 10),
             compute_dtype=jnp.float32, rtol=5e-3, atol=5e-3)
    # bf16 MXU path + ragged N (padded to 256 -> two vertex tiles, grid=(1, 2)).
    run_case(k_b, B=1, C=4, N=200, vol_dims=(4, 5, 6), img_shape=(4, 5, 6),
             compute_dtype=jnp.bfloat16, rtol=2.5e-2, atol=2.5e-2,
             round_inputs=True)

    print("KERNEL_OK")
</pallas_src>

<mosaic_0001>
module attributes {stable_mosaic.version = 11 : i64} {
  func.func @_neighborhood_kernel(%arg0: i32, %arg1: i32, %arg2: memref<1x3x3456xf32, #tpu.memory_space<vmem>>, %arg3: memref<80x2xf32, #tpu.memory_space<vmem>>, %arg4: memref<1x6x4x80xf32, #tpu.memory_space<vmem>>, %arg5: memref<4x108xf32, #tpu.memory_space<vmem>>, %arg6: memref<4x1xf32, #tpu.memory_space<vmem>>, %arg7: memref<1x4x128xf32, #tpu.memory_space<vmem>>) attributes {dimension_semantics = [#tpu.dimension_semantics<parallel>, #tpu.dimension_semantics<parallel>], iteration_bounds = array<i64: 2, 1>, scalar_prefetch = 0 : i64, scratch_operands = 0 : i64, tpu.core_type = #tpu.core_type<tc>, window_params = [{transform_indices = @transform_0, window_bounds = array<i64: 1, 3, 3456>}, {pipeline_mode = #tpu.pipeline_mode<synchronous>, transform_indices = @transform_1, window_bounds = array<i64: 80, 2>}, {transform_indices = @transform_2, window_bounds = array<i64: 1, 6, 4, 80>}, {pipeline_mode = #tpu.pipeline_mode<synchronous>, transform_indices = @transform_3, window_bounds = array<i64: 4, 108>}, {pipeline_mode = #tpu.pipeline_mode<synchronous>, transform_indices = @transform_4, window_bounds = array<i64: 4, 1>}, {transform_indices = @transform_5, window_bounds = array<i64: 1, 4, 128>}]} {
    %c0 = arith.constant 0 : index
    %c0_0 = arith.constant 0 : index
    %c0_1 = arith.constant 0 : index
    %0 = vector.load %arg2[%c0, %c0_0, %c0_1] : memref<1x3x3456xf32, #tpu.memory_space<vmem>>, vector<1x3x3456xf32>
    %1 = vector.shape_cast %0 : vector<1x3x3456xf32> to vector<3x3456xf32>
    %2 = vector.extract_strided_slice %1 {offsets = [0, 0], sizes = [1, 3456], strides = [1, 1]} : vector<3x3456xf32> to vector<1x3456xf32>
    %3 = vector.extract_strided_slice %1 {offsets = [1, 0], sizes = [1, 3456], strides = [1, 1]} : vector<3x3456xf32> to vector<1x3456xf32>
    %4 = vector.extract_strided_slice %1 {offsets = [2, 0], sizes = [1, 3456], strides = [1, 1]} : vector<3x3456xf32> to vector<1x3456xf32>
    %cst = arith.constant 1.000000e+00 : f32
    %5 = vector.broadcast %cst : f32 to vector<1x3456xf32>
    %6 = arith.addf %2, %5 : vector<1x3456xf32>
    %cst_2 = arith.constant 4.500000e+00 : f32
    %7 = vector.broadcast %cst_2 : f32 to vector<1x3456xf32>
    %8 = arith.mulf %6, %7 : vector<1x3456xf32>
    %cst_3 = arith.constant 0.000000e+00 : f32
    %cst_4 = arith.constant 9.000000e+00 : f32
    %9 = vector.broadcast %cst_3 : f32 to vector<1x3456xf32>
    %10 = arith.maximumf %9, %8 : vector<1x3456xf32>
    %11 = vector.broadcast %cst_4 : f32 to vector<1x3456xf32>
    %12 = arith.minimumf %11, %10 : vector<1x3456xf32>
    %cst_5 = arith.constant 1.000000e+00 : f32
    %13 = vector.broadcast %cst_5 : f32 to vector<1x3456xf32>
    %14 = arith.addf %3, %13 : vector<1x3456xf32>
    %cst_6 = arith.constant 3.500000e+00 : f32
    %15 = vector.broadcast %cst_6 : f32 to vector<1x3456xf32>
    %16 = arith.mulf %14, %15 : vector<1x3456xf32>
    %cst_7 = arith.constant 0.000000e+00 : f32
    %cst_8 = arith.constant 7.000000e+00 : f32
    %17 = vector.broadcast %cst_7 : f32 to vector<1x3456xf32>
    %18 = arith.maximumf %17, %16 : vector<1x3456xf32>
    %19 = vector.broadcast %cst_8 : f32 to vector<1x3456xf32>
    %20 = arith.minimumf %19, %18 : vector<1x3456xf32>
    %cst_9 = arith.constant 1.000000e+00 : f32
    %21 = vector.broadcast %cst_9 : f32 to vector<1x3456xf32>
    %22 = arith.addf %4, %21 : vector<1x3456xf32>
    %cst_10 = arith.constant 2.500000e+00 : f32
    %23 = vector.broadcast %cst_10 : f32 to vector<1x3456xf32>
    %24 = arith.mulf %22, %23 : vector<1x3456xf32>
    %cst_11 = arith.constant 0.000000e+00 : f32
    %cst_12 = arith.constant 5.000000e+00 : f32
    %25 = vector.broadcast %cst_11 : f32 to vector<1x3456xf32>
    %26 = arith.maximumf %25, %24 : vector<1x3456xf32>
    %27 = vector.broadcast %cst_12 : f32 to vector<1x3456xf32>
    %28 = arith.minimumf %27, %26 : vector<1x3456xf32>
    %c0_13 = arith.constant 0 : index
    %c0_14 = arith.constant 0 : index
    %29 = vector.load %arg3[%c0_13, %c0_14] : memref<80x2xf32, #tpu.memory_space<vmem>>, vector<80x1xf32>
    %c0_15 = arith.constant 0 : index
    %c1 = arith.constant 1 : index
    %30 = vector.load %arg3[%c0_15, %c1] : memref<80x2xf32, #tpu.memory_space<vmem>>, vector<80x1xf32>
    %31 = vector.broadcast %30 : vector<80x1xf32> to vector<80x3456xf32>
    %32 = vector.broadcast %12 : vector<1x3456xf32> to vector<80x3456xf32>
    %33 = arith.subf %31, %32 : vector<80x3456xf32>
    %34 = math.absf %33 : vector<80x3456xf32>
    %cst_16 = arith.constant 1.000000e+00 : f32
    %35 = vector.broadcast %cst_16 : f32 to vector<80x3456xf32>
    %36 = arith.subf %35, %34 : vector<80x3456xf32>
    %cst_17 = arith.constant 0.000000e+00 : f32
    %37 = vector.broadcast %cst_17 : f32 to vector<80x3456xf32>
    %38 = arith.maximumf %37, %36 : vector<80x3456xf32>
    %39 = vector.broadcast %29 : vector<80x1xf32> to vector<80x3456xf32>
    %40 = vector.broadcast %20 : vector<1x3456xf32> to vector<80x3456xf32>
    %41 = arith.subf %39, %40 : vector<80x3456xf32>
    %42 = math.absf %41 : vector<80x3456xf32>
    %cst_18 = arith.constant 1.000000e+00 : f32
    %43 = vector.broadcast %cst_18 : f32 to vector<80x3456xf32>
    %44 = arith.subf %43, %42 : vector<80x3456xf32>
    %cst_19 = arith.constant 0.000000e+00 : f32
    %45 = vector.broadcast %cst_19 : f32 to vector<80x3456xf32>
    %46 = arith.maximumf %45, %44 : vector<80x3456xf32>
    %47 = arith.mulf %38, %46 : vector<80x3456xf32>
    %cst_20 = arith.constant 0.000000e+00 : f32
    %48 = vector.broadcast %cst_20 : f32 to vector<4x3456xf32>
    %c0_i32 = arith.constant 0 : i32
    %49 = arith.sitofp %c0_i32 : i32 to f32
    %50 = vector.broadcast %49 : f32 to vector<1x3456xf32>
    %51 = arith.subf %50, %28 : vector<1x3456xf32>
    %52 = math.absf %51 : vector<1x3456xf32>
    %cst_21 = arith.constant 1.000000e+00 : f32
    %53 = vector.broadcast %cst_21 : f32 to vector<1x3456xf32>
    %54 = arith.subf %53, %52 : vector<1x3456xf32>
    %cst_22 = arith.constant 0.000000e+00 : f32
    %55 = vector.broadcast %cst_22 : f32 to vector<1x3456xf32>
    %56 = arith.maximumf %55, %54 : vector<1x3456xf32>
    %c0_23 = arith.constant 0 : index
    %57 = arith.index_cast %c0_i32 : i32 to index
    %c0_24 = arith.constant 0 : index
    %c0_25 = arith.constant 0 : index
    %58 = vector.load %arg4[%c0_23, %57, %c0_24, %c0_25] : memref<1x6x4x80xf32, #tpu.memory_space<vmem>>, vector<1x1x4x80xf32>
    %59 = vector.shape_cast %58 : vector<1x1x4x80xf32> to vector<4x80xf32>
    %cst_26 = arith.constant dense<0.000000e+00> : vector<4x3456xf32>
    %60 = tpu.matmul %59, %47, %cst_26 {dimension_numbers = #tpu.dot_dimension_numbers<[1], [0], [0], [1], [0, 0, 1, 1], [], []>} : vector<4x80xf32>, vector<80x3456xf32>, vector<4x3456xf32> -> vector<4x3456xf32>
    %61 = vector.broadcast %56 : vector<1x3456xf32> to vector<4x3456xf32>
    %62 = arith.mulf %61, %60 : vector<4x3456xf32>
    %63 = arith.addf %48, %62 : vector<4x3456xf32>
    %c1_i32 = arith.constant 1 : i32
    %64 = arith.sitofp %c1_i32 : i32 to f32
    %65 = vector.broadcast %64 : f32 to vector<1x3456xf32>
    %66 = arith.subf %65, %28 : vector<1x3456xf32>
    %67 = math.absf %66 : vector<1x3456xf32>
    %cst_27 = arith.constant 1.000000e+00 : f32
    %68 = vector.broadcast %cst_27 : f32 to vector<1x3456xf32>
    %69 = arith.subf %68, %67 : vector<1x3456xf32>
    %cst_28 = arith.constant 0.000000e+00 : f32
    %70 = vector.broadcast %cst_28 : f32 to vector<1x3456xf32>
    %71 = arith.maximumf %70, %69 : vector<1x3456xf32>
    %c0_29 = arith.constant 0 : index
    %72 = arith.index_cast %c1_i32 : i32 to index
    %c0_30 = arith.constant 0 : index
    %c0_31 = arith.constant 0 : index
    %73 = vector.load %arg4[%c0_29, %72, %c0_30, %c0_31] : memref<1x6x4x80xf32, #tpu.memory_space<vmem>>, vector<1x1x4x80xf32>
    %74 = vector.shape_cast %73 : vector<1x1x4x80xf32> to vector<4x80xf32>
    %cst_32 = arith.constant dense<0.000000e+00> : vector<4x3456xf32>
    %75 = tpu.matmul %74, %47, %cst_32 {dimension_numbers = #tpu.dot_dimension_numbers<[1], [0], [0], [1], [0, 0, 1, 1], [], []>} : vector<4x80xf32>, vector<80x3456xf32>, vector<4x3456xf32> -> vector<4x3456xf32>
    %76 = vector.broadcast %71 : vector<1x3456xf32> to vector<4x3456xf32>
    %77 = arith.mulf %76, %75 : vector<4x3456xf32>
    %78 = arith.addf %63, %77 : vector<4x3456xf32>
    %c2_i32 = arith.constant 2 : i32
    %79 = arith.sitofp %c2_i32 : i32 to f32
    %80 = vector.broadcast %79 : f32 to vector<1x3456xf32>
    %81 = arith.subf %80, %28 : vector<1x3456xf32>
    %82 = math.absf %81 : vector<1x3456xf32>
    %cst_33 = arith.constant 1.000000e+00 : f32
    %83 = vector.broadcast %cst_33 : f32 to vector<1x3456xf32>
    %84 = arith.subf %83, %82 : vector<1x3456xf32>
    %cst_34 = arith.constant 0.000000e+00 : f32
    %85 = vector.broadcast %cst_34 : f32 to vector<1x3456xf32>
    %86 = arith.maximumf %85, %84 : vector<1x3456xf32>
    %c0_35 = arith.constant 0 : index
    %87 = arith.index_cast %c2_i32 : i32 to index
    %c0_36 = arith.constant 0 : index
    %c0_37 = arith.constant 0 : index
    %88 = vector.load %arg4[%c0_35, %87, %c0_36, %c0_37] : memref<1x6x4x80xf32, #tpu.memory_space<vmem>>, vector<1x1x4x80xf32>
    %89 = vector.shape_cast %88 : vector<1x1x4x80xf32> to vector<4x80xf32>
    %cst_38 = arith.constant dense<0.000000e+00> : vector<4x3456xf32>
    %90 = tpu.matmul %89, %47, %cst_38 {dimension_numbers = #tpu.dot_dimension_numbers<[1], [0], [0], [1], [0, 0, 1, 1], [], []>} : vector<4x80xf32>, vector<80x3456xf32>, vector<4x3456xf32> -> vector<4x3456xf32>
    %91 = vector.broadcast %86 : vector<1x3456xf32> to vector<4x3456xf32>
    %92 = arith.mulf %91, %90 : vector<4x3456xf32>
    %93 = arith.addf %78, %92 : vector<4x3456xf32>
    %c3_i32 = arith.constant 3 : i32
    %94 = arith.sitofp %c3_i32 : i32 to f32
    %95 = vector.broadcast %94 : f32 to vector<1x3456xf32>
    %96 = arith.subf %95, %28 : vector<1x3456xf32>
    %97 = math.absf %96 : vector<1x3456xf32>
    %cst_39 = arith.constant 1.000000e+00 : f32
    %98 = vector.broadcast %cst_39 : f32 to vector<1x3456xf32>
    %99 = arith.subf %98, %97 : vector<1x3456xf32>
    %cst_40 = arith.constant 0.000000e+00 : f32
    %100 = vector.broadcast %cst_40 : f32 to vector<1x3456xf32>
    %101 = arith.maximumf %100, %99 : vector<1x3456xf32>
    %c0_41 = arith.constant 0 : index
    %102 = arith.index_cast %c3_i32 : i32 to index
    %c0_42 = arith.constant 0 : index
    %c0_43 = arith.constant 0 : index
    %103 = vector.load %arg4[%c0_41, %102, %c0_42, %c0_43] : memref<1x6x4x80xf32, #tpu.memory_space<vmem>>, vector<1x1x4x80xf32>
    %104 = vector.shape_cast %103 : vector<1x1x4x80xf32> to vector<4x80xf32>
    %cst_44 = arith.constant dense<0.000000e+00> : vector<4x3456xf32>
    %105 = tpu.matmul %104, %47, %cst_44 {dimension_numbers = #tpu.dot_dimension_numbers<[1], [0], [0], [1], [0, 0, 1, 1], [], []>} : vector<4x80xf32>, vector<80x3456xf32>, vector<4x3456xf32> -> vector<4x3456xf32>
    %106 = vector.broadcast %101 : vector<1x3456xf32> to vector<4x3456xf32>
    %107 = arith.mulf %106, %105 : vector<4x3456xf32>
    %108 = arith.addf %93, %107 : vector<4x3456xf32>
    %c4_i32 = arith.constant 4 : i32
    %109 = arith.sitofp %c4_i32 : i32 to f32
    %110 = vector.broadcast %109 : f32 to vector<1x3456xf32>
    %111 = arith.subf %110, %28 : vector<1x3456xf32>
    %112 = math.absf %111 : vector<1x3456xf32>
    %cst_45 = arith.constant 1.000000e+00 : f32
    %113 = vector.broadcast %cst_45 : f32 to vector<1x3456xf32>
    %114 = arith.subf %113, %112 : vector<1x3456xf32>
    %cst_46 = arith.constant 0.000000e+00 : f32
    %115 = vector.broadcast %cst_46 : f32 to vector<1x3456xf32>
    %116 = arith.maximumf %115, %114 : vector<1x3456xf32>
    %c0_47 = arith.constant 0 : index
    %117 = arith.index_cast %c4_i32 : i32 to index
    %c0_48 = arith.constant 0 : index
    %c0_49 = arith.constant 0 : index
    %118 = vector.load %arg4[%c0_47, %117, %c0_48, %c0_49] : memref<1x6x4x80xf32, #tpu.memory_space<vmem>>, vector<1x1x4x80xf32>
    %119 = vector.shape_cast %118 : vector<1x1x4x80xf32> to vector<4x80xf32>
    %cst_50 = arith.constant dense<0.000000e+00> : vector<4x3456xf32>
    %120 = tpu.matmul %119, %47, %cst_50 {dimension_numbers = #tpu.dot_dimension_numbers<[1], [0], [0], [1], [0, 0, 1, 1], [], []>} : vector<4x80xf32>, vector<80x3456xf32>, vector<4x3456xf32> -> vector<4x3456xf32>
    %121 = vector.broadcast %116 : vector<1x3456xf32> to vector<4x3456xf32>
    %122 = arith.mulf %121, %120 : vector<4x3456xf32>
    %123 = arith.addf %108, %122 : vector<4x3456xf32>
    %c5_i32 = arith.constant 5 : i32
    %124 = arith.sitofp %c5_i32 : i32 to f32
    %125 = vector.broadcast %124 : f32 to vector<1x3456xf32>
    %126 = arith.subf %125, %28 : vector<1x3456xf32>
    %127 = math.absf %126 : vector<1x3456xf32>
    %cst_51 = arith.constant 1.000000e+00 : f32
    %128 = vector.broadcast %cst_51 : f32 to vector<1x3456xf32>
    %129 = arith.subf %128, %127 : vector<1x3456xf32>
    %cst_52 = arith.constant 0.000000e+00 : f32
    %130 = vector.broadcast %cst_52 : f32 to vector<1x3456xf32>
    %131 = arith.maximumf %130, %129 : vector<1x3456xf32>
    %c0_53 = arith.constant 0 : index
    %132 = arith.index_cast %c5_i32 : i32 to index
    %c0_54 = arith.constant 0 : index
    %c0_55 = arith.constant 0 : index
    %133 = vector.load %arg4[%c0_53, %132, %c0_54, %c0_55] : memref<1x6x4x80xf32, #tpu.memory_space<vmem>>, vector<1x1x4x80xf32>
    %134 = vector.shape_cast %133 : vector<1x1x4x80xf32> to vector<4x80xf32>
    %cst_56 = arith.constant dense<0.000000e+00> : vector<4x3456xf32>
    %135 = tpu.matmul %134, %47, %cst_56 {dimension_numbers = #tpu.dot_dimension_numbers<[1], [0], [0], [1], [0, 0, 1, 1], [], []>} : vector<4x80xf32>, vector<80x3456xf32>, vector<4x3456xf32> -> vector<4x3456xf32>
    %136 = vector.broadcast %131 : vector<1x3456xf32> to vector<4x3456xf32>
    %137 = arith.mulf %136, %135 : vector<4x3456xf32>
    %138 = arith.addf %123, %137 : vector<4x3456xf32>
    %c6_i32 = arith.constant 6 : i32
    %139 = vector.extract_strided_slice %138 {offsets = [0, 0], sizes = [4, 128], strides = [1, 1]} : vector<4x3456xf32> to vector<4x128xf32>
    %140 = vector.extract_strided_slice %138 {offsets = [0, 128], sizes = [4, 128], strides = [1, 1]} : vector<4x3456xf32> to vector<4x128xf32>
    %141 = vector.extract_strided_slice %138 {offsets = [0, 256], sizes = [4, 128], strides = [1, 1]} : vector<4x3456xf32> to vector<4x128xf32>
    %142 = vector.extract_strided_slice %138 {offsets = [0, 384], sizes = [4, 128], strides = [1, 1]} : vector<4x3456xf32> to vector<4x128xf32>
    %143 = vector.extract_strided_slice %138 {offsets = [0, 512], sizes = [4, 128], strides = [1, 1]} : vector<4x3456xf32> to vector<4x128xf32>
    %144 = vector.extract_strided_slice %138 {offsets = [0, 640], sizes = [4, 128], strides = [1, 1]} : vector<4x3456xf32> to vector<4x128xf32>
    %145 = vector.extract_strided_slice %138 {offsets = [0, 768], sizes = [4, 128], strides = [1, 1]} : vector<4x3456xf32> to vector<4x128xf32>
    %146 = vector.extract_strided_slice %138 {offsets = [0, 896], sizes = [4, 128], strides = [1, 1]} : vector<4x3456xf32> to vector<4x128xf32>
    %147 = vector.extract_strided_slice %138 {offsets = [0, 1024], sizes = [4, 128], strides = [1, 1]} : vector<4x3456xf32> to vector<4x128xf32>
    %148 = vector.extract_strided_slice %138 {offsets = [0, 1152], sizes = [4, 128], strides = [1, 1]} : vector<4x3456xf32> to vector<4x128xf32>
    %149 = vector.extract_strided_slice %138 {offsets = [0, 1280], sizes = [4, 128], strides = [1, 1]} : vector<4x3456xf32> to vector<4x128xf32>
    %150 = vector.extract_strided_slice %138 {offsets = [0, 1408], sizes = [4, 128], strides = [1, 1]} : vector<4x3456xf32> to vector<4x128xf32>
    %151 = vector.extract_strided_slice %138 {offsets = [0, 1536], sizes = [4, 128], strides = [1, 1]} : vector<4x3456xf32> to vector<4x128xf32>
    %152 = vector.extract_strided_slice %138 {offsets = [0, 1664], sizes = [4, 128], strides = [1, 1]} : vector<4x3456xf32> to vector<4x128xf32>
    %153 = vector.extract_strided_slice %138 {offsets = [0, 1792], sizes = [4, 128], strides = [1, 1]} : vector<4x3456xf32> to vector<4x128xf32>
    %154 = vector.extract_strided_slice %138 {offsets = [0, 1920], sizes = [4, 128], strides = [1, 1]} : vector<4x3456xf32> to vector<4x128xf32>
    %155 = vector.extract_strided_slice %138 {offsets = [0, 2048], sizes = [4, 128], strides = [1, 1]} : vector<4x3456xf32> to vector<4x128xf32>
    %156 = vector.extract_strided_slice %138 {offsets = [0, 2176], sizes = [4, 128], strides = [1, 1]} : vector<4x3456xf32> to vector<4x128xf32>
    %157 = vector.extract_strided_slice %138 {offsets = [0, 2304], sizes = [4, 128], strides = [1, 1]} : vector<4x3456xf32> to vector<4x128xf32>
    %158 = vector.extract_strided_slice %138 {offsets = [0, 2432], sizes = [4, 128], strides = [1, 1]} : vector<4x3456xf32> to vector<4x128xf32>
    %159 = vector.extract_strided_slice %138 {offsets = [0, 2560], sizes = [4, 128], strides = [1, 1]} : vector<4x3456xf32> to vector<4x128xf32>
    %160 = vector.extract_strided_slice %138 {offsets = [0, 2688], sizes = [4, 128], strides = [1, 1]} : vector<4x3456xf32> to vector<4x128xf32>
    %161 = vector.extract_strided_slice %138 {offsets = [0, 2816], sizes = [4, 128], strides = [1, 1]} : vector<4x3456xf32> to vector<4x128xf32>
    %162 = vector.extract_strided_slice %138 {offsets = [0, 2944], sizes = [4, 128], strides = [1, 1]} : vector<4x3456xf32> to vector<4x128xf32>
    %163 = vector.extract_strided_slice %138 {offsets = [0, 3072], sizes = [4, 128], strides = [1, 1]} : vector<4x3456xf32> to vector<4x128xf32>
    %164 = vector.extract_strided_slice %138 {offsets = [0, 3200], sizes = [4, 128], strides = [1, 1]} : vector<4x3456xf32> to vector<4x128xf32>
    %165 = vector.extract_strided_slice %138 {offsets = [0, 3328], sizes = [4, 128], strides = [1, 1]} : vector<4x3456xf32> to vector<4x128xf32>
    %166 = tpu.concatenate %139, %140, %141, %142, %143, %144, %145, %146, %147, %148, %149, %150, %151, %152, %153, %154 in 0 : vector<4x128xf32>, vector<4x128xf32>, vector<4x128xf32>, vector<4x128xf32>, vector<4x128xf32>, vector<4x128xf32>, vector<4x128xf32>, vector<4x128xf32>, vector<4x128xf32>, vector<4x128xf32>, vector<4x128xf32>, vector<4x128xf32>, vector<4x128xf32>, vector<4x128xf32>, vector<4x128xf32>, vector<4x128xf32> -> vector<64x128xf32>
    %167 = tpu.concatenate %155, %156, %157, %158, %159, %160, %161, %162, %163, %164, %165 in 0 : vector<4x128xf32>, vector<4x128xf32>, vector<4x128xf32>, vector<4x128xf32>, vector<4x128xf32>, vector<4x128xf32>, vector<4x128xf32>, vector<4x128xf32>, vector<4x128xf32>, vector<4x128xf32>, vector<4x128xf32> -> vector<44x128xf32>
    %168 = tpu.concatenate %166, %167 in 0 : vector<64x128xf32>, vector<44x128xf32> -> vector<108x128xf32>
    %c0_57 = arith.constant 0 : index
    %c0_58 = arith.constant 0 : index
    %169 = vector.load %arg5[%c0_57, %c0_58] : memref<4x108xf32, #tpu.memory_space<vmem>>, vector<4x108xf32>
    %cst_59 = arith.constant dense<0.000000e+00> : vector<4x128xf32>
    %170 = tpu.matmul %169, %168, %cst_59 {dimension_numbers = #tpu.dot_dimension_numbers<[1], [0], [0], [1], [0, 0, 1, 1], [], []>} : vector<4x108xf32>, vector<108x128xf32>, vector<4x128xf32> -> vector<4x128xf32>
    %c0_60 = arith.constant 0 : index
    %c0_61 = arith.constant 0 : index
    %171 = vector.load %arg6[%c0_60, %c0_61] : memref<4x1xf32, #tpu.memory_space<vmem>>, vector<4x1xf32>
    %172 = vector.broadcast %171 : vector<4x1xf32> to vector<4x128xf32>
    %173 = arith.addf %170, %172 : vector<4x128xf32>
    %c0_62 = arith.constant 0 : index
    %c0_63 = arith.constant 0 : index
    %c0_64 = arith.constant 0 : index
    %174 = vector.load %arg7[%c0_62, %c0_63, %c0_64] : memref<1x4x128xf32, #tpu.memory_space<vmem>>, vector<1x4x128xf32>
    %175 = vector.shape_cast %174 : vector<1x4x128xf32> to vector<4x128xf32>
    %176 = vector.shape_cast %173 : vector<4x128xf32> to vector<1x4x128xf32>
    tpu.vector_store %arg7[%c0_62, %c0_63, %c0_64], %176 {strides = array<i32>} : memref<1x4x128xf32, #tpu.memory_space<vmem>>, vector<1x4x128xf32>,
    return
  }
  func.func @transform_0(%arg0: i32, %arg1: i32) -> (i32, i32, i32) {
    %c0_i32 = arith.constant 0 : i32
    %c0_i32_0 = arith.constant 0 : i32
    return %arg0, %c0_i32, %arg1 : i32, i32, i32
  }
  func.func @transform_1(%arg0: i32, %arg1: i32) -> (i32, i32) {
    %c0_i32 = arith.constant 0 : i32
    %c0_i32_0 = arith.constant 0 : i32
    %c0_i32_1 = arith.constant 0 : i32
    return %c0_i32, %c0_i32_0 : i32, i32
  }
  func.func @transform_2(%arg0: i32, %arg1: i32) -> (i32, i32, i32, i32) {
    %c0_i32 = arith.constant 0 : i32
    %c0_i32_0 = arith.constant 0 : i32
    %c0_i32_1 = arith.constant 0 : i32
    %c0_i32_2 = arith.constant 0 : i32
    return %arg0, %c0_i32, %c0_i32_0, %c0_i32_1 : i32, i32, i32, i32
  }
  func.func @transform_3(%arg0: i32, %arg1: i32) -> (i32, i32) {
    %c0_i32 = arith.constant 0 : i32
    %c0_i32_0 = arith.constant 0 : i32
    %c0_i32_1 = arith.constant 0 : i32
    return %c0_i32, %c0_i32_0 : i32, i32
  }
  func.func @transform_4(%arg0: i32, %arg1: i32) -> (i32, i32) {
    %c0_i32 = arith.constant 0 : i32
    %c0_i32_0 = arith.constant 0 : i32
    %c0_i32_1 = arith.constant 0 : i32
    return %c0_i32, %c0_i32_0 : i32, i32
  }
  func.func @transform_5(%arg0: i32, %arg1: i32) -> (i32, i32, i32) {
    %c0_i32 = arith.constant 0 : i32
    %c0_i32_0 = arith.constant 0 : i32
    return %arg0, %c0_i32, %arg1 : i32, i32, i32
  }
}

</mosaic_0001>

<llo_original>
// kernel: tpu_custom_call.1
$region0: #{tpu_custom_call.1}
  #allocation0 [shape = 'u32[]', space=smem, size = 0x4, offset = 0x4, fixed_abs, tag = 'smem constant byte address 0x4 - core index']
  #allocation1 [shape = 'u32[72,128]{1,0:T(1,128)}', space=vmem, size = 0x9000, scoped, tag = 'internal scratch']
  %s0 = inlined_call_operand.vmem [shape: f32[2,3,3456], index: 0, kind: input, shape index: {}]
  %s1 = inlined_call_operand.vmem [shape: f32[80,2], index: 1, kind: input, shape index: {}]
  %s2 = inlined_call_operand.vmem [shape: f32[2,6,4,80], index: 2, kind: input, shape index: {}]
  %s3 = inlined_call_operand.vmem [shape: f32[4,108], index: 3, kind: input, shape index: {}]
  %s4 = inlined_call_operand.vmem [shape: f32[4,1], index: 4, kind: input, shape index: {}]
  %s5 = inlined_call_operand.hbm [shape: f32[2,4,128], index: 5, kind: output, shape index: {}]
  %s6 = sld [smem:[#allocation0]]
  $region53: #{tpu_custom_call.1} parent=0
    _
  %s8 = ssub.s32 1, %s6
  %s9 = scalar_select 0, %s8, %s6
  $region1: #{tpu_custom_call.1} parent=0
    #allocation2 [shape = 'u8[4096]{0}', space=vmem, size = 0x1000, scoped, tag = 'output window, operand 0']
    #allocation3 [shape = 's32[2]{0}', space=sflag, size = 0x8, scoped, tag = 'scoped memory for tpu_custom_call.1']
    %10 = vsyncpa [#allocation3], 0
    %s11 = scalar_lea.sflag [#allocation3], 1
    %12 = vsyncpa %s11, 0
    loop: start=0, step=1, limit=4
    $region2: #{tpu_custom_call.1} parent=1 // loop_pre_header
      _
    $region3: #{tpu_custom_call.1} parent=1 // loop_header
      %s14 = sphi 0, %s18
      %p15 = scmp.ge.s32.totalorder %s14, 4
      %s21 = sphi 0, %s33
      %s22 = sphi 0, %s29
      %s23 = sphi 0, %s21
      %s24 = sphi 0, %s22
      %s25 = sphi 0, %s23
      %s26 = sphi 0, %s24
      %s38 = sphi 0, %s40
      %s41 = sphi 0, %s38
      %s42 = sphi 0, %s41
      %s58 = sphi 0, %s42
      %s62 = sphi 0, %s62
      %s64 = sphi 0, %s62
      %s65 = sphi 0, %s64
      %s79 = sphi 0, %s65
      %s85 = sphi 0, %s87
      %s88 = sphi 0, %s85
      %s89 = sphi 0, %s88
      %s105 = sphi 0, %s89
      %s109 = sphi 0, %s109
      %s111 = sphi 0, %s109
      %s112 = sphi 0, %s111
      %s126 = sphi 0, %s112
      %s130 = sphi 0, %s130
      %s132 = sphi 0, %s130
      %s133 = sphi 0, %s132
      %s147 = sphi 0, %s133
      %s155 = sphi 0, %s157
      %s158 = sphi 0, %s155
      %s159 = sphi 0, %s158
      %s175 = sphi 0, %s159
    $region4: #{tpu_custom_call.1} parent=1 // loop_header_branch
      %17 = sbr.rel (%p15) target = $region8
    $region5: #{tpu_custom_call.1} parent=1 // loop_body
      %s19 = ssub.s32 %s14, 1
      %s20 = ssub.s32 %s14, 2
      %s27 = sadd.s32 1, %s22
      %p28 = scmp.ge.s32.totalorder %s27, 1
      %s29 = scalar_select %p28, 0, %s27
      %s30 = sadd.s32 1, %s21
      %s31 = scalar_select %p28, %s30, %s21
      %p32 = scmp.ge.s32.totalorder %s31, 2
      %s33 = scalar_select %p32, 0, %s31
      %s34 = ssub.s32 %s21, %s33
      %s35 = ssub.s32 %s22, %s29
      %s36 = sor.u32 %s34, %s35
      %p37 = scmp.eq.s32.totalorder %s36, 0
      %s39 = sadd.s32 %s38, 1
      %s40 = scalar_select %p37, %s38, %s39
      %p43 = pneg %p37
      %p44 = scmp.eq.s32.totalorder %s14, 1
      %p45 = por %p43, %p44
      %p46 = scmp.ne.s32.totalorder %s38, %s41
      %p47 = scmp.eq.s32.totalorder %s14, 0
      %p48 = por %p46, %p47
      %p49 = scmp.ne.s32.totalorder %s38, %s41
      %p50 = scmp.eq.s32.totalorder %s19, 1
      %p51 = por %p49, %p50
      %p52 = scmp.ne.s32.totalorder %s41, %s42
      %p53 = scmp.eq.s32.totalorder %s19, 0
      %p54 = por %p52, %p53
      %p55 = scmp.ne.s32.totalorder %s41, %s42
      %p56 = scmp.eq.s32.totalorder %s20, 1
      %p57 = por %p55, %p56
      %p59 = scmp.ne.s32.totalorder %s42, %s58
      %p60 = scmp.eq.s32.totalorder %s20, 0
      %p61 = por %p59, %p60
      %s63 = sadd.s32 %s62, 1
      %p66 = scmp.eq.s32.totalorder %s14, 1
      %p67 = scmp.ne.s32.totalorder %s62, %s64
      %p68 = scmp.eq.s32.totalorder %s14, 0
      %p69 = por %p67, %p68
      %p70 = scmp.ne.s32.totalorder %s62, %s64
      %p71 = scmp.eq.s32.totalorder %s19, 1
      %p72 = por %p70, %p71
      %p73 = scmp.ne.s32.totalorder %s64, %s65
      %p74 = scmp.eq.s32.totalorder %s19, 0
      %p75 = por %p73, %p74
      %p76 = scmp.ne.s32.totalorder %s64, %s65
      %p77 = scmp.eq.s32.totalorder %s20, 1
      %p78 = por %p76, %p77
      %p80 = scmp.ne.s32.totalorder %s65, %s79
      %p81 = scmp.eq.s32.totalorder %s20, 0
      %p82 = por %p80, %p81
      %s83 = ssub.s32 %s21, %s33
      %p84 = scmp.eq.s32.totalorder %s83, 0
      %s86 = sadd.s32 %s85, 1
      %s87 = scalar_select %p84, %s85, %s86
      %p90 = pneg %p84
      %p91 = scmp.eq.s32.totalorder %s14, 1
      %p92 = por %p90, %p91
      %p93 = scmp.ne.s32.totalorder %s85, %s88
      %p94 = scmp.eq.s32.totalorder %s14, 0
      %p95 = por %p93, %p94
      %p96 = scmp.ne.s32.totalorder %s85, %s88
      %p97 = scmp.eq.s32.totalorder %s19, 1
      %p98 = por %p96, %p97
      %p99 = scmp.ne.s32.totalorder %s88, %s89
      %p100 = scmp.eq.s32.totalorder %s19, 0
      %p101 = por %p99, %p100
      %p102 = scmp.ne.s32.totalorder %s88, %s89
      %p103 = scmp.eq.s32.totalorder %s20, 1
      %p104 = por %p102, %p103
      %p106 = scmp.ne.s32.totalorder %s89, %s105
      %p107 = scmp.eq.s32.totalorder %s20, 0
      %p108 = por %p106, %p107
      %s110 = sadd.s32 %s109, 1
      %p113 = scmp.eq.s32.totalorder %s14, 1
      %p114 = scmp.ne.s32.totalorder %s109, %s111
      %p115 = scmp.eq.s32.totalorder %s14, 0
      %p116 = por %p114, %p115
      %p117 = scmp.ne.s32.totalorder %s109, %s111
      %p118 = scmp.eq.s32.totalorder %s19, 1
      %p119 = por %p117, %p118
      %p120 = scmp.ne.s32.totalorder %s111, %s112
      %p121 = scmp.eq.s32.totalorder %s19, 0
      %p122 = por %p120, %p121
      %p123 = scmp.ne.s32.totalorder %s111, %s112
      %p124 = scmp.eq.s32.totalorder %s20, 1
      %p125 = por %p123, %p124
      %p127 = scmp.ne.s32.totalorder %s112, %s126
      %p128 = scmp.eq.s32.totalorder %s20, 0
      %p129 = por %p127, %p128
      %s131 = sadd.s32 %s130, 1
      %p134 = scmp.eq.s32.totalorder %s14, 1
      %p135 = scmp.ne.s32.totalorder %s130, %s132
      %p136 = scmp.eq.s32.totalorder %s14, 0
      %p137 = por %p135, %p136
      %p138 = scmp.ne.s32.totalorder %s130, %s132
      %p139 = scmp.eq.s32.totalorder %s19, 1
      %p140 = por %p138, %p139
      %p141 = scmp.ne.s32.totalorder %s132, %s133
      %p142 = scmp.eq.s32.totalorder %s19, 0
      %p143 = por %p141, %p142
      %p144 = scmp.ne.s32.totalorder %s132, %s133
      %p145 = scmp.eq.s32.totalorder %s20, 1
      %p146 = por %p144, %p145
      %p148 = scmp.ne.s32.totalorder %s133, %s147
      %p149 = scmp.eq.s32.totalorder %s20, 0
      %p150 = por %p148, %p149
      %s151 = ssub.s32 %s21, %s33
      %s152 = ssub.s32 %s22, %s29
      %s153 = sor.u32 %s151, %s152
      %p154 = scmp.eq.s32.totalorder %s153, 0
      %s156 = sadd.s32 %s155, 1
      %s157 = scalar_select %p154, %s155, %s156
      %p160 = pneg %p154
      %p161 = scmp.eq.s32.totalorder %s14, 1
      %p162 = por %p160, %p161
      %p163 = scmp.ne.s32.totalorder %s155, %s158
      %p164 = scmp.eq.s32.totalorder %s14, 0
      %p165 = por %p163, %p164
      %p166 = scmp.ne.s32.totalorder %s155, %s158
      %p167 = scmp.eq.s32.totalorder %s19, 1
      %p168 = por %p166, %p167
      %p169 = scmp.ne.s32.totalorder %s158, %s159
      %p170 = scmp.eq.s32.totalorder %s19, 0
      %p171 = por %p169, %p170
      %p172 = scmp.ne.s32.totalorder %s158, %s159
      %p173 = scmp.eq.s32.totalorder %s20, 1
      %p174 = por %p172, %p173
      %p176 = scmp.ne.s32.totalorder %s159, %s175
      %p177 = scmp.eq.s32.totalorder %s20, 0
      %p178 = por %p176, %p177
      %p179 = scmp.le.s32.totalorder 1, %s14
      %p180 = scmp.lt.s32.totalorder %s14, 3
      %p181 = pnand %p179, %p180
      %p182 = pneg %p181
      // Predicated region
      $region9: #{tpu_custom_call.1} parent=5 // pred_check
        _
      $region10: #{tpu_custom_call.1} parent=5 // pred_check_branch
        %184 = sbr.rel (%p181) target = $region12
      $region11: #{tpu_custom_call.1} parent=5 // pred_region
        %s185 = ssub.s32 %s14, 1
        // Predicated region
        $region13: #{tpu_custom_call.1} parent=11 // pred_check
          %p186 = pneg %p75
        $region14: #{tpu_custom_call.1} parent=11 // pred_check_branch
          %188 = sbr.rel (%p186) target = $region16
        $region15: #{tpu_custom_call.1} parent=11 // pred_region
          _
        $region16: #{tpu_custom_call.1} parent=11 // pred_fallthru
          _
        // Predicated region
        $region17: #{tpu_custom_call.1} parent=11 // pred_check
          %p189 = pneg %p122
        $region18: #{tpu_custom_call.1} parent=11 // pred_check_branch
          %191 = sbr.rel (%p189) target = $region20
        $region19: #{tpu_custom_call.1} parent=11 // pred_region
          _
        $region20: #{tpu_custom_call.1} parent=11 // pred_fallthru
          _
        // Predicated region
        $region21: #{tpu_custom_call.1} parent=11 // pred_check
          %p192 = pneg %p143
        $region22: #{tpu_custom_call.1} parent=11 // pred_check_branch
          %194 = sbr.rel (%p192) target = $region24
        $region23: #{tpu_custom_call.1} parent=11 // pred_region
          _
        $region24: #{tpu_custom_call.1} parent=11 // pred_fallthru
          _
      $region12: #{tpu_custom_call.1} parent=5 // pred_fallthru
        _
      %p195 = scmp.lt.s32.totalorder %s14, 2
      // Predicated region
      $region25: #{tpu_custom_call.1} parent=5 // pred_check
        %p196 = pneg %p195
      $region26: #{tpu_custom_call.1} parent=5 // pred_check_branch
        %198 = sbr.rel (%p196) target = $region28
      $region27: #{tpu_custom_call.1} parent=5 // pred_region
        // Predicated region
        $region29: #{tpu_custom_call.1} parent=27 // pred_check
          %p199 = pneg %p48
        $region30: #{tpu_custom_call.1} parent=27 // pred_check_branch
          %201 = sbr.rel (%p199) target = $region32
        $region31: #{tpu_custom_call.1} parent=27 // pred_region
          %s202 = smul.u32 27, %s22
          %p203 = scmp.lt.s32.totalorder %s21, 1
          %s204 = scalar_select %p203, %s21, 1
          %p205 = scmp.lt.s32.totalorder %s202, 26
          %s206 = scalar_select %p205, %s202, 26
          %s207 = smul.addr %s204, 27
          %s208 = sadd.s32 %s206, %s207
          %s209 = smul.addr %s208, 4
          %s210 = scalar_lea.vmem %s0, %s209
          %s211 = smul.u32 27, %s22
        $region32: #{tpu_custom_call.1} parent=27 // pred_fallthru
          _
        // Predicated region
        $region33: #{tpu_custom_call.1} parent=27 // pred_check
          %p212 = pneg %p95
        $region34: #{tpu_custom_call.1} parent=27 // pred_check_branch
          %214 = sbr.rel (%p212) target = $region36
        $region35: #{tpu_custom_call.1} parent=27 // pred_region
          %p215 = scmp.lt.s32.totalorder %s21, 1
          %s216 = scalar_select %p215, %s21, 1
          %s217 = smul.addr %s216, 6
          %s218 = smul.addr %s217, 4
          %s219 = scalar_lea.vmem %s2, %s218
        $region36: #{tpu_custom_call.1} parent=27 // pred_fallthru
          _
      $region28: #{tpu_custom_call.1} parent=5 // pred_fallthru
        _
      %p220 = scmp.le.s32.totalorder 1, %s14
      %p221 = scmp.lt.s32.totalorder %s14, 3
      %p222 = pnand %p220, %p221
      %p223 = pneg %p222
      // Predicated region
      $region37: #{tpu_custom_call.1} parent=5 // pred_check
        _
      $region38: #{tpu_custom_call.1} parent=5 // pred_check_branch
        %225 = sbr.rel (%p222) target = $region40
      $region39: #{tpu_custom_call.1} parent=5 // pred_region
        %s226 = ssub.s32 %s14, 1
        %s227 = smul.u32 27, %s24
        %p228 = scmp.lt.s32.totalorder %s23, 1
        %s229 = scalar_select %p228, %s23, 1
        %p230 = scmp.lt.s32.totalorder %s227, 26
        %s231 = scalar_select %p230, %s227, 26
        %s232 = smul.addr %s229, 27
        %s233 = sadd.s32 %s231, %s232
        %s234 = smul.addr %s233, 4
        %s235 = scalar_lea.vmem %s0, %s234
        %p236 = pneg %p54
        %p237 = pneg %p51
        %p238 = pneg %p75
        %p239 = pneg %p72
        %p240 = scmp.lt.s32.totalorder %s23, 1
        %s241 = scalar_select %p240, %s23, 1
        %s242 = smul.addr %s241, 6
        %s243 = smul.addr %s242, 4
        %s244 = scalar_lea.vmem %s2, %s243
        %p245 = pneg %p101
        %p246 = pneg %p98
        %p247 = pneg %p122
        %p248 = pneg %p119
        %p249 = pneg %p143
        %p250 = pneg %p140
        %p251 = pneg %p171
        %p252 = pneg %p168
        %s253 = sand.u32 %s158, 1
        %s254 = scalar_lea.sflag [#allocation3], %s253
        %s255 = sand.u32 %s158, 1
        %s256 = smul.addr %s255, 4
        %s257 = scalar_lea.vmem [#allocation2], %s256
        %s258 = smul.u32 27, %s24
        %p259 = scmp.lt.s32.totalorder %s23, 1
        %s260 = scalar_select %p259, %s23, 1
        %p261 = scmp.lt.s32.totalorder %s258, 26
        %s262 = scalar_select %p261, %s258, 26
        %s263 = smul.addr %s260, 27
        %s264 = sadd.s32 %s262, %s263
        %s265 = smul.addr %s264, 4
        %s266 = scalar_lea.vmem %s0, %s265
        %s267 = smul.u32 27, %s24
        %p268 = scmp.lt.s32.totalorder %s23, 1
        %s269 = scalar_select %p268, %s23, 1
        %s270 = smul.addr %s269, 6
        %s271 = smul.addr %s270, 4
        %s272 = scalar_lea.vmem %s2, %s271
        %v273 = vld [vmem:[%s266] sm:$0x77]
        %v274 = vld [vmem:[%s266 + $0x8] sm:$0x77]
        %v275 = vld [vmem:[%s266 + $0x10] sm:$0x77]
        %v276 = vld [vmem:[%s266 + $0x18] sm:$0x77]
        %v277 = vld [vmem:[%s266 + $0x20] sm:$0x77]
        %v278 = vld [vmem:[%s266 + $0x28] sm:$0x77]
        %v279 = vld [vmem:[%s266 + $0x30] sm:$0x77]
        %v280 = vld [vmem:[%s266 + $0x38] sm:$0x77]
        %v281 = vld [vmem:[%s266 + $0x40] sm:$0x77]
        %v282 = vld [vmem:[%s266 + $0x48] sm:$0x77]
        %v283 = vld [vmem:[%s266 + $0x50] sm:$0x77]
        %v284 = vld [vmem:[%s266 + $0x58] sm:$0x77]
        %v285 = vld [vmem:[%s266 + $0x60] sm:$0x77]
        %v286 = vld [vmem:[%s266 + $0x68] sm:$0x7]
        %v287 = vadd.f32 %v273, 1.0
        %v288 = vadd.f32 %v274, 1.0
        %v289 = vadd.f32 %v275, 1.0
        %v290 = vadd.f32 %v276, 1.0
        %v291 = vadd.f32 %v277, 1.0
        %v292 = vadd.f32 %v278, 1.0
        %v293 = vadd.f32 %v279, 1.0
        %v294 = vadd.f32 %v280, 1.0
        %v295 = vadd.f32 %v281, 1.0
        %v296 = vadd.f32 %v282, 1.0
        %v297 = vadd.f32 %v283, 1.0
        %v298 = vadd.f32 %v284, 1.0
        %v299 = vadd.f32 %v285, 1.0
        %v300 = vadd.f32 %v286, 1.0
        %v301 = vmul.f32 %v287, 4.5
        %v302 = vmul.f32 %v288, 4.5
        %v303 = vmul.f32 %v289, 4.5
        %v304 = vmul.f32 %v290, 4.5
        %v305 = vmul.f32 %v291, 4.5
        %v306 = vmul.f32 %v292, 4.5
        %v307 = vmul.f32 %v293, 4.5
        %v308 = vmul.f32 %v294, 4.5
        %v309 = vmul.f32 %v295, 4.5
        %v310 = vmul.f32 %v296, 4.5
        %v311 = vmul.f32 %v297, 4.5
        %v312 = vmul.f32 %v298, 4.5
        %v313 = vmul.f32 %v299, 4.5
        %v314 = vmul.f32 %v300, 4.5
        %v315 = vmax.f32 %v301, 0.0
        %v316 = vmax.f32 %v302, 0.0
        %v317 = vmax.f32 %v303, 0.0
        %v318 = vmax.f32 %v304, 0.0
        %v319 = vmax.f32 %v305, 0.0
        %v320 = vmax.f32 %v306, 0.0
        %v321 = vmax.f32 %v307, 0.0
        %v322 = vmax.f32 %v308, 0.0
        %v323 = vmax.f32 %v309, 0.0
        %v324 = vmax.f32 %v310, 0.0
        %v325 = vmax.f32 %v311, 0.0
        %v326 = vmax.f32 %v312, 0.0
        %v327 = vmax.f32 %v313, 0.0
        %v328 = vmax.f32 %v314, 0.0
        %v329 = vmin.f32 %v315, 9.0
        %v330 = vmin.f32 %v316, 9.0
        %v331 = vmin.f32 %v317, 9.0
        %v332 = vmin.f32 %v318, 9.0
        %v333 = vmin.f32 %v319, 9.0
        %v334 = vmin.f32 %v320, 9.0
        %v335 = vmin.f32 %v321, 9.0
        %v336 = vmin.f32 %v322, 9.0
        %v337 = vmin.f32 %v323, 9.0
        %v338 = vmin.f32 %v324, 9.0
        %v339 = vmin.f32 %v325, 9.0
        %v340 = vmin.f32 %v326, 9.0
        %v341 = vmin.f32 %v327, 9.0
        %v342 = vmin.f32 %v328, 9.0
        %v343 = vmul.f32 %v287, 3.5
        %v344 = vmul.f32 %v288, 3.5
        %v345 = vmul.f32 %v289, 3.5
        %v346 = vmul.f32 %v290, 3.5
        %v347 = vmul.f32 %v291, 3.5
        %v348 = vmul.f32 %v292, 3.5
        %v349 = vmul.f32 %v293, 3.5
        %v350 = vmul.f32 %v294, 3.5
        %v351 = vmul.f32 %v295, 3.5
        %v352 = vmul.f32 %v296, 3.5
        %v353 = vmul.f32 %v297, 3.5
        %v354 = vmul.f32 %v298, 3.5
        %v355 = vmul.f32 %v299, 3.5
        %v356 = vmul.f32 %v300, 3.5
        %v357 = vmax.f32 %v343, 0.0
        %v358 = vmax.f32 %v344, 0.0
        %v359 = vmax.f32 %v345, 0.0
        %v360 = vmax.f32 %v346, 0.0
        %v361 = vmax.f32 %v347, 0.0
        %v362 = vmax.f32 %v348, 0.0
        %v363 = vmax.f32 %v349, 0.0
        %v364 = vmax.f32 %v350, 0.0
        %v365 = vmax.f32 %v351, 0.0
        %v366 = vmax.f32 %v352, 0.0
        %v367 = vmax.f32 %v353, 0.0
        %v368 = vmax.f32 %v354, 0.0
        %v369 = vmax.f32 %v355, 0.0
        %v370 = vmax.f32 %v356, 0.0
        %v371 = vmin.f32 %v357, 7.0
        %v372 = vmin.f32 %v358, 7.0
        %v373 = vmin.f32 %v359, 7.0
        %v374 = vmin.f32 %v360, 7.0
        %v375 = vmin.f32 %v361, 7.0
        %v376 = vmin.f32 %v362, 7.0
        %v377 = vmin.f32 %v363, 7.0
        %v378 = vmin.f32 %v364, 7.0
        %v379 = vmin.f32 %v365, 7.0
        %v380 = vmin.f32 %v366, 7.0
        %v381 = vmin.f32 %v367, 7.0
        %v382 = vmin.f32 %v368, 7.0
        %v383 = vmin.f32 %v369, 7.0
        %v384 = vmin.f32 %v370, 7.0
        %v385 = vmul.f32 %v287, 2.5
        %v386 = vmul.f32 %v288, 2.5
        %v387 = vmul.f32 %v289, 2.5
        %v388 = vmul.f32 %v290, 2.5
        %v389 = vmul.f32 %v291, 2.5
        %v390 = vmul.f32 %v292, 2.5
        %v391 = vmul.f32 %v293, 2.5
        %v392 = vmul.f32 %v294, 2.5
        %v393 = vmul.f32 %v295, 2.5
        %v394 = vmul.f32 %v296, 2.5
        %v395 = vmul.f32 %v297, 2.5
        %v396 = vmul.f32 %v298, 2.5
        %v397 = vmul.f32 %v299, 2.5
        %v398 = vmul.f32 %v300, 2.5
        %v399 = vmax.f32 %v385, 0.0
        %v400 = vmax.f32 %v386, 0.0
        %v401 = vmax.f32 %v387, 0.0
        %v402 = vmax.f32 %v388, 0.0
        %v403 = vmax.f32 %v389, 0.0
        %v404 = vmax.f32 %v390, 0.0
        %v405 = vmax.f32 %v391, 0.0
        %v406 = vmax.f32 %v392, 0.0
        %v407 = vmax.f32 %v393, 0.0
        %v408 = vmax.f32 %v394, 0.0
        %v409 = vmax.f32 %v395, 0.0
        %v410 = vmax.f32 %v396, 0.0
        %v411 = vmax.f32 %v397, 0.0
        %v412 = vmax.f32 %v398, 0.0
        %v413 = vmin.f32 %v399, 5.0
        %v414 = vmin.f32 %v400, 5.0
        %v415 = vmin.f32 %v401, 5.0
        %v416 = vmin.f32 %v402, 5.0
        %v417 = vmin.f32 %v403, 5.0
        %v418 = vmin.f32 %v404, 5.0
        %v419 = vmin.f32 %v405, 5.0
        %v420 = vmin.f32 %v406, 5.0
        %v421 = vmin.f32 %v407, 5.0
        %v422 = vmin.f32 %v408, 5.0
        %v423 = vmin.f32 %v409, 5.0
        %v424 = vmin.f32 %v410, 5.0
        %v425 = vmin.f32 %v411, 5.0
        %v426 = vmin.f32 %v412, 5.0
        %v427 = vld [vmem:[%s1] sm:$0xff]
        %v428 = vld [vmem:[%s1 + $0x8] sm:$0xff]
        %v429 = vld [vmem:[%s1 + $0x10] sm:$0xff]
        %v430 = vld [vmem:[%s1 + $0x18] sm:$0xff]
        %v431 = vld [vmem:[%s1 + $0x20] sm:$0xff]
        %v432 = vld [vmem:[%s1 + $0x28] sm:$0xff]
        %v433 = vld [vmem:[%s1 + $0x30] sm:$0xff]
        %v434 = vld [vmem:[%s1 + $0x38] sm:$0xff]
        %v435 = vld [vmem:[%s1 + $0x40] sm:$0xff]
        %v436 = vld [vmem:[%s1 + $0x48] sm:$0xff]
        %438 = vset.pattern.permute.xlu0 1
        %439 = vperm.xlu0 %438, %v427
        %v440 = vpop.permute.xlu0 %439
        %443 = vset.pattern.permute.xlu0 1
        %444 = vperm.xlu0 %443, %v428
        %v445 = vpop.permute.xlu0 %444
        %448 = vset.pattern.permute.xlu0 1
        %449 = vperm.xlu0 %448, %v429
        %v450 = vpop.permute.xlu0 %449
        %453 = vset.pattern.permute.xlu0 1
        %454 = vperm.xlu0 %453, %v430
        %v455 = vpop.permute.xlu0 %454
        %458 = vset.pattern.permute.xlu0 1
        %459 = vperm.xlu0 %458, %v431
        %v460 = vpop.permute.xlu0 %459
        %463 = vset.pattern.permute.xlu0 1
        %464 = vperm.xlu0 %463, %v432
        %v465 = vpop.permute.xlu0 %464
        %468 = vset.pattern.permute.xlu0 1
        %469 = vperm.xlu0 %468, %v433
        %v470 = vpop.permute.xlu0 %469
        %473 = vset.pattern.permute.xlu0 1
        %474 = vperm.xlu0 %473, %v434
        %v475 = vpop.permute.xlu0 %474
        %478 = vset.pattern.permute.xlu0 1
        %479 = vperm.xlu0 %478, %v435
        %v480 = vpop.permute.xlu0 %479
        %483 = vset.pattern.permute.xlu0 1
        %484 = vperm.xlu0 %483, %v436
        %v485 = vpop.permute.xlu0 %484
        %v501 = vperm.slane %v329, 0
        %v502 = vperm.slane %v329, 4
        %v503 = vperm.slane %v330, 0
        %v504 = vperm.slane %v330, 4
        %v505 = vperm.slane %v331, 0
        %v506 = vperm.slane %v331, 4
        %v507 = vperm.slane %v332, 0
        %v508 = vperm.slane %v332, 4
        %v509 = vperm.slane %v333, 0
        %v510 = vperm.slane %v333, 4
        %v511 = vperm.slane %v334, 0
        %v512 = vperm.slane %v334, 4
        %v513 = vperm.slane %v335, 0
        %v514 = vperm.slane %v335, 4
        %v515 = vperm.slane %v336, 0
        %v516 = vperm.slane %v336, 4
        %v517 = vperm.slane %v337, 0
        %v518 = vperm.slane %v337, 4
        %v519 = vperm.slane %v338, 0
        %v520 = vperm.slane %v338, 4
        %v521 = vperm.slane %v339, 0
        %v522 = vperm.slane %v339, 4
        %v523 = vperm.slane %v340, 0
        %v524 = vperm.slane %v340, 4
        %v525 = vperm.slane %v341, 0
        %v526 = vperm.slane %v341, 4
        %v527 = vperm.slane %v342, 0
        %v555 = vperm.slane %v501, 0
        %v556 = vperm.slane %v502, 0
        %v557 = vperm.slane %v503, 0
        %v558 = vperm.slane %v504, 0
        %v559 = vperm.slane %v505, 0
        %v560 = vperm.slane %v506, 0
        %v561 = vperm.slane %v507, 0
        %v562 = vperm.slane %v508, 0
        %v563 = vperm.slane %v509, 0
        %v564 = vperm.slane %v510, 0
        %v565 = vperm.slane %v511, 0
        %v566 = vperm.slane %v512, 0
        %v567 = vperm.slane %v513, 0
        %v568 = vperm.slane %v514, 0
        %v569 = vperm.slane %v515, 0
        %v570 = vperm.slane %v516, 0
        %v571 = vperm.slane %v517, 0
        %v572 = vperm.slane %v518, 0
        %v573 = vperm.slane %v519, 0
        %v574 = vperm.slane %v520, 0
        %v575 = vperm.slane %v521, 0
        %v576 = vperm.slane %v522, 0
        %v577 = vperm.slane %v523, 0
        %v578 = vperm.slane %v524, 0
        %v579 = vperm.slane %v525, 0
        %v580 = vperm.slane %v526, 0
        %v581 = vperm.slane %v527, 0
        %v582 = vsub.f32 %v440, %v555
        %v583 = vsub.f32 %v440, %v556
        %v584 = vsub.f32 %v440, %v557
        %v585 = vsub.f32 %v440, %v558
        %v586 = vsub.f32 %v440, %v559
        %v587 = vsub.f32 %v440, %v560
        %v588 = vsub.f32 %v440, %v561
        %v589 = vsub.f32 %v440, %v562
        %v590 = vsub.f32 %v440, %v563
        %v591 = vsub.f32 %v440, %v564
        %v592 = vsub.f32 %v440, %v565
        %v593 = vsub.f32 %v440, %v566
        %v594 = vsub.f32 %v440, %v567
        %v595 = vsub.f32 %v440, %v568
        %v596 = vsub.f32 %v440, %v569
        %v597 = vsub.f32 %v440, %v570
        %v598 = vsub.f32 %v440, %v571
        %v599 = vsub.f32 %v440, %v572
        %v600 = vsub.f32 %v440, %v573
        %v601 = vsub.f32 %v440, %v574
        %v602 = vsub.f32 %v440, %v575
        %v603 = vsub.f32 %v440, %v576
        %v604 = vsub.f32 %v440, %v577
        %v605 = vsub.f32 %v440, %v578
        %v606 = vsub.f32 %v440, %v579
        %v607 = vsub.f32 %v440, %v580
        %v608 = vsub.f32 %v440, %v581
        %v609 = vsub.f32 %v445, %v555
        %v610 = vsub.f32 %v445, %v556
        %v611 = vsub.f32 %v445, %v557
        %v612 = vsub.f32 %v445, %v558
        %v613 = vsub.f32 %v445, %v559
        %v614 = vsub.f32 %v445, %v560
        %v615 = vsub.f32 %v445, %v561
        %v616 = vsub.f32 %v445, %v562
        %v617 = vsub.f32 %v445, %v563
        %v618 = vsub.f32 %v445, %v564
        %v619 = vsub.f32 %v445, %v565
        %v620 = vsub.f32 %v445, %v566
        %v621 = vsub.f32 %v445, %v567
        %v622 = vsub.f32 %v445, %v568
        %v623 = vsub.f32 %v445, %v569
        %v624 = vsub.f32 %v445, %v570
        %v625 = vsub.f32 %v445, %v571
        %v626 = vsub.f32 %v445, %v572
        %v627 = vsub.f32 %v445, %v573
        %v628 = vsub.f32 %v445, %v574
        %v629 = vsub.f32 %v445, %v575
        %v630 = vsub.f32 %v445, %v576
        %v631 = vsub.f32 %v445, %v577
        %v632 = vsub.f32 %v445, %v578
        %v633 = vsub.f32 %v445, %v579
        %v634 = vsub.f32 %v445, %v580
        %v635 = vsub.f32 %v445, %v581
        %v636 = vsub.f32 %v450, %v555
        %v637 = vsub.f32 %v450, %v556
        %v638 = vsub.f32 %v450, %v557
        %v639 = vsub.f32 %v450, %v558
        %v640 = vsub.f32 %v450, %v559
        %v641 = vsub.f32 %v450, %v560
        %v642 = vsub.f32 %v450, %v561
        %v643 = vsub.f32 %v450, %v562
        %v644 = vsub.f32 %v450, %v563
        %v645 = vsub.f32 %v450, %v564
        %v646 = vsub.f32 %v450, %v565
        %v647 = vsub.f32 %v450, %v566
        %v648 = vsub.f32 %v450, %v567
        %v649 = vsub.f32 %v450, %v568
        %v650 = vsub.f32 %v450, %v569
        %v651 = vsub.f32 %v450, %v570
        %v652 = vsub.f32 %v450, %v571
        %v653 = vsub.f32 %v450, %v572
        %v654 = vsub.f32 %v450, %v573
        %v655 = vsub.f32 %v450, %v574
        %v656 = vsub.f32 %v450, %v575
        %v657 = vsub.f32 %v450, %v576
        %v658 = vsub.f32 %v450, %v577
        %v659 = vsub.f32 %v450, %v578
        %v660 = vsub.f32 %v450, %v579
        %v661 = vsub.f32 %v450, %v580
        %v662 = vsub.f32 %v450, %v581
        %v663 = vsub.f32 %v455, %v555
        %v664 = vsub.f32 %v455, %v556
        %v665 = vsub.f32 %v455, %v557
        %v666 = vsub.f32 %v455, %v558
        %v667 = vsub.f32 %v455, %v559
        %v668 = vsub.f32 %v455, %v560
        %v669 = vsub.f32 %v455, %v561
        %v670 = vsub.f32 %v455, %v562
        %v671 = vsub.f32 %v455, %v563
        %v672 = vsub.f32 %v455, %v564
        %v673 = vsub.f32 %v455, %v565
        %v674 = vsub.f32 %v455, %v566
        %v675 = vsub.f32 %v455, %v567
        %v676 = vsub.f32 %v455, %v568
        %v677 = vsub.f32 %v455, %v569
        %v678 = vsub.f32 %v455, %v570
        %v679 = vsub.f32 %v455, %v571
        %v680 = vsub.f32 %v455, %v572
        %v681 = vsub.f32 %v455, %v573
        %v682 = vsub.f32 %v455, %v574
        %v683 = vsub.f32 %v455, %v575
        %v684 = vsub.f32 %v455, %v576
        %v685 = vsub.f32 %v455, %v577
        %v686 = vsub.f32 %v455, %v578
        %v687 = vsub.f32 %v455, %v579
        %v688 = vsub.f32 %v455, %v580
        %v689 = vsub.f32 %v455, %v581
        %v690 = vsub.f32 %v460, %v555
        %v691 = vsub.f32 %v460, %v556
        %v692 = vsub.f32 %v460, %v557
        %v693 = vsub.f32 %v460, %v558
        %v694 = vsub.f32 %v460, %v559
        %v695 = vsub.f32 %v460, %v560
        %v696 = vsub.f32 %v460, %v561
        %v697 = vsub.f32 %v460, %v562
        %v698 = vsub.f32 %v460, %v563
        %v699 = vsub.f32 %v460, %v564
        %v700 = vsub.f32 %v460, %v565
        %v701 = vsub.f32 %v460, %v566
        %v702 = vsub.f32 %v460, %v567
        %v703 = vsub.f32 %v460, %v568
        %v704 = vsub.f32 %v460, %v569
        %v705 = vsub.f32 %v460, %v570
        %v706 = vsub.f32 %v460, %v571
        %v707 = vsub.f32 %v460, %v572
        %v708 = vsub.f32 %v460, %v573
        %v709 = vsub.f32 %v460, %v574
        %v710 = vsub.f32 %v460, %v575
        %v711 = vsub.f32 %v460, %v576
        %v712 = vsub.f32 %v460, %v577
        %v713 = vsub.f32 %v460, %v578
        %v714 = vsub.f32 %v460, %v579
        %v715 = vsub.f32 %v460, %v580
        %v716 = vsub.f32 %v460, %v581
        %v717 = vsub.f32 %v465, %v555
        %v718 = vsub.f32 %v465, %v556
        %v719 = vsub.f32 %v465, %v557
        %v720 = vsub.f32 %v465, %v558
        %v721 = vsub.f32 %v465, %v559
        %v722 = vsub.f32 %v465, %v560
        %v723 = vsub.f32 %v465, %v561
        %v724 = vsub.f32 %v465, %v562
        %v725 = vsub.f32 %v465, %v563
        %v726 = vsub.f32 %v465, %v564
        %v727 = vsub.f32 %v465, %v565
        %v728 = vsub.f32 %v465, %v566
        %v729 = vsub.f32 %v465, %v567
        %v730 = vsub.f32 %v465, %v568
        %v731 = vsub.f32 %v465, %v569
        %v732 = vsub.f32 %v465, %v570
        %v733 = vsub.f32 %v465, %v571
        %v734 = vsub.f32 %v465, %v572
        %v735 = vsub.f32 %v465, %v573
        %v736 = vsub.f32 %v465, %v574
        %v737 = vsub.f32 %v465, %v575
        %v738 = vsub.f32 %v465, %v576
        %v739 = vsub.f32 %v465, %v577
        %v740 = vsub.f32 %v465, %v578
        %v741 = vsub.f32 %v465, %v579
        %v742 = vsub.f32 %v465, %v580
        %v743 = vsub.f32 %v465, %v581
        %v744 = vsub.f32 %v470, %v555
        %v745 = vsub.f32 %v470, %v556
        %v746 = vsub.f32 %v470, %v557
        %v747 = vsub.f32 %v470, %v558
        %v748 = vsub.f32 %v470, %v559
        %v749 = vsub.f32 %v470, %v560
        %v750 = vsub.f32 %v470, %v561
        %v751 = vsub.f32 %v470, %v562
        %v752 = vsub.f32 %v470, %v563
        %v753 = vsub.f32 %v470, %v564
        %v754 = vsub.f32 %v470, %v565
        %v755 = vsub.f32 %v470, %v566
        %v756 = vsub.f32 %v470, %v567
        %v757 = vsub.f32 %v470, %v568
        %v758 = vsub.f32 %v470, %v569
        %v759 = vsub.f32 %v470, %v570
        %v760 = vsub.f32 %v470, %v571
        %v761 = vsub.f32 %v470, %v572
        %v762 = vsub.f32 %v470, %v573
        %v763 = vsub.f32 %v470, %v574
        %v764 = vsub.f32 %v470, %v575
        %v765 = vsub.f32 %v470, %v576
        %v766 = vsub.f32 %v470, %v577
        %v767 = vsub.f32 %v470, %v578
        %v768 = vsub.f32 %v470, %v579
        %v769 = vsub.f32 %v470, %v580
        %v770 = vsub.f32 %v470, %v581
        %v771 = vsub.f32 %v475, %v555
        %v772 = vsub.f32 %v475, %v556
        %v773 = vsub.f32 %v475, %v557
        %v774 = vsub.f32 %v475, %v558
        %v775 = vsub.f32 %v475, %v559
        %v776 = vsub.f32 %v475, %v560
        %v777 = vsub.f32 %v475, %v561
        %v778 = vsub.f32 %v475, %v562
        %v779 = vsub.f32 %v475, %v563
        %v780 = vsub.f32 %v475, %v564
        %v781 = vsub.f32 %v475, %v565
        %v782 = vsub.f32 %v475, %v566
        %v783 = vsub.f32 %v475, %v567
        %v784 = vsub.f32 %v475, %v568
        %v785 = vsub.f32 %v475, %v569
        %v786 = vsub.f32 %v475, %v570
        %v787 = vsub.f32 %v475, %v571
        %v788 = vsub.f32 %v475, %v572
        %v789 = vsub.f32 %v475, %v573
        %v790 = vsub.f32 %v475, %v574
        %v791 = vsub.f32 %v475, %v575
        %v792 = vsub.f32 %v475, %v576
        %v793 = vsub.f32 %v475, %v577
        %v794 = vsub.f32 %v475, %v578
        %v795 = vsub.f32 %v475, %v579
        %v796 = vsub.f32 %v475, %v580
        %v797 = vsub.f32 %v475, %v581
        %v798 = vsub.f32 %v480, %v555
        %v799 = vsub.f32 %v480, %v556
        %v800 = vsub.f32 %v480, %v557
        %v801 = vsub.f32 %v480, %v558
        %v802 = vsub.f32 %v480, %v559
        %v803 = vsub.f32 %v480, %v560
        %v804 = vsub.f32 %v480, %v561
        %v805 = vsub.f32 %v480, %v562
        %v806 = vsub.f32 %v480, %v563
        %v807 = vsub.f32 %v480, %v564
        %v808 = vsub.f32 %v480, %v565
        %v809 = vsub.f32 %v480, %v566
        %v810 = vsub.f32 %v480, %v567
        %v811 = vsub.f32 %v480, %v568
        %v812 = vsub.f32 %v480, %v569
        %v813 = vsub.f32 %v480, %v570
        %v814 = vsub.f32 %v480, %v571
        %v815 = vsub.f32 %v480, %v572
        %v816 = vsub.f32 %v480, %v573
        %v817 = vsub.f32 %v480, %v574
        %v818 = vsub.f32 %v480, %v575
        %v819 = vsub.f32 %v480, %v576
        %v820 = vsub.f32 %v480, %v577
        %v821 = vsub.f32 %v480, %v578
        %v822 = vsub.f32 %v480, %v579
        %v823 = vsub.f32 %v480, %v580
        %v824 = vsub.f32 %v480, %v581
        %v825 = vsub.f32 %v485, %v555
        %v826 = vsub.f32 %v485, %v556
        %v827 = vsub.f32 %v485, %v557
        %v828 = vsub.f32 %v485, %v558
        %v829 = vsub.f32 %v485, %v559
        %v830 = vsub.f32 %v485, %v560
        %v831 = vsub.f32 %v485, %v561
        %v832 = vsub.f32 %v485, %v562
        %v833 = vsub.f32 %v485, %v563
        %v834 = vsub.f32 %v485, %v564
        %v835 = vsub.f32 %v485, %v565
        %v836 = vsub.f32 %v485, %v566
        %v837 = vsub.f32 %v485, %v567
        %v838 = vsub.f32 %v485, %v568
        %v839 = vsub.f32 %v485, %v569
        %v840 = vsub.f32 %v485, %v570
        %v841 = vsub.f32 %v485, %v571
        %v842 = vsub.f32 %v485, %v572
        %v843 = vsub.f32 %v485, %v573
        %v844 = vsub.f32 %v485, %v574
        %v845 = vsub.f32 %v485, %v575
        %v846 = vsub.f32 %v485, %v576
        %v847 = vsub.f32 %v485, %v577
        %v848 = vsub.f32 %v485, %v578
        %v849 = vsub.f32 %v485, %v579
        %v850 = vsub.f32 %v485, %v580
        %v851 = vsub.f32 %v485, %v581
        %v852 = vand.u32 2147483647, %v582
        %v853 = vand.u32 2147483647, %v583
        %v854 = vand.u32 2147483647, %v584
        %v855 = vand.u32 2147483647, %v585
        %v856 = vand.u32 2147483647, %v586
        %v857 = vand.u32 2147483647, %v587
        %v858 = vand.u32 2147483647, %v588
        %v859 = vand.u32 2147483647, %v589
        %v860 = vand.u32 2147483647, %v590
        %v861 = vand.u32 2147483647, %v591
        %v862 = vand.u32 2147483647, %v592
        %v863 = vand.u32 2147483647, %v593
        %v864 = vand.u32 2147483647, %v594
        %v865 = vand.u32 2147483647, %v595
        %v866 = vand.u32 2147483647, %v596
        %v867 = vand.u32 2147483647, %v597
        %v868 = vand.u32 2147483647, %v598
        %v869 = vand.u32 2147483647, %v599
        %v870 = vand.u32 2147483647, %v600
        %v871 = vand.u32 2147483647, %v601
        %v872 = vand.u32 2147483647, %v602
        %v873 = vand.u32 2147483647, %v603
        %v874 = vand.u32 2147483647, %v604
        %v875 = vand.u32 2147483647, %v605
        %v876 = vand.u32 2147483647, %v606
        %v877 = vand.u32 2147483647, %v607
        %v878 = vand.u32 2147483647, %v608
        %v879 = vand.u32 2147483647, %v609
        %v880 = vand.u32 2147483647, %v610
        %v881 = vand.u32 2147483647, %v611
        %v882 = vand.u32 2147483647, %v612
        %v883 = vand.u32 2147483647, %v613
        %v884 = vand.u32 2147483647, %v614
        %v885 = vand.u32 2147483647, %v615
        %v886 = vand.u32 2147483647, %v616
        %v887 = vand.u32 2147483647, %v617
        %v888 = vand.u32 2147483647, %v618
        %v889 = vand.u32 2147483647, %v619
        %v890 = vand.u32 2147483647, %v620
        %v891 = vand.u32 2147483647, %v621
        %v892 = vand.u32 2147483647, %v622
        %v893 = vand.u32 2147483647, %v623
        %v894 = vand.u32 2147483647, %v624
        %v895 = vand.u32 2147483647, %v625
        %v896 = vand.u32 2147483647, %v626
        %v897 = vand.u32 2147483647, %v627
        %v898 = vand.u32 2147483647, %v628
        %v899 = vand.u32 2147483647, %v629
        %v900 = vand.u32 2147483647, %v630
        %v901 = vand.u32 2147483647, %v631
        %v902 = vand.u32 2147483647, %v632
        %v903 = vand.u32 2147483647, %v633
        %v904 = vand.u32 2147483647, %v634
        %v905 = vand.u32 2147483647, %v635
        %v906 = vand.u32 2147483647, %v636
        %v907 = vand.u32 2147483647, %v637
        %v908 = vand.u32 2147483647, %v638
        %v909 = vand.u32 2147483647, %v639
        %v910 = vand.u32 2147483647, %v640
        %v911 = vand.u32 2147483647, %v641
        %v912 = vand.u32 2147483647, %v642
        %v913 = vand.u32 2147483647, %v643
        %v914 = vand.u32 2147483647, %v644
        %v915 = vand.u32 2147483647, %v645
        %v916 = vand.u32 2147483647, %v646
        %v917 = vand.u32 2147483647, %v647
        %v918 = vand.u32 2147483647, %v648
        %v919 = vand.u32 2147483647, %v649
        %v920 = vand.u32 2147483647, %v650
        %v921 = vand.u32 2147483647, %v651
        %v922 = vand.u32 2147483647, %v652
        %v923 = vand.u32 2147483647, %v653
        %v924 = vand.u32 2147483647, %v654
        %v925 = vand.u32 2147483647, %v655
        %v926 = vand.u32 2147483647, %v656
        %v927 = vand.u32 2147483647, %v657
        %v928 = vand.u32 2147483647, %v658
        %v929 = vand.u32 2147483647, %v659
        %v930 = vand.u32 2147483647, %v660
        %v931 = vand.u32 2147483647, %v661
        %v932 = vand.u32 2147483647, %v662
        %v933 = vand.u32 2147483647, %v663
        %v934 = vand.u32 2147483647, %v664
        %v935 = vand.u32 2147483647, %v665
        %v936 = vand.u32 2147483647, %v666
        %v937 = vand.u32 2147483647, %v667
        %v938 = vand.u32 2147483647, %v668
        %v939 = vand.u32 2147483647, %v669
        %v940 = vand.u32 2147483647, %v670
        %v941 = vand.u32 2147483647, %v671
        %v942 = vand.u32 2147483647, %v672
        %v943 = vand.u32 2147483647, %v673
        %v944 = vand.u32 2147483647, %v674
        %v945 = vand.u32 2147483647, %v675
        %v946 = vand.u32 2147483647, %v676
        %v947 = vand.u32 2147483647, %v677
        %v948 = vand.u32 2147483647, %v678
        %v949 = vand.u32 2147483647, %v679
        %v950 = vand.u32 2147483647, %v680
        %v951 = vand.u32 2147483647, %v681
        %v952 = vand.u32 2147483647, %v682
        %v953 = vand.u32 2147483647, %v683
        %v954 = vand.u32 2147483647, %v684
        %v955 = vand.u32 2147483647, %v685
        %v956 = vand.u32 2147483647, %v686
        %v957 = vand.u32 2147483647, %v687
        %v958 = vand.u32 2147483647, %v688
        %v959 = vand.u32 2147483647, %v689
        %v960 = vand.u32 2147483647, %v690
        %v961 = vand.u32 2147483647, %v691
        %v962 = vand.u32 2147483647, %v692
        %v963 = vand.u32 2147483647, %v693
        %v964 = vand.u32 2147483647, %v694
        %v965 = vand.u32 2147483647, %v695
        %v966 = vand.u32 2147483647, %v696
        %v967 = vand.u32 2147483647, %v697
        %v968 = vand.u32 2147483647, %v698
        %v969 = vand.u32 2147483647, %v699
        %v970 = vand.u32 2147483647, %v700
        %v971 = vand.u32 2147483647, %v701
        %v972 = vand.u32 2147483647, %v702
        %v973 = vand.u32 2147483647, %v703
        %v974 = vand.u32 2147483647, %v704
        %v975 = vand.u32 2147483647, %v705
        %v976 = vand.u32 2147483647, %v706
        %v977 = vand.u32 2147483647, %v707
        %v978 = vand.u32 2147483647, %v708
        %v979 = vand.u32 2147483647, %v709
        %v980 = vand.u32 2147483647, %v710
        %v981 = vand.u32 2147483647, %v711
        %v982 = vand.u32 2147483647, %v712
        %v983 = vand.u32 2147483647, %v713
        %v984 = vand.u32 2147483647, %v714
        %v985 = vand.u32 2147483647, %v715
        %v986 = vand.u32 2147483647, %v716
        %v987 = vand.u32 2147483647, %v717
        %v988 = vand.u32 2147483647, %v718
        %v989 = vand.u32 2147483647, %v719
        %v990 = vand.u32 2147483647, %v720
        %v991 = vand.u32 2147483647, %v721
        %v992 = vand.u32 2147483647, %v722
        %v993 = vand.u32 2147483647, %v723
        %v994 = vand.u32 2147483647, %v724
        %v995 = vand.u32 2147483647, %v725
        %v996 = vand.u32 2147483647, %v726
        %v997 = vand.u32 2147483647, %v727
        %v998 = vand.u32 2147483647, %v728
        %v999 = vand.u32 2147483647, %v729
        %v1000 = vand.u32 2147483647, %v730
        %v1001 = vand.u32 2147483647, %v731
        %v1002 = vand.u32 2147483647, %v732
        %v1003 = vand.u32 2147483647, %v733
        %v1004 = vand.u32 2147483647, %v734
        %v1005 = vand.u32 2147483647, %v735
        %v1006 = vand.u32 2147483647, %v736
        %v1007 = vand.u32 2147483647, %v737
        %v1008 = vand.u32 2147483647, %v738
        %v1009 = vand.u32 2147483647, %v739
        %v1010 = vand.u32 2147483647, %v740
        %v1011 = vand.u32 2147483647, %v741
        %v1012 = vand.u32 2147483647, %v742
        %v1013 = vand.u32 2147483647, %v743
        %v1014 = vand.u32 2147483647, %v744
        %v1015 = vand.u32 2147483647, %v745
        %v1016 = vand.u32 2147483647, %v746
        %v1017 = vand.u32 2147483647, %v747
        %v1018 = vand.u32 2147483647, %v748
        %v1019 = vand.u32 2147483647, %v749
        %v1020 = vand.u32 2147483647, %v750
        %v1021 = vand.u32 2147483647, %v751
        %v1022 = vand.u32 2147483647, %v752
        %v1023 = vand.u32 2147483647, %v753
        %v1024 = vand.u32 2147483647, %v754
        %v1025 = vand.u32 2147483647, %v755
        %v1026 = vand.u32 2147483647, %v756
        %v1027 = vand.u32 2147483647, %v757
        %v1028 = vand.u32 2147483647, %v758
        %v1029 = vand.u32 2147483647, %v759
        %v1030 = vand.u32 2147483647, %v760
        %v1031 = vand.u32 2147483647, %v761
        %v1032 = vand.u32 2147483647, %v762
        %v1033 = vand.u32 2147483647, %v763
        %v1034 = vand.u32 2147483647, %v764
        %v1035 = vand.u32 2147483647, %v765
        %v1036 = vand.u32 2147483647, %v766
        %v1037 = vand.u32 2147483647, %v767
        %v1038 = vand.u32 2147483647, %v768
        %v1039 = vand.u32 2147483647, %v769
        %v1040 = vand.u32 2147483647, %v770
        %v1041 = vand.u32 2147483647, %v771
        %v1042 = vand.u32 2147483647, %v772
        %v1043 = vand.u32 2147483647, %v773
        %v1044 = vand.u32 2147483647, %v774
        %v1045 = vand.u32 2147483647, %v775
        %v1046 = vand.u32 2147483647, %v776
        %v1047 = vand.u32 2147483647, %v777
        %v1048 = vand.u32 2147483647, %v778
        %v1049 = vand.u32 2147483647, %v779
        %v1050 = vand.u32 2147483647, %v780
        %v1051 = vand.u32 2147483647, %v781
        %v1052 = vand.u32 2147483647, %v782
        %v1053 = vand.u32 2147483647, %v783
        %v1054 = vand.u32 2147483647, %v784
        %v1055 = vand.u32 2147483647, %v785
        %v1056 = vand.u32 2147483647, %v786
        %v1057 = vand.u32 2147483647, %v787
        %v1058 = vand.u32 2147483647, %v788
        %v1059 = vand.u32 2147483647, %v789
        %v1060 = vand.u32 2147483647, %v790
        %v1061 = vand.u32 2147483647, %v791
        %v1062 = vand.u32 2147483647, %v792
        %v1063 = vand.u32 2147483647, %v793
        %v1064 = vand.u32 2147483647, %v794
        %v1065 = vand.u32 2147483647, %v795
        %v1066 = vand.u32 2147483647, %v796
        %v1067 = vand.u32 2147483647, %v797
        %v1068 = vand.u32 2147483647, %v798
        %v1069 = vand.u32 2147483647, %v799
        %v1070 = vand.u32 2147483647, %v800
        %v1071 = vand.u32 2147483647, %v801
        %v1072 = vand.u32 2147483647, %v802
        %v1073 = vand.u32 2147483647, %v803
        %v1074 = vand.u32 2147483647, %v804
        %v1075 = vand.u32 2147483647, %v805
        %v1076 = vand.u32 2147483647, %v806
        %v1077 = vand.u32 2147483647, %v807
        %v1078 = vand.u32 2147483647, %v808
        %v1079 = vand.u32 2147483647, %v809
        %v1080 = vand.u32 2147483647, %v810
        %v1081 = vand.u32 2147483647, %v811
        %v1082 = vand.u32 2147483647, %v812
        %v1083 = vand.u32 2147483647, %v813
        %v1084 = vand.u32 2147483647, %v814
        %v1085 = vand.u32 2147483647, %v815
        %v1086 = vand.u32 2147483647, %v816
        %v1087 = vand.u32 2147483647, %v817
        %v1088 = vand.u32 2147483647, %v818
        %v1089 = vand.u32 2147483647, %v819
        %v1090 = vand.u32 2147483647, %v820
        %v1091 = vand.u32 2147483647, %v821
        %v1092 = vand.u32 2147483647, %v822
        %v1093 = vand.u32 2147483647, %v823
        %v1094 = vand.u32 2147483647, %v824
        %v1095 = vand.u32 2147483647, %v825
        %v1096 = vand.u32 2147483647, %v826
        %v1097 = vand.u32 2147483647, %v827
        %v1098 = vand.u32 2147483647, %v828
        %v1099 = vand.u32 2147483647, %v829
        %v1100 = vand.u32 2147483647, %v830
        %v1101 = vand.u32 2147483647, %v831
        %v1102 = vand.u32 2147483647, %v832
        %v1103 = vand.u32 2147483647, %v833
        %v1104 = vand.u32 2147483647, %v834
        %v1105 = vand.u32 2147483647, %v835
        %v1106 = vand.u32 2147483647, %v836
        %v1107 = vand.u32 2147483647, %v837
        %v1108 = vand.u32 2147483647, %v838
        %v1109 = vand.u32 2147483647, %v839
        %v1110 = vand.u32 2147483647, %v840
        %v1111 = vand.u32 2147483647, %v841
        %v1112 = vand.u32 2147483647, %v842
        %v1113 = vand.u32 2147483647, %v843
        %v1114 = vand.u32 2147483647, %v844
        %v1115 = vand.u32 2147483647, %v845
        %v1116 = vand.u32 2147483647, %v846
        %v1117 = vand.u32 2147483647, %v847
        %v1118 = vand.u32 2147483647, %v848
        %v1119 = vand.u32 2147483647, %v849
        %v1120 = vand.u32 2147483647, %v850
        %v1121 = vand.u32 2147483647, %v851
        %v1122 = vsub.f32 1.0, %v852
        %v1123 = vsub.f32 1.0, %v853
        %v1124 = vsub.f32 1.0, %v854
        %v1125 = vsub.f32 1.0, %v855
        %v1126 = vsub.f32 1.0, %v856
        %v1127 = vsub.f32 1.0, %v857
        %v1128 = vsub.f32 1.0, %v858
        %v1129 = vsub.f32 1.0, %v859
        %v1130 = vsub.f32 1.0, %v860
        %v1131 = vsub.f32 1.0, %v861
        %v1132 = vsub.f32 1.0, %v862
        %v1133 = vsub.f32 1.0, %v863
        %v1134 = vsub.f32 1.0, %v864
        %v1135 = vsub.f32 1.0, %v865
        %v1136 = vsub.f32 1.0, %v866
        %v1137 = vsub.f32 1.0, %v867
        %v1138 = vsub.f32 1.0, %v868
        %v1139 = vsub.f32 1.0, %v869
        %v1140 = vsub.f32 1.0, %v870
        %v1141 = vsub.f32 1.0, %v871
        %v1142 = vsub.f32 1.0, %v872
        %v1143 = vsub.f32 1.0, %v873
        %v1144 = vsub.f32 1.0, %v874
        %v1145 = vsub.f32 1.0, %v875
        %v1146 = vsub.f32 1.0, %v876
        %v1147 = vsub.f32 1.0, %v877
        %v1148 = vsub.f32 1.0, %v878
        %v1149 = vsub.f32 1.0, %v879
        %v1150 = vsub.f32 1.0, %v880
        %v1151 = vsub.f32 1.0, %v881
        %v1152 = vsub.f32 1.0, %v882
        %v1153 = vsub.f32 1.0, %v883
        %v1154 = vsub.f32 1.0, %v884
        %v1155 = vsub.f32 1.0, %v885
        %v1156 = vsub.f32 1.0, %v886
        %v1157 = vsub.f32 1.0, %v887
        %v1158 = vsub.f32 1.0, %v888
        %v1159 = vsub.f32 1.0, %v889
        %v1160 = vsub.f32 1.0, %v890
        %v1161 = vsub.f32 1.0, %v891
        %v1162 = vsub.f32 1.0, %v892
        %v1163 = vsub.f32 1.0, %v893
        %v1164 = vsub.f32 1.0, %v894
        %v1165 = vsub.f32 1.0, %v895
        %v1166 = vsub.f32 1.0, %v896
        %v1167 = vsub.f32 1.0, %v897
        %v1168 = vsub.f32 1.0, %v898
        %v1169 = vsub.f32 1.0, %v899
        %v1170 = vsub.f32 1.0, %v900
        %v1171 = vsub.f32 1.0, %v901
        %v1172 = vsub.f32 1.0, %v902
        %v1173 = vsub.f32 1.0, %v903
        %v1174 = vsub.f32 1.0, %v904
        %v1175 = vsub.f32 1.0, %v905
        %v1176 = vsub.f32 1.0, %v906
        %v1177 = vsub.f32 1.0, %v907
        %v1178 = vsub.f32 1.0, %v908
        %v1179 = vsub.f32 1.0, %v909
        %v1180 = vsub.f32 1.0, %v910
        %v1181 = vsub.f32 1.0, %v911
        %v1182 = vsub.f32 1.0, %v912
        %v1183 = vsub.f32 1.0, %v913
        %v1184 = vsub.f32 1.0, %v914
        %v1185 = vsub.f32 1.0, %v915
        %v1186 = vsub.f32 1.0, %v916
        %v1187 = vsub.f32 1.0, %v917
        %v1188 = vsub.f32 1.0, %v918
        %v1189 = vsub.f32 1.0, %v919
        %v1190 = vsub.f32 1.0, %v920
        %v1191 = vsub.f32 1.0, %v921
        %v1192 = vsub.f32 1.0, %v922
        %v1193 = vsub.f32 1.0, %v923
        %v1194 = vsub.f32 1.0, %v924
        %v1195 = vsub.f32 1.0, %v925
        %v1196 = vsub.f32 1.0, %v926
        %v1197 = vsub.f32 1.0, %v927
        %v1198 = vsub.f32 1.0, %v928
        %v1199 = vsub.f32 1.0, %v929
        %v1200 = vsub.f32 1.0, %v930
        %v1201 = vsub.f32 1.0, %v931
        %v1202 = vsub.f32 1.0, %v932
        %v1203 = vsub.f32 1.0, %v933
        %v1204 = vsub.f32 1.0, %v934
        %v1205 = vsub.f32 1.0, %v935
        %v1206 = vsub.f32 1.0, %v936
        %v1207 = vsub.f32 1.0, %v937
        %v1208 = vsub.f32 1.0, %v938
        %v1209 = vsub.f32 1.0, %v939
        %v1210 = vsub.f32 1.0, %v940
        %v1211 = vsub.f32 1.0, %v941
        %v1212 = vsub.f32 1.0, %v942
        %v1213 = vsub.f32 1.0, %v943
        %v1214 = vsub.f32 1.0, %v944
        %v1215 = vsub.f32 1.0, %v945
        %v1216 = vsub.f32 1.0, %v946
        %v1217 = vsub.f32 1.0, %v947
        %v1218 = vsub.f32 1.0, %v948
        %v1219 = vsub.f32 1.0, %v949
        %v1220 = vsub.f32 1.0, %v950
        %v1221 = vsub.f32 1.0, %v951
        %v1222 = vsub.f32 1.0, %v952
        %v1223 = vsub.f32 1.0, %v953
        %v1224 = vsub.f32 1.0, %v954
        %v1225 = vsub.f32 1.0, %v955
        %v1226 = vsub.f32 1.0, %v956
        %v1227 = vsub.f32 1.0, %v957
        %v1228 = vsub.f32 1.0, %v958
        %v1229 = vsub.f32 1.0, %v959
        %v1230 = vsub.f32 1.0, %v960
        %v1231 = vsub.f32 1.0, %v961
        %v1232 = vsub.f32 1.0, %v962
        %v1233 = vsub.f32 1.0, %v963
        %v1234 = vsub.f32 1.0, %v964
        %v1235 = vsub.f32 1.0, %v965
        %v1236 = vsub.f32 1.0, %v966
        %v1237 = vsub.f32 1.0, %v967
        %v1238 = vsub.f32 1.0, %v968
        %v1239 = vsub.f32 1.0, %v969
        %v1240 = vsub.f32 1.0, %v970
        %v1241 = vsub.f32 1.0, %v971
        %v1242 = vsub.f32 1.0, %v972
        %v1243 = vsub.f32 1.0, %v973
        %v1244 = vsub.f32 1.0, %v974
        %v1245 = vsub.f32 1.0, %v975
        %v1246 = vsub.f32 1.0, %v976
        %v1247 = vsub.f32 1.0, %v977
        %v1248 = vsub.f32 1.0, %v978
        %v1249 = vsub.f32 1.0, %v979
        %v1250 = vsub.f32 1.0, %v980
        %v1251 = vsub.f32 1.0, %v981
        %v1252 = vsub.f32 1.0, %v982
        %v1253 = vsub.f32 1.0, %v983
        %v1254 = vsub.f32 1.0, %v984
        %v1255 = vsub.f32 1.0, %v985
        %v1256 = vsub.f32 1.0, %v986
        %v1257 = vsub.f32 1.0, %v987
        %v1258 = vsub.f32 1.0, %v988
        %v1259 = vsub.f32 1.0, %v989
        %v1260 = vsub.f32 1.0, %v990
        %v1261 = vsub.f32 1.0, %v991
        %v1262 = vsub.f32 1.0, %v992
        %v1263 = vsub.f32 1.0, %v993
        %v1264 = vsub.f32 1.0, %v994
        %v1265 = vsub.f32 1.0, %v995
        %v1266 = vsub.f32 1.0, %v996
        %v1267 = vsub.f32 1.0, %v997
        %v1268 = vsub.f32 1.0, %v998
        %v1269 = vsub.f32 1.0, %v999
        %v1270 = vsub.f32 1.0, %v1000
        %v1271 = vsub.f32 1.0, %v1001
        %v1272 = vsub.f32 1.0, %v1002
        %v1273 = vsub.f32 1.0, %v1003
        %v1274 = vsub.f32 1.0, %v1004
        %v1275 = vsub.f32 1.0, %v1005
        %v1276 = vsub.f32 1.0, %v1006
        %v1277 = vsub.f32 1.0, %v1007
        %v1278 = vsub.f32 1.0, %v1008
        %v1279 = vsub.f32 1.0, %v1009
        %v1280 = vsub.f32 1.0, %v1010
        %v1281 = vsub.f32 1.0, %v1011
        %v1282 = vsub.f32 1.0, %v1012
        %v1283 = vsub.f32 1.0, %v1013
        %v1284 = vsub.f32 1.0, %v1014
        %v1285 = vsub.f32 1.0, %v1015
        %v1286 = vsub.f32 1.0, %v1016
        %v1287 = vsub.f32 1.0, %v1017
        %v1288 = vsub.f32 1.0, %v1018
        %v1289 = vsub.f32 1.0, %v1019
        %v1290 = vsub.f32 1.0, %v1020
        %v1291 = vsub.f32 1.0, %v1021
        %v1292 = vsub.f32 1.0, %v1022
        %v1293 = vsub.f32 1.0, %v1023
        %v1294 = vsub.f32 1.0, %v1024
        %v1295 = vsub.f32 1.0, %v1025
        %v1296 = vsub.f32 1.0, %v1026
        %v1297 = vsub.f32 1.0, %v1027
        %v1298 = vsub.f32 1.0, %v1028
        %v1299 = vsub.f32 1.0, %v1029
        %v1300 = vsub.f32 1.0, %v1030
        %v1301 = vsub.f32 1.0, %v1031
        %v1302 = vsub.f32 1.0, %v1032
        %v1303 = vsub.f32 1.0, %v1033
        %v1304 = vsub.f32 1.0, %v1034
        %v1305 = vsub.f32 1.0, %v1035
        %v1306 = vsub.f32 1.0, %v1036
        %v1307 = vsub.f32 1.0, %v1037
        %v1308 = vsub.f32 1.0, %v1038
        %v1309 = vsub.f32 1.0, %v1039
        %v1310 = vsub.f32 1.0, %v1040
        %v1311 = vsub.f32 1.0, %v1041
        %v1312 = vsub.f32 1.0, %v1042
        %v1313 = vsub.f32 1.0, %v1043
        %v1314 = vsub.f32 1.0, %v1044
        %v1315 = vsub.f32 1.0, %v1045
        %v1316 = vsub.f32 1.0, %v1046
        %v1317 = vsub.f32 1.0, %v1047
        %v1318 = vsub.f32 1.0, %v1048
        %v1319 = vsub.f32 1.0, %v1049
        %v1320 = vsub.f32 1.0, %v1050
        %v1321 = vsub.f32 1.0, %v1051
        %v1322 = vsub.f32 1.0, %v1052
        %v1323 = vsub.f32 1.0, %v1053
        %v1324 = vsub.f32 1.0, %v1054
        %v1325 = vsub.f32 1.0, %v1055
        %v1326 = vsub.f32 1.0, %v1056
        %v1327 = vsub.f32 1.0, %v1057
        %v1328 = vsub.f32 1.0, %v1058
        %v1329 = vsub.f32 1.0, %v1059
        %v1330 = vsub.f32 1.0, %v1060
        %v1331 = vsub.f32 1.0, %v1061
        %v1332 = vsub.f32 1.0, %v1062
        %v1333 = vsub.f32 1.0, %v1063
        %v1334 = vsub.f32 1.0, %v1064
        %v1335 = vsub.f32 1.0, %v1065
        %v1336 = vsub.f32 1.0, %v1066
        %v1337 = vsub.f32 1.0, %v1067
        %v1338 = vsub.f32 1.0, %v1068
        %v1339 = vsub.f32 1.0, %v1069
        %v1340 = vsub.f32 1.0, %v1070
        %v1341 = vsub.f32 1.0, %v1071
        %v1342 = vsub.f32 1.0, %v1072
        %v1343 = vsub.f32 1.0, %v1073
        %v1344 = vsub.f32 1.0, %v1074
        %v1345 = vsub.f32 1.0, %v1075
        %v1346 = vsub.f32 1.0, %v1076
        %v1347 = vsub.f32 1.0, %v1077
        %v1348 = vsub.f32 1.0, %v1078
        %v1349 = vsub.f32 1.0, %v1079
        %v1350 = vsub.f32 1.0, %v1080
        %v1351 = vsub.f32 1.0, %v1081
        %v1352 = vsub.f32 1.0, %v1082
        %v1353 = vsub.f32 1.0, %v1083
        %v1354 = vsub.f32 1.0, %v1084
        %v1355 = vsub.f32 1.0, %v1085
        %v1356 = vsub.f32 1.0, %v1086
        %v1357 = vsub.f32 1.0, %v1087
        %v1358 = vsub.f32 1.0, %v1088
        %v1359 = vsub.f32 1.0, %v1089
        %v1360 = vsub.f32 1.0, %v1090
        %v1361 = vsub.f32 1.0, %v1091
        %v1362 = vsub.f32 1.0, %v1092
        %v1363 = vsub.f32 1.0, %v1093
        %v1364 = vsub.f32 1.0, %v1094
        %v1365 = vsub.f32 1.0, %v1095
        %v1366 = vsub.f32 1.0, %v1096
        %v1367 = vsub.f32 1.0, %v1097
        %v1368 = vsub.f32 1.0, %v1098
        %v1369 = vsub.f32 1.0, %v1099
        %v1370 = vsub.f32 1.0, %v1100
        %v1371 = vsub.f32 1.0, %v1101
        %v1372 = vsub.f32 1.0, %v1102
        %v1373 = vsub.f32 1.0, %v1103
        %v1374 = vsub.f32 1.0, %v1104
        %v1375 = vsub.f32 1.0, %v1105
        %v1376 = vsub.f32 1.0, %v1106
        %v1377 = vsub.f32 1.0, %v1107
        %v1378 = vsub.f32 1.0, %v1108
        %v1379 = vsub.f32 1.0, %v1109
        %v1380 = vsub.f32 1.0, %v1110
        %v1381 = vsub.f32 1.0, %v1111
        %v1382 = vsub.f32 1.0, %v1112
        %v1383 = vsub.f32 1.0, %v1113
        %v1384 = vsub.f32 1.0, %v1114
        %v1385 = vsub.f32 1.0, %v1115
        %v1386 = vsub.f32 1.0, %v1116
        %v1387 = vsub.f32 1.0, %v1117
        %v1388 = vsub.f32 1.0, %v1118
        %v1389 = vsub.f32 1.0, %v1119
        %v1390 = vsub.f32 1.0, %v1120
        %v1391 = vsub.f32 1.0, %v1121
        %v1392 = vmax.f32 %v1122, 0.0
        %v1393 = vmax.f32 %v1123, 0.0
        %v1394 = vmax.f32 %v1124, 0.0
        %v1395 = vmax.f32 %v1125, 0.0
        %v1396 = vmax.f32 %v1126, 0.0
        %v1397 = vmax.f32 %v1127, 0.0
        %v1398 = vmax.f32 %v1128, 0.0
        %v1399 = vmax.f32 %v1129, 0.0
        %v1400 = vmax.f32 %v1130, 0.0
        %v1401 = vmax.f32 %v1131, 0.0
        %v1402 = vmax.f32 %v1132, 0.0
        %v1403 = vmax.f32 %v1133, 0.0
        %v1404 = vmax.f32 %v1134, 0.0
        %v1405 = vmax.f32 %v1135, 0.0
        %v1406 = vmax.f32 %v1136, 0.0
        %v1407 = vmax.f32 %v1137, 0.0
        %v1408 = vmax.f32 %v1138, 0.0
        %v1409 = vmax.f32 %v1139, 0.0
        %v1410 = vmax.f32 %v1140, 0.0
        %v1411 = vmax.f32 %v1141, 0.0
        %v1412 = vmax.f32 %v1142, 0.0
        %v1413 = vmax.f32 %v1143, 0.0
        %v1414 = vmax.f32 %v1144, 0.0
        %v1415 = vmax.f32 %v1145, 0.0
        %v1416 = vmax.f32 %v1146, 0.0
        %v1417 = vmax.f32 %v1147, 0.0
        %v1418 = vmax.f32 %v1148, 0.0
        %v1419 = vmax.f32 %v1149, 0.0
        %v1420 = vmax.f32 %v1150, 0.0
        %v1421 = vmax.f32 %v1151, 0.0
        %v1422 = vmax.f32 %v1152, 0.0
        %v1423 = vmax.f32 %v1153, 0.0
        %v1424 = vmax.f32 %v1154, 0.0
        %v1425 = vmax.f32 %v1155, 0.0
        %v1426 = vmax.f32 %v1156, 0.0
        %v1427 = vmax.f32 %v1157, 0.0
        %v1428 = vmax.f32 %v1158, 0.0
        %v1429 = vmax.f32 %v1159, 0.0
        %v1430 = vmax.f32 %v1160, 0.0
        %v1431 = vmax.f32 %v1161, 0.0
        %v1432 = vmax.f32 %v1162, 0.0
        %v1433 = vmax.f32 %v1163, 0.0
        %v1434 = vmax.f32 %v1164, 0.0
        %v1435 = vmax.f32 %v1165, 0.0
        %v1436 = vmax.f32 %v1166, 0.0
        %v1437 = vmax.f32 %v1167, 0.0
        %v1438 = vmax.f32 %v1168, 0.0
        %v1439 = vmax.f32 %v1169, 0.0
        %v1440 = vmax.f32 %v1170, 0.0
        %v1441 = vmax.f32 %v1171, 0.0
        %v1442 = vmax.f32 %v1172, 0.0
        %v1443 = vmax.f32 %v1173, 0.0
        %v1444 = vmax.f32 %v1174, 0.0
        %v1445 = vmax.f32 %v1175, 0.0
        %v1446 = vmax.f32 %v1176, 0.0
        %v1447 = vmax.f32 %v1177, 0.0
        %v1448 = vmax.f32 %v1178, 0.0
        %v1449 = vmax.f32 %v1179, 0.0
        %v1450 = vmax.f32 %v1180, 0.0
        %v1451 = vmax.f32 %v1181, 0.0
        %v1452 = vmax.f32 %v1182, 0.0
        %v1453 = vmax.f32 %v1183, 0.0
        %v1454 = vmax.f32 %v1184, 0.0
        %v1455 = vmax.f32 %v1185, 0.0
        %v1456 = vmax.f32 %v1186, 0.0
        %v1457 = vmax.f32 %v1187, 0.0
        %v1458 = vmax.f32 %v1188, 0.0
        %v1459 = vmax.f32 %v1189, 0.0
        %v1460 = vmax.f32 %v1190, 0.0
        %v1461 = vmax.f32 %v1191, 0.0
        %v1462 = vmax.f32 %v1192, 0.0
        %v1463 = vmax.f32 %v1193, 0.0
        %v1464 = vmax.f32 %v1194, 0.0
        %v1465 = vmax.f32 %v1195, 0.0
        %v1466 = vmax.f32 %v1196, 0.0
        %v1467 = vmax.f32 %v1197, 0.0
        %v1468 = vmax.f32 %v1198, 0.0
        %v1469 = vmax.f32 %v1199, 0.0
        %v1470 = vmax.f32 %v1200, 0.0
        %v1471 = vmax.f32 %v1201, 0.0
        %v1472 = vmax.f32 %v1202, 0.0
        %v1473 = vmax.f32 %v1203, 0.0
        %v1474 = vmax.f32 %v1204, 0.0
        %v1475 = vmax.f32 %v1205, 0.0
        %v1476 = vmax.f32 %v1206, 0.0
        %v1477 = vmax.f32 %v1207, 0.0
        %v1478 = vmax.f32 %v1208, 0.0
        %v1479 = vmax.f32 %v1209, 0.0
        %v1480 = vmax.f32 %v1210, 0.0
        %v1481 = vmax.f32 %v1211, 0.0
        %v1482 = vmax.f32 %v1212, 0.0
        %v1483 = vmax.f32 %v1213, 0.0
        %v1484 = vmax.f32 %v1214, 0.0
        %v1485 = vmax.f32 %v1215, 0.0
        %v1486 = vmax.f32 %v1216, 0.0
        %v1487 = vmax.f32 %v1217, 0.0
        %v1488 = vmax.f32 %v1218, 0.0
        %v1489 = vmax.f32 %v1219, 0.0
        %v1490 = vmax.f32 %v1220, 0.0
        %v1491 = vmax.f32 %v1221, 0.0
        %v1492 = vmax.f32 %v1222, 0.0
        %v1493 = vmax.f32 %v1223, 0.0
        %v1494 = vmax.f32 %v1224, 0.0
        %v1495 = vmax.f32 %v1225, 0.0
        %v1496 = vmax.f32 %v1226, 0.0
        %v1497 = vmax.f32 %v1227, 0.0
        %v1498 = vmax.f32 %v1228, 0.0
        %v1499 = vmax.f32 %v1229, 0.0
        %v1500 = vmax.f32 %v1230, 0.0
        %v1501 = vmax.f32 %v1231, 0.0
        %v1502 = vmax.f32 %v1232, 0.0
        %v1503 = vmax.f32 %v1233, 0.0
        %v1504 = vmax.f32 %v1234, 0.0
        %v1505 = vmax.f32 %v1235, 0.0
        %v1506 = vmax.f32 %v1236, 0.0
        %v1507 = vmax.f32 %v1237, 0.0
        %v1508 = vmax.f32 %v1238, 0.0
        %v1509 = vmax.f32 %v1239, 0.0
        %v1510 = vmax.f32 %v1240, 0.0
        %v1511 = vmax.f32 %v1241, 0.0
        %v1512 = vmax.f32 %v1242, 0.0
        %v1513 = vmax.f32 %v1243, 0.0
        %v1514 = vmax.f32 %v1244, 0.0
        %v1515 = vmax.f32 %v1245, 0.0
        %v1516 = vmax.f32 %v1246, 0.0
        %v1517 = vmax.f32 %v1247, 0.0
        %v1518 = vmax.f32 %v1248, 0.0
        %v1519 = vmax.f32 %v1249, 0.0
        %v1520 = vmax.f32 %v1250, 0.0
        %v1521 = vmax.f32 %v1251, 0.0
        %v1522 = vmax.f32 %v1252, 0.0
        %v1523 = vmax.f32 %v1253, 0.0
        %v1524 = vmax.f32 %v1254, 0.0
        %v1525 = vmax.f32 %v1255, 0.0
        %v1526 = vmax.f32 %v1256, 0.0
        %v1527 = vmax.f32 %v1257, 0.0
        %v1528 = vmax.f32 %v1258, 0.0
        %v1529 = vmax.f32 %v1259, 0.0
        %v1530 = vmax.f32 %v1260, 0.0
        %v1531 = vmax.f32 %v1261, 0.0
        %v1532 = vmax.f32 %v1262, 0.0
        %v1533 = vmax.f32 %v1263, 0.0
        %v1534 = vmax.f32 %v1264, 0.0
        %v1535 = vmax.f32 %v1265, 0.0
        %v1536 = vmax.f32 %v1266, 0.0
        %v1537 = vmax.f32 %v1267, 0.0
        %v1538 = vmax.f32 %v1268, 0.0
        %v1539 = vmax.f32 %v1269, 0.0
        %v1540 = vmax.f32 %v1270, 0.0
        %v1541 = vmax.f32 %v1271, 0.0
        %v1542 = vmax.f32 %v1272, 0.0
        %v1543 = vmax.f32 %v1273, 0.0
        %v1544 = vmax.f32 %v1274, 0.0
        %v1545 = vmax.f32 %v1275, 0.0
        %v1546 = vmax.f32 %v1276, 0.0
        %v1547 = vmax.f32 %v1277, 0.0
        %v1548 = vmax.f32 %v1278, 0.0
        %v1549 = vmax.f32 %v1279, 0.0
        %v1550 = vmax.f32 %v1280, 0.0
        %v1551 = vmax.f32 %v1281, 0.0
        %v1552 = vmax.f32 %v1282, 0.0
        %v1553 = vmax.f32 %v1283, 0.0
        %v1554 = vmax.f32 %v1284, 0.0
        %v1555 = vmax.f32 %v1285, 0.0
        %v1556 = vmax.f32 %v1286, 0.0
        %v1557 = vmax.f32 %v1287, 0.0
        %v1558 = vmax.f32 %v1288, 0.0
        %v1559 = vmax.f32 %v1289, 0.0
        %v1560 = vmax.f32 %v1290, 0.0
        %v1561 = vmax.f32 %v1291, 0.0
        %v1562 = vmax.f32 %v1292, 0.0
        %v1563 = vmax.f32 %v1293, 0.0
        %v1564 = vmax.f32 %v1294, 0.0
        %v1565 = vmax.f32 %v1295, 0.0
        %v1566 = vmax.f32 %v1296, 0.0
        %v1567 = vmax.f32 %v1297, 0.0
        %v1568 = vmax.f32 %v1298, 0.0
        %v1569 = vmax.f32 %v1299, 0.0
        %v1570 = vmax.f32 %v1300, 0.0
        %v1571 = vmax.f32 %v1301, 0.0
        %v1572 = vmax.f32 %v1302, 0.0
        %v1573 = vmax.f32 %v1303, 0.0
        %v1574 = vmax.f32 %v1304, 0.0
        %v1575 = vmax.f32 %v1305, 0.0
        %v1576 = vmax.f32 %v1306, 0.0
        %v1577 = vmax.f32 %v1307, 0.0
        %v1578 = vmax.f32 %v1308, 0.0
        %v1579 = vmax.f32 %v1309, 0.0
        %v1580 = vmax.f32 %v1310, 0.0
        %v1581 = vmax.f32 %v1311, 0.0
        %v1582 = vmax.f32 %v1312, 0.0
        %v1583 = vmax.f32 %v1313, 0.0
        %v1584 = vmax.f32 %v1314, 0.0
        %v1585 = vmax.f32 %v1315, 0.0
        %v1586 = vmax.f32 %v1316, 0.0
        %v1587 = vmax.f32 %v1317, 0.0
        %v1588 = vmax.f32 %v1318, 0.0
        %v1589 = vmax.f32 %v1319, 0.0
        %v1590 = vmax.f32 %v1320, 0.0
        %v1591 = vmax.f32 %v1321, 0.0
        %v1592 = vmax.f32 %v1322, 0.0
        %v1593 = vmax.f32 %v1323, 0.0
        %v1594 = vmax.f32 %v1324, 0.0
        %v1595 = vmax.f32 %v1325, 0.0
        %v1596 = vmax.f32 %v1326, 0.0
        %v1597 = vmax.f32 %v1327, 0.0
        %v1598 = vmax.f32 %v1328, 0.0
        %v1599 = vmax.f32 %v1329, 0.0
        %v1600 = vmax.f32 %v1330, 0.0
        %v1601 = vmax.f32 %v1331, 0.0
        %v1602 = vmax.f32 %v1332, 0.0
        %v1603 = vmax.f32 %v1333, 0.0
        %v1604 = vmax.f32 %v1334, 0.0
        %v1605 = vmax.f32 %v1335, 0.0
        %v1606 = vmax.f32 %v1336, 0.0
        %v1607 = vmax.f32 %v1337, 0.0
        %v1608 = vmax.f32 %v1338, 0.0
        %v1609 = vmax.f32 %v1339, 0.0
        %v1610 = vmax.f32 %v1340, 0.0
        %v1611 = vmax.f32 %v1341, 0.0
        %v1612 = vmax.f32 %v1342, 0.0
        %v1613 = vmax.f32 %v1343, 0.0
        %v1614 = vmax.f32 %v1344, 0.0
        %v1615 = vmax.f32 %v1345, 0.0
        %v1616 = vmax.f32 %v1346, 0.0
        %v1617 = vmax.f32 %v1347, 0.0
        %v1618 = vmax.f32 %v1348, 0.0
        %v1619 = vmax.f32 %v1349, 0.0
        %v1620 = vmax.f32 %v1350, 0.0
        %v1621 = vmax.f32 %v1351, 0.0
        %v1622 = vmax.f32 %v1352, 0.0
        %v1623 = vmax.f32 %v1353, 0.0
        %v1624 = vmax.f32 %v1354, 0.0
        %v1625 = vmax.f32 %v1355, 0.0
        %v1626 = vmax.f32 %v1356, 0.0
        %v1627 = vmax.f32 %v1357, 0.0
        %v1628 = vmax.f32 %v1358, 0.0
        %v1629 = vmax.f32 %v1359, 0.0
        %v1630 = vmax.f32 %v1360, 0.0
        %v1631 = vmax.f32 %v1361, 0.0
        %v1632 = vmax.f32 %v1362, 0.0
        %v1633 = vmax.f32 %v1363, 0.0
        %v1634 = vmax.f32 %v1364, 0.0
        %v1635 = vmax.f32 %v1365, 0.0
        %v1636 = vmax.f32 %v1366, 0.0
        %v1637 = vmax.f32 %v1367, 0.0
        %v1638 = vmax.f32 %v1368, 0.0
        %v1639 = vmax.f32 %v1369, 0.0
        %v1640 = vmax.f32 %v1370, 0.0
        %v1641 = vmax.f32 %v1371, 0.0
        %v1642 = vmax.f32 %v1372, 0.0
        %v1643 = vmax.f32 %v1373, 0.0
        %v1644 = vmax.f32 %v1374, 0.0
        %v1645 = vmax.f32 %v1375, 0.0
        %v1646 = vmax.f32 %v1376, 0.0
        %v1647 = vmax.f32 %v1377, 0.0
        %v1648 = vmax.f32 %v1378, 0.0
        %v1649 = vmax.f32 %v1379, 0.0
        %v1650 = vmax.f32 %v1380, 0.0
        %v1651 = vmax.f32 %v1381, 0.0
        %v1652 = vmax.f32 %v1382, 0.0
        %v1653 = vmax.f32 %v1383, 0.0
        %v1654 = vmax.f32 %v1384, 0.0
        %v1655 = vmax.f32 %v1385, 0.0
        %v1656 = vmax.f32 %v1386, 0.0
        %v1657 = vmax.f32 %v1387, 0.0
        %v1658 = vmax.f32 %v1388, 0.0
        %v1659 = vmax.f32 %v1389, 0.0
        %v1660 = vmax.f32 %v1390, 0.0
        %v1661 = vmax.f32 %v1391, 0.0
        %1662 = vset.pattern.permute.xlu0 0
        %1663 = vperm.xlu0 %1662, %v427
        %v1664 = vpop.permute.xlu0 %1663
        %1666 = vset.pattern.permute.xlu0 0
        %1667 = vperm.xlu0 %1666, %v428
        %v1668 = vpop.permute.xlu0 %1667
        %1670 = vset.pattern.permute.xlu0 0
        %1671 = vperm.xlu0 %1670, %v429
        %v1672 = vpop.permute.xlu0 %1671
        %1674 = vset.pattern.permute.xlu0 0
        %1675 = vperm.xlu0 %1674, %v430
        %v1676 = vpop.permute.xlu0 %1675
        %1678 = vset.pattern.permute.xlu0 0
        %1679 = vperm.xlu0 %1678, %v431
        %v1680 = vpop.permute.xlu0 %1679
        %1682 = vset.pattern.permute.xlu0 0
        %1683 = vperm.xlu0 %1682, %v432
        %v1684 = vpop.permute.xlu0 %1683
        %1686 = vset.pattern.permute.xlu0 0
        %1687 = vperm.xlu0 %1686, %v433
        %v1688 = vpop.permute.xlu0 %1687
        %1690 = vset.pattern.permute.xlu0 0
        %1691 = vperm.xlu0 %1690, %v434
        %v1692 = vpop.permute.xlu0 %1691
        %1694 = vset.pattern.permute.xlu0 0
        %1695 = vperm.xlu0 %1694, %v435
        %v1696 = vpop.permute.xlu0 %1695
        %1698 = vset.pattern.permute.xlu0 0
        %1699 = vperm.xlu0 %1698, %v436
        %v1700 = vpop.permute.xlu0 %1699
        %v1716 = vperm.slane %v371, 1
        %v1717 = vperm.slane %v371, 5
        %v1718 = vperm.slane %v372, 1
        %v1719 = vperm.slane %v372, 5
        %v1720 = vperm.slane %v373, 1
        %v1721 = vperm.slane %v373, 5
        %v1722 = vperm.slane %v374, 1
        %v1723 = vperm.slane %v374, 5
        %v1724 = vperm.slane %v375, 1
        %v1725 = vperm.slane %v375, 5
        %v1726 = vperm.slane %v376, 1
        %v1727 = vperm.slane %v376, 5
        %v1728 = vperm.slane %v377, 1
        %v1729 = vperm.slane %v377, 5
        %v1730 = vperm.slane %v378, 1
        %v1731 = vperm.slane %v378, 5
        %v1732 = vperm.slane %v379, 1
        %v1733 = vperm.slane %v379, 5
        %v1734 = vperm.slane %v380, 1
        %v1735 = vperm.slane %v380, 5
        %v1736 = vperm.slane %v381, 1
        %v1737 = vperm.slane %v381, 5
        %v1738 = vperm.slane %v382, 1
        %v1739 = vperm.slane %v382, 5
        %v1740 = vperm.slane %v383, 1
        %v1741 = vperm.slane %v383, 5
        %v1742 = vperm.slane %v384, 1
        %v1770 = vperm.slane %v1716, 1
        %v1771 = vperm.slane %v1717, 1
        %v1772 = vperm.slane %v1718, 1
        %v1773 = vperm.slane %v1719, 1
        %v1774 = vperm.slane %v1720, 1
        %v1775 = vperm.slane %v1721, 1
        %v1776 = vperm.slane %v1722, 1
        %v1777 = vperm.slane %v1723, 1
        %v1778 = vperm.slane %v1724, 1
        %v1779 = vperm.slane %v1725, 1
        %v1780 = vperm.slane %v1726, 1
        %v1781 = vperm.slane %v1727, 1
        %v1782 = vperm.slane %v1728, 1
        %v1783 = vperm.slane %v1729, 1
        %v1784 = vperm.slane %v1730, 1
        %v1785 = vperm.slane %v1731, 1
        %v1786 = vperm.slane %v1732, 1
        %v1787 = vperm.slane %v1733, 1
        %v1788 = vperm.slane %v1734, 1
        %v1789 = vperm.slane %v1735, 1
        %v1790 = vperm.slane %v1736, 1
        %v1791 = vperm.slane %v1737, 1
        %v1792 = vperm.slane %v1738, 1
        %v1793 = vperm.slane %v1739, 1
        %v1794 = vperm.slane %v1740, 1
        %v1795 = vperm.slane %v1741, 1
        %v1796 = vperm.slane %v1742, 1
        %v1797 = vsub.f32 %v1664, %v1770
        %v1798 = vsub.f32 %v1664, %v1771
        %v1799 = vsub.f32 %v1664, %v1772
        %v1800 = vsub.f32 %v1664, %v1773
        %v1801 = vsub.f32 %v1664, %v1774
        %v1802 = vsub.f32 %v1664, %v1775
        %v1803 = vsub.f32 %v1664, %v1776
        %v1804 = vsub.f32 %v1664, %v1777
        %v1805 = vsub.f32 %v1664, %v1778
        %v1806 = vsub.f32 %v1664, %v1779
        %v1807 = vsub.f32 %v1664, %v1780
        %v1808 = vsub.f32 %v1664, %v1781
        %v1809 = vsub.f32 %v1664, %v1782
        %v1810 = vsub.f32 %v1664, %v1783
        %v1811 = vsub.f32 %v1664, %v1784
        %v1812 = vsub.f32 %v1664, %v1785
        %v1813 = vsub.f32 %v1664, %v1786
        %v1814 = vsub.f32 %v1664, %v1787
        %v1815 = vsub.f32 %v1664, %v1788
        %v1816 = vsub.f32 %v1664, %v1789
        %v1817 = vsub.f32 %v1664, %v1790
        %v1818 = vsub.f32 %v1664, %v1791
        %v1819 = vsub.f32 %v1664, %v1792
        %v1820 = vsub.f32 %v1664, %v1793
        %v1821 = vsub.f32 %v1664, %v1794
        %v1822 = vsub.f32 %v1664, %v1795
        %v1823 = vsub.f32 %v1664, %v1796
        %v1824 = vsub.f32 %v1668, %v1770
        %v1825 = vsub.f32 %v1668, %v1771
        %v1826 = vsub.f32 %v1668, %v1772
        %v1827 = vsub.f32 %v1668, %v1773
        %v1828 = vsub.f32 %v1668, %v1774
        %v1829 = vsub.f32 %v1668, %v1775
        %v1830 = vsub.f32 %v1668, %v1776
        %v1831 = vsub.f32 %v1668, %v1777
        %v1832 = vsub.f32 %v1668, %v1778
        %v1833 = vsub.f32 %v1668, %v1779
        %v1834 = vsub.f32 %v1668, %v1780
        %v1835 = vsub.f32 %v1668, %v1781
        %v1836 = vsub.f32 %v1668, %v1782
        %v1837 = vsub.f32 %v1668, %v1783
        %v1838 = vsub.f32 %v1668, %v1784
        %v1839 = vsub.f32 %v1668, %v1785
        %v1840 = vsub.f32 %v1668, %v1786
        %v1841 = vsub.f32 %v1668, %v1787
        %v1842 = vsub.f32 %v1668, %v1788
        %v1843 = vsub.f32 %v1668, %v1789
        %v1844 = vsub.f32 %v1668, %v1790
        %v1845 = vsub.f32 %v1668, %v1791
        %v1846 = vsub.f32 %v1668, %v1792
        %v1847 = vsub.f32 %v1668, %v1793
        %v1848 = vsub.f32 %v1668, %v1794
        %v1849 = vsub.f32 %v1668, %v1795
        %v1850 = vsub.f32 %v1668, %v1796
        %v1851 = vsub.f32 %v1672, %v1770
        %v1852 = vsub.f32 %v1672, %v1771
        %v1853 = vsub.f32 %v1672, %v1772
        %v1854 = vsub.f32 %v1672, %v1773
        %v1855 = vsub.f32 %v1672, %v1774
        %v1856 = vsub.f32 %v1672, %v1775
        %v1857 = vsub.f32 %v1672, %v1776
        %v1858 = vsub.f32 %v1672, %v1777
        %v1859 = vsub.f32 %v1672, %v1778
        %v1860 = vsub.f32 %v1672, %v1779
        %v1861 = vsub.f32 %v1672, %v1780
        %v1862 = vsub.f32 %v1672, %v1781
        %v1863 = vsub.f32 %v1672, %v1782
        %v1864 = vsub.f32 %v1672, %v1783
        %v1865 = vsub.f32 %v1672, %v1784
        %v1866 = vsub.f32 %v1672, %v1785
        %v1867 = vsub.f32 %v1672, %v1786
        %v1868 = vsub.f32 %v1672, %v1787
        %v1869 = vsub.f32 %v1672, %v1788
        %v1870 = vsub.f32 %v1672, %v1789
        %v1871 = vsub.f32 %v1672, %v1790
        %v1872 = vsub.f32 %v1672, %v1791
        %v1873 = vsub.f32 %v1672, %v1792
        %v1874 = vsub.f32 %v1672, %v1793
        %v1875 = vsub.f32 %v1672, %v1794
        %v1876 = vsub.f32 %v1672, %v1795
        %v1877 = vsub.f32 %v1672, %v1796
        %v1878 = vsub.f32 %v1676, %v1770
        %v1879 = vsub.f32 %v1676, %v1771
        %v1880 = vsub.f32 %v1676, %v1772
        %v1881 = vsub.f32 %v1676, %v1773
        %v1882 = vsub.f32 %v1676, %v1774
        %v1883 = vsub.f32 %v1676, %v1775
        %v1884 = vsub.f32 %v1676, %v1776
        %v1885 = vsub.f32 %v1676, %v1777
        %v1886 = vsub.f32 %v1676, %v1778
        %v1887 = vsub.f32 %v1676, %v1779
        %v1888 = vsub.f32 %v1676, %v1780
        %v1889 = vsub.f32 %v1676, %v1781
        %v1890 = vsub.f32 %v1676, %v1782
        %v1891 = vsub.f32 %v1676, %v1783
        %v1892 = vsub.f32 %v1676, %v1784
        %v1893 = vsub.f32 %v1676, %v1785
        %v1894 = vsub.f32 %v1676, %v1786
        %v1895 = vsub.f32 %v1676, %v1787
        %v1896 = vsub.f32 %v1676, %v1788
        %v1897 = vsub.f32 %v1676, %v1789
        %v1898 = vsub.f32 %v1676, %v1790
        %v1899 = vsub.f32 %v1676, %v1791
        %v1900 = vsub.f32 %v1676, %v1792
        %v1901 = vsub.f32 %v1676, %v1793
        %v1902 = vsub.f32 %v1676, %v1794
        %v1903 = vsub.f32 %v1676, %v1795
        %v1904 = vsub.f32 %v1676, %v1796
        %v1905 = vsub.f32 %v1680, %v1770
        %v1906 = vsub.f32 %v1680, %v1771
        %v1907 = vsub.f32 %v1680, %v1772
        %v1908 = vsub.f32 %v1680, %v1773
        %v1909 = vsub.f32 %v1680, %v1774
        %v1910 = vsub.f32 %v1680, %v1775
        %v1911 = vsub.f32 %v1680, %v1776
        %v1912 = vsub.f32 %v1680, %v1777
        %v1913 = vsub.f32 %v1680, %v1778
        %v1914 = vsub.f32 %v1680, %v1779
        %v1915 = vsub.f32 %v1680, %v1780
        %v1916 = vsub.f32 %v1680, %v1781
        %v1917 = vsub.f32 %v1680, %v1782
        %v1918 = vsub.f32 %v1680, %v1783
        %v1919 = vsub.f32 %v1680, %v1784
        %v1920 = vsub.f32 %v1680, %v1785
        %v1921 = vsub.f32 %v1680, %v1786
        %v1922 = vsub.f32 %v1680, %v1787
        %v1923 = vsub.f32 %v1680, %v1788
        %v1924 = vsub.f32 %v1680, %v1789
        %v1925 = vsub.f32 %v1680, %v1790
        %v1926 = vsub.f32 %v1680, %v1791
        %v1927 = vsub.f32 %v1680, %v1792
        %v1928 = vsub.f32 %v1680, %v1793
        %v1929 = vsub.f32 %v1680, %v1794
        %v1930 = vsub.f32 %v1680, %v1795
        %v1931 = vsub.f32 %v1680, %v1796
        %v1932 = vsub.f32 %v1684, %v1770
        %v1933 = vsub.f32 %v1684, %v1771
        %v1934 = vsub.f32 %v1684, %v1772
        %v1935 = vsub.f32 %v1684, %v1773
        %v1936 = vsub.f32 %v1684, %v1774
        %v1937 = vsub.f32 %v1684, %v1775
        %v1938 = vsub.f32 %v1684, %v1776
        %v1939 = vsub.f32 %v1684, %v1777
        %v1940 = vsub.f32 %v1684, %v1778
        %v1941 = vsub.f32 %v1684, %v1779
        %v1942 = vsub.f32 %v1684, %v1780
        %v1943 = vsub.f32 %v1684, %v1781
        %v1944 = vsub.f32 %v1684, %v1782
        %v1945 = vsub.f32 %v1684, %v1783
        %v1946 = vsub.f32 %v1684, %v1784
        %v1947 = vsub.f32 %v1684, %v1785
        %v1948 = vsub.f32 %v1684, %v1786
        %v1949 = vsub.f32 %v1684, %v1787
        %v1950 = vsub.f32 %v1684, %v1788
        %v1951 = vsub.f32 %v1684, %v1789
        %v1952 = vsub.f32 %v1684, %v1790
        %v1953 = vsub.f32 %v1684, %v1791
        %v1954 = vsub.f32 %v1684, %v1792
        %v1955 = vsub.f32 %v1684, %v1793
        %v1956 = vsub.f32 %v1684, %v1794
        %v1957 = vsub.f32 %v1684, %v1795
        %v1958 = vsub.f32 %v1684, %v1796
        %v1959 = vsub.f32 %v1688, %v1770
        %v1960 = vsub.f32 %v1688, %v1771
        %v1961 = vsub.f32 %v1688, %v1772
        %v1962 = vsub.f32 %v1688, %v1773
        %v1963 = vsub.f32 %v1688, %v1774
        %v1964 = vsub.f32 %v1688, %v1775
        %v1965 = vsub.f32 %v1688, %v1776
        %v1966 = vsub.f32 %v1688, %v1777
        %v1967 = vsub.f32 %v1688, %v1778
        %v1968 = vsub.f32 %v1688, %v1779
        %v1969 = vsub.f32 %v1688, %v1780
        %v1970 = vsub.f32 %v1688, %v1781
        %v1971 = vsub.f32 %v1688, %v1782
        %v1972 = vsub.f32 %v1688, %v1783
        %v1973 = vsub.f32 %v1688, %v1784
        %v1974 = vsub.f32 %v1688, %v1785
        %v1975 = vsub.f32 %v1688, %v1786
        %v1976 = vsub.f32 %v1688, %v1787
        %v1977 = vsub.f32 %v1688, %v1788
        %v1978 = vsub.f32 %v1688, %v1789
        %v1979 = vsub.f32 %v1688, %v1790
        %v1980 = vsub.f32 %v1688, %v1791
        %v1981 = vsub.f32 %v1688, %v1792
        %v1982 = vsub.f32 %v1688, %v1793
        %v1983 = vsub.f32 %v1688, %v1794
        %v1984 = vsub.f32 %v1688, %v1795
        %v1985 = vsub.f32 %v1688, %v1796
        %v1986 = vsub.f32 %v1692, %v1770
        %v1987 = vsub.f32 %v1692, %v1771
        %v1988 = vsub.f32 %v1692, %v1772
        %v1989 = vsub.f32 %v1692, %v1773
        %v1990 = vsub.f32 %v1692, %v1774
        %v1991 = vsub.f32 %v1692, %v1775
        %v1992 = vsub.f32 %v1692, %v1776
        %v1993 = vsub.f32 %v1692, %v1777
        %v1994 = vsub.f32 %v1692, %v1778
        %v1995 = vsub.f32 %v1692, %v1779
        %v1996 = vsub.f32 %v1692, %v1780
        %v1997 = vsub.f32 %v1692, %v1781
        %v1998 = vsub.f32 %v1692, %v1782
        %v1999 = vsub.f32 %v1692, %v1783
        %v2000 = vsub.f32 %v1692, %v1784
        %v2001 = vsub.f32 %v1692, %v1785
        %v2002 = vsub.f32 %v1692, %v1786
        %v2003 = vsub.f32 %v1692, %v1787
        %v2004 = vsub.f32 %v1692, %v1788
        %v2005 = vsub.f32 %v1692, %v1789
        %v2006 = vsub.f32 %v1692, %v1790
        %v2007 = vsub.f32 %v1692, %v1791
        %v2008 = vsub.f32 %v1692, %v1792
        %v2009 = vsub.f32 %v1692, %v1793
        %v2010 = vsub.f32 %v1692, %v1794
        %v2011 = vsub.f32 %v1692, %v1795
        %v2012 = vsub.f32 %v1692, %v1796
        %v2013 = vsub.f32 %v1696, %v1770
        %v2014 = vsub.f32 %v1696, %v1771
        %v2015 = vsub.f32 %v1696, %v1772
        %v2016 = vsub.f32 %v1696, %v1773
        %v2017 = vsub.f32 %v1696, %v1774
        %v2018 = vsub.f32 %v1696, %v1775
        %v2019 = vsub.f32 %v1696, %v1776
        %v2020 = vsub.f32 %v1696, %v1777
        %v2021 = vsub.f32 %v1696, %v1778
        %v2022 = vsub.f32 %v1696, %v1779
        %v2023 = vsub.f32 %v1696, %v1780
        %v2024 = vsub.f32 %v1696, %v1781
        %v2025 = vsub.f32 %v1696, %v1782
        %v2026 = vsub.f32 %v1696, %v1783
        %v2027 = vsub.f32 %v1696, %v1784
        %v2028 = vsub.f32 %v1696, %v1785
        %v2029 = vsub.f32 %v1696, %v1786
        %v2030 = vsub.f32 %v1696, %v1787
        %v2031 = vsub.f32 %v1696, %v1788
        %v2032 = vsub.f32 %v1696, %v1789
        %v2033 = vsub.f32 %v1696, %v1790
        %v2034 = vsub.f32 %v1696, %v1791
        %v2035 = vsub.f32 %v1696, %v1792
        %v2036 = vsub.f32 %v1696, %v1793
        %v2037 = vsub.f32 %v1696, %v1794
        %v2038 = vsub.f32 %v1696, %v1795
        %v2039 = vsub.f32 %v1696, %v1796
        %v2040 = vsub.f32 %v1700, %v1770
        %v2041 = vsub.f32 %v1700, %v1771
        %v2042 = vsub.f32 %v1700, %v1772
        %v2043 = vsub.f32 %v1700, %v1773
        %v2044 = vsub.f32 %v1700, %v1774
        %v2045 = vsub.f32 %v1700, %v1775
        %v2046 = vsub.f32 %v1700, %v1776
        %v2047 = vsub.f32 %v1700, %v1777
        %v2048 = vsub.f32 %v1700, %v1778
        %v2049 = vsub.f32 %v1700, %v1779
        %v2050 = vsub.f32 %v1700, %v1780
        %v2051 = vsub.f32 %v1700, %v1781
        %v2052 = vsub.f32 %v1700, %v1782
        %v2053 = vsub.f32 %v1700, %v1783
        %v2054 = vsub.f32 %v1700, %v1784
        %v2055 = vsub.f32 %v1700, %v1785
        %v2056 = vsub.f32 %v1700, %v1786
        %v2057 = vsub.f32 %v1700, %v1787
        %v2058 = vsub.f32 %v1700, %v1788
        %v2059 = vsub.f32 %v1700, %v1789
        %v2060 = vsub.f32 %v1700, %v1790
        %v2061 = vsub.f32 %v1700, %v1791
        %v2062 = vsub.f32 %v1700, %v1792
        %v2063 = vsub.f32 %v1700, %v1793
        %v2064 = vsub.f32 %v1700, %v1794
        %v2065 = vsub.f32 %v1700, %v1795
        %v2066 = vsub.f32 %v1700, %v1796
        %v2067 = vand.u32 2147483647, %v1797
        %v2068 = vand.u32 2147483647, %v1798
        %v2069 = vand.u32 2147483647, %v1799
        %v2070 = vand.u32 2147483647, %v1800
        %v2071 = vand.u32 2147483647, %v1801
        %v2072 = vand.u32 2147483647, %v1802
        %v2073 = vand.u32 2147483647, %v1803
        %v2074 = vand.u32 2147483647, %v1804
        %v2075 = vand.u32 2147483647, %v1805
        %v2076 = vand.u32 2147483647, %v1806
        %v2077 = vand.u32 2147483647, %v1807
        %v2078 = vand.u32 2147483647, %v1808
        %v2079 = vand.u32 2147483647, %v1809
        %v2080 = vand.u32 2147483647, %v1810
        %v2081 = vand.u32 2147483647, %v1811
        %v2082 = vand.u32 2147483647, %v1812
        %v2083 = vand.u32 2147483647, %v1813
        %v2084 = vand.u32 2147483647, %v1814
        %v2085 = vand.u32 2147483647, %v1815
        %v2086 = vand.u32 2147483647, %v1816
        %v2087 = vand.u32 2147483647, %v1817
        %v2088 = vand.u32 2147483647, %v1818
        %v2089 = vand.u32 2147483647, %v1819
        %v2090 = vand.u32 2147483647, %v1820
        %v2091 = vand.u32 2147483647, %v1821
        %v2092 = vand.u32 2147483647, %v1822
        %v2093 = vand.u32 2147483647, %v1823
        %v2094 = vand.u32 2147483647, %v1824
        %v2095 = vand.u32 2147483647, %v1825
        %v2096 = vand.u32 2147483647, %v1826
        %v2097 = vand.u32 2147483647, %v1827
        %v2098 = vand.u32 2147483647, %v1828
        %v2099 = vand.u32 2147483647, %v1829
        %v2100 = vand.u32 2147483647, %v1830
        %v2101 = vand.u32 2147483647, %v1831
        %v2102 = vand.u32 2147483647, %v1832
        %v2103 = vand.u32 2147483647, %v1833
        %v2104 = vand.u32 2147483647, %v1834
        %v2105 = vand.u32 2147483647, %v1835
        %v2106 = vand.u32 2147483647, %v1836
        %v2107 = vand.u32 2147483647, %v1837
        %v2108 = vand.u32 2147483647, %v1838
        %v2109 = vand.u32 2147483647, %v1839
        %v2110 = vand.u32 2147483647, %v1840
        %v2111 = vand.u32 2147483647, %v1841
        %v2112 = vand.u32 2147483647, %v1842
        %v2113 = vand.u32 2147483647, %v1843
        %v2114 = vand.u32 2147483647, %v1844
        %v2115 = vand.u32 2147483647, %v1845
        %v2116 = vand.u32 2147483647, %v1846
        %v2117 = vand.u32 2147483647, %v1847
        %v2118 = vand.u32 2147483647, %v1848
        %v2119 = vand.u32 2147483647, %v1849
        %v2120 = vand.u32 2147483647, %v1850
        %v2121 = vand.u32 2147483647, %v1851
        %v2122 = vand.u32 2147483647, %v1852
        %v2123 = vand.u32 2147483647, %v1853
        %v2124 = vand.u32 2147483647, %v1854
        %v2125 = vand.u32 2147483647, %v1855
        %v2126 = vand.u32 2147483647, %v1856
        %v2127 = vand.u32 2147483647, %v1857
        %v2128 = vand.u32 2147483647, %v1858
        %v2129 = vand.u32 2147483647, %v1859
        %v2130 = vand.u32 2147483647, %v1860
        %v2131 = vand.u32 2147483647, %v1861
        %v2132 = vand.u32 2147483647, %v1862
        %v2133 = vand.u32 2147483647, %v1863
        %v2134 = vand.u32 2147483647, %v1864
        %v2135 = vand.u32 2147483647, %v1865
        %v2136 = vand.u32 2147483647, %v1866
        %v2137 = vand.u32 2147483647, %v1867
        %v2138 = vand.u32 2147483647, %v1868
        %v2139 = vand.u32 2147483647, %v1869
        %v2140 = vand.u32 2147483647, %v1870
        %v2141 = vand.u32 2147483647, %v1871
        %v2142 = vand.u32 2147483647, %v1872
        %v2143 = vand.u32 2147483647, %v1873
        %v2144 = vand.u32 2147483647, %v1874
        %v2145 = vand.u32 2147483647, %v1875
        %v2146 = vand.u32 2147483647, %v1876
        %v2147 = vand.u32 2147483647, %v1877
        %v2148 = vand.u32 2147483647, %v1878
        %v2149 = vand.u32 2147483647, %v1879
        %v2150 = vand.u32 2147483647, %v1880
        %v2151 = vand.u32 2147483647, %v1881
        %v2152 = vand.u32 2147483647, %v1882
        %v2153 = vand.u32 2147483647, %v1883
        %v2154 = vand.u32 2147483647, %v1884
        %v2155 = vand.u32 2147483647, %v1885
        %v2156 = vand.u32 2147483647, %v1886
        %v2157 = vand.u32 2147483647, %v1887
        %v2158 = vand.u32 2147483647, %v1888
        %v2159 = vand.u32 2147483647, %v1889
        %v2160 = vand.u32 2147483647, %v1890
        %v2161 = vand.u32 2147483647, %v1891
        %v2162 = vand.u32 2147483647, %v1892
        %v2163 = vand.u32 2147483647, %v1893
        %v2164 = vand.u32 2147483647, %v1894
        %v2165 = vand.u32 2147483647, %v1895
        %v2166 = vand.u32 2147483647, %v1896
        %v2167 = vand.u32 2147483647, %v1897
        %v2168 = vand.u32 2147483647, %v1898
        %v2169 = vand.u32 2147483647, %v1899
        %v2170 = vand.u32 2147483647, %v1900
        %v2171 = vand.u32 2147483647, %v1901
        %v2172 = vand.u32 2147483647, %v1902
        %v2173 = vand.u32 2147483647, %v1903
        %v2174 = vand.u32 2147483647, %v1904
        %v2175 = vand.u32 2147483647, %v1905
        %v2176 = vand.u32 2147483647, %v1906
        %v2177 = vand.u32 2147483647, %v1907
        %v2178 = vand.u32 2147483647, %v1908
        %v2179 = vand.u32 2147483647, %v1909
        %v2180 = vand.u32 2147483647, %v1910
        %v2181 = vand.u32 2147483647, %v1911
        %v2182 = vand.u32 2147483647, %v1912
        %v2183 = vand.u32 2147483647, %v1913
        %v2184 = vand.u32 2147483647, %v1914
        %v2185 = vand.u32 2147483647, %v1915
        %v2186 = vand.u32 2147483647, %v1916
        %v2187 = vand.u32 2147483647, %v1917
        %v2188 = vand.u32 2147483647, %v1918
        %v2189 = vand.u32 2147483647, %v1919
        %v2190 = vand.u32 2147483647, %v1920
        %v2191 = vand.u32 2147483647, %v1921
        %v2192 = vand.u32 2147483647, %v1922
        %v2193 = vand.u32 2147483647, %v1923
        %v2194 = vand.u32 2147483647, %v1924
        %v2195 = vand.u32 2147483647, %v1925
        %v2196 = vand.u32 2147483647, %v1926
        %v2197 = vand.u32 2147483647, %v1927
        %v2198 = vand.u32 2147483647, %v1928
        %v2199 = vand.u32 2147483647, %v1929
        %v2200 = vand.u32 2147483647, %v1930
        %v2201 = vand.u32 2147483647, %v1931
        %v2202 = vand.u32 2147483647, %v1932
        %v2203 = vand.u32 2147483647, %v1933
        %v2204 = vand.u32 2147483647, %v1934
        %v2205 = vand.u32 2147483647, %v1935
        %v2206 = vand.u32 2147483647, %v1936
        %v2207 = vand.u32 2147483647, %v1937
        %v2208 = vand.u32 2147483647, %v1938
        %v2209 = vand.u32 2147483647, %v1939
        %v2210 = vand.u32 2147483647, %v1940
        %v2211 = vand.u32 2147483647, %v1941
        %v2212 = vand.u32 2147483647, %v1942
        %v2213 = vand.u32 2147483647, %v1943
        %v2214 = vand.u32 2147483647, %v1944
        %v2215 = vand.u32 2147483647, %v1945
        %v2216 = vand.u32 2147483647, %v1946
        %v2217 = vand.u32 2147483647, %v1947
        %v2218 = vand.u32 2147483647, %v1948
        %v2219 = vand.u32 2147483647, %v1949
        %v2220 = vand.u32 2147483647, %v1950
        %v2221 = vand.u32 2147483647, %v1951
        %v2222 = vand.u32 2147483647, %v1952
        %v2223 = vand.u32 2147483647, %v1953
        %v2224 = vand.u32 2147483647, %v1954
        %v2225 = vand.u32 2147483647, %v1955
        %v2226 = vand.u32 2147483647, %v1956
        %v2227 = vand.u32 2147483647, %v1957
        %v2228 = vand.u32 2147483647, %v1958
        %v2229 = vand.u32 2147483647, %v1959
        %v2230 = vand.u32 2147483647, %v1960
        %v2231 = vand.u32 2147483647, %v1961
        %v2232 = vand.u32 2147483647, %v1962
        %v2233 = vand.u32 2147483647, %v1963
        %v2234 = vand.u32 2147483647, %v1964
        %v2235 = vand.u32 2147483647, %v1965
        %v2236 = vand.u32 2147483647, %v1966
        %v2237 = vand.u32 2147483647, %v1967
        %v2238 = vand.u32 2147483647, %v1968
        %v2239 = vand.u32 2147483647, %v1969
        %v2240 = vand.u32 2147483647, %v1970
        %v2241 = vand.u32 2147483647, %v1971
        %v2242 = vand.u32 2147483647, %v1972
        %v2243 = vand.u32 2147483647, %v1973
        %v2244 = vand.u32 2147483647, %v1974
        %v2245 = vand.u32 2147483647, %v1975
        %v2246 = vand.u32 2147483647, %v1976
        %v2247 = vand.u32 2147483647, %v1977
        %v2248 = vand.u32 2147483647, %v1978
        %v2249 = vand.u32 2147483647, %v1979
        %v2250 = vand.u32 2147483647, %v1980
        %v2251 = vand.u32 2147483647, %v1981
        %v2252 = vand.u32 2147483647, %v1982
        %v2253 = vand.u32 2147483647, %v1983
        %v2254 = vand.u32 2147483647, %v1984
        %v2255 = vand.u32 2147483647, %v1985
        %v2256 = vand.u32 2147483647, %v1986
        %v2257 = vand.u32 2147483647, %v1987
        %v2258 = vand.u32 2147483647, %v1988
        %v2259 = vand.u32 2147483647, %v1989
        %v2260 = vand.u32 2147483647, %v1990
        %v2261 = vand.u32 2147483647, %v1991
        %v2262 = vand.u32 2147483647, %v1992
        %v2263 = vand.u32 2147483647, %v1993
        %v2264 = vand.u32 2147483647, %v1994
        %v2265 = vand.u32 2147483647, %v1995
        %v2266 = vand.u32 2147483647, %v1996
        %v2267 = vand.u32 2147483647, %v1997
        %v2268 = vand.u32 2147483647, %v1998
        %v2269 = vand.u32 2147483647, %v1999
        %v2270 = vand.u32 2147483647, %v2000
        %v2271 = vand.u32 2147483647, %v2001
        %v2272 = vand.u32 2147483647, %v2002
        %v2273 = vand.u32 2147483647, %v2003
        %v2274 = vand.u32 2147483647, %v2004
        %v2275 = vand.u32 2147483647, %v2005
        %v2276 = vand.u32 2147483647, %v2006
        %v2277 = vand.u32 2147483647, %v2007
        %v2278 = vand.u32 2147483647, %v2008
        %v2279 = vand.u32 2147483647, %v2009
        %v2280 = vand.u32 2147483647, %v2010
        %v2281 = vand.u32 2147483647, %v2011
        %v2282 = vand.u32 2147483647, %v2012
        %v2283 = vand.u32 2147483647, %v2013
        %v2284 = vand.u32 2147483647, %v2014
        %v2285 = vand.u32 2147483647, %v2015
        %v2286 = vand.u32 2147483647, %v2016
        %v2287 = vand.u32 2147483647, %v2017
        %v2288 = vand.u32 2147483647, %v2018
        %v2289 = vand.u32 2147483647, %v2019
        %v2290 = vand.u32 2147483647, %v2020
        %v2291 = vand.u32 2147483647, %v2021
        %v2292 = vand.u32 2147483647, %v2022
        %v2293 = vand.u32 2147483647, %v2023
        %v2294 = vand.u32 2147483647, %v2024
        %v2295 = vand.u32 2147483647, %v2025
        %v2296 = vand.u32 2147483647, %v2026
        %v2297 = vand.u32 2147483647, %v2027
        %v2298 = vand.u32 2147483647, %v2028
        %v2299 = vand.u32 2147483647, %v2029
        %v2300 = vand.u32 2147483647, %v2030
        %v2301 = vand.u32 2147483647, %v2031
        %v2302 = vand.u32 2147483647, %v2032
        %v2303 = vand.u32 2147483647, %v2033
        %v2304 = vand.u32 2147483647, %v2034
        %v2305 = vand.u32 2147483647, %v2035
        %v2306 = vand.u32 2147483647, %v2036
        %v2307 = vand.u32 2147483647, %v2037
        %v2308 = vand.u32 2147483647, %v2038
        %v2309 = vand.u32 2147483647, %v2039
        %v2310 = vand.u32 2147483647, %v2040
        %v2311 = vand.u32 2147483647, %v2041
        %v2312 = vand.u32 2147483647, %v2042
        %v2313 = vand.u32 2147483647, %v2043
        %v2314 = vand.u32 2147483647, %v2044
        %v2315 = vand.u32 2147483647, %v2045
        %v2316 = vand.u32 2147483647, %v2046
        %v2317 = vand.u32 2147483647, %v2047
        %v2318 = vand.u32 2147483647, %v2048
        %v2319 = vand.u32 2147483647, %v2049
        %v2320 = vand.u32 2147483647, %v2050
        %v2321 = vand.u32 2147483647, %v2051
        %v2322 = vand.u32 2147483647, %v2052
        %v2323 = vand.u32 2147483647, %v2053
        %v2324 = vand.u32 2147483647, %v2054
        %v2325 = vand.u32 2147483647, %v2055
        %v2326 = vand.u32 2147483647, %v2056
        %v2327 = vand.u32 2147483647, %v2057
        %v2328 = vand.u32 2147483647, %v2058
        %v2329 = vand.u32 2147483647, %v2059
        %v2330 = vand.u32 2147483647, %v2060
        %v2331 = vand.u32 2147483647, %v2061
        %v2332 = vand.u32 2147483647, %v2062
        %v2333 = vand.u32 2147483647, %v2063
        %v2334 = vand.u32 2147483647, %v2064
        %v2335 = vand.u32 2147483647, %v2065
        %v2336 = vand.u32 2147483647, %v2066
        %v2337 = vsub.f32 1.0, %v2067
        %v2338 = vsub.f32 1.0, %v2068
        %v2339 = vsub.f32 1.0, %v2069
        %v2340 = vsub.f32 1.0, %v2070
        %v2341 = vsub.f32 1.0, %v2071
        %v2342 = vsub.f32 1.0, %v2072
        %v2343 = vsub.f32 1.0, %v2073
        %v2344 = vsub.f32 1.0, %v2074
        %v2345 = vsub.f32 1.0, %v2075
        %v2346 = vsub.f32 1.0, %v2076
        %v2347 = vsub.f32 1.0, %v2077
        %v2348 = vsub.f32 1.0, %v2078
        %v2349 = vsub.f32 1.0, %v2079
        %v2350 = vsub.f32 1.0, %v2080
        %v2351 = vsub.f32 1.0, %v2081
        %v2352 = vsub.f32 1.0, %v2082
        %v2353 = vsub.f32 1.0, %v2083
        %v2354 = vsub.f32 1.0, %v2084
        %v2355 = vsub.f32 1.0, %v2085
        %v2356 = vsub.f32 1.0, %v2086
        %v2357 = vsub.f32 1.0, %v2087
        %v2358 = vsub.f32 1.0, %v2088
        %v2359 = vsub.f32 1.0, %v2089
        %v2360 = vsub.f32 1.0, %v2090
        %v2361 = vsub.f32 1.0, %v2091
        %v2362 = vsub.f32 1.0, %v2092
        %v2363 = vsub.f32 1.0, %v2093
        %v2364 = vsub.f32 1.0, %v2094
        %v2365 = vsub.f32 1.0, %v2095
        %v2366 = vsub.f32 1.0, %v2096
        %v2367 = vsub.f32 1.0, %v2097
        %v2368 = vsub.f32 1.0, %v2098
        %v2369 = vsub.f32 1.0, %v2099
        %v2370 = vsub.f32 1.0, %v2100
        %v2371 = vsub.f32 1.0, %v2101
        %v2372 = vsub.f32 1.0, %v2102
        %v2373 = vsub.f32 1.0, %v2103
        %v2374 = vsub.f32 1.0, %v2104
        %v2375 = vsub.f32 1.0, %v2105
        %v2376 = vsub.f32 1.0, %v2106
        %v2377 = vsub.f32 1.0, %v2107
        %v2378 = vsub.f32 1.0, %v2108
        %v2379 = vsub.f32 1.0, %v2109
        %v2380 = vsub.f32 1.0, %v2110
        %v2381 = vsub.f32 1.0, %v2111
        %v2382 = vsub.f32 1.0, %v2112
        %v2383 = vsub.f32 1.0, %v2113
        %v2384 = vsub.f32 1.0, %v2114
        %v2385 = vsub.f32 1.0, %v2115
        %v2386 = vsub.f32 1.0, %v2116
        %v2387 = vsub.f32 1.0, %v2117
        %v2388 = vsub.f32 1.0, %v2118
        %v2389 = vsub.f32 1.0, %v2119
        %v2390 = vsub.f32 1.0, %v2120
        %v2391 = vsub.f32 1.0, %v2121
        %v2392 = vsub.f32 1.0, %v2122
        %v2393 = vsub.f32 1.0, %v2123
        %v2394 = vsub.f32 1.0, %v2124
        %v2395 = vsub.f32 1.0, %v2125
        %v2396 = vsub.f32 1.0, %v2126
        %v2397 = vsub.f32 1.0, %v2127
        %v2398 = vsub.f32 1.0, %v2128
        %v2399 = vsub.f32 1.0, %v2129
        %v2400 = vsub.f32 1.0, %v2130
        %v2401 = vsub.f32 1.0, %v2131
        %v2402 = vsub.f32 1.0, %v2132
        %v2403 = vsub.f32 1.0, %v2133
        %v2404 = vsub.f32 1.0, %v2134
        %v2405 = vsub.f32 1.0, %v2135
        %v2406 = vsub.f32 1.0, %v2136
        %v2407 = vsub.f32 1.0, %v2137
        %v2408 = vsub.f32 1.0, %v2138
        %v2409 = vsub.f32 1.0, %v2139
        %v2410 = vsub.f32 1.0, %v2140
        %v2411 = vsub.f32 1.0, %v2141
        %v2412 = vsub.f32 1.0, %v2142
        %v2413 = vsub.f32 1.0, %v2143
        %v2414 = vsub.f32 1.0, %v2144
        %v2415 = vsub.f32 1.0, %v2145
        %v2416 = vsub.f32 1.0, %v2146
        %v2417 = vsub.f32 1.0, %v2147
        %v2418 = vsub.f32 1.0, %v2148
        %v2419 = vsub.f32 1.0, %v2149
        %v2420 = vsub.f32 1.0, %v2150
        %v2421 = vsub.f32 1.0, %v2151
        %v2422 = vsub.f32 1.0, %v2152
        %v2423 = vsub.f32 1.0, %v2153
        %v2424 = vsub.f32 1.0, %v2154
        %v2425 = vsub.f32 1.0, %v2155
        %v2426 = vsub.f32 1.0, %v2156
        %v2427 = vsub.f32 1.0, %v2157
        %v2428 = vsub.f32 1.0, %v2158
        %v2429 = vsub.f32 1.0, %v2159
        %v2430 = vsub.f32 1.0, %v2160
        %v2431 = vsub.f32 1.0, %v2161
        %v2432 = vsub.f32 1.0, %v2162
        %v2433 = vsub.f32 1.0, %v2163
        %v2434 = vsub.f32 1.0, %v2164
        %v2435 = vsub.f32 1.0, %v2165
        %v2436 = vsub.f32 1.0, %v2166
        %v2437 = vsub.f32 1.0, %v2167
        %v2438 = vsub.f32 1.0, %v2168
        %v2439 = vsub.f32 1.0, %v2169
        %v2440 = vsub.f32 1.0, %v2170
        %v2441 = vsub.f32 1.0, %v2171
        %v2442 = vsub.f32 1.0, %v2172
        %v2443 = vsub.f32 1.0, %v2173
        %v2444 = vsub.f32 1.0, %v2174
        %v2445 = vsub.f32 1.0, %v2175
        %v2446 = vsub.f32 1.0, %v2176
        %v2447 = vsub.f32 1.0, %v2177
        %v2448 = vsub.f32 1.0, %v2178
        %v2449 = vsub.f32 1.0, %v2179
        %v2450 = vsub.f32 1.0, %v2180
        %v2451 = vsub.f32 1.0, %v2181
        %v2452 = vsub.f32 1.0, %v2182
        %v2453 = vsub.f32 1.0, %v2183
        %v2454 = vsub.f32 1.0, %v2184
        %v2455 = vsub.f32 1.0, %v2185
        %v2456 = vsub.f32 1.0, %v2186
        %v2457 = vsub.f32 1.0, %v2187
        %v2458 = vsub.f32 1.0, %v2188
        %v2459 = vsub.f32 1.0, %v2189
        %v2460 = vsub.f32 1.0, %v2190
        %v2461 = vsub.f32 1.0, %v2191
        %v2462 = vsub.f32 1.0, %v2192
        %v2463 = vsub.f32 1.0, %v2193
        %v2464 = vsub.f32 1.0, %v2194
        %v2465 = vsub.f32 1.0, %v2195
        %v2466 = vsub.f32 1.0, %v2196
        %v2467 = vsub.f32 1.0, %v2197
        %v2468 = vsub.f32 1.0, %v2198
        %v2469 = vsub.f32 1.0, %v2199
        %v2470 = vsub.f32 1.0, %v2200
        %v2471 = vsub.f32 1.0, %v2201
        %v2472 = vsub.f32 1.0, %v2202
        %v2473 = vsub.f32 1.0, %v2203
        %v2474 = vsub.f32 1.0, %v2204
        %v2475 = vsub.f32 1.0, %v2205
        %v2476 = vsub.f32 1.0, %v2206
        %v2477 = vsub.f32 1.0, %v2207
        %v2478 = vsub.f32 1.0, %v2208
        %v2479 = vsub.f32 1.0, %v2209
        %v2480 = vsub.f32 1.0, %v2210
        %v2481 = vsub.f32 1.0, %v2211
        %v2482 = vsub.f32 1.0, %v2212
        %v2483 = vsub.f32 1.0, %v2213
        %v2484 = vsub.f32 1.0, %v2214
        %v2485 = vsub.f32 1.0, %v2215
        %v2486 = vsub.f32 1.0, %v2216
        %v2487 = vsub.f32 1.0, %v2217
        %v2488 = vsub.f32 1.0, %v2218
        %v2489 = vsub.f32 1.0, %v2219
        %v2490 = vsub.f32 1.0, %v2220
        %v2491 = vsub.f32 1.0, %v2221
        %v2492 = vsub.f32 1.0, %v2222
        %v2493 = vsub.f32 1.0, %v2223
        %v2494 = vsub.f32 1.0, %v2224
        %v2495 = vsub.f32 1.0, %v2225
        %v2496 = vsub.f32 1.0, %v2226
        %v2497 = vsub.f32 1.0, %v2227
        %v2498 = vsub.f32 1.0, %v2228
        %v2499 = vsub.f32 1.0, %v2229
        %v2500 = vsub.f32 1.0, %v2230
        %v2501 = vsub.f32 1.0, %v2231
        %v2502 = vsub.f32 1.0, %v2232
        %v2503 = vsub.f32 1.0, %v2233
        %v2504 = vsub.f32 1.0, %v2234
        %v2505 = vsub.f32 1.0, %v2235
        %v2506 = vsub.f32 1.0, %v2236
        %v2507 = vsub.f32 1.0, %v2237
        %v2508 = vsub.f32 1.0, %v2238
        %v2509 = vsub.f32 1.0, %v2239
        %v2510 = vsub.f32 1.0, %v2240
        %v2511 = vsub.f32 1.0, %v2241
        %v2512 = vsub.f32 1.0, %v2242
        %v2513 = vsub.f32 1.0, %v2243
        %v2514 = vsub.f32 1.0, %v2244
        %v2515 = vsub.f32 1.0, %v2245
        %v2516 = vsub.f32 1.0, %v2246
        %v2517 = vsub.f32 1.0, %v2247
        %v2518 = vsub.f32 1.0, %v2248
        %v2519 = vsub.f32 1.0, %v2249
        %v2520 = vsub.f32 1.0, %v2250
        %v2521 = vsub.f32 1.0, %v2251
        %v2522 = vsub.f32 1.0, %v2252
        %v2523 = vsub.f32 1.0, %v2253
        %v2524 = vsub.f32 1.0, %v2254
        %v2525 = vsub.f32 1.0, %v2255
        %v2526 = vsub.f32 1.0, %v2256
        %v2527 = vsub.f32 1.0, %v2257
        %v2528 = vsub.f32 1.0, %v2258
        %v2529 = vsub.f32 1.0, %v2259
        %v2530 = vsub.f32 1.0, %v2260
        %v2531 = vsub.f32 1.0, %v2261
        %v2532 = vsub.f32 1.0, %v2262
        %v2533 = vsub.f32 1.0, %v2263
        %v2534 = vsub.f32 1.0, %v2264
        %v2535 = vsub.f32 1.0, %v2265
        %v2536 = vsub.f32 1.0, %v2266
        %v2537 = vsub.f32 1.0, %v2267
        %v2538 = vsub.f32 1.0, %v2268
        %v2539 = vsub.f32 1.0, %v2269
        %v2540 = vsub.f32 1.0, %v2270
        %v2541 = vsub.f32 1.0, %v2271
        %v2542 = vsub.f32 1.0, %v2272
        %v2543 = vsub.f32 1.0, %v2273
        %v2544 = vsub.f32 1.0, %v2274
        %v2545 = vsub.f32 1.0, %v2275
        %v2546 = vsub.f32 1.0, %v2276
        %v2547 = vsub.f32 1.0, %v2277
        %v2548 = vsub.f32 1.0, %v2278
        %v2549 = vsub.f32 1.0, %v2279
        %v2550 = vsub.f32 1.0, %v2280
        %v2551 = vsub.f32 1.0, %v2281
        %v2552 = vsub.f32 1.0, %v2282
        %v2553 = vsub.f32 1.0, %v2283
        %v2554 = vsub.f32 1.0, %v2284
        %v2555 = vsub.f32 1.0, %v2285
        %v2556 = vsub.f32 1.0, %v2286
        %v2557 = vsub.f32 1.0, %v2287
        %v2558 = vsub.f32 1.0, %v2288
        %v2559 = vsub.f32 1.0, %v2289
        %v2560 = vsub.f32 1.0, %v2290
        %v2561 = vsub.f32 1.0, %v2291
        %v2562 = vsub.f32 1.0, %v2292
        %v2563 = vsub.f32 1.0, %v2293
        %v2564 = vsub.f32 1.0, %v2294
        %v2565 = vsub.f32 1.0, %v2295
        %v2566 = vsub.f32 1.0, %v2296
        %v2567 = vsub.f32 1.0, %v2297
        %v2568 = vsub.f32 1.0, %v2298
        %v2569 = vsub.f32 1.0, %v2299
        %v2570 = vsub.f32 1.0, %v2300
        %v2571 = vsub.f32 1.0, %v2301
        %v2572 = vsub.f32 1.0, %v2302
        %v2573 = vsub.f32 1.0, %v2303
        %v2574 = vsub.f32 1.0, %v2304
        %v2575 = vsub.f32 1.0, %v2305
        %v2576 = vsub.f32 1.0, %v2306
        %v2577 = vsub.f32 1.0, %v2307
        %v2578 = vsub.f32 1.0, %v2308
        %v2579 = vsub.f32 1.0, %v2309
        %v2580 = vsub.f32 1.0, %v2310
        %v2581 = vsub.f32 1.0, %v2311
        %v2582 = vsub.f32 1.0, %v2312
        %v2583 = vsub.f32 1.0, %v2313
        %v2584 = vsub.f32 1.0, %v2314
        %v2585 = vsub.f32 1.0, %v2315
        %v2586 = vsub.f32 1.0, %v2316
        %v2587 = vsub.f32 1.0, %v2317
        %v2588 = vsub.f32 1.0, %v2318
        %v2589 = vsub.f32 1.0, %v2319
        %v2590 = vsub.f32 1.0, %v2320
        %v2591 = vsub.f32 1.0, %v2321
        %v2592 = vsub.f32 1.0, %v2322
        %v2593 = vsub.f32 1.0, %v2323
        %v2594 = vsub.f32 1.0, %v2324
        %v2595 = vsub.f32 1.0, %v2325
        %v2596 = vsub.f32 1.0, %v2326
        %v2597 = vsub.f32 1.0, %v2327
        %v2598 = vsub.f32 1.0, %v2328
        %v2599 = vsub.f32 1.0, %v2329
        %v2600 = vsub.f32 1.0, %v2330
        %v2601 = vsub.f32 1.0, %v2331
        %v2602 = vsub.f32 1.0, %v2332
        %v2603 = vsub.f32 1.0, %v2333
        %v2604 = vsub.f32 1.0, %v2334
        %v2605 = vsub.f32 1.0, %v2335
        %v2606 = vsub.f32 1.0, %v2336
        %v2607 = vmax.f32 %v2337, 0.0
        %v2608 = vmax.f32 %v2338, 0.0
        %v2609 = vmax.f32 %v2339, 0.0
        %v2610 = vmax.f32 %v2340, 0.0
        %v2611 = vmax.f32 %v2341, 0.0
        %v2612 = vmax.f32 %v2342, 0.0
        %v2613 = vmax.f32 %v2343, 0.0
        %v2614 = vmax.f32 %v2344, 0.0
        %v2615 = vmax.f32 %v2345, 0.0
        %v2616 = vmax.f32 %v2346, 0.0
        %v2617 = vmax.f32 %v2347, 0.0
        %v2618 = vmax.f32 %v2348, 0.0
        %v2619 = vmax.f32 %v2349, 0.0
        %v2620 = vmax.f32 %v2350, 0.0
        %v2621 = vmax.f32 %v2351, 0.0
        %v2622 = vmax.f32 %v2352, 0.0
        %v2623 = vmax.f32 %v2353, 0.0
        %v2624 = vmax.f32 %v2354, 0.0
        %v2625 = vmax.f32 %v2355, 0.0
        %v2626 = vmax.f32 %v2356, 0.0
        %v2627 = vmax.f32 %v2357, 0.0
        %v2628 = vmax.f32 %v2358, 0.0
        %v2629 = vmax.f32 %v2359, 0.0
        %v2630 = vmax.f32 %v2360, 0.0
        %v2631 = vmax.f32 %v2361, 0.0
        %v2632 = vmax.f32 %v2362, 0.0
        %v2633 = vmax.f32 %v2363, 0.0
        %v2634 = vmax.f32 %v2364, 0.0
        %v2635 = vmax.f32 %v2365, 0.0
        %v2636 = vmax.f32 %v2366, 0.0
        %v2637 = vmax.f32 %v2367, 0.0
        %v2638 = vmax.f32 %v2368, 0.0
        %v2639 = vmax.f32 %v2369, 0.0
        %v2640 = vmax.f32 %v2370, 0.0
        %v2641 = vmax.f32 %v2371, 0.0
        %v2642 = vmax.f32 %v2372, 0.0
        %v2643 = vmax.f32 %v2373, 0.0
        %v2644 = vmax.f32 %v2374, 0.0
        %v2645 = vmax.f32 %v2375, 0.0
        %v2646 = vmax.f32 %v2376, 0.0
        %v2647 = vmax.f32 %v2377, 0.0
        %v2648 = vmax.f32 %v2378, 0.0
        %v2649 = vmax.f32 %v2379, 0.0
        %v2650 = vmax.f32 %v2380, 0.0
        %v2651 = vmax.f32 %v2381, 0.0
        %v2652 = vmax.f32 %v2382, 0.0
        %v2653 = vmax.f32 %v2383, 0.0
        %v2654 = vmax.f32 %v2384, 0.0
        %v2655 = vmax.f32 %v2385, 0.0
        %v2656 = vmax.f32 %v2386, 0.0
        %v2657 = vmax.f32 %v2387, 0.0
        %v2658 = vmax.f32 %v2388, 0.0
        %v2659 = vmax.f32 %v2389, 0.0
        %v2660 = vmax.f32 %v2390, 0.0
        %v2661 = vmax.f32 %v2391, 0.0
        %v2662 = vmax.f32 %v2392, 0.0
        %v2663 = vmax.f32 %v2393, 0.0
        %v2664 = vmax.f32 %v2394, 0.0
        %v2665 = vmax.f32 %v2395, 0.0
        %v2666 = vmax.f32 %v2396, 0.0
        %v2667 = vmax.f32 %v2397, 0.0
        %v2668 = vmax.f32 %v2398, 0.0
        %v2669 = vmax.f32 %v2399, 0.0
        %v2670 = vmax.f32 %v2400, 0.0
        %v2671 = vmax.f32 %v2401, 0.0
        %v2672 = vmax.f32 %v2402, 0.0
        %v2673 = vmax.f32 %v2403, 0.0
        %v2674 = vmax.f32 %v2404, 0.0
        %v2675 = vmax.f32 %v2405, 0.0
        %v2676 = vmax.f32 %v2406, 0.0
        %v2677 = vmax.f32 %v2407, 0.0
        %v2678 = vmax.f32 %v2408, 0.0
        %v2679 = vmax.f32 %v2409, 0.0
        %v2680 = vmax.f32 %v2410, 0.0
        %v2681 = vmax.f32 %v2411, 0.0
        %v2682 = vmax.f32 %v2412, 0.0
        %v2683 = vmax.f32 %v2413, 0.0
        %v2684 = vmax.f32 %v2414, 0.0
        %v2685 = vmax.f32 %v2415, 0.0
        %v2686 = vmax.f32 %v2416, 0.0
        %v2687 = vmax.f32 %v2417, 0.0
        %v2688 = vmax.f32 %v2418, 0.0
        %v2689 = vmax.f32 %v2419, 0.0
        %v2690 = vmax.f32 %v2420, 0.0
        %v2691 = vmax.f32 %v2421, 0.0
        %v2692 = vmax.f32 %v2422, 0.0
        %v2693 = vmax.f32 %v2423, 0.0
        %v2694 = vmax.f32 %v2424, 0.0
        %v2695 = vmax.f32 %v2425, 0.0
        %v2696 = vmax.f32 %v2426, 0.0
        %v2697 = vmax.f32 %v2427, 0.0
        %v2698 = vmax.f32 %v2428, 0.0
        %v2699 = vmax.f32 %v2429, 0.0
        %v2700 = vmax.f32 %v2430, 0.0
        %v2701 = vmax.f32 %v2431, 0.0
        %v2702 = vmax.f32 %v2432, 0.0
        %v2703 = vmax.f32 %v2433, 0.0
        %v2704 = vmax.f32 %v2434, 0.0
        %v2705 = vmax.f32 %v2435, 0.0
        %v2706 = vmax.f32 %v2436, 0.0
        %v2707 = vmax.f32 %v2437, 0.0
        %v2708 = vmax.f32 %v2438, 0.0
        %v2709 = vmax.f32 %v2439, 0.0
        %v2710 = vmax.f32 %v2440, 0.0
        %v2711 = vmax.f32 %v2441, 0.0
        %v2712 = vmax.f32 %v2442, 0.0
        %v2713 = vmax.f32 %v2443, 0.0
        %v2714 = vmax.f32 %v2444, 0.0
        %v2715 = vmax.f32 %v2445, 0.0
        %v2716 = vmax.f32 %v2446, 0.0
        %v2717 = vmax.f32 %v2447, 0.0
        %v2718 = vmax.f32 %v2448, 0.0
        %v2719 = vmax.f32 %v2449, 0.0
        %v2720 = vmax.f32 %v2450, 0.0
        %v2721 = vmax.f32 %v2451, 0.0
        %v2722 = vmax.f32 %v2452, 0.0
        %v2723 = vmax.f32 %v2453, 0.0
        %v2724 = vmax.f32 %v2454, 0.0
        %v2725 = vmax.f32 %v2455, 0.0
        %v2726 = vmax.f32 %v2456, 0.0
        %v2727 = vmax.f32 %v2457, 0.0
        %v2728 = vmax.f32 %v2458, 0.0
        %v2729 = vmax.f32 %v2459, 0.0
        %v2730 = vmax.f32 %v2460, 0.0
        %v2731 = vmax.f32 %v2461, 0.0
        %v2732 = vmax.f32 %v2462, 0.0
        %v2733 = vmax.f32 %v2463, 0.0
        %v2734 = vmax.f32 %v2464, 0.0
        %v2735 = vmax.f32 %v2465, 0.0
        %v2736 = vmax.f32 %v2466, 0.0
        %v2737 = vmax.f32 %v2467, 0.0
        %v2738 = vmax.f32 %v2468, 0.0
        %v2739 = vmax.f32 %v2469, 0.0
        %v2740 = vmax.f32 %v2470, 0.0
        %v2741 = vmax.f32 %v2471, 0.0
        %v2742 = vmax.f32 %v2472, 0.0
        %v2743 = vmax.f32 %v2473, 0.0
        %v2744 = vmax.f32 %v2474, 0.0
        %v2745 = vmax.f32 %v2475, 0.0
        %v2746 = vmax.f32 %v2476, 0.0
        %v2747 = vmax.f32 %v2477, 0.0
        %v2748 = vmax.f32 %v2478, 0.0
        %v2749 = vmax.f32 %v2479, 0.0
        %v2750 = vmax.f32 %v2480, 0.0
        %v2751 = vmax.f32 %v2481, 0.0
        %v2752 = vmax.f32 %v2482, 0.0
        %v2753 = vmax.f32 %v2483, 0.0
        %v2754 = vmax.f32 %v2484, 0.0
        %v2755 = vmax.f32 %v2485, 0.0
        %v2756 = vmax.f32 %v2486, 0.0
        %v2757 = vmax.f32 %v2487, 0.0
        %v2758 = vmax.f32 %v2488, 0.0
        %v2759 = vmax.f32 %v2489, 0.0
        %v2760 = vmax.f32 %v2490, 0.0
        %v2761 = vmax.f32 %v2491, 0.0
        %v2762 = vmax.f32 %v2492, 0.0
        %v2763 = vmax.f32 %v2493, 0.0
        %v2764 = vmax.f32 %v2494, 0.0
        %v2765 = vmax.f32 %v2495, 0.0
        %v2766 = vmax.f32 %v2496, 0.0
        %v2767 = vmax.f32 %v2497, 0.0
        %v2768 = vmax.f32 %v2498, 0.0
        %v2769 = vmax.f32 %v2499, 0.0
        %v2770 = vmax.f32 %v2500, 0.0
        %v2771 = vmax.f32 %v2501, 0.0
        %v2772 = vmax.f32 %v2502, 0.0
        %v2773 = vmax.f32 %v2503, 0.0
        %v2774 = vmax.f32 %v2504, 0.0
        %v2775 = vmax.f32 %v2505, 0.0
        %v2776 = vmax.f32 %v2506, 0.0
        %v2777 = vmax.f32 %v2507, 0.0
        %v2778 = vmax.f32 %v2508, 0.0
        %v2779 = vmax.f32 %v2509, 0.0
        %v2780 = vmax.f32 %v2510, 0.0
        %v2781 = vmax.f32 %v2511, 0.0
        %v2782 = vmax.f32 %v2512, 0.0
        %v2783 = vmax.f32 %v2513, 0.0
        %v2784 = vmax.f32 %v2514, 0.0
        %v2785 = vmax.f32 %v2515, 0.0
        %v2786 = vmax.f32 %v2516, 0.0
        %v2787 = vmax.f32 %v2517, 0.0
        %v2788 = vmax.f32 %v2518, 0.0
        %v2789 = vmax.f32 %v2519, 0.0
        %v2790 = vmax.f32 %v2520, 0.0
        %v2791 = vmax.f32 %v2521, 0.0
        %v2792 = vmax.f32 %v2522, 0.0
        %v2793 = vmax.f32 %v2523, 0.0
        %v2794 = vmax.f32 %v2524, 0.0
        %v2795 = vmax.f32 %v2525, 0.0
        %v2796 = vmax.f32 %v2526, 0.0
        %v2797 = vmax.f32 %v2527, 0.0
        %v2798 = vmax.f32 %v2528, 0.0
        %v2799 = vmax.f32 %v2529, 0.0
        %v2800 = vmax.f32 %v2530, 0.0
        %v2801 = vmax.f32 %v2531, 0.0
        %v2802 = vmax.f32 %v2532, 0.0
        %v2803 = vmax.f32 %v2533, 0.0
        %v2804 = vmax.f32 %v2534, 0.0
        %v2805 = vmax.f32 %v2535, 0.0
        %v2806 = vmax.f32 %v2536, 0.0
        %v2807 = vmax.f32 %v2537, 0.0
        %v2808 = vmax.f32 %v2538, 0.0
        %v2809 = vmax.f32 %v2539, 0.0
        %v2810 = vmax.f32 %v2540, 0.0
        %v2811 = vmax.f32 %v2541, 0.0
        %v2812 = vmax.f32 %v2542, 0.0
        %v2813 = vmax.f32 %v2543, 0.0
        %v2814 = vmax.f32 %v2544, 0.0
        %v2815 = vmax.f32 %v2545, 0.0
        %v2816 = vmax.f32 %v2546, 0.0
        %v2817 = vmax.f32 %v2547, 0.0
        %v2818 = vmax.f32 %v2548, 0.0
        %v2819 = vmax.f32 %v2549, 0.0
        %v2820 = vmax.f32 %v2550, 0.0
        %v2821 = vmax.f32 %v2551, 0.0
        %v2822 = vmax.f32 %v2552, 0.0
        %v2823 = vmax.f32 %v2553, 0.0
        %v2824 = vmax.f32 %v2554, 0.0
        %v2825 = vmax.f32 %v2555, 0.0
        %v2826 = vmax.f32 %v2556, 0.0
        %v2827 = vmax.f32 %v2557, 0.0
        %v2828 = vmax.f32 %v2558, 0.0
        %v2829 = vmax.f32 %v2559, 0.0
        %v2830 = vmax.f32 %v2560, 0.0
        %v2831 = vmax.f32 %v2561, 0.0
        %v2832 = vmax.f32 %v2562, 0.0
        %v2833 = vmax.f32 %v2563, 0.0
        %v2834 = vmax.f32 %v2564, 0.0
        %v2835 = vmax.f32 %v2565, 0.0
        %v2836 = vmax.f32 %v2566, 0.0
        %v2837 = vmax.f32 %v2567, 0.0
        %v2838 = vmax.f32 %v2568, 0.0
        %v2839 = vmax.f32 %v2569, 0.0
        %v2840 = vmax.f32 %v2570, 0.0
        %v2841 = vmax.f32 %v2571, 0.0
        %v2842 = vmax.f32 %v2572, 0.0
        %v2843 = vmax.f32 %v2573, 0.0
        %v2844 = vmax.f32 %v2574, 0.0
        %v2845 = vmax.f32 %v2575, 0.0
        %v2846 = vmax.f32 %v2576, 0.0
        %v2847 = vmax.f32 %v2577, 0.0
        %v2848 = vmax.f32 %v2578, 0.0
        %v2849 = vmax.f32 %v2579, 0.0
        %v2850 = vmax.f32 %v2580, 0.0
        %v2851 = vmax.f32 %v2581, 0.0
        %v2852 = vmax.f32 %v2582, 0.0
        %v2853 = vmax.f32 %v2583, 0.0
        %v2854 = vmax.f32 %v2584, 0.0
        %v2855 = vmax.f32 %v2585, 0.0
        %v2856 = vmax.f32 %v2586, 0.0
        %v2857 = vmax.f32 %v2587, 0.0
        %v2858 = vmax.f32 %v2588, 0.0
        %v2859 = vmax.f32 %v2589, 0.0
        %v2860 = vmax.f32 %v2590, 0.0
        %v2861 = vmax.f32 %v2591, 0.0
        %v2862 = vmax.f32 %v2592, 0.0
        %v2863 = vmax.f32 %v2593, 0.0
        %v2864 = vmax.f32 %v2594, 0.0
        %v2865 = vmax.f32 %v2595, 0.0
        %v2866 = vmax.f32 %v2596, 0.0
        %v2867 = vmax.f32 %v2597, 0.0
        %v2868 = vmax.f32 %v2598, 0.0
        %v2869 = vmax.f32 %v2599, 0.0
        %v2870 = vmax.f32 %v2600, 0.0
        %v2871 = vmax.f32 %v2601, 0.0
        %v2872 = vmax.f32 %v2602, 0.0
        %v2873 = vmax.f32 %v2603, 0.0
        %v2874 = vmax.f32 %v2604, 0.0
        %v2875 = vmax.f32 %v2605, 0.0
        %v2876 = vmax.f32 %v2606, 0.0
        %v2877 = vmul.f32 %v1392, %v2607
        %v2878 = vmul.f32 %v1393, %v2608
        %v2879 = vmul.f32 %v1394, %v2609
        %v2880 = vmul.f32 %v1395, %v2610
        %v2881 = vmul.f32 %v1396, %v2611
        %v2882 = vmul.f32 %v1397, %v2612
        %v2883 = vmul.f32 %v1398, %v2613
        %v2884 = vmul.f32 %v1399, %v2614
        %v2885 = vmul.f32 %v1400, %v2615
        %v2886 = vmul.f32 %v1401, %v2616
        %v2887 = vmul.f32 %v1402, %v2617
        %v2888 = vmul.f32 %v1403, %v2618
        %v2889 = vmul.f32 %v1404, %v2619
        %v2890 = vmul.f32 %v1405, %v2620
        %v2891 = vmul.f32 %v1406, %v2621
        %v2892 = vmul.f32 %v1407, %v2622
        %v2893 = vmul.f32 %v1408, %v2623
        %v2894 = vmul.f32 %v1409, %v2624
        %v2895 = vmul.f32 %v1410, %v2625
        %v2896 = vmul.f32 %v1411, %v2626
        %v2897 = vmul.f32 %v1412, %v2627
        %v2898 = vmul.f32 %v1413, %v2628
        %v2899 = vmul.f32 %v1414, %v2629
        %v2900 = vmul.f32 %v1415, %v2630
        %v2901 = vmul.f32 %v1416, %v2631
        %v2902 = vmul.f32 %v1417, %v2632
        %v2903 = vmul.f32 %v1418, %v2633
        %v2904 = vmul.f32 %v1419, %v2634
        %v2905 = vmul.f32 %v1420, %v2635
        %v2906 = vmul.f32 %v1421, %v2636
        %v2907 = vmul.f32 %v1422, %v2637
        %v2908 = vmul.f32 %v1423, %v2638
        %v2909 = vmul.f32 %v1424, %v2639
        %v2910 = vmul.f32 %v1425, %v2640
        %v2911 = vmul.f32 %v1426, %v2641
        %v2912 = vmul.f32 %v1427, %v2642
        %v2913 = vmul.f32 %v1428, %v2643
        %v2914 = vmul.f32 %v1429, %v2644
        %v2915 = vmul.f32 %v1430, %v2645
        %v2916 = vmul.f32 %v1431, %v2646
        %v2917 = vmul.f32 %v1432, %v2647
        %v2918 = vmul.f32 %v1433, %v2648
        %v2919 = vmul.f32 %v1434, %v2649
        %v2920 = vmul.f32 %v1435, %v2650
        %v2921 = vmul.f32 %v1436, %v2651
        %v2922 = vmul.f32 %v1437, %v2652
        %v2923 = vmul.f32 %v1438, %v2653
        %v2924 = vmul.f32 %v1439, %v2654
        %v2925 = vmul.f32 %v1440, %v2655
        %v2926 = vmul.f32 %v1441, %v2656
        %v2927 = vmul.f32 %v1442, %v2657
        %v2928 = vmul.f32 %v1443, %v2658
        %v2929 = vmul.f32 %v1444, %v2659
        %v2930 = vmul.f32 %v1445, %v2660
        %v2931 = vmul.f32 %v1446, %v2661
        %v2932 = vmul.f32 %v1447, %v2662
        %v2933 = vmul.f32 %v1448, %v2663
        %v2934 = vmul.f32 %v1449, %v2664
        %v2935 = vmul.f32 %v1450, %v2665
        %v2936 = vmul.f32 %v1451, %v2666
        %v2937 = vmul.f32 %v1452, %v2667
        %v2938 = vmul.f32 %v1453, %v2668
        %v2939 = vmul.f32 %v1454, %v2669
        %v2940 = vmul.f32 %v1455, %v2670
        %v2941 = vmul.f32 %v1456, %v2671
        %v2942 = vmul.f32 %v1457, %v2672
        %v2943 = vmul.f32 %v1458, %v2673
        %v2944 = vmul.f32 %v1459, %v2674
        %v2945 = vmul.f32 %v1460, %v2675
        %v2946 = vmul.f32 %v1461, %v2676
        %v2947 = vmul.f32 %v1462, %v2677
        %v2948 = vmul.f32 %v1463, %v2678
        %v2949 = vmul.f32 %v1464, %v2679
        %v2950 = vmul.f32 %v1465, %v2680
        %v2951 = vmul.f32 %v1466, %v2681
        %v2952 = vmul.f32 %v1467, %v2682
        %v2953 = vmul.f32 %v1468, %v2683
        %v2954 = vmul.f32 %v1469, %v2684
        %v2955 = vmul.f32 %v1470, %v2685
        %v2956 = vmul.f32 %v1471, %v2686
        %v2957 = vmul.f32 %v1472, %v2687
        %v2958 = vmul.f32 %v1473, %v2688
        %v2959 = vmul.f32 %v1474, %v2689
        %v2960 = vmul.f32 %v1475, %v2690
        %v2961 = vmul.f32 %v1476, %v2691
        %v2962 = vmul.f32 %v1477, %v2692
        %v2963 = vmul.f32 %v1478, %v2693
        %v2964 = vmul.f32 %v1479, %v2694
        %v2965 = vmul.f32 %v1480, %v2695
        %v2966 = vmul.f32 %v1481, %v2696
        %v2967 = vmul.f32 %v1482, %v2697
        %v2968 = vmul.f32 %v1483, %v2698
        %v2969 = vmul.f32 %v1484, %v2699
        %v2970 = vmul.f32 %v1485, %v2700
        %v2971 = vmul.f32 %v1486, %v2701
        %v2972 = vmul.f32 %v1487, %v2702
        %v2973 = vmul.f32 %v1488, %v2703
        %v2974 = vmul.f32 %v1489, %v2704
        %v2975 = vmul.f32 %v1490, %v2705
        %v2976 = vmul.f32 %v1491, %v2706
        %v2977 = vmul.f32 %v1492, %v2707
        %v2978 = vmul.f32 %v1493, %v2708
        %v2979 = vmul.f32 %v1494, %v2709
        %v2980 = vmul.f32 %v1495, %v2710
        %v2981 = vmul.f32 %v1496, %v2711
        %v2982 = vmul.f32 %v1497, %v2712
        %v2983 = vmul.f32 %v1498, %v2713
        %v2984 = vmul.f32 %v1499, %v2714
        %v2985 = vmul.f32 %v1500, %v2715
        %v2986 = vmul.f32 %v1501, %v2716
        %v2987 = vmul.f32 %v1502, %v2717
        %v2988 = vmul.f32 %v1503, %v2718
        %v2989 = vmul.f32 %v1504, %v2719
        %v2990 = vmul.f32 %v1505, %v2720
        %v2991 = vmul.f32 %v1506, %v2721
        %v2992 = vmul.f32 %v1507, %v2722
        %v2993 = vmul.f32 %v1508, %v2723
        %v2994 = vmul.f32 %v1509, %v2724
        %v2995 = vmul.f32 %v1510, %v2725
        %v2996 = vmul.f32 %v1511, %v2726
        %v2997 = vmul.f32 %v1512, %v2727
        %v2998 = vmul.f32 %v1513, %v2728
        %v2999 = vmul.f32 %v1514, %v2729
        %v3000 = vmul.f32 %v1515, %v2730
        %v3001 = vmul.f32 %v1516, %v2731
        %v3002 = vmul.f32 %v1517, %v2732
        %v3003 = vmul.f32 %v1518, %v2733
        %v3004 = vmul.f32 %v1519, %v2734
        %v3005 = vmul.f32 %v1520, %v2735
        %v3006 = vmul.f32 %v1521, %v2736
        %v3007 = vmul.f32 %v1522, %v2737
        %v3008 = vmul.f32 %v1523, %v2738
        %v3009 = vmul.f32 %v1524, %v2739
        %v3010 = vmul.f32 %v1525, %v2740
        %v3011 = vmul.f32 %v1526, %v2741
        %v3012 = vmul.f32 %v1527, %v2742
        %v3013 = vmul.f32 %v1528, %v2743
        %v3014 = vmul.f32 %v1529, %v2744
        %v3015 = vmul.f32 %v1530, %v2745
        %v3016 = vmul.f32 %v1531, %v2746
        %v3017 = vmul.f32 %v1532, %v2747
        %v3018 = vmul.f32 %v1533, %v2748
        %v3019 = vmul.f32 %v1534, %v2749
        %v3020 = vmul.f32 %v1535, %v2750
        %v3021 = vmul.f32 %v1536, %v2751
        %v3022 = vmul.f32 %v1537, %v2752
        %v3023 = vmul.f32 %v1538, %v2753
        %v3024 = vmul.f32 %v1539, %v2754
        %v3025 = vmul.f32 %v1540, %v2755
        %v3026 = vmul.f32 %v1541, %v2756
        %v3027 = vmul.f32 %v1542, %v2757
        %v3028 = vmul.f32 %v1543, %v2758
        %v3029 = vmul.f32 %v1544, %v2759
        %v3030 = vmul.f32 %v1545, %v2760
        %v3031 = vmul.f32 %v1546, %v2761
        %v3032 = vmul.f32 %v1547, %v2762
        %v3033 = vmul.f32 %v1548, %v2763
        %v3034 = vmul.f32 %v1549, %v2764
        %v3035 = vmul.f32 %v1550, %v2765
        %v3036 = vmul.f32 %v1551, %v2766
        %v3037 = vmul.f32 %v1552, %v2767
        %v3038 = vmul.f32 %v1553, %v2768
        %v3039 = vmul.f32 %v1554, %v2769
        %v3040 = vmul.f32 %v1555, %v2770
        %v3041 = vmul.f32 %v1556, %v2771
        %v3042 = vmul.f32 %v1557, %v2772
        %v3043 = vmul.f32 %v1558, %v2773
        %v3044 = vmul.f32 %v1559, %v2774
        %v3045 = vmul.f32 %v1560, %v2775
        %v3046 = vmul.f32 %v1561, %v2776
        %v3047 = vmul.f32 %v1562, %v2777
        %v3048 = vmul.f32 %v1563, %v2778
        %v3049 = vmul.f32 %v1564, %v2779
        %v3050 = vmul.f32 %v1565, %v2780
        %v3051 = vmul.f32 %v1566, %v2781
        %v3052 = vmul.f32 %v1567, %v2782
        %v3053 = vmul.f32 %v1568, %v2783
        %v3054 = vmul.f32 %v1569, %v2784
        %v3055 = vmul.f32 %v1570, %v2785
        %v3056 = vmul.f32 %v1571, %v2786
        %v3057 = vmul.f32 %v1572, %v2787
        %v3058 = vmul.f32 %v1573, %v2788
        %v3059 = vmul.f32 %v1574, %v2789
        %v3060 = vmul.f32 %v1575, %v2790
        %v3061 = vmul.f32 %v1576, %v2791
        %v3062 = vmul.f32 %v1577, %v2792
        %v3063 = vmul.f32 %v1578, %v2793
        %v3064 = vmul.f32 %v1579, %v2794
        %v3065 = vmul.f32 %v1580, %v2795
        %v3066 = vmul.f32 %v1581, %v2796
        %v3067 = vmul.f32 %v1582, %v2797
        %v3068 = vmul.f32 %v1583, %v2798
        %v3069 = vmul.f32 %v1584, %v2799
        %v3070 = vmul.f32 %v1585, %v2800
        %v3071 = vmul.f32 %v1586, %v2801
        %v3072 = vmul.f32 %v1587, %v2802
        %v3073 = vmul.f32 %v1588, %v2803
        %v3074 = vmul.f32 %v1589, %v2804
        %v3075 = vmul.f32 %v1590, %v2805
        %v3076 = vmul.f32 %v1591, %v2806
        %v3077 = vmul.f32 %v1592, %v2807
        %v3078 = vmul.f32 %v1593, %v2808
        %v3079 = vmul.f32 %v1594, %v2809
        %v3080 = vmul.f32 %v1595, %v2810
        %v3081 = vmul.f32 %v1596, %v2811
        %v3082 = vmul.f32 %v1597, %v2812
        %v3083 = vmul.f32 %v1598, %v2813
        %v3084 = vmul.f32 %v1599, %v2814
        %v3085 = vmul.f32 %v1600, %v2815
        %v3086 = vmul.f32 %v1601, %v2816
        %v3087 = vmul.f32 %v1602, %v2817
        %v3088 = vmul.f32 %v1603, %v2818
        %v3089 = vmul.f32 %v1604, %v2819
        %v3090 = vmul.f32 %v1605, %v2820
        %v3091 = vmul.f32 %v1606, %v2821
        %v3092 = vmul.f32 %v1607, %v2822
        %v3093 = vmul.f32 %v1608, %v2823
        %v3094 = vmul.f32 %v1609, %v2824
        %v3095 = vmul.f32 %v1610, %v2825
        %v3096 = vmul.f32 %v1611, %v2826
        %v3097 = vmul.f32 %v1612, %v2827
        %v3098 = vmul.f32 %v1613, %v2828
        %v3099 = vmul.f32 %v1614, %v2829
        %v3100 = vmul.f32 %v1615, %v2830
        %v3101 = vmul.f32 %v1616, %v2831
        %v3102 = vmul.f32 %v1617, %v2832
        %v3103 = vmul.f32 %v1618, %v2833
        %v3104 = vmul.f32 %v1619, %v2834
        %v3105 = vmul.f32 %v1620, %v2835
        %v3106 = vmul.f32 %v1621, %v2836
        %v3107 = vmul.f32 %v1622, %v2837
        %v3108 = vmul.f32 %v1623, %v2838
        %v3109 = vmul.f32 %v1624, %v2839
        %v3110 = vmul.f32 %v1625, %v2840
        %v3111 = vmul.f32 %v1626, %v2841
        %v3112 = vmul.f32 %v1627, %v2842
        %v3113 = vmul.f32 %v1628, %v2843
        %v3114 = vmul.f32 %v1629, %v2844
        %v3115 = vmul.f32 %v1630, %v2845
        %v3116 = vmul.f32 %v1631, %v2846
        %v3117 = vmul.f32 %v1632, %v2847
        %v3118 = vmul.f32 %v1633, %v2848
        %v3119 = vmul.f32 %v1634, %v2849
        %v3120 = vmul.f32 %v1635, %v2850
        %v3121 = vmul.f32 %v1636, %v2851
        %v3122 = vmul.f32 %v1637, %v2852
        %v3123 = vmul.f32 %v1638, %v2853
        %v3124 = vmul.f32 %v1639, %v2854
        %v3125 = vmul.f32 %v1640, %v2855
        %v3126 = vmul.f32 %v1641, %v2856
        %v3127 = vmul.f32 %v1642, %v2857
        %v3128 = vmul.f32 %v1643, %v2858
        %v3129 = vmul.f32 %v1644, %v2859
        %v3130 = vmul.f32 %v1645, %v2860
        %v3131 = vmul.f32 %v1646, %v2861
        %v3132 = vmul.f32 %v1647, %v2862
        %v3133 = vmul.f32 %v1648, %v2863
        %v3134 = vmul.f32 %v1649, %v2864
        %v3135 = vmul.f32 %v1650, %v2865
        %v3136 = vmul.f32 %v1651, %v2866
        %v3137 = vmul.f32 %v1652, %v2867
        %v3138 = vmul.f32 %v1653, %v2868
        %v3139 = vmul.f32 %v1654, %v2869
        %v3140 = vmul.f32 %v1655, %v2870
        %v3141 = vmul.f32 %v1656, %v2871
        %v3142 = vmul.f32 %v1657, %v2872
        %v3143 = vmul.f32 %v1658, %v2873
        %v3144 = vmul.f32 %v1659, %v2874
        %v3145 = vmul.f32 %v1660, %v2875
        %v3146 = vmul.f32 %v1661, %v2876
        %v3147 = vsub.f32 0.0, %v413
        %v3148 = vsub.f32 0.0, %v414
        %v3149 = vsub.f32 0.0, %v415
        %v3150 = vsub.f32 0.0, %v416
        %v3151 = vsub.f32 0.0, %v417
        %v3152 = vsub.f32 0.0, %v418
        %v3153 = vsub.f32 0.0, %v419
        %v3154 = vsub.f32 0.0, %v420
        %v3155 = vsub.f32 0.0, %v421
        %v3156 = vsub.f32 0.0, %v422
        %v3157 = vsub.f32 0.0, %v423
        %v3158 = vsub.f32 0.0, %v424
        %v3159 = vsub.f32 0.0, %v425
        %v3160 = vsub.f32 0.0, %v426
        %v3161 = vand.u32 2147483647, %v3147
        %v3162 = vand.u32 2147483647, %v3148
        %v3163 = vand.u32 2147483647, %v3149
        %v3164 = vand.u32 2147483647, %v3150
        %v3165 = vand.u32 2147483647, %v3151
        %v3166 = vand.u32 2147483647, %v3152
        %v3167 = vand.u32 2147483647, %v3153
        %v3168 = vand.u32 2147483647, %v3154
        %v3169 = vand.u32 2147483647, %v3155
        %v3170 = vand.u32 2147483647, %v3156
        %v3171 = vand.u32 2147483647, %v3157
        %v3172 = vand.u32 2147483647, %v3158
        %v3173 = vand.u32 2147483647, %v3159
        %v3174 = vand.u32 2147483647, %v3160
        %v3175 = vsub.f32 1.0, %v3161
        %v3176 = vsub.f32 1.0, %v3162
        %v3177 = vsub.f32 1.0, %v3163
        %v3178 = vsub.f32 1.0, %v3164
        %v3179 = vsub.f32 1.0, %v3165
        %v3180 = vsub.f32 1.0, %v3166
        %v3181 = vsub.f32 1.0, %v3167
        %v3182 = vsub.f32 1.0, %v3168
        %v3183 = vsub.f32 1.0, %v3169
        %v3184 = vsub.f32 1.0, %v3170
        %v3185 = vsub.f32 1.0, %v3171
        %v3186 = vsub.f32 1.0, %v3172
        %v3187 = vsub.f32 1.0, %v3173
        %v3188 = vsub.f32 1.0, %v3174
        %v3189 = vmax.f32 %v3175, 0.0
        %v3190 = vmax.f32 %v3176, 0.0
        %v3191 = vmax.f32 %v3177, 0.0
        %v3192 = vmax.f32 %v3178, 0.0
        %v3193 = vmax.f32 %v3179, 0.0
        %v3194 = vmax.f32 %v3180, 0.0
        %v3195 = vmax.f32 %v3181, 0.0
        %v3196 = vmax.f32 %v3182, 0.0
        %v3197 = vmax.f32 %v3183, 0.0
        %v3198 = vmax.f32 %v3184, 0.0
        %v3199 = vmax.f32 %v3185, 0.0
        %v3200 = vmax.f32 %v3186, 0.0
        %v3201 = vmax.f32 %v3187, 0.0
        %v3202 = vmax.f32 %v3188, 0.0
        %v3203 = vld [vmem:[%s272] sm:$0xf]
        %vm3204 = vcmask 654336
        %v3206 = vsel %vm3204, %v3203, 0
        %3208 = vmatpush.msra.mxu0 0.0
        %3209 = vmatpush.msra.mxu0 0.0
        %3210 = vmatpush.msra.mxu0 0.0
        %3211 = vmatpush.msra.mxu0 0.0
        %3212 = vmatpush.msra.mxu0 0.0
        %3213 = vmatpush.msra.mxu0 0.0
        %3214 = vmatpush.msra.mxu0 %v3120
        %3215 = vmatpush.msra.mxu0 %v3093
        %3216 = vmatpush.msra.mxu0 %v3066
        %3217 = vmatpush.msra.mxu0 %v3039
        %3218 = vmatpush.msra.mxu0 %v3012
        %3219 = vmatpush.msra.mxu0 %v2985
        %3220 = vmatpush.msra.mxu0 %v2958
        %3221 = vmatpush.msra.mxu0 %v2931
        %3222 = vmatpush.msra.mxu0 %v2904
        %3223 = vmatpush.msra.mxu0 %v2877
        %3224 = vmatmul.f32.gmra.mxu0 %v3206
        %v3225 = vpop.f32.mrf.mxu0
        %v3226 = vadd.f32 0.0, %v3225
        %3227 = vdwg.mxu0
        %3228 = vmatpush.msra.mxu0 0.0
        %3229 = vmatpush.msra.mxu0 0.0
        %3230 = vmatpush.msra.mxu0 0.0
        %3231 = vmatpush.msra.mxu0 0.0
        %3232 = vmatpush.msra.mxu0 0.0
        %3233 = vmatpush.msra.mxu0 0.0
        %3234 = vmatpush.msra.mxu0 %v3121
        %3235 = vmatpush.msra.mxu0 %v3094
        %3236 = vmatpush.msra.mxu0 %v3067
        %3237 = vmatpush.msra.mxu0 %v3040
        %3238 = vmatpush.msra.mxu0 %v3013
        %3239 = vmatpush.msra.mxu0 %v2986
        %3240 = vmatpush.msra.mxu0 %v2959
        %3241 = vmatpush.msra.mxu0 %v2932
        %3242 = vmatpush.msra.mxu0 %v2905
        %3243 = vmatpush.msra.mxu0 %v2878
        %3244 = vmatmul.f32.gmra.mxu0 %v3206
        %v3245 = vpop.f32.mrf.mxu0
        %v3246 = vadd.f32 0.0, %v3245
        %3247 = vdwg.mxu0
        %3248 = vmatpush.msra.mxu0 0.0
        %3249 = vmatpush.msra.mxu0 0.0
        %3250 = vmatpush.msra.mxu0 0.0
        %3251 = vmatpush.msra.mxu0 0.0
        %3252 = vmatpush.msra.mxu0 0.0
        %3253 = vmatpush.msra.mxu0 0.0
        %3254 = vmatpush.msra.mxu0 %v3122
        %3255 = vmatpush.msra.mxu0 %v3095
        %3256 = vmatpush.msra.mxu0 %v3068
        %3257 = vmatpush.msra.mxu0 %v3041
        %3258 = vmatpush.msra.mxu0 %v3014
        %3259 = vmatpush.msra.mxu0 %v2987
        %3260 = vmatpush.msra.mxu0 %v2960
        %3261 = vmatpush.msra.mxu0 %v2933
        %3262 = vmatpush.msra.mxu0 %v2906
        %3263 = vmatpush.msra.mxu0 %v2879
        %3264 = vmatmul.f32.gmra.mxu0 %v3206
        %v3265 = vpop.f32.mrf.mxu0
        %v3266 = vadd.f32 0.0, %v3265
        %3267 = vdwg.mxu0
        %3268 = vmatpush.msra.mxu0 0.0
        %3269 = vmatpush.msra.mxu0 0.0
        %3270 = vmatpush.msra.mxu0 0.0
        %3271 = vmatpush.msra.mxu0 0.0
        %3272 = vmatpush.msra.mxu0 0.0
        %3273 = vmatpush.msra.mxu0 0.0
        %3274 = vmatpush.msra.mxu0 %v3123
        %3275 = vmatpush.msra.mxu0 %v3096
        %3276 = vmatpush.msra.mxu0 %v3069
        %3277 = vmatpush.msra.mxu0 %v3042
        %3278 = vmatpush.msra.mxu0 %v3015
        %3279 = vmatpush.msra.mxu0 %v2988
        %3280 = vmatpush.msra.mxu0 %v2961
        %3281 = vmatpush.msra.mxu0 %v2934
        %3282 = vmatpush.msra.mxu0 %v2907
        %3283 = vmatpush.msra.mxu0 %v2880
        %3284 = vmatmul.f32.gmra.mxu0 %v3206
        %v3285 = vpop.f32.mrf.mxu0
        %v3286 = vadd.f32 0.0, %v3285
        %3287 = vdwg.mxu0
        %3288 = vmatpush.msra.mxu0 0.0
        %3289 = vmatpush.msra.mxu0 0.0
        %3290 = vmatpush.msra.mxu0 0.0
        %3291 = vmatpush.msra.mxu0 0.0
        %3292 = vmatpush.msra.mxu0 0.0
        %3293 = vmatpush.msra.mxu0 0.0
        %3294 = vmatpush.msra.mxu0 %v3124
        %3295 = vmatpush.msra.mxu0 %v3097
        %3296 = vmatpush.msra.mxu0 %v3070
        %3297 = vmatpush.msra.mxu0 %v3043
        %3298 = vmatpush.msra.mxu0 %v3016
        %3299 = vmatpush.msra.mxu0 %v2989
        %3300 = vmatpush.msra.mxu0 %v2962
        %3301 = vmatpush.msra.mxu0 %v2935
        %3302 = vmatpush.msra.mxu0 %v2908
        %3303 = vmatpush.msra.mxu0 %v2881
        %3304 = vmatmul.f32.gmra.mxu0 %v3206
        %v3305 = vpop.f32.mrf.mxu0
        %v3306 = vadd.f32 0.0, %v3305
        %3307 = vdwg.mxu0
        %3308 = vmatpush.msra.mxu0 0.0
        %3309 = vmatpush.msra.mxu0 0.0
        %3310 = vmatpush.msra.mxu0 0.0
        %3311 = vmatpush.msra.mxu0 0.0
        %3312 = vmatpush.msra.mxu0 0.0
        %3313 = vmatpush.msra.mxu0 0.0
        %3314 = vmatpush.msra.mxu0 %v3125
        %3315 = vmatpush.msra.mxu0 %v3098
        %3316 = vmatpush.msra.mxu0 %v3071
        %3317 = vmatpush.msra.mxu0 %v3044
        %3318 = vmatpush.msra.mxu0 %v3017
        %3319 = vmatpush.msra.mxu0 %v2990
        %3320 = vmatpush.msra.mxu0 %v2963
        %3321 = vmatpush.msra.mxu0 %v2936
        %3322 = vmatpush.msra.mxu0 %v2909
        %3323 = vmatpush.msra.mxu0 %v2882
        %3324 = vmatmul.f32.gmra.mxu0 %v3206
        %v3325 = vpop.f32.mrf.mxu0
        %v3326 = vadd.f32 0.0, %v3325
        %3327 = vdwg.mxu0
        %3328 = vmatpush.msra.mxu0 0.0
        %3329 = vmatpush.msra.mxu0 0.0
        %3330 = vmatpush.msra.mxu0 0.0
        %3331 = vmatpush.msra.mxu0 0.0
        %3332 = vmatpush.msra.mxu0 0.0
        %3333 = vmatpush.msra.mxu0 0.0
        %3334 = vmatpush.msra.mxu0 %v3126
        %3335 = vmatpush.msra.mxu0 %v3099
        %3336 = vmatpush.msra.mxu0 %v3072
        %3337 = vmatpush.msra.mxu0 %v3045
        %3338 = vmatpush.msra.mxu0 %v3018
        %3339 = vmatpush.msra.mxu0 %v2991
        %3340 = vmatpush.msra.mxu0 %v2964
        %3341 = vmatpush.msra.mxu0 %v2937
        %3342 = vmatpush.msra.mxu0 %v2910
        %3343 = vmatpush.msra.mxu0 %v2883
        %3344 = vmatmul.f32.gmra.mxu0 %v3206
        %v3345 = vpop.f32.mrf.mxu0
        %v3346 = vadd.f32 0.0, %v3345
        %3347 = vdwg.mxu0
        %3348 = vmatpush.msra.mxu0 0.0
        %3349 = vmatpush.msra.mxu0 0.0
        %3350 = vmatpush.msra.mxu0 0.0
        %3351 = vmatpush.msra.mxu0 0.0
        %3352 = vmatpush.msra.mxu0 0.0
        %3353 = vmatpush.msra.mxu0 0.0
        %3354 = vmatpush.msra.mxu0 %v3127
        %3355 = vmatpush.msra.mxu0 %v3100
        %3356 = vmatpush.msra.mxu0 %v3073
        %3357 = vmatpush.msra.mxu0 %v3046
        %3358 = vmatpush.msra.mxu0 %v3019
        %3359 = vmatpush.msra.mxu0 %v2992
        %3360 = vmatpush.msra.mxu0 %v2965
        %3361 = vmatpush.msra.mxu0 %v2938
        %3362 = vmatpush.msra.mxu0 %v2911
        %3363 = vmatpush.msra.mxu0 %v2884
        %3364 = vmatmul.f32.gmra.mxu0 %v3206
        %v3365 = vpop.f32.mrf.mxu0
        %v3366 = vadd.f32 0.0, %v3365
        %3367 = vdwg.mxu0
        %3368 = vmatpush.msra.mxu0 0.0
        %3369 = vmatpush.msra.mxu0 0.0
        %3370 = vmatpush.msra.mxu0 0.0
        %3371 = vmatpush.msra.mxu0 0.0
        %3372 = vmatpush.msra.mxu0 0.0
        %3373 = vmatpush.msra.mxu0 0.0
        %3374 = vmatpush.msra.mxu0 %v3128
        %3375 = vmatpush.msra.mxu0 %v3101
        %3376 = vmatpush.msra.mxu0 %v3074
        %3377 = vmatpush.msra.mxu0 %v3047
        %3378 = vmatpush.msra.mxu0 %v3020
        %3379 = vmatpush.msra.mxu0 %v2993
        %3380 = vmatpush.msra.mxu0 %v2966
        %3381 = vmatpush.msra.mxu0 %v2939
        %3382 = vmatpush.msra.mxu0 %v2912
        %3383 = vmatpush.msra.mxu0 %v2885
        %3384 = vmatmul.f32.gmra.mxu0 %v3206
        %v3385 = vpop.f32.mrf.mxu0
        %v3386 = vadd.f32 0.0, %v3385
        %3387 = vdwg.mxu0
        %3388 = vmatpush.msra.mxu0 0.0
        %3389 = vmatpush.msra.mxu0 0.0
        %3390 = vmatpush.msra.mxu0 0.0
        %3391 = vmatpush.msra.mxu0 0.0
        %3392 = vmatpush.msra.mxu0 0.0
        %3393 = vmatpush.msra.mxu0 0.0
        %3394 = vmatpush.msra.mxu0 %v3129
        %3395 = vmatpush.msra.mxu0 %v3102
        %3396 = vmatpush.msra.mxu0 %v3075
        %3397 = vmatpush.msra.mxu0 %v3048
        %3398 = vmatpush.msra.mxu0 %v3021
        %3399 = vmatpush.msra.mxu0 %v2994
        %3400 = vmatpush.msra.mxu0 %v2967
        %3401 = vmatpush.msra.mxu0 %v2940
        %3402 = vmatpush.msra.mxu0 %v2913
        %3403 = vmatpush.msra.mxu0 %v2886
        %3404 = vmatmul.f32.gmra.mxu0 %v3206
        %v3405 = vpop.f32.mrf.mxu0
        %v3406 = vadd.f32 0.0, %v3405
        %3407 = vdwg.mxu0
        %3408 = vmatpush.msra.mxu0 0.0
        %3409 = vmatpush.msra.mxu0 0.0
        %3410 = vmatpush.msra.mxu0 0.0
        %3411 = vmatpush.msra.mxu0 0.0
        %3412 = vmatpush.msra.mxu0 0.0
        %3413 = vmatpush.msra.mxu0 0.0
        %3414 = vmatpush.msra.mxu0 %v3130
        %3415 = vmatpush.msra.mxu0 %v3103
        %3416 = vmatpush.msra.mxu0 %v3076
        %3417 = vmatpush.msra.mxu0 %v3049
        %3418 = vmatpush.msra.mxu0 %v3022
        %3419 = vmatpush.msra.mxu0 %v2995
        %3420 = vmatpush.msra.mxu0 %v2968
        %3421 = vmatpush.msra.mxu0 %v2941
        %3422 = vmatpush.msra.mxu0 %v2914
        %3423 = vmatpush.msra.mxu0 %v2887
        %3424 = vmatmul.f32.gmra.mxu0 %v3206
        %v3425 = vpop.f32.mrf.mxu0
        %v3426 = vadd.f32 0.0, %v3425
        %3427 = vdwg.mxu0
        %3428 = vmatpush.msra.mxu0 0.0
        %3429 = vmatpush.msra.mxu0 0.0
        %3430 = vmatpush.msra.mxu0 0.0
        %3431 = vmatpush.msra.mxu0 0.0
        %3432 = vmatpush.msra.mxu0 0.0
        %3433 = vmatpush.msra.mxu0 0.0
        %3434 = vmatpush.msra.mxu0 %v3131
        %3435 = vmatpush.msra.mxu0 %v3104
        %3436 = vmatpush.msra.mxu0 %v3077
        %3437 = vmatpush.msra.mxu0 %v3050
        %3438 = vmatpush.msra.mxu0 %v3023
        %3439 = vmatpush.msra.mxu0 %v2996
        %3440 = vmatpush.msra.mxu0 %v2969
        %3441 = vmatpush.msra.mxu0 %v2942
        %3442 = vmatpush.msra.mxu0 %v2915
        %3443 = vmatpush.msra.mxu0 %v2888
        %3444 = vmatmul.f32.gmra.mxu0 %v3206
        %v3445 = vpop.f32.mrf.mxu0
        %v3446 = vadd.f32 0.0, %v3445
        %3447 = vdwg.mxu0
        %3448 = vmatpush.msra.mxu0 0.0
        %3449 = vmatpush.msra.mxu0 0.0
        %3450 = vmatpush.msra.mxu0 0.0
        %3451 = vmatpush.msra.mxu0 0.0
        %3452 = vmatpush.msra.mxu0 0.0
        %3453 = vmatpush.msra.mxu0 0.0
        %3454 = vmatpush.msra.mxu0 %v3132
        %3455 = vmatpush.msra.mxu0 %v3105
        %3456 = vmatpush.msra.mxu0 %v3078
        %3457 = vmatpush.msra.mxu0 %v3051
        %3458 = vmatpush.msra.mxu0 %v3024
        %3459 = vmatpush.msra.mxu0 %v2997
        %3460 = vmatpush.msra.mxu0 %v2970
        %3461 = vmatpush.msra.mxu0 %v2943
        %3462 = vmatpush.msra.mxu0 %v2916
        %3463 = vmatpush.msra.mxu0 %v2889
        %3464 = vmatmul.f32.gmra.mxu0 %v3206
        %v3465 = vpop.f32.mrf.mxu0
        %v3466 = vadd.f32 0.0, %v3465
        %3467 = vdwg.mxu0
        %3468 = vmatpush.msra.mxu0 0.0
        %3469 = vmatpush.msra.mxu0 0.0
        %3470 = vmatpush.msra.mxu0 0.0
        %3471 = vmatpush.msra.mxu0 0.0
        %3472 = vmatpush.msra.mxu0 0.0
        %3473 = vmatpush.msra.mxu0 0.0
        %3474 = vmatpush.msra.mxu0 %v3133
        %3475 = vmatpush.msra.mxu0 %v3106
        %3476 = vmatpush.msra.mxu0 %v3079
        %3477 = vmatpush.msra.mxu0 %v3052
        %3478 = vmatpush.msra.mxu0 %v3025
        %3479 = vmatpush.msra.mxu0 %v2998
        %3480 = vmatpush.msra.mxu0 %v2971
        %3481 = vmatpush.msra.mxu0 %v2944
        %3482 = vmatpush.msra.mxu0 %v2917
        %3483 = vmatpush.msra.mxu0 %v2890
        %3484 = vmatmul.f32.gmra.mxu0 %v3206
        %v3485 = vpop.f32.mrf.mxu0
        %v3486 = vadd.f32 0.0, %v3485
        %3487 = vdwg.mxu0
        %3488 = vmatpush.msra.mxu0 0.0
        %3489 = vmatpush.msra.mxu0 0.0
        %3490 = vmatpush.msra.mxu0 0.0
        %3491 = vmatpush.msra.mxu0 0.0
        %3492 = vmatpush.msra.mxu0 0.0
        %3493 = vmatpush.msra.mxu0 0.0
        %3494 = vmatpush.msra.mxu0 %v3134
        %3495 = vmatpush.msra.mxu0 %v3107
        %3496 = vmatpush.msra.mxu0 %v3080
        %3497 = vmatpush.msra.mxu0 %v3053
        %3498 = vmatpush.msra.mxu0 %v3026
        %3499 = vmatpush.msra.mxu0 %v2999
        %3500 = vmatpush.msra.mxu0 %v2972
        %3501 = vmatpush.msra.mxu0 %v2945
        %3502 = vmatpush.msra.mxu0 %v2918
        %3503 = vmatpush.msra.mxu0 %v2891
        %3504 = vmatmul.f32.gmra.mxu0 %v3206
        %v3505 = vpop.f32.mrf.mxu0
        %v3506 = vadd.f32 0.0, %v3505
        %3507 = vdwg.mxu0
        %3508 = vmatpush.msra.mxu0 0.0
        %3509 = vmatpush.msra.mxu0 0.0
        %3510 = vmatpush.msra.mxu0 0.0
        %3511 = vmatpush.msra.mxu0 0.0
        %3512 = vmatpush.msra.mxu0 0.0
        %3513 = vmatpush.msra.mxu0 0.0
        %3514 = vmatpush.msra.mxu0 %v3135
        %3515 = vmatpush.msra.mxu0 %v3108
        %3516 = vmatpush.msra.mxu0 %v3081
        %3517 = vmatpush.msra.mxu0 %v3054
        %3518 = vmatpush.msra.mxu0 %v3027
        %3519 = vmatpush.msra.mxu0 %v3000
        %3520 = vmatpush.msra.mxu0 %v2973
        %3521 = vmatpush.msra.mxu0 %v2946
        %3522 = vmatpush.msra.mxu0 %v2919
        %3523 = vmatpush.msra.mxu0 %v2892
        %3524 = vmatmul.f32.gmra.mxu0 %v3206
        %v3525 = vpop.f32.mrf.mxu0
        %v3526 = vadd.f32 0.0, %v3525
        %3527 = vdwg.mxu0
        %3528 = vmatpush.msra.mxu0 0.0
        %3529 = vmatpush.msra.mxu0 0.0
        %3530 = vmatpush.msra.mxu0 0.0
        %3531 = vmatpush.msra.mxu0 0.0
        %3532 = vmatpush.msra.mxu0 0.0
        %3533 = vmatpush.msra.mxu0 0.0
        %3534 = vmatpush.msra.mxu0 %v3136
        %3535 = vmatpush.msra.mxu0 %v3109
        %3536 = vmatpush.msra.mxu0 %v3082
        %3537 = vmatpush.msra.mxu0 %v3055
        %3538 = vmatpush.msra.mxu0 %v3028
        %3539 = vmatpush.msra.mxu0 %v3001
        %3540 = vmatpush.msra.mxu0 %v2974
        %3541 = vmatpush.msra.mxu0 %v2947
        %3542 = vmatpush.msra.mxu0 %v2920
        %3543 = vmatpush.msra.mxu0 %v2893
        %3544 = vmatmul.f32.gmra.mxu0 %v3206
        %v3545 = vpop.f32.mrf.mxu0
        %v3546 = vadd.f32 0.0, %v3545
        %3547 = vdwg.mxu0
        %3548 = vmatpush.msra.mxu0 0.0
        %3549 = vmatpush.msra.mxu0 0.0
        %3550 = vmatpush.msra.mxu0 0.0
        %3551 = vmatpush.msra.mxu0 0.0
        %3552 = vmatpush.msra.mxu0 0.0
        %3553 = vmatpush.msra.mxu0 0.0
        %3554 = vmatpush.msra.mxu0 %v3137
        %3555 = vmatpush.msra.mxu0 %v3110
        %3556 = vmatpush.msra.mxu0 %v3083
        %3557 = vmatpush.msra.mxu0 %v3056
        %3558 = vmatpush.msra.mxu0 %v3029
        %3559 = vmatpush.msra.mxu0 %v3002
        %3560 = vmatpush.msra.mxu0 %v2975
        %3561 = vmatpush.msra.mxu0 %v2948
        %3562 = vmatpush.msra.mxu0 %v2921
        %3563 = vmatpush.msra.mxu0 %v2894
        %3564 = vmatmul.f32.gmra.mxu0 %v3206
        %v3565 = vpop.f32.mrf.mxu0
        %v3566 = vadd.f32 0.0, %v3565
        %3567 = vdwg.mxu0
        %3568 = vmatpush.msra.mxu0 0.0
        %3569 = vmatpush.msra.mxu0 0.0
        %3570 = vmatpush.msra.mxu0 0.0
        %3571 = vmatpush.msra.mxu0 0.0
        %3572 = vmatpush.msra.mxu0 0.0
        %3573 = vmatpush.msra.mxu0 0.0
        %3574 = vmatpush.msra.mxu0 %v3138
        %3575 = vmatpush.msra.mxu0 %v3111
        %3576 = vmatpush.msra.mxu0 %v3084
        %3577 = vmatpush.msra.mxu0 %v3057
        %3578 = vmatpush.msra.mxu0 %v3030
        %3579 = vmatpush.msra.mxu0 %v3003
        %3580 = vmatpush.msra.mxu0 %v2976
        %3581 = vmatpush.msra.mxu0 %v2949
        %3582 = vmatpush.msra.mxu0 %v2922
        %3583 = vmatpush.msra.mxu0 %v2895
        %3584 = vmatmul.f32.gmra.mxu0 %v3206
        %v3585 = vpop.f32.mrf.mxu0
        %v3586 = vadd.f32 0.0, %v3585
        %3587 = vdwg.mxu0
        %3588 = vmatpush.msra.mxu0 0.0
        %3589 = vmatpush.msra.mxu0 0.0
        %3590 = vmatpush.msra.mxu0 0.0
        %3591 = vmatpush.msra.mxu0 0.0
        %3592 = vmatpush.msra.mxu0 0.0
        %3593 = vmatpush.msra.mxu0 0.0
        %3594 = vmatpush.msra.mxu0 %v3139
        %3595 = vmatpush.msra.mxu0 %v3112
        %3596 = vmatpush.msra.mxu0 %v3085
        %3597 = vmatpush.msra.mxu0 %v3058
        %3598 = vmatpush.msra.mxu0 %v3031
        %3599 = vmatpush.msra.mxu0 %v3004
        %3600 = vmatpush.msra.mxu0 %v2977
        %3601 = vmatpush.msra.mxu0 %v2950
        %3602 = vmatpush.msra.mxu0 %v2923
        %3603 = vmatpush.msra.mxu0 %v2896
        %3604 = vmatmul.f32.gmra.mxu0 %v3206
        %v3605 = vpop.f32.mrf.mxu0
        %v3606 = vadd.f32 0.0, %v3605
        %3607 = vdwg.mxu0
        %3608 = vmatpush.msra.mxu0 0.0
        %3609 = vmatpush.msra.mxu0 0.0
        %3610 = vmatpush.msra.mxu0 0.0
        %3611 = vmatpush.msra.mxu0 0.0
        %3612 = vmatpush.msra.mxu0 0.0
        %3613 = vmatpush.msra.mxu0 0.0
        %3614 = vmatpush.msra.mxu0 %v3140
        %3615 = vmatpush.msra.mxu0 %v3113
        %3616 = vmatpush.msra.mxu0 %v3086
        %3617 = vmatpush.msra.mxu0 %v3059
        %3618 = vmatpush.msra.mxu0 %v3032
        %3619 = vmatpush.msra.mxu0 %v3005
        %3620 = vmatpush.msra.mxu0 %v2978
        %3621 = vmatpush.msra.mxu0 %v2951
        %3622 = vmatpush.msra.mxu0 %v2924
        %3623 = vmatpush.msra.mxu0 %v2897
        %3624 = vmatmul.f32.gmra.mxu0 %v3206
        %v3625 = vpop.f32.mrf.mxu0
        %v3626 = vadd.f32 0.0, %v3625
        %3627 = vdwg.mxu0
        %3628 = vmatpush.msra.mxu0 0.0
        %3629 = vmatpush.msra.mxu0 0.0
        %3630 = vmatpush.msra.mxu0 0.0
        %3631 = vmatpush.msra.mxu0 0.0
        %3632 = vmatpush.msra.mxu0 0.0
        %3633 = vmatpush.msra.mxu0 0.0
        %3634 = vmatpush.msra.mxu0 %v3141
        %3635 = vmatpush.msra.mxu0 %v3114
        %3636 = vmatpush.msra.mxu0 %v3087
        %3637 = vmatpush.msra.mxu0 %v3060
        %3638 = vmatpush.msra.mxu0 %v3033
        %3639 = vmatpush.msra.mxu0 %v3006
        %3640 = vmatpush.msra.mxu0 %v2979
        %3641 = vmatpush.msra.mxu0 %v2952
        %3642 = vmatpush.msra.mxu0 %v2925
        %3643 = vmatpush.msra.mxu0 %v2898
        %3644 = vmatmul.f32.gmra.mxu0 %v3206
        %v3645 = vpop.f32.mrf.mxu0
        %v3646 = vadd.f32 0.0, %v3645
        %3647 = vdwg.mxu0
        %3648 = vmatpush.msra.mxu0 0.0
        %3649 = vmatpush.msra.mxu0 0.0
        %3650 = vmatpush.msra.mxu0 0.0
        %3651 = vmatpush.msra.mxu0 0.0
        %3652 = vmatpush.msra.mxu0 0.0
        %3653 = vmatpush.msra.mxu0 0.0
        %3654 = vmatpush.msra.mxu0 %v3142
        %3655 = vmatpush.msra.mxu0 %v3115
        %3656 = vmatpush.msra.mxu0 %v3088
        %3657 = vmatpush.msra.mxu0 %v3061
        %3658 = vmatpush.msra.mxu0 %v3034
        %3659 = vmatpush.msra.mxu0 %v3007
        %3660 = vmatpush.msra.mxu0 %v2980
        %3661 = vmatpush.msra.mxu0 %v2953
        %3662 = vmatpush.msra.mxu0 %v2926
        %3663 = vmatpush.msra.mxu0 %v2899
        %3664 = vmatmul.f32.gmra.mxu0 %v3206
        %v3665 = vpop.f32.mrf.mxu0
        %v3666 = vadd.f32 0.0, %v3665
        %3667 = vdwg.mxu0
        %3668 = vmatpush.msra.mxu0 0.0
        %3669 = vmatpush.msra.mxu0 0.0
        %3670 = vmatpush.msra.mxu0 0.0
        %3671 = vmatpush.msra.mxu0 0.0
        %3672 = vmatpush.msra.mxu0 0.0
        %3673 = vmatpush.msra.mxu0 0.0
        %3674 = vmatpush.msra.mxu0 %v3143
        %3675 = vmatpush.msra.mxu0 %v3116
        %3676 = vmatpush.msra.mxu0 %v3089
        %3677 = vmatpush.msra.mxu0 %v3062
        %3678 = vmatpush.msra.mxu0 %v3035
        %3679 = vmatpush.msra.mxu0 %v3008
        %3680 = vmatpush.msra.mxu0 %v2981
        %3681 = vmatpush.msra.mxu0 %v2954
        %3682 = vmatpush.msra.mxu0 %v2927
        %3683 = vmatpush.msra.mxu0 %v2900
        %3684 = vmatmul.f32.gmra.mxu0 %v3206
        %v3685 = vpop.f32.mrf.mxu0
        %v3686 = vadd.f32 0.0, %v3685
        %3687 = vdwg.mxu0
        %3688 = vmatpush.msra.mxu0 0.0
        %3689 = vmatpush.msra.mxu0 0.0
        %3690 = vmatpush.msra.mxu0 0.0
        %3691 = vmatpush.msra.mxu0 0.0
        %3692 = vmatpush.msra.mxu0 0.0
        %3693 = vmatpush.msra.mxu0 0.0
        %3694 = vmatpush.msra.mxu0 %v3144
        %3695 = vmatpush.msra.mxu0 %v3117
        %3696 = vmatpush.msra.mxu0 %v3090
        %3697 = vmatpush.msra.mxu0 %v3063
        %3698 = vmatpush.msra.mxu0 %v3036
        %3699 = vmatpush.msra.mxu0 %v3009
        %3700 = vmatpush.msra.mxu0 %v2982
        %3701 = vmatpush.msra.mxu0 %v2955
        %3702 = vmatpush.msra.mxu0 %v2928
        %3703 = vmatpush.msra.mxu0 %v2901
        %3704 = vmatmul.f32.gmra.mxu0 %v3206
        %v3705 = vpop.f32.mrf.mxu0
        %v3706 = vadd.f32 0.0, %v3705
        %3707 = vdwg.mxu0
        %3708 = vmatpush.msra.mxu0 0.0
        %3709 = vmatpush.msra.mxu0 0.0
        %3710 = vmatpush.msra.mxu0 0.0
        %3711 = vmatpush.msra.mxu0 0.0
        %3712 = vmatpush.msra.mxu0 0.0
        %3713 = vmatpush.msra.mxu0 0.0
        %3714 = vmatpush.msra.mxu0 %v3145
        %3715 = vmatpush.msra.mxu0 %v3118
        %3716 = vmatpush.msra.mxu0 %v3091
        %3717 = vmatpush.msra.mxu0 %v3064
        %3718 = vmatpush.msra.mxu0 %v3037
        %3719 = vmatpush.msra.mxu0 %v3010
        %3720 = vmatpush.msra.mxu0 %v2983
        %3721 = vmatpush.msra.mxu0 %v2956
        %3722 = vmatpush.msra.mxu0 %v2929
        %3723 = vmatpush.msra.mxu0 %v2902
        %3724 = vmatmul.f32.gmra.mxu0 %v3206
        %v3725 = vpop.f32.mrf.mxu0
        %v3726 = vadd.f32 0.0, %v3725
        %3727 = vdwg.mxu0
        %3728 = vmatpush.msra.mxu0 0.0
        %3729 = vmatpush.msra.mxu0 0.0
        %3730 = vmatpush.msra.mxu0 0.0
        %3731 = vmatpush.msra.mxu0 0.0
        %3732 = vmatpush.msra.mxu0 0.0
        %3733 = vmatpush.msra.mxu0 0.0
        %3734 = vmatpush.msra.mxu0 %v3146
        %3735 = vmatpush.msra.mxu0 %v3119
        %3736 = vmatpush.msra.mxu0 %v3092
        %3737 = vmatpush.msra.mxu0 %v3065
        %3738 = vmatpush.msra.mxu0 %v3038
        %3739 = vmatpush.msra.mxu0 %v3011
        %3740 = vmatpush.msra.mxu0 %v2984
        %3741 = vmatpush.msra.mxu0 %v2957
        %3742 = vmatpush.msra.mxu0 %v2930
        %3743 = vmatpush.msra.mxu0 %v2903
        %3744 = vmatmul.f32.gmra.mxu0 %v3206
        %v3745 = vpop.f32.mrf.mxu0
        %v3746 = vadd.f32 0.0, %v3745
        %3747 = vdwg.mxu0
        %v3762 = vperm.slane %v3189, 2
        %v3763 = vperm.slane %v3189, 6
        %v3764 = vperm.slane %v3190, 2
        %v3765 = vperm.slane %v3190, 6
        %v3766 = vperm.slane %v3191, 2
        %v3767 = vperm.slane %v3191, 6
        %v3768 = vperm.slane %v3192, 2
        %v3769 = vperm.slane %v3192, 6
        %v3770 = vperm.slane %v3193, 2
        %v3771 = vperm.slane %v3193, 6
        %v3772 = vperm.slane %v3194, 2
        %v3773 = vperm.slane %v3194, 6
        %v3774 = vperm.slane %v3195, 2
        %v3775 = vperm.slane %v3195, 6
        %v3776 = vperm.slane %v3196, 2
        %v3777 = vperm.slane %v3196, 6
        %v3778 = vperm.slane %v3197, 2
        %v3779 = vperm.slane %v3197, 6
        %v3780 = vperm.slane %v3198, 2
        %v3781 = vperm.slane %v3198, 6
        %v3782 = vperm.slane %v3199, 2
        %v3783 = vperm.slane %v3199, 6
        %v3784 = vperm.slane %v3200, 2
        %v3785 = vperm.slane %v3200, 6
        %v3786 = vperm.slane %v3201, 2
        %v3787 = vperm.slane %v3201, 6
        %v3788 = vperm.slane %v3202, 2
        %v3816 = vperm.slane %v3762, 2
        %v3817 = vperm.slane %v3763, 2
        %v3818 = vperm.slane %v3764, 2
        %v3819 = vperm.slane %v3765, 2
        %v3820 = vperm.slane %v3766, 2
        %v3821 = vperm.slane %v3767, 2
        %v3822 = vperm.slane %v3768, 2
        %v3823 = vperm.slane %v3769, 2
        %v3824 = vperm.slane %v3770, 2
        %v3825 = vperm.slane %v3771, 2
        %v3826 = vperm.slane %v3772, 2
        %v3827 = vperm.slane %v3773, 2
        %v3828 = vperm.slane %v3774, 2
        %v3829 = vperm.slane %v3775, 2
        %v3830 = vperm.slane %v3776, 2
        %v3831 = vperm.slane %v3777, 2
        %v3832 = vperm.slane %v3778, 2
        %v3833 = vperm.slane %v3779, 2
        %v3834 = vperm.slane %v3780, 2
        %v3835 = vperm.slane %v3781, 2
        %v3836 = vperm.slane %v3782, 2
        %v3837 = vperm.slane %v3783, 2
        %v3838 = vperm.slane %v3784, 2
        %v3839 = vperm.slane %v3785, 2
        %v3840 = vperm.slane %v3786, 2
        %v3841 = vperm.slane %v3787, 2
        %v3842 = vperm.slane %v3788, 2
        %v3843 = vmul.f32 %v3816, %v3226
        %v3844 = vmul.f32 %v3817, %v3246
        %v3845 = vmul.f32 %v3818, %v3266
        %v3846 = vmul.f32 %v3819, %v3286
        %v3847 = vmul.f32 %v3820, %v3306
        %v3848 = vmul.f32 %v3821, %v3326
        %v3849 = vmul.f32 %v3822, %v3346
        %v3850 = vmul.f32 %v3823, %v3366
        %v3851 = vmul.f32 %v3824, %v3386
        %v3852 = vmul.f32 %v3825, %v3406
        %v3853 = vmul.f32 %v3826, %v3426
        %v3854 = vmul.f32 %v3827, %v3446
        %v3855 = vmul.f32 %v3828, %v3466
        %v3856 = vmul.f32 %v3829, %v3486
        %v3857 = vmul.f32 %v3830, %v3506
        %v3858 = vmul.f32 %v3831, %v3526
        %v3859 = vmul.f32 %v3832, %v3546
        %v3860 = vmul.f32 %v3833, %v3566
        %v3861 = vmul.f32 %v3834, %v3586
        %v3862 = vmul.f32 %v3835, %v3606
        %v3863 = vmul.f32 %v3836, %v3626
        %v3864 = vmul.f32 %v3837, %v3646
        %v3865 = vmul.f32 %v3838, %v3666
        %v3866 = vmul.f32 %v3839, %v3686
        %v3867 = vmul.f32 %v3840, %v3706
        %v3868 = vmul.f32 %v3841, %v3726
        %v3869 = vmul.f32 %v3842, %v3746
        %v3870 = vadd.f32 %v3843, 0.0
        %v3871 = vadd.f32 %v3844, 0.0
        %v3872 = vadd.f32 %v3845, 0.0
        %v3873 = vadd.f32 %v3846, 0.0
        %v3874 = vadd.f32 %v3847, 0.0
        %v3875 = vadd.f32 %v3848, 0.0
        %v3876 = vadd.f32 %v3849, 0.0
        %v3877 = vadd.f32 %v3850, 0.0
        %v3878 = vadd.f32 %v3851, 0.0
        %v3879 = vadd.f32 %v3852, 0.0
        %v3880 = vadd.f32 %v3853, 0.0
        %v3881 = vadd.f32 %v3854, 0.0
        %v3882 = vadd.f32 %v3855, 0.0
        %v3883 = vadd.f32 %v3856, 0.0
        %v3884 = vadd.f32 %v3857, 0.0
        %v3885 = vadd.f32 %v3858, 0.0
        %v3886 = vadd.f32 %v3859, 0.0
        %v3887 = vadd.f32 %v3860, 0.0
        %v3888 = vadd.f32 %v3861, 0.0
        %v3889 = vadd.f32 %v3862, 0.0
        %v3890 = vadd.f32 %v3863, 0.0
        %v3891 = vadd.f32 %v3864, 0.0
        %v3892 = vadd.f32 %v3865, 0.0
        %v3893 = vadd.f32 %v3866, 0.0
        %v3894 = vadd.f32 %v3867, 0.0
        %v3895 = vadd.f32 %v3868, 0.0
        %v3896 = vadd.f32 %v3869, 0.0
        %v3897 = vsub.f32 1.0, %v413
        %v3898 = vsub.f32 1.0, %v414
        %v3899 = vsub.f32 1.0, %v415
        %v3900 = vsub.f32 1.0, %v416
        %v3901 = vsub.f32 1.0, %v417
        %v3902 = vsub.f32 1.0, %v418
        %v3903 = vsub.f32 1.0, %v419
        %v3904 = vsub.f32 1.0, %v420
        %v3905 = vsub.f32 1.0, %v421
        %v3906 = vsub.f32 1.0, %v422
        %v3907 = vsub.f32 1.0, %v423
        %v3908 = vsub.f32 1.0, %v424
        %v3909 = vsub.f32 1.0, %v425
        %v3910 = vsub.f32 1.0, %v426
        %v3911 = vand.u32 2147483647, %v3897
        %v3912 = vand.u32 2147483647, %v3898
        %v3913 = vand.u32 2147483647, %v3899
        %v3914 = vand.u32 2147483647, %v3900
        %v3915 = vand.u32 2147483647, %v3901
        %v3916 = vand.u32 2147483647, %v3902
        %v3917 = vand.u32 2147483647, %v3903
        %v3918 = vand.u32 2147483647, %v3904
        %v3919 = vand.u32 2147483647, %v3905
        %v3920 = vand.u32 2147483647, %v3906
        %v3921 = vand.u32 2147483647, %v3907
        %v3922 = vand.u32 2147483647, %v3908
        %v3923 = vand.u32 2147483647, %v3909
        %v3924 = vand.u32 2147483647, %v3910
        %v3925 = vsub.f32 1.0, %v3911
        %v3926 = vsub.f32 1.0, %v3912
        %v3927 = vsub.f32 1.0, %v3913
        %v3928 = vsub.f32 1.0, %v3914
        %v3929 = vsub.f32 1.0, %v3915
        %v3930 = vsub.f32 1.0, %v3916
        %v3931 = vsub.f32 1.0, %v3917
        %v3932 = vsub.f32 1.0, %v3918
        %v3933 = vsub.f32 1.0, %v3919
        %v3934 = vsub.f32 1.0, %v3920
        %v3935 = vsub.f32 1.0, %v3921
        %v3936 = vsub.f32 1.0, %v3922
        %v3937 = vsub.f32 1.0, %v3923
        %v3938 = vsub.f32 1.0, %v3924
        %v3939 = vmax.f32 %v3925, 0.0
        %v3940 = vmax.f32 %v3926, 0.0
        %v3941 = vmax.f32 %v3927, 0.0
        %v3942 = vmax.f32 %v3928, 0.0
        %v3943 = vmax.f32 %v3929, 0.0
        %v3944 = vmax.f32 %v3930, 0.0
        %v3945 = vmax.f32 %v3931, 0.0
        %v3946 = vmax.f32 %v3932, 0.0
        %v3947 = vmax.f32 %v3933, 0.0
        %v3948 = vmax.f32 %v3934, 0.0
        %v3949 = vmax.f32 %v3935, 0.0
        %v3950 = vmax.f32 %v3936, 0.0
        %v3951 = vmax.f32 %v3937, 0.0
        %v3952 = vmax.f32 %v3938, 0.0
        %s3953 = scalar_lea.vmem %s272, 4
        %v3954 = vld [vmem:[%s3953] sm:$0xf]
        %v3956 = vsel %vm3204, %v3954, 0
        %3958 = vmatpush.msra.mxu0 0.0
        %3959 = vmatpush.msra.mxu0 0.0
        %3960 = vmatpush.msra.mxu0 0.0
        %3961 = vmatpush.msra.mxu0 0.0
        %3962 = vmatpush.msra.mxu0 0.0
        %3963 = vmatpush.msra.mxu0 0.0
        %3964 = vmatpush.msra.mxu0 %v3120
        %3965 = vmatpush.msra.mxu0 %v3093
        %3966 = vmatpush.msra.mxu0 %v3066
        %3967 = vmatpush.msra.mxu0 %v3039
        %3968 = vmatpush.msra.mxu0 %v3012
        %3969 = vmatpush.msra.mxu0 %v2985
        %3970 = vmatpush.msra.mxu0 %v2958
        %3971 = vmatpush.msra.mxu0 %v2931
        %3972 = vmatpush.msra.mxu0 %v2904
        %3973 = vmatpush.msra.mxu0 %v2877
        %3974 = vmatmul.f32.gmra.mxu0 %v3956
        %v3975 = vpop.f32.mrf.mxu0
        %v3976 = vadd.f32 0.0, %v3975
        %3977 = vdwg.mxu0
        %3978 = vmatpush.msra.mxu0 0.0
        %3979 = vmatpush.msra.mxu0 0.0
        %3980 = vmatpush.msra.mxu0 0.0
        %3981 = vmatpush.msra.mxu0 0.0
        %3982 = vmatpush.msra.mxu0 0.0
        %3983 = vmatpush.msra.mxu0 0.0
        %3984 = vmatpush.msra.mxu0 %v3121
        %3985 = vmatpush.msra.mxu0 %v3094
        %3986 = vmatpush.msra.mxu0 %v3067
        %3987 = vmatpush.msra.mxu0 %v3040
        %3988 = vmatpush.msra.mxu0 %v3013
        %3989 = vmatpush.msra.mxu0 %v2986
        %3990 = vmatpush.msra.mxu0 %v2959
        %3991 = vmatpush.msra.mxu0 %v2932
        %3992 = vmatpush.msra.mxu0 %v2905
        %3993 = vmatpush.msra.mxu0 %v2878
        %3994 = vmatmul.f32.gmra.mxu0 %v3956
        %v3995 = vpop.f32.mrf.mxu0
        %v3996 = vadd.f32 0.0, %v3995
        %3997 = vdwg.mxu0
        %3998 = vmatpush.msra.mxu0 0.0
        %3999 = vmatpush.msra.mxu0 0.0
        %4000 = vmatpush.msra.mxu0 0.0
        %4001 = vmatpush.msra.mxu0 0.0
        %4002 = vmatpush.msra.mxu0 0.0
        %4003 = vmatpush.msra.mxu0 0.0
        %4004 = vmatpush.msra.mxu0 %v3122
        %4005 = vmatpush.msra.mxu0 %v3095
        %4006 = vmatpush.msra.mxu0 %v3068
        %4007 = vmatpush.msra.mxu0 %v3041
        %4008 = vmatpush.msra.mxu0 %v3014
        %4009 = vmatpush.msra.mxu0 %v2987
        %4010 = vmatpush.msra.mxu0 %v2960
        %4011 = vmatpush.msra.mxu0 %v2933
        %4012 = vmatpush.msra.mxu0 %v2906
        %4013 = vmatpush.msra.mxu0 %v2879
        %4014 = vmatmul.f32.gmra.mxu0 %v3956
        %v4015 = vpop.f32.mrf.mxu0
        %v4016 = vadd.f32 0.0, %v4015
        %4017 = vdwg.mxu0
        %4018 = vmatpush.msra.mxu0 0.0
        %4019 = vmatpush.msra.mxu0 0.0
        %4020 = vmatpush.msra.mxu0 0.0
        %4021 = vmatpush.msra.mxu0 0.0
        %4022 = vmatpush.msra.mxu0 0.0
        %4023 = vmatpush.msra.mxu0 0.0
        %4024 = vmatpush.msra.mxu0 %v3123
        %4025 = vmatpush.msra.mxu0 %v3096
        %4026 = vmatpush.msra.mxu0 %v3069
        %4027 = vmatpush.msra.mxu0 %v3042
        %4028 = vmatpush.msra.mxu0 %v3015
        %4029 = vmatpush.msra.mxu0 %v2988
        %4030 = vmatpush.msra.mxu0 %v2961
        %4031 = vmatpush.msra.mxu0 %v2934
        %4032 = vmatpush.msra.mxu0 %v2907
        %4033 = vmatpush.msra.mxu0 %v2880
        %4034 = vmatmul.f32.gmra.mxu0 %v3956
        %v4035 = vpop.f32.mrf.mxu0
        %v4036 = vadd.f32 0.0, %v4035
        %4037 = vdwg.mxu0
        %4038 = vmatpush.msra.mxu0 0.0
        %4039 = vmatpush.msra.mxu0 0.0
        %4040 = vmatpush.msra.mxu0 0.0
        %4041 = vmatpush.msra.mxu0 0.0
        %4042 = vmatpush.msra.mxu0 0.0
        %4043 = vmatpush.msra.mxu0 0.0
        %4044 = vmatpush.msra.mxu0 %v3124
        %4045 = vmatpush.msra.mxu0 %v3097
        %4046 = vmatpush.msra.mxu0 %v3070
        %4047 = vmatpush.msra.mxu0 %v3043
        %4048 = vmatpush.msra.mxu0 %v3016
        %4049 = vmatpush.msra.mxu0 %v2989
        %4050 = vmatpush.msra.mxu0 %v2962
        %4051 = vmatpush.msra.mxu0 %v2935
        %4052 = vmatpush.msra.mxu0 %v2908
        %4053 = vmatpush.msra.mxu0 %v2881
        %4054 = vmatmul.f32.gmra.mxu0 %v3956
        %v4055 = vpop.f32.mrf.mxu0
        %v4056 = vadd.f32 0.0, %v4055
        %4057 = vdwg.mxu0
        %4058 = vmatpush.msra.mxu0 0.0
        %4059 = vmatpush.msra.mxu0 0.0
        %4060 = vmatpush.msra.mxu0 0.0
        %4061 = vmatpush.msra.mxu0 0.0
        %4062 = vmatpush.msra.mxu0 0.0
        %4063 = vmatpush.msra.mxu0 0.0
        %4064 = vmatpush.msra.mxu0 %v3125
        %4065 = vmatpush.msra.mxu0 %v3098
        %4066 = vmatpush.msra.mxu0 %v3071
        %4067 = vmatpush.msra.mxu0 %v3044
        %4068 = vmatpush.msra.mxu0 %v3017
        %4069 = vmatpush.msra.mxu0 %v2990
        %4070 = vmatpush.msra.mxu0 %v2963
        %4071 = vmatpush.msra.mxu0 %v2936
        %4072 = vmatpush.msra.mxu0 %v2909
        %4073 = vmatpush.msra.mxu0 %v2882
        %4074 = vmatmul.f32.gmra.mxu0 %v3956
        %v4075 = vpop.f32.mrf.mxu0
        %v4076 = vadd.f32 0.0, %v4075
        %4077 = vdwg.mxu0
        %4078 = vmatpush.msra.mxu0 0.0
        %4079 = vmatpush.msra.mxu0 0.0
        %4080 = vmatpush.msra.mxu0 0.0
        %4081 = vmatpush.msra.mxu0 0.0
        %4082 = vmatpush.msra.mxu0 0.0
        %4083 = vmatpush.msra.mxu0 0.0
        %4084 = vmatpush.msra.mxu0 %v3126
        %4085 = vmatpush.msra.mxu0 %v3099
        %4086 = vmatpush.msra.mxu0 %v3072
        %4087 = vmatpush.msra.mxu0 %v3045
        %4088 = vmatpush.msra.mxu0 %v3018
        %4089 = vmatpush.msra.mxu0 %v2991
        %4090 = vmatpush.msra.mxu0 %v2964
        %4091 = vmatpush.msra.mxu0 %v2937
        %4092 = vmatpush.msra.mxu0 %v2910
        %4093 = vmatpush.msra.mxu0 %v2883
        %4094 = vmatmul.f32.gmra.mxu0 %v3956
        %v4095 = vpop.f32.mrf.mxu0
        %v4096 = vadd.f32 0.0, %v4095
        %4097 = vdwg.mxu0
        %4098 = vmatpush.msra.mxu0 0.0
        %4099 = vmatpush.msra.mxu0 0.0
        %4100 = vmatpush.msra.mxu0 0.0
        %4101 = vmatpush.msra.mxu0 0.0
        %4102 = vmatpush.msra.mxu0 0.0
        %4103 = vmatpush.msra.mxu0 0.0
        %4104 = vmatpush.msra.mxu0 %v3127
        %4105 = vmatpush.msra.mxu0 %v3100
        %4106 = vmatpush.msra.mxu0 %v3073
        %4107 = vmatpush.msra.mxu0 %v3046
        %4108 = vmatpush.msra.mxu0 %v3019
        %4109 = vmatpush.msra.mxu0 %v2992
        %4110 = vmatpush.msra.mxu0 %v2965
        %4111 = vmatpush.msra.mxu0 %v2938
        %4112 = vmatpush.msra.mxu0 %v2911
        %4113 = vmatpush.msra.mxu0 %v2884
        %4114 = vmatmul.f32.gmra.mxu0 %v3956
        %v4115 = vpop.f32.mrf.mxu0
        %v4116 = vadd.f32 0.0, %v4115
        %4117 = vdwg.mxu0
        %4118 = vmatpush.msra.mxu0 0.0
        %4119 = vmatpush.msra.mxu0 0.0
        %4120 = vmatpush.msra.mxu0 0.0
        %4121 = vmatpush.msra.mxu0 0.0
        %4122 = vmatpush.msra.mxu0 0.0
        %4123 = vmatpush.msra.mxu0 0.0
        %4124 = vmatpush.msra.mxu0 %v3128
        %4125 = vmatpush.msra.mxu0 %v3101
        %4126 = vmatpush.msra.mxu0 %v3074
        %4127 = vmatpush.msra.mxu0 %v3047
        %4128 = vmatpush.msra.mxu0 %v3020
        %4129 = vmatpush.msra.mxu0 %v2993
        %4130 = vmatpush.msra.mxu0 %v2966
        %4131 = vmatpush.msra.mxu0 %v2939
        %4132 = vmatpush.msra.mxu0 %v2912
        %4133 = vmatpush.msra.mxu0 %v2885
        %4134 = vmatmul.f32.gmra.mxu0 %v3956
        %v4135 = vpop.f32.mrf.mxu0
        %v4136 = vadd.f32 0.0, %v4135
        %4137 = vdwg.mxu0
        %4138 = vmatpush.msra.mxu0 0.0
        %4139 = vmatpush.msra.mxu0 0.0
        %4140 = vmatpush.msra.mxu0 0.0
        %4141 = vmatpush.msra.mxu0 0.0
        %4142 = vmatpush.msra.mxu0 0.0
        %4143 = vmatpush.msra.mxu0 0.0
        %4144 = vmatpush.msra.mxu0 %v3129
        %4145 = vmatpush.msra.mxu0 %v3102
        %4146 = vmatpush.msra.mxu0 %v3075
        %4147 = vmatpush.msra.mxu0 %v3048
        %4148 = vmatpush.msra.mxu0 %v3021
        %4149 = vmatpush.msra.mxu0 %v2994
        %4150 = vmatpush.msra.mxu0 %v2967
        %4151 = vmatpush.msra.mxu0 %v2940
        %4152 = vmatpush.msra.mxu0 %v2913
        %4153 = vmatpush.msra.mxu0 %v2886
        %4154 = vmatmul.f32.gmra.mxu0 %v3956
        %v4155 = vpop.f32.mrf.mxu0
        %v4156 = vadd.f32 0.0, %v4155
        %4157 = vdwg.mxu0
        %4158 = vmatpush.msra.mxu0 0.0
        %4159 = vmatpush.msra.mxu0 0.0
        %4160 = vmatpush.msra.mxu0 0.0
        %4161 = vmatpush.msra.mxu0 0.0
        %4162 = vmatpush.msra.mxu0 0.0
        %4163 = vmatpush.msra.mxu0 0.0
        %4164 = vmatpush.msra.mxu0 %v3130
        %4165 = vmatpush.msra.mxu0 %v3103
        %4166 = vmatpush.msra.mxu0 %v3076
        %4167 = vmatpush.msra.mxu0 %v3049
        %4168 = vmatpush.msra.mxu0 %v3022
        %4169 = vmatpush.msra.mxu0 %v2995
        %4170 = vmatpush.msra.mxu0 %v2968
        %4171 = vmatpush.msra.mxu0 %v2941
        %4172 = vmatpush.msra.mxu0 %v2914
        %4173 = vmatpush.msra.mxu0 %v2887
        %4174 = vmatmul.f32.gmra.mxu0 %v3956
        %v4175 = vpop.f32.mrf.mxu0
        %v4176 = vadd.f32 0.0, %v4175
        %4177 = vdwg.mxu0
        %4178 = vmatpush.msra.mxu0 0.0
        %4179 = vmatpush.msra.mxu0 0.0
        %4180 = vmatpush.msra.mxu0 0.0
        %4181 = vmatpush.msra.mxu0 0.0
        %4182 = vmatpush.msra.mxu0 0.0
        %4183 = vmatpush.msra.mxu0 0.0
        %4184 = vmatpush.msra.mxu0 %v3131
        %4185 = vmatpush.msra.mxu0 %v3104
        %4186 = vmatpush.msra.mxu0 %v3077
        %4187 = vmatpush.msra.mxu0 %v3050
        %4188 = vmatpush.msra.mxu0 %v3023
        %4189 = vmatpush.msra.mxu0 %v2996
        %4190 = vmatpush.msra.mxu0 %v2969
        %4191 = vmatpush.msra.mxu0 %v2942
        %4192 = vmatpush.msra.mxu0 %v2915
        %4193 = vmatpush.msra.mxu0 %v2888
        %4194 = vmatmul.f32.gmra.mxu0 %v3956
        %v4195 = vpop.f32.mrf.mxu0
        %v4196 = vadd.f32 0.0, %v4195
        %4197 = vdwg.mxu0
        %4198 = vmatpush.msra.mxu0 0.0
        %4199 = vmatpush.msra.mxu0 0.0
        %4200 = vmatpush.msra.mxu0 0.0
        %4201 = vmatpush.msra.mxu0 0.0
        %4202 = vmatpush.msra.mxu0 0.0
        %4203 = vmatpush.msra.mxu0 0.0
        %4204 = vmatpush.msra.mxu0 %v3132
        %4205 = vmatpush.msra.mxu0 %v3105
        %4206 = vmatpush.msra.mxu0 %v3078
        %4207 = vmatpush.msra.mxu0 %v3051
        %4208 = vmatpush.msra.mxu0 %v3024
        %4209 = vmatpush.msra.mxu0 %v2997
        %4210 = vmatpush.msra.mxu0 %v2970
        %4211 = vmatpush.msra.mxu0 %v2943
        %4212 = vmatpush.msra.mxu0 %v2916
        %4213 = vmatpush.msra.mxu0 %v2889
        %4214 = vmatmul.f32.gmra.mxu0 %v3956
        %v4215 = vpop.f32.mrf.mxu0
        %v4216 = vadd.f32 0.0, %v4215
        %4217 = vdwg.mxu0
        %4218 = vmatpush.msra.mxu0 0.0
        %4219 = vmatpush.msra.mxu0 0.0
        %4220 = vmatpush.msra.mxu0 0.0
        %4221 = vmatpush.msra.mxu0 0.0
        %4222 = vmatpush.msra.mxu0 0.0
        %4223 = vmatpush.msra.mxu0 0.0
        %4224 = vmatpush.msra.mxu0 %v3133
        %4225 = vmatpush.msra.mxu0 %v3106
        %4226 = vmatpush.msra.mxu0 %v3079
        %4227 = vmatpush.msra.mxu0 %v3052
        %4228 = vmatpush.msra.mxu0 %v3025
        %4229 = vmatpush.msra.mxu0 %v2998
        %4230 = vmatpush.msra.mxu0 %v2971
        %4231 = vmatpush.msra.mxu0 %v2944
        %4232 = vmatpush.msra.mxu0 %v2917
        %4233 = vmatpush.msra.mxu0 %v2890
        %4234 = vmatmul.f32.gmra.mxu0 %v3956
        %v4235 = vpop.f32.mrf.mxu0
        %v4236 = vadd.f32 0.0, %v4235
        %4237 = vdwg.mxu0
        %4238 = vmatpush.msra.mxu0 0.0
        %4239 = vmatpush.msra.mxu0 0.0
        %4240 = vmatpush.msra.mxu0 0.0
        %4241 = vmatpush.msra.mxu0 0.0
        %4242 = vmatpush.msra.mxu0 0.0
        %4243 = vmatpush.msra.mxu0 0.0
        %4244 = vmatpush.msra.mxu0 %v3134
        %4245 = vmatpush.msra.mxu0 %v3107
        %4246 = vmatpush.msra.mxu0 %v3080
        %4247 = vmatpush.msra.mxu0 %v3053
        %4248 = vmatpush.msra.mxu0 %v3026
        %4249 = vmatpush.msra.mxu0 %v2999
        %4250 = vmatpush.msra.mxu0 %v2972
        %4251 = vmatpush.msra.mxu0 %v2945
        %4252 = vmatpush.msra.mxu0 %v2918
        %4253 = vmatpush.msra.mxu0 %v2891
        %4254 = vmatmul.f32.gmra.mxu0 %v3956
        %v4255 = vpop.f32.mrf.mxu0
        %v4256 = vadd.f32 0.0, %v4255
        %4257 = vdwg.mxu0
        %4258 = vmatpush.msra.mxu0 0.0
        %4259 = vmatpush.msra.mxu0 0.0
        %4260 = vmatpush.msra.mxu0 0.0
        %4261 = vmatpush.msra.mxu0 0.0
        %4262 = vmatpush.msra.mxu0 0.0
        %4263 = vmatpush.msra.mxu0 0.0
        %4264 = vmatpush.msra.mxu0 %v3135
        %4265 = vmatpush.msra.mxu0 %v3108
        %4266 = vmatpush.msra.mxu0 %v3081
        %4267 = vmatpush.msra.mxu0 %v3054
        %4268 = vmatpush.msra.mxu0 %v3027
        %4269 = vmatpush.msra.mxu0 %v3000
        %4270 = vmatpush.msra.mxu0 %v2973
        %4271 = vmatpush.msra.mxu0 %v2946
        %4272 = vmatpush.msra.mxu0 %v2919
        %4273 = vmatpush.msra.mxu0 %v2892
        %4274 = vmatmul.f32.gmra.mxu0 %v3956
        %v4275 = vpop.f32.mrf.mxu0
        %v4276 = vadd.f32 0.0, %v4275
        %4277 = vdwg.mxu0
        %4278 = vmatpush.msra.mxu0 0.0
        %4279 = vmatpush.msra.mxu0 0.0
        %4280 = vmatpush.msra.mxu0 0.0
        %4281 = vmatpush.msra.mxu0 0.0
        %4282 = vmatpush.msra.mxu0 0.0
        %4283 = vmatpush.msra.mxu0 0.0
        %4284 = vmatpush.msra.mxu0 %v3136
        %4285 = vmatpush.msra.mxu0 %v3109
        %4286 = vmatpush.msra.mxu0 %v3082
        %4287 = vmatpush.msra.mxu0 %v3055
        %4288 = vmatpush.msra.mxu0 %v3028
        %4289 = vmatpush.msra.mxu0 %v3001
        %4290 = vmatpush.msra.mxu0 %v2974
        %4291 = vmatpush.msra.mxu0 %v2947
        %4292 = vmatpush.msra.mxu0 %v2920
        %4293 = vmatpush.msra.mxu0 %v2893
        %4294 = vmatmul.f32.gmra.mxu0 %v3956
        %v4295 = vpop.f32.mrf.mxu0
        %v4296 = vadd.f32 0.0, %v4295
        %4297 = vdwg.mxu0
        %4298 = vmatpush.msra.mxu0 0.0
        %4299 = vmatpush.msra.mxu0 0.0
        %4300 = vmatpush.msra.mxu0 0.0
        %4301 = vmatpush.msra.mxu0 0.0
        %4302 = vmatpush.msra.mxu0 0.0
        %4303 = vmatpush.msra.mxu0 0.0
        %4304 = vmatpush.msra.mxu0 %v3137
        %4305 = vmatpush.msra.mxu0 %v3110
        %4306 = vmatpush.msra.mxu0 %v3083
        %4307 = vmatpush.msra.mxu0 %v3056
        %4308 = vmatpush.msra.mxu0 %v3029
        %4309 = vmatpush.msra.mxu0 %v3002
        %4310 = vmatpush.msra.mxu0 %v2975
        %4311 = vmatpush.msra.mxu0 %v2948
        %4312 = vmatpush.msra.mxu0 %v2921
        %4313 = vmatpush.msra.mxu0 %v2894
        %4314 = vmatmul.f32.gmra.mxu0 %v3956
        %v4315 = vpop.f32.mrf.mxu0
        %v4316 = vadd.f32 0.0, %v4315
        %4317 = vdwg.mxu0
        %4318 = vmatpush.msra.mxu0 0.0
        %4319 = vmatpush.msra.mxu0 0.0
        %4320 = vmatpush.msra.mxu0 0.0
        %4321 = vmatpush.msra.mxu0 0.0
        %4322 = vmatpush.msra.mxu0 0.0
        %4323 = vmatpush.msra.mxu0 0.0
        %4324 = vmatpush.msra.mxu0 %v3138
        %4325 = vmatpush.msra.mxu0 %v3111
        %4326 = vmatpush.msra.mxu0 %v3084
        %4327 = vmatpush.msra.mxu0 %v3057
        %4328 = vmatpush.msra.mxu0 %v3030
        %4329 = vmatpush.msra.mxu0 %v3003
        %4330 = vmatpush.msra.mxu0 %v2976
        %4331 = vmatpush.msra.mxu0 %v2949
        %4332 = vmatpush.msra.mxu0 %v2922
        %4333 = vmatpush.msra.mxu0 %v2895
        %4334 = vmatmul.f32.gmra.mxu0 %v3956
        %v4335 = vpop.f32.mrf.mxu0
        %v4336 = vadd.f32 0.0, %v4335
        %4337 = vdwg.mxu0
        %4338 = vmatpush.msra.mxu0 0.0
        %4339 = vmatpush.msra.mxu0 0.0
        %4340 = vmatpush.msra.mxu0 0.0
        %4341 = vmatpush.msra.mxu0 0.0
        %4342 = vmatpush.msra.mxu0 0.0
        %4343 = vmatpush.msra.mxu0 0.0
        %4344 = vmatpush.msra.mxu0 %v3139
        %4345 = vmatpush.msra.mxu0 %v3112
        %4346 = vmatpush.msra.mxu0 %v3085
        %4347 = vmatpush.msra.mxu0 %v3058
        %4348 = vmatpush.msra.mxu0 %v3031
        %4349 = vmatpush.msra.mxu0 %v3004
        %4350 = vmatpush.msra.mxu0 %v2977
        %4351 = vmatpush.msra.mxu0 %v2950
        %4352 = vmatpush.msra.mxu0 %v2923
        %4353 = vmatpush.msra.mxu0 %v2896
        %4354 = vmatmul.f32.gmra.mxu0 %v3956
        %v4355 = vpop.f32.mrf.mxu0
        %v4356 = vadd.f32 0.0, %v4355
        %4357 = vdwg.mxu0
        %4358 = vmatpush.msra.mxu0 0.0
        %4359 = vmatpush.msra.mxu0 0.0
        %4360 = vmatpush.msra.mxu0 0.0
        %4361 = vmatpush.msra.mxu0 0.0
        %4362 = vmatpush.msra.mxu0 0.0
        %4363 = vmatpush.msra.mxu0 0.0
        %4364 = vmatpush.msra.mxu0 %v3140
        %4365 = vmatpush.msra.mxu0 %v3113
        %4366 = vmatpush.msra.mxu0 %v3086
        %4367 = vmatpush.msra.mxu0 %v3059
        %4368 = vmatpush.msra.mxu0 %v3032
        %4369 = vmatpush.msra.mxu0 %v3005
        %4370 = vmatpush.msra.mxu0 %v2978
        %4371 = vmatpush.msra.mxu0 %v2951
        %4372 = vmatpush.msra.mxu0 %v2924
        %4373 = vmatpush.msra.mxu0 %v2897
        %4374 = vmatmul.f32.gmra.mxu0 %v3956
        %v4375 = vpop.f32.mrf.mxu0
        %v4376 = vadd.f32 0.0, %v4375
        %4377 = vdwg.mxu0
        %4378 = vmatpush.msra.mxu0 0.0
        %4379 = vmatpush.msra.mxu0 0.0
        %4380 = vmatpush.msra.mxu0 0.0
        %4381 = vmatpush.msra.mxu0 0.0
        %4382 = vmatpush.msra.mxu0 0.0
        %4383 = vmatpush.msra.mxu0 0.0
        %4384 = vmatpush.msra.mxu0 %v3141
        %4385 = vmatpush.msra.mxu0 %v3114
        %4386 = vmatpush.msra.mxu0 %v3087
        %4387 = vmatpush.msra.mxu0 %v3060
        %4388 = vmatpush.msra.mxu0 %v3033
        %4389 = vmatpush.msra.mxu0 %v3006
        %4390 = vmatpush.msra.mxu0 %v2979
        %4391 = vmatpush.msra.mxu0 %v2952
        %4392 = vmatpush.msra.mxu0 %v2925
        %4393 = vmatpush.msra.mxu0 %v2898
        %4394 = vmatmul.f32.gmra.mxu0 %v3956
        %v4395 = vpop.f32.mrf.mxu0
        %v4396 = vadd.f32 0.0, %v4395
        %4397 = vdwg.mxu0
        %4398 = vmatpush.msra.mxu0 0.0
        %4399 = vmatpush.msra.mxu0 0.0
        %4400 = vmatpush.msra.mxu0 0.0
        %4401 = vmatpush.msra.mxu0 0.0
        %4402 = vmatpush.msra.mxu0 0.0
        %4403 = vmatpush.msra.mxu0 0.0
        %4404 = vmatpush.msra.mxu0 %v3142
        %4405 = vmatpush.msra.mxu0 %v3115
        %4406 = vmatpush.msra.mxu0 %v3088
        %4407 = vmatpush.msra.mxu0 %v3061
        %4408 = vmatpush.msra.mxu0 %v3034
        %4409 = vmatpush.msra.mxu0 %v3007
        %4410 = vmatpush.msra.mxu0 %v2980
        %4411 = vmatpush.msra.mxu0 %v2953
        %4412 = vmatpush.msra.mxu0 %v2926
        %4413 = vmatpush.msra.mxu0 %v2899
        %4414 = vmatmul.f32.gmra.mxu0 %v3956
        %v4415 = vpop.f32.mrf.mxu0
        %v4416 = vadd.f32 0.0, %v4415
        %4417 = vdwg.mxu0
        %4418 = vmatpush.msra.mxu0 0.0
        %4419 = vmatpush.msra.mxu0 0.0
        %4420 = vmatpush.msra.mxu0 0.0
        %4421 = vmatpush.msra.mxu0 0.0
        %4422 = vmatpush.msra.mxu0 0.0
        %4423 = vmatpush.msra.mxu0 0.0
        %4424 = vmatpush.msra.mxu0 %v3143
        %4425 = vmatpush.msra.mxu0 %v3116
        %4426 = vmatpush.msra.mxu0 %v3089
        %4427 = vmatpush.msra.mxu0 %v3062
        %4428 = vmatpush.msra.mxu0 %v3035
        %4429 = vmatpush.msra.mxu0 %v3008
        %4430 = vmatpush.msra.mxu0 %v2981
        %4431 = vmatpush.msra.mxu0 %v2954
        %4432 = vmatpush.msra.mxu0 %v2927
        %4433 = vmatpush.msra.mxu0 %v2900
        %4434 = vmatmul.f32.gmra.mxu0 %v3956
        %v4435 = vpop.f32.mrf.mxu0
        %v4436 = vadd.f32 0.0, %v4435
        %4437 = vdwg.mxu0
        %4438 = vmatpush.msra.mxu0 0.0
        %4439 = vmatpush.msra.mxu0 0.0
        %4440 = vmatpush.msra.mxu0 0.0
        %4441 = vmatpush.msra.mxu0 0.0
        %4442 = vmatpush.msra.mxu0 0.0
        %4443 = vmatpush.msra.mxu0 0.0
        %4444 = vmatpush.msra.mxu0 %v3144
        %4445 = vmatpush.msra.mxu0 %v3117
        %4446 = vmatpush.msra.mxu0 %v3090
        %4447 = vmatpush.msra.mxu0 %v3063
        %4448 = vmatpush.msra.mxu0 %v3036
        %4449 = vmatpush.msra.mxu0 %v3009
        %4450 = vmatpush.msra.mxu0 %v2982
        %4451 = vmatpush.msra.mxu0 %v2955
        %4452 = vmatpush.msra.mxu0 %v2928
        %4453 = vmatpush.msra.mxu0 %v2901
        %4454 = vmatmul.f32.gmra.mxu0 %v3956
        %v4455 = vpop.f32.mrf.mxu0
        %v4456 = vadd.f32 0.0, %v4455
        %4457 = vdwg.mxu0
        %4458 = vmatpush.msra.mxu0 0.0
        %4459 = vmatpush.msra.mxu0 0.0
        %4460 = vmatpush.msra.mxu0 0.0
        %4461 = vmatpush.msra.mxu0 0.0
        %4462 = vmatpush.msra.mxu0 0.0
        %4463 = vmatpush.msra.mxu0 0.0
        %4464 = vmatpush.msra.mxu0 %v3145
        %4465 = vmatpush.msra.mxu0 %v3118
        %4466 = vmatpush.msra.mxu0 %v3091
        %4467 = vmatpush.msra.mxu0 %v3064
        %4468 = vmatpush.msra.mxu0 %v3037
        %4469 = vmatpush.msra.mxu0 %v3010
        %4470 = vmatpush.msra.mxu0 %v2983
        %4471 = vmatpush.msra.mxu0 %v2956
        %4472 = vmatpush.msra.mxu0 %v2929
        %4473 = vmatpush.msra.mxu0 %v2902
        %4474 = vmatmul.f32.gmra.mxu0 %v3956
        %v4475 = vpop.f32.mrf.mxu0
        %v4476 = vadd.f32 0.0, %v4475
        %4477 = vdwg.mxu0
        %4478 = vmatpush.msra.mxu0 0.0
        %4479 = vmatpush.msra.mxu0 0.0
        %4480 = vmatpush.msra.mxu0 0.0
        %4481 = vmatpush.msra.mxu0 0.0
        %4482 = vmatpush.msra.mxu0 0.0
        %4483 = vmatpush.msra.mxu0 0.0
        %4484 = vmatpush.msra.mxu0 %v3146
        %4485 = vmatpush.msra.mxu0 %v3119
        %4486 = vmatpush.msra.mxu0 %v3092
        %4487 = vmatpush.msra.mxu0 %v3065
        %4488 = vmatpush.msra.mxu0 %v3038
        %4489 = vmatpush.msra.mxu0 %v3011
        %4490 = vmatpush.msra.mxu0 %v2984
        %4491 = vmatpush.msra.mxu0 %v2957
        %4492 = vmatpush.msra.mxu0 %v2930
        %4493 = vmatpush.msra.mxu0 %v2903
        %4494 = vmatmul.f32.gmra.mxu0 %v3956
        %v4495 = vpop.f32.mrf.mxu0
        %v4496 = vadd.f32 0.0, %v4495
        %4497 = vdwg.mxu0
        %v4512 = vperm.slane %v3939, 2
        %v4513 = vperm.slane %v3939, 6
        %v4514 = vperm.slane %v3940, 2
        %v4515 = vperm.slane %v3940, 6
        %v4516 = vperm.slane %v3941, 2
        %v4517 = vperm.slane %v3941, 6
        %v4518 = vperm.slane %v3942, 2
        %v4519 = vperm.slane %v3942, 6
        %v4520 = vperm.slane %v3943, 2
        %v4521 = vperm.slane %v3943, 6
        %v4522 = vperm.slane %v3944, 2
        %v4523 = vperm.slane %v3944, 6
        %v4524 = vperm.slane %v3945, 2
        %v4525 = vperm.slane %v3945, 6
        %v4526 = vperm.slane %v3946, 2
        %v4527 = vperm.slane %v3946, 6
        %v4528 = vperm.slane %v3947, 2
        %v4529 = vperm.slane %v3947, 6
        %v4530 = vperm.slane %v3948, 2
        %v4531 = vperm.slane %v3948, 6
        %v4532 = vperm.slane %v3949, 2
        %v4533 = vperm.slane %v3949, 6
        %v4534 = vperm.slane %v3950, 2
        %v4535 = vperm.slane %v3950, 6
        %v4536 = vperm.slane %v3951, 2
        %v4537 = vperm.slane %v3951, 6
        %v4538 = vperm.slane %v3952, 2
        %v4566 = vperm.slane %v4512, 2
        %v4567 = vperm.slane %v4513, 2
        %v4568 = vperm.slane %v4514, 2
        %v4569 = vperm.slane %v4515, 2
        %v4570 = vperm.slane %v4516, 2
        %v4571 = vperm.slane %v4517, 2
        %v4572 = vperm.slane %v4518, 2
        %v4573 = vperm.slane %v4519, 2
        %v4574 = vperm.slane %v4520, 2
        %v4575 = vperm.slane %v4521, 2
        %v4576 = vperm.slane %v4522, 2
        %v4577 = vperm.slane %v4523, 2
        %v4578 = vperm.slane %v4524, 2
        %v4579 = vperm.slane %v4525, 2
        %v4580 = vperm.slane %v4526, 2
        %v4581 = vperm.slane %v4527, 2
        %v4582 = vperm.slane %v4528, 2
        %v4583 = vperm.slane %v4529, 2
        %v4584 = vperm.slane %v4530, 2
        %v4585 = vperm.slane %v4531, 2
        %v4586 = vperm.slane %v4532, 2
        %v4587 = vperm.slane %v4533, 2
        %v4588 = vperm.slane %v4534, 2
        %v4589 = vperm.slane %v4535, 2
        %v4590 = vperm.slane %v4536, 2
        %v4591 = vperm.slane %v4537, 2
        %v4592 = vperm.slane %v4538, 2
        %v4593 = vmul.f32 %v4566, %v3976
        %v4594 = vmul.f32 %v4567, %v3996
        %v4595 = vmul.f32 %v4568, %v4016
        %v4596 = vmul.f32 %v4569, %v4036
        %v4597 = vmul.f32 %v4570, %v4056
        %v4598 = vmul.f32 %v4571, %v4076
        %v4599 = vmul.f32 %v4572, %v4096
        %v4600 = vmul.f32 %v4573, %v4116
        %v4601 = vmul.f32 %v4574, %v4136
        %v4602 = vmul.f32 %v4575, %v4156
        %v4603 = vmul.f32 %v4576, %v4176
        %v4604 = vmul.f32 %v4577, %v4196
        %v4605 = vmul.f32 %v4578, %v4216
        %v4606 = vmul.f32 %v4579, %v4236
        %v4607 = vmul.f32 %v4580, %v4256
        %v4608 = vmul.f32 %v4581, %v4276
        %v4609 = vmul.f32 %v4582, %v4296
        %v4610 = vmul.f32 %v4583, %v4316
        %v4611 = vmul.f32 %v4584, %v4336
        %v4612 = vmul.f32 %v4585, %v4356
        %v4613 = vmul.f32 %v4586, %v4376
        %v4614 = vmul.f32 %v4587, %v4396
        %v4615 = vmul.f32 %v4588, %v4416
        %v4616 = vmul.f32 %v4589, %v4436
        %v4617 = vmul.f32 %v4590, %v4456
        %v4618 = vmul.f32 %v4591, %v4476
        %v4619 = vmul.f32 %v4592, %v4496
        %v4620 = vadd.f32 %v3870, %v4593
        %v4621 = vadd.f32 %v3871, %v4594
        %v4622 = vadd.f32 %v3872, %v4595
        %v4623 = vadd.f32 %v3873, %v4596
        %v4624 = vadd.f32 %v3874, %v4597
        %v4625 = vadd.f32 %v3875, %v4598
        %v4626 = vadd.f32 %v3876, %v4599
        %v4627 = vadd.f32 %v3877, %v4600
        %v4628 = vadd.f32 %v3878, %v4601
        %v4629 = vadd.f32 %v3879, %v4602
        %v4630 = vadd.f32 %v3880, %v4603
        %v4631 = vadd.f32 %v3881, %v4604
        %v4632 = vadd.f32 %v3882, %v4605
        %v4633 = vadd.f32 %v3883, %v4606
        %v4634 = vadd.f32 %v3884, %v4607
        %v4635 = vadd.f32 %v3885, %v4608
        %v4636 = vadd.f32 %v3886, %v4609
        %v4637 = vadd.f32 %v3887, %v4610
        %v4638 = vadd.f32 %v3888, %v4611
        %v4639 = vadd.f32 %v3889, %v4612
        %v4640 = vadd.f32 %v3890, %v4613
        %v4641 = vadd.f32 %v3891, %v4614
        %v4642 = vadd.f32 %v3892, %v4615
        %v4643 = vadd.f32 %v3893, %v4616
        %v4644 = vadd.f32 %v3894, %v4617
        %v4645 = vadd.f32 %v3895, %v4618
        %v4646 = vadd.f32 %v3896, %v4619
        %v4647 = vsub.f32 2.0, %v413
        %v4648 = vsub.f32 2.0, %v414
        %v4649 = vsub.f32 2.0, %v415
        %v4650 = vsub.f32 2.0, %v416
        %v4651 = vsub.f32 2.0, %v417
        %v4652 = vsub.f32 2.0, %v418
        %v4653 = vsub.f32 2.0, %v419
        %v4654 = vsub.f32 2.0, %v420
        %v4655 = vsub.f32 2.0, %v421
        %v4656 = vsub.f32 2.0, %v422
        %v4657 = vsub.f32 2.0, %v423
        %v4658 = vsub.f32 2.0, %v424
        %v4659 = vsub.f32 2.0, %v425
        %v4660 = vsub.f32 2.0, %v426
        %v4661 = vand.u32 2147483647, %v4647
        %v4662 = vand.u32 2147483647, %v4648
        %v4663 = vand.u32 2147483647, %v4649
        %v4664 = vand.u32 2147483647, %v4650
        %v4665 = vand.u32 2147483647, %v4651
        %v4666 = vand.u32 2147483647, %v4652
        %v4667 = vand.u32 2147483647, %v4653
        %v4668 = vand.u32 2147483647, %v4654
        %v4669 = vand.u32 2147483647, %v4655
        %v4670 = vand.u32 2147483647, %v4656
        %v4671 = vand.u32 2147483647, %v4657
        %v4672 = vand.u32 2147483647, %v4658
        %v4673 = vand.u32 2147483647, %v4659
        %v4674 = vand.u32 2147483647, %v4660
        %v4675 = vsub.f32 1.0, %v4661
        %v4676 = vsub.f32 1.0, %v4662
        %v4677 = vsub.f32 1.0, %v4663
        %v4678 = vsub.f32 1.0, %v4664
        %v4679 = vsub.f32 1.0, %v4665
        %v4680 = vsub.f32 1.0, %v4666
        %v4681 = vsub.f32 1.0, %v4667
        %v4682 = vsub.f32 1.0, %v4668
        %v4683 = vsub.f32 1.0, %v4669
        %v4684 = vsub.f32 1.0, %v4670
        %v4685 = vsub.f32 1.0, %v4671
        %v4686 = vsub.f32 1.0, %v4672
        %v4687 = vsub.f32 1.0, %v4673
        %v4688 = vsub.f32 1.0, %v4674
        %v4689 = vmax.f32 %v4675, 0.0
        %v4690 = vmax.f32 %v4676, 0.0
        %v4691 = vmax.f32 %v4677, 0.0
        %v4692 = vmax.f32 %v4678, 0.0
        %v4693 = vmax.f32 %v4679, 0.0
        %v4694 = vmax.f32 %v4680, 0.0
        %v4695 = vmax.f32 %v4681, 0.0
        %v4696 = vmax.f32 %v4682, 0.0
        %v4697 = vmax.f32 %v4683, 0.0
        %v4698 = vmax.f32 %v4684, 0.0
        %v4699 = vmax.f32 %v4685, 0.0
        %v4700 = vmax.f32 %v4686, 0.0
        %v4701 = vmax.f32 %v4687, 0.0
        %v4702 = vmax.f32 %v4688, 0.0
        %s4703 = scalar_lea.vmem %s272, 8
        %v4704 = vld [vmem:[%s4703] sm:$0xf]
        %v4706 = vsel %vm3204, %v4704, 0
        %4708 = vmatpush.msra.mxu0 0.0
        %4709 = vmatpush.msra.mxu0 0.0
        %4710 = vmatpush.msra.mxu0 0.0
        %4711 = vmatpush.msra.mxu0 0.0
        %4712 = vmatpush.msra.mxu0 0.0
        %4713 = vmatpush.msra.mxu0 0.0
        %4714 = vmatpush.msra.mxu0 %v3120
        %4715 = vmatpush.msra.mxu0 %v3093
        %4716 = vmatpush.msra.mxu0 %v3066
        %4717 = vmatpush.msra.mxu0 %v3039
        %4718 = vmatpush.msra.mxu0 %v3012
        %4719 = vmatpush.msra.mxu0 %v2985
        %4720 = vmatpush.msra.mxu0 %v2958
        %4721 = vmatpush.msra.mxu0 %v2931
        %4722 = vmatpush.msra.mxu0 %v2904
        %4723 = vmatpush.msra.mxu0 %v2877
        %4724 = vmatmul.f32.gmra.mxu0 %v4706
        %v4725 = vpop.f32.mrf.mxu0
        %v4726 = vadd.f32 0.0, %v4725
        %4727 = vdwg.mxu0
        %4728 = vmatpush.msra.mxu0 0.0
        %4729 = vmatpush.msra.mxu0 0.0
        %4730 = vmatpush.msra.mxu0 0.0
        %4731 = vmatpush.msra.mxu0 0.0
        %4732 = vmatpush.msra.mxu0 0.0
        %4733 = vmatpush.msra.mxu0 0.0
        %4734 = vmatpush.msra.mxu0 %v3121
        %4735 = vmatpush.msra.mxu0 %v3094
        %4736 = vmatpush.msra.mxu0 %v3067
        %4737 = vmatpush.msra.mxu0 %v3040
        %4738 = vmatpush.msra.mxu0 %v3013
        %4739 = vmatpush.msra.mxu0 %v2986
        %4740 = vmatpush.msra.mxu0 %v2959
        %4741 = vmatpush.msra.mxu0 %v2932
        %4742 = vmatpush.msra.mxu0 %v2905
        %4743 = vmatpush.msra.mxu0 %v2878
        %4744 = vmatmul.f32.gmra.mxu0 %v4706
        %v4745 = vpop.f32.mrf.mxu0
        %v4746 = vadd.f32 0.0, %v4745
        %4747 = vdwg.mxu0
        %4748 = vmatpush.msra.mxu0 0.0
        %4749 = vmatpush.msra.mxu0 0.0
        %4750 = vmatpush.msra.mxu0 0.0
        %4751 = vmatpush.msra.mxu0 0.0
        %4752 = vmatpush.msra.mxu0 0.0
        %4753 = vmatpush.msra.mxu0 0.0
        %4754 = vmatpush.msra.mxu0 %v3122
        %4755 = vmatpush.msra.mxu0 %v3095
        %4756 = vmatpush.msra.mxu0 %v3068
        %4757 = vmatpush.msra.mxu0 %v3041
        %4758 = vmatpush.msra.mxu0 %v3014
        %4759 = vmatpush.msra.mxu0 %v2987
        %4760 = vmatpush.msra.mxu0 %v2960
        %4761 = vmatpush.msra.mxu0 %v2933
        %4762 = vmatpush.msra.mxu0 %v2906
        %4763 = vmatpush.msra.mxu0 %v2879
        %4764 = vmatmul.f32.gmra.mxu0 %v4706
        %v4765 = vpop.f32.mrf.mxu0
        %v4766 = vadd.f32 0.0, %v4765
        %4767 = vdwg.mxu0
        %4768 = vmatpush.msra.mxu0 0.0
        %4769 = vmatpush.msra.mxu0 0.0
        %4770 = vmatpush.msra.mxu0 0.0
        %4771 = vmatpush.msra.mxu0 0.0
        %4772 = vmatpush.msra.mxu0 0.0
        %4773 = vmatpush.msra.mxu0 0.0
        %4774 = vmatpush.msra.mxu0 %v3123
        %4775 = vmatpush.msra.mxu0 %v3096
        %4776 = vmatpush.msra.mxu0 %v3069
        %4777 = vmatpush.msra.mxu0 %v3042
        %4778 = vmatpush.msra.mxu0 %v3015
        %4779 = vmatpush.msra.mxu0 %v2988
        %4780 = vmatpush.msra.mxu0 %v2961
        %4781 = vmatpush.msra.mxu0 %v2934
        %4782 = vmatpush.msra.mxu0 %v2907
        %4783 = vmatpush.msra.mxu0 %v2880
        %4784 = vmatmul.f32.gmra.mxu0 %v4706
        %v4785 = vpop.f32.mrf.mxu0
        %v4786 = vadd.f32 0.0, %v4785
        %4787 = vdwg.mxu0
        %4788 = vmatpush.msra.mxu0 0.0
        %4789 = vmatpush.msra.mxu0 0.0
        %4790 = vmatpush.msra.mxu0 0.0
        %4791 = vmatpush.msra.mxu0 0.0
        %4792 = vmatpush.msra.mxu0 0.0
        %4793 = vmatpush.msra.mxu0 0.0
        %4794 = vmatpush.msra.mxu0 %v3124
        %4795 = vmatpush.msra.mxu0 %v3097
        %4796 = vmatpush.msra.mxu0 %v3070
        %4797 = vmatpush.msra.mxu0 %v3043
        %4798 = vmatpush.msra.mxu0 %v3016
        %4799 = vmatpush.msra.mxu0 %v2989
        %4800 = vmatpush.msra.mxu0 %v2962
        %4801 = vmatpush.msra.mxu0 %v2935
        %4802 = vmatpush.msra.mxu0 %v2908
        %4803 = vmatpush.msra.mxu0 %v2881
        %4804 = vmatmul.f32.gmra.mxu0 %v4706
        %v4805 = vpop.f32.mrf.mxu0
        %v4806 = vadd.f32 0.0, %v4805
        %4807 = vdwg.mxu0
        %4808 = vmatpush.msra.mxu0 0.0
        %4809 = vmatpush.msra.mxu0 0.0
        %4810 = vmatpush.msra.mxu0 0.0
        %4811 = vmatpush.msra.mxu0 0.0
        %4812 = vmatpush.msra.mxu0 0.0
        %4813 = vmatpush.msra.mxu0 0.0
        %4814 = vmatpush.msra.mxu0 %v3125
        %4815 = vmatpush.msra.mxu0 %v3098
        %4816 = vmatpush.msra.mxu0 %v3071
        %4817 = vmatpush.msra.mxu0 %v3044
        %4818 = vmatpush.msra.mxu0 %v3017
        %4819 = vmatpush.msra.mxu0 %v2990
        %4820 = vmatpush.msra.mxu0 %v2963
        %4821 = vmatpush.msra.mxu0 %v2936
        %4822 = vmatpush.msra.mxu0 %v2909
        %4823 = vmatpush.msra.mxu0 %v2882
        %4824 = vmatmul.f32.gmra.mxu0 %v4706
        %v4825 = vpop.f32.mrf.mxu0
        %v4826 = vadd.f32 0.0, %v4825
        %4827 = vdwg.mxu0
        %4828 = vmatpush.msra.mxu0 0.0
        %4829 = vmatpush.msra.mxu0 0.0
        %4830 = vmatpush.msra.mxu0 0.0
        %4831 = vmatpush.msra.mxu0 0.0
        %4832 = vmatpush.msra.mxu0 0.0
        %4833 = vmatpush.msra.mxu0 0.0
        %4834 = vmatpush.msra.mxu0 %v3126
        %4835 = vmatpush.msra.mxu0 %v3099
        %4836 = vmatpush.msra.mxu0 %v3072
        %4837 = vmatpush.msra.mxu0 %v3045
        %4838 = vmatpush.msra.mxu0 %v3018
        %4839 = vmatpush.msra.mxu0 %v2991
        %4840 = vmatpush.msra.mxu0 %v2964
        %4841 = vmatpush.msra.mxu0 %v2937
        %4842 = vmatpush.msra.mxu0 %v2910
        %4843 = vmatpush.msra.mxu0 %v2883
        %4844 = vmatmul.f32.gmra.mxu0 %v4706
        %v4845 = vpop.f32.mrf.mxu0
        %v4846 = vadd.f32 0.0, %v4845
        %4847 = vdwg.mxu0
        %4848 = vmatpush.msra.mxu0 0.0
        %4849 = vmatpush.msra.mxu0 0.0
        %4850 = vmatpush.msra.mxu0 0.0
        %4851 = vmatpush.msra.mxu0 0.0
        %4852 = vmatpush.msra.mxu0 0.0
        %4853 = vmatpush.msra.mxu0 0.0
        %4854 = vmatpush.msra.mxu0 %v3127
        %4855 = vmatpush.msra.mxu0 %v3100
        %4856 = vmatpush.msra.mxu0 %v3073
        %4857 = vmatpush.msra.mxu0 %v3046
        %4858 = vmatpush.msra.mxu0 %v3019
        %4859 = vmatpush.msra.mxu0 %v2992
        %4860 = vmatpush.msra.mxu0 %v2965
        %4861 = vmatpush.msra.mxu0 %v2938
        %4862 = vmatpush.msra.mxu0 %v2911
        %4863 = vmatpush.msra.mxu0 %v2884
        %4864 = vmatmul.f32.gmra.mxu0 %v4706
        %v4865 = vpop.f32.mrf.mxu0
        %v4866 = vadd.f32 0.0, %v4865
        %4867 = vdwg.mxu0
        %4868 = vmatpush.msra.mxu0 0.0
        %4869 = vmatpush.msra.mxu0 0.0
        %4870 = vmatpush.msra.mxu0 0.0
        %4871 = vmatpush.msra.mxu0 0.0
        %4872 = vmatpush.msra.mxu0 0.0
        %4873 = vmatpush.msra.mxu0 0.0
        %4874 = vmatpush.msra.mxu0 %v3128
        %4875 = vmatpush.msra.mxu0 %v3101
        %4876 = vmatpush.msra.mxu0 %v3074
        %4877 = vmatpush.msra.mxu0 %v3047
        %4878 = vmatpush.msra.mxu0 %v3020
        %4879 = vmatpush.msra.mxu0 %v2993
        %4880 = vmatpush.msra.mxu0 %v2966
        %4881 = vmatpush.msra.mxu0 %v2939
        %4882 = vmatpush.msra.mxu0 %v2912
        %4883 = vmatpush.msra.mxu0 %v2885
        %4884 = vmatmul.f32.gmra.mxu0 %v4706
        %v4885 = vpop.f32.mrf.mxu0
        %v4886 = vadd.f32 0.0, %v4885
        %4887 = vdwg.mxu0
        %4888 = vmatpush.msra.mxu0 0.0
        %4889 = vmatpush.msra.mxu0 0.0
        %4890 = vmatpush.msra.mxu0 0.0
        %4891 = vmatpush.msra.mxu0 0.0
        %4892 = vmatpush.msra.mxu0 0.0
        %4893 = vmatpush.msra.mxu0 0.0
        %4894 = vmatpush.msra.mxu0 %v3129
        %4895 = vmatpush.msra.mxu0 %v3102
        %4896 = vmatpush.msra.mxu0 %v3075
        %4897 = vmatpush.msra.mxu0 %v3048
        %4898 = vmatpush.msra.mxu0 %v3021
        %4899 = vmatpush.msra.mxu0 %v2994
        %4900 = vmatpush.msra.mxu0 %v2967
        %4901 = vmatpush.msra.mxu0 %v2940
        %4902 = vmatpush.msra.mxu0 %v2913
        %4903 = vmatpush.msra.mxu0 %v2886
        %4904 = vmatmul.f32.gmra.mxu0 %v4706
        %v4905 = vpop.f32.mrf.mxu0
        %v4906 = vadd.f32 0.0, %v4905
        %4907 = vdwg.mxu0
        %4908 = vmatpush.msra.mxu0 0.0
        %4909 = vmatpush.msra.mxu0 0.0
        %4910 = vmatpush.msra.mxu0 0.0
        %4911 = vmatpush.msra.mxu0 0.0
        %4912 = vmatpush.msra.mxu0 0.0
        %4913 = vmatpush.msra.mxu0 0.0
        %4914 = vmatpush.msra.mxu0 %v3130
        %4915 = vmatpush.msra.mxu0 %v3103
        %4916 = vmatpush.msra.mxu0 %v3076
        %4917 = vmatpush.msra.mxu0 %v3049
        %4918 = vmatpush.msra.mxu0 %v3022
        %4919 = vmatpush.msra.mxu0 %v2995
        %4920 = vmatpush.msra.mxu0 %v2968
        %4921 = vmatpush.msra.mxu0 %v2941
        %4922 = vmatpush.msra.mxu0 %v2914
        %4923 = vmatpush.msra.mxu0 %v2887
        %4924 = vmatmul.f32.gmra.mxu0 %v4706
        %v4925 = vpop.f32.mrf.mxu0
        %v4926 = vadd.f32 0.0, %v4925
        %4927 = vdwg.mxu0
        %4928 = vmatpush.msra.mxu0 0.0
        %4929 = vmatpush.msra.mxu0 0.0
        %4930 = vmatpush.msra.mxu0 0.0
        %4931 = vmatpush.msra.mxu0 0.0
        %4932 = vmatpush.msra.mxu0 0.0
        %4933 = vmatpush.msra.mxu0 0.0
        %4934 = vmatpush.msra.mxu0 %v3131
        %4935 = vmatpush.msra.mxu0 %v3104
        %4936 = vmatpush.msra.mxu0 %v3077
        %4937 = vmatpush.msra.mxu0 %v3050
        %4938 = vmatpush.msra.mxu0 %v3023
        %4939 = vmatpush.msra.mxu0 %v2996
        %4940 = vmatpush.msra.mxu0 %v2969
        %4941 = vmatpush.msra.mxu0 %v2942
        %4942 = vmatpush.msra.mxu0 %v2915
        %4943 = vmatpush.msra.mxu0 %v2888
        %4944 = vmatmul.f32.gmra.mxu0 %v4706
        %v4945 = vpop.f32.mrf.mxu0
        %v4946 = vadd.f32 0.0, %v4945
        %4947 = vdwg.mxu0
        %4948 = vmatpush.msra.mxu0 0.0
        %4949 = vmatpush.msra.mxu0 0.0
        %4950 = vmatpush.msra.mxu0 0.0
        %4951 = vmatpush.msra.mxu0 0.0
        %4952 = vmatpush.msra.mxu0 0.0
        %4953 = vmatpush.msra.mxu0 0.0
        %4954 = vmatpush.msra.mxu0 %v3132
        %4955 = vmatpush.msra.mxu0 %v3105
        %4956 = vmatpush.msra.mxu0 %v3078
        %4957 = vmatpush.msra.mxu0 %v3051
        %4958 = vmatpush.msra.mxu0 %v3024
        %4959 = vmatpush.msra.mxu0 %v2997
        %4960 = vmatpush.msra.mxu0 %v2970
        %4961 = vmatpush.msra.mxu0 %v2943
        %4962 = vmatpush.msra.mxu0 %v2916
        %4963 = vmatpush.msra.mxu0 %v2889
        %4964 = vmatmul.f32.gmra.mxu0 %v4706
        %v4965 = vpop.f32.mrf.mxu0
        %v4966 = vadd.f32 0.0, %v4965
        %4967 = vdwg.mxu0
        %4968 = vmatpush.msra.mxu0 0.0
        %4969 = vmatpush.msra.mxu0 0.0
        %4970 = vmatpush.msra.mxu0 0.0
        %4971 = vmatpush.msra.mxu0 0.0
        %4972 = vmatpush.msra.mxu0 0.0
        %4973 = vmatpush.msra.mxu0 0.0
        %4974 = vmatpush.msra.mxu0 %v3133
        %4975 = vmatpush.msra.mxu0 %v3106
        %4976 = vmatpush.msra.mxu0 %v3079
        %4977 = vmatpush.msra.mxu0 %v3052
        %4978 = vmatpush.msra.mxu0 %v3025
        %4979 = vmatpush.msra.mxu0 %v2998
        %4980 = vmatpush.msra.mxu0 %v2971
        %4981 = vmatpush.msra.mxu0 %v2944
        %4982 = vmatpush.msra.mxu0 %v2917
        %4983 = vmatpush.msra.mxu0 %v2890
        %4984 = vmatmul.f32.gmra.mxu0 %v4706
        %v4985 = vpop.f32.mrf.mxu0
        %v4986 = vadd.f32 0.0, %v4985
        %4987 = vdwg.mxu0
        %4988 = vmatpush.msra.mxu0 0.0
        %4989 = vmatpush.msra.mxu0 0.0
        %4990 = vmatpush.msra.mxu0 0.0
        %4991 = vmatpush.msra.mxu0 0.0
        %4992 = vmatpush.msra.mxu0 0.0
        %4993 = vmatpush.msra.mxu0 0.0
        %4994 = vmatpush.msra.mxu0 %v3134
        %4995 = vmatpush.msra.mxu0 %v3107
        %4996 = vmatpush.msra.mxu0 %v3080
        %4997 = vmatpush.msra.mxu0 %v3053
        %4998 = vmatpush.msra.mxu0 %v3026
        %4999 = vmatpush.msra.mxu0 %v2999
        %5000 = vmatpush.msra.mxu0 %v2972
        %5001 = vmatpush.msra.mxu0 %v2945
        %5002 = vmatpush.msra.mxu0 %v2918
        %5003 = vmatpush.msra.mxu0 %v2891
        %5004 = vmatmul.f32.gmra.mxu0 %v4706
        %v5005 = vpop.f32.mrf.mxu0
        %v5006 = vadd.f32 0.0, %v5005
        %5007 = vdwg.mxu0
        %5008 = vmatpush.msra.mxu0 0.0
        %5009 = vmatpush.msra.mxu0 0.0
        %5010 = vmatpush.msra.mxu0 0.0
        %5011 = vmatpush.msra.mxu0 0.0
        %5012 = vmatpush.msra.mxu0 0.0
        %5013 = vmatpush.msra.mxu0 0.0
        %5014 = vmatpush.msra.mxu0 %v3135
        %5015 = vmatpush.msra.mxu0 %v3108
        %5016 = vmatpush.msra.mxu0 %v3081
        %5017 = vmatpush.msra.mxu0 %v3054
        %5018 = vmatpush.msra.mxu0 %v3027
        %5019 = vmatpush.msra.mxu0 %v3000
        %5020 = vmatpush.msra.mxu0 %v2973
        %5021 = vmatpush.msra.mxu0 %v2946
        %5022 = vmatpush.msra.mxu0 %v2919
        %5023 = vmatpush.msra.mxu0 %v2892
        %5024 = vmatmul.f32.gmra.mxu0 %v4706
        %v5025 = vpop.f32.mrf.mxu0
        %v5026 = vadd.f32 0.0, %v5025
        %5027 = vdwg.mxu0
        %5028 = vmatpush.msra.mxu0 0.0
        %5029 = vmatpush.msra.mxu0 0.0
        %5030 = vmatpush.msra.mxu0 0.0
        %5031 = vmatpush.msra.mxu0 0.0
        %5032 = vmatpush.msra.mxu0 0.0
        %5033 = vmatpush.msra.mxu0 0.0
        %5034 = vmatpush.msra.mxu0 %v3136
        %5035 = vmatpush.msra.mxu0 %v3109
        %5036 = vmatpush.msra.mxu0 %v3082
        %5037 = vmatpush.msra.mxu0 %v3055
        %5038 = vmatpush.msra.mxu0 %v3028
        %5039 = vmatpush.msra.mxu0 %v3001
        %5040 = vmatpush.msra.mxu0 %v2974
        %5041 = vmatpush.msra.mxu0 %v2947
        %5042 = vmatpush.msra.mxu0 %v2920
        %5043 = vmatpush.msra.mxu0 %v2893
        %5044 = vmatmul.f32.gmra.mxu0 %v4706
        %v5045 = vpop.f32.mrf.mxu0
        %v5046 = vadd.f32 0.0, %v5045
        %5047 = vdwg.mxu0
        %5048 = vmatpush.msra.mxu0 0.0
        %5049 = vmatpush.msra.mxu0 0.0
        %5050 = vmatpush.msra.mxu0 0.0
        %5051 = vmatpush.msra.mxu0 0.0
        %5052 = vmatpush.msra.mxu0 0.0
        %5053 = vmatpush.msra.mxu0 0.0
        %5054 = vmatpush.msra.mxu0 %v3137
        %5055 = vmatpush.msra.mxu0 %v3110
        %5056 = vmatpush.msra.mxu0 %v3083
        %5057 = vmatpush.msra.mxu0 %v3056
        %5058 = vmatpush.msra.mxu0 %v3029
        %5059 = vmatpush.msra.mxu0 %v3002
        %5060 = vmatpush.msra.mxu0 %v2975
        %5061 = vmatpush.msra.mxu0 %v2948
        %5062 = vmatpush.msra.mxu0 %v2921
        %5063 = vmatpush.msra.mxu0 %v2894
        %5064 = vmatmul.f32.gmra.mxu0 %v4706
        %v5065 = vpop.f32.mrf.mxu0
        %v5066 = vadd.f32 0.0, %v5065
        %5067 = vdwg.mxu0
        %5068 = vmatpush.msra.mxu0 0.0
        %5069 = vmatpush.msra.mxu0 0.0
        %5070 = vmatpush.msra.mxu0 0.0
        %5071 = vmatpush.msra.mxu0 0.0
        %5072 = vmatpush.msra.mxu0 0.0
        %5073 = vmatpush.msra.mxu0 0.0
        %5074 = vmatpush.msra.mxu0 %v3138
        %5075 = vmatpush.msra.mxu0 %v3111
        %5076 = vmatpush.msra.mxu0 %v3084
        %5077 = vmatpush.msra.mxu0 %v3057
        %5078 = vmatpush.msra.mxu0 %v3030
        %5079 = vmatpush.msra.mxu0 %v3003
        %5080 = vmatpush.msra.mxu0 %v2976
        %5081 = vmatpush.msra.mxu0 %v2949
        %5082 = vmatpush.msra.mxu0 %v2922
        %5083 = vmatpush.msra.mxu0 %v2895
        %5084 = vmatmul.f32.gmra.mxu0 %v4706
        %v5085 = vpop.f32.mrf.mxu0
        %v5086 = vadd.f32 0.0, %v5085
        %5087 = vdwg.mxu0
        %5088 = vmatpush.msra.mxu0 0.0
        %5089 = vmatpush.msra.mxu0 0.0
        %5090 = vmatpush.msra.mxu0 0.0
        %5091 = vmatpush.msra.mxu0 0.0
        %5092 = vmatpush.msra.mxu0 0.0
        %5093 = vmatpush.msra.mxu0 0.0
        %5094 = vmatpush.msra.mxu0 %v3139
        %5095 = vmatpush.msra.mxu0 %v3112
        %5096 = vmatpush.msra.mxu0 %v3085
        %5097 = vmatpush.msra.mxu0 %v3058
        %5098 = vmatpush.msra.mxu0 %v3031
        %5099 = vmatpush.msra.mxu0 %v3004
        %5100 = vmatpush.msra.mxu0 %v2977
        %5101 = vmatpush.msra.mxu0 %v2950
        %5102 = vmatpush.msra.mxu0 %v2923
        %5103 = vmatpush.msra.mxu0 %v2896
        %5104 = vmatmul.f32.gmra.mxu0 %v4706
        %v5105 = vpop.f32.mrf.mxu0
        %v5106 = vadd.f32 0.0, %v5105
        %5107 = vdwg.mxu0
        %5108 = vmatpush.msra.mxu0 0.0
        %5109 = vmatpush.msra.mxu0 0.0
        %5110 = vmatpush.msra.mxu0 0.0
        %5111 = vmatpush.msra.mxu0 0.0
        %5112 = vmatpush.msra.mxu0 0.0
        %5113 = vmatpush.msra.mxu0 0.0
        %5114 = vmatpush.msra.mxu0 %v3140
        %5115 = vmatpush.msra.mxu0 %v3113
        %5116 = vmatpush.msra.mxu0 %v3086
        %5117 = vmatpush.msra.mxu0 %v3059
        %5118 = vmatpush.msra.mxu0 %v3032
        %5119 = vmatpush.msra.mxu0 %v3005
        %5120 = vmatpush.msra.mxu0 %v2978
        %5121 = vmatpush.msra.mxu0 %v2951
        %5122 = vmatpush.msra.mxu0 %v2924
        %5123 = vmatpush.msra.mxu0 %v2897
        %5124 = vmatmul.f32.gmra.mxu0 %v4706
        %v5125 = vpop.f32.mrf.mxu0
        %v5126 = vadd.f32 0.0, %v5125
        %5127 = vdwg.mxu0
        %5128 = vmatpush.msra.mxu0 0.0
        %5129 = vmatpush.msra.mxu0 0.0
        %5130 = vmatpush.msra.mxu0 0.0
        %5131 = vmatpush.msra.mxu0 0.0
        %5132 = vmatpush.msra.mxu0 0.0
        %5133 = vmatpush.msra.mxu0 0.0
        %5134 = vmatpush.msra.mxu0 %v3141
        %5135 = vmatpush.msra.mxu0 %v3114
        %5136 = vmatpush.msra.mxu0 %v3087
        %5137 = vmatpush.msra.mxu0 %v3060
        %5138 = vmatpush.msra.mxu0 %v3033
        %5139 = vmatpush.msra.mxu0 %v3006
        %5140 = vmatpush.msra.mxu0 %v2979
        %5141 = vmatpush.msra.mxu0 %v2952
        %5142 = vmatpush.msra.mxu0 %v2925
        %5143 = vmatpush.msra.mxu0 %v2898
        %5144 = vmatmul.f32.gmra.mxu0 %v4706
        %v5145 = vpop.f32.mrf.mxu0
        %v5146 = vadd.f32 0.0, %v5145
        %5147 = vdwg.mxu0
        %5148 = vmatpush.msra.mxu0 0.0
        %5149 = vmatpush.msra.mxu0 0.0
        %5150 = vmatpush.msra.mxu0 0.0
        %5151 = vmatpush.msra.mxu0 0.0
        %5152 = vmatpush.msra.mxu0 0.0
        %5153 = vmatpush.msra.mxu0 0.0
        %5154 = vmatpush.msra.mxu0 %v3142
        %5155 = vmatpush.msra.mxu0 %v3115
        %5156 = vmatpush.msra.mxu0 %v3088
        %5157 = vmatpush.msra.mxu0 %v3061
        %5158 = vmatpush.msra.mxu0 %v3034
        %5159 = vmatpush.msra.mxu0 %v3007
        %5160 = vmatpush.msra.mxu0 %v2980
        %5161 = vmatpush.msra.mxu0 %v2953
        %5162 = vmatpush.msra.mxu0 %v2926
        %5163 = vmatpush.msra.mxu0 %v2899
        %5164 = vmatmul.f32.gmra.mxu0 %v4706
        %v5165 = vpop.f32.mrf.mxu0
        %v5166 = vadd.f32 0.0, %v5165
        %5167 = vdwg.mxu0
        %5168 = vmatpush.msra.mxu0 0.0
        %5169 = vmatpush.msra.mxu0 0.0
        %5170 = vmatpush.msra.mxu0 0.0
        %5171 = vmatpush.msra.mxu0 0.0
        %5172 = vmatpush.msra.mxu0 0.0
        %5173 = vmatpush.msra.mxu0 0.0
        %5174 = vmatpush.msra.mxu0 %v3143
        %5175 = vmatpush.msra.mxu0 %v3116
        %5176 = vmatpush.msra.mxu0 %v3089
        %5177 = vmatpush.msra.mxu0 %v3062
        %5178 = vmatpush.msra.mxu0 %v3035
        %5179 = vmatpush.msra.mxu0 %v3008
        %5180 = vmatpush.msra.mxu0 %v2981
        %5181 = vmatpush.msra.mxu0 %v2954
        %5182 = vmatpush.msra.mxu0 %v2927
        %5183 = vmatpush.msra.mxu0 %v2900
        %5184 = vmatmul.f32.gmra.mxu0 %v4706
        %v5185 = vpop.f32.mrf.mxu0
        %v5186 = vadd.f32 0.0, %v5185
        %5187 = vdwg.mxu0
        %5188 = vmatpush.msra.mxu0 0.0
        %5189 = vmatpush.msra.mxu0 0.0
        %5190 = vmatpush.msra.mxu0 0.0
        %5191 = vmatpush.msra.mxu0 0.0
        %5192 = vmatpush.msra.mxu0 0.0
        %5193 = vmatpush.msra.mxu0 0.0
        %5194 = vmatpush.msra.mxu0 %v3144
        %5195 = vmatpush.msra.mxu0 %v3117
        %5196 = vmatpush.msra.mxu0 %v3090
        %5197 = vmatpush.msra.mxu0 %v3063
        %5198 = vmatpush.msra.mxu0 %v3036
        %5199 = vmatpush.msra.mxu0 %v3009
        %5200 = vmatpush.msra.mxu0 %v2982
        %5201 = vmatpush.msra.mxu0 %v2955
        %5202 = vmatpush.msra.mxu0 %v2928
        %5203 = vmatpush.msra.mxu0 %v2901
        %5204 = vmatmul.f32.gmra.mxu0 %v4706
        %v5205 = vpop.f32.mrf.mxu0
        %v5206 = vadd.f32 0.0, %v5205
        %5207 = vdwg.mxu0
        %5208 = vmatpush.msra.mxu0 0.0
        %5209 = vmatpush.msra.mxu0 0.0
        %5210 = vmatpush.msra.mxu0 0.0
        %5211 = vmatpush.msra.mxu0 0.0
        %5212 = vmatpush.msra.mxu0 0.0
        %5213 = vmatpush.msra.mxu0 0.0
        %5214 = vmatpush.msra.mxu0 %v3145
        %5215 = vmatpush.msra.mxu0 %v3118
        %5216 = vmatpush.msra.mxu0 %v3091
        %5217 = vmatpush.msra.mxu0 %v3064
        %5218 = vmatpush.msra.mxu0 %v3037
        %5219 = vmatpush.msra.mxu0 %v3010
        %5220 = vmatpush.msra.mxu0 %v2983
        %5221 = vmatpush.msra.mxu0 %v2956
        %5222 = vmatpush.msra.mxu0 %v2929
        %5223 = vmatpush.msra.mxu0 %v2902
        %5224 = vmatmul.f32.gmra.mxu0 %v4706
        %v5225 = vpop.f32.mrf.mxu0
        %v5226 = vadd.f32 0.0, %v5225
        %5227 = vdwg.mxu0
        %5228 = vmatpush.msra.mxu0 0.0
        %5229 = vmatpush.msra.mxu0 0.0
        %5230 = vmatpush.msra.mxu0 0.0
        %5231 = vmatpush.msra.mxu0 0.0
        %5232 = vmatpush.msra.mxu0 0.0
        %5233 = vmatpush.msra.mxu0 0.0
        %5234 = vmatpush.msra.mxu0 %v3146
        %5235 = vmatpush.msra.mxu0 %v3119
        %5236 = vmatpush.msra.mxu0 %v3092
        %5237 = vmatpush.msra.mxu0 %v3065
        %5238 = vmatpush.msra.mxu0 %v3038
        %5239 = vmatpush.msra.mxu0 %v3011
        %5240 = vmatpush.msra.mxu0 %v2984
        %5241 = vmatpush.msra.mxu0 %v2957
        %5242 = vmatpush.msra.mxu0 %v2930
        %5243 = vmatpush.msra.mxu0 %v2903
        %5244 = vmatmul.f32.gmra.mxu0 %v4706
        %v5245 = vpop.f32.mrf.mxu0
        %v5246 = vadd.f32 0.0, %v5245
        %5247 = vdwg.mxu0
        %v5262 = vperm.slane %v4689, 2
        %v5263 = vperm.slane %v4689, 6
        %v5264 = vperm.slane %v4690, 2
        %v5265 = vperm.slane %v4690, 6
        %v5266 = vperm.slane %v4691, 2
        %v5267 = vperm.slane %v4691, 6
        %v5268 = vperm.slane %v4692, 2
        %v5269 = vperm.slane %v4692, 6
        %v5270 = vperm.slane %v4693, 2
        %v5271 = vperm.slane %v4693, 6
        %v5272 = vperm.slane %v4694, 2
        %v5273 = vperm.slane %v4694, 6
        %v5274 = vperm.slane %v4695, 2
        %v5275 = vperm.slane %v4695, 6
        %v5276 = vperm.slane %v4696, 2
        %v5277 = vperm.slane %v4696, 6
        %v5278 = vperm.slane %v4697, 2
        %v5279 = vperm.slane %v4697, 6
        %v5280 = vperm.slane %v4698, 2
        %v5281 = vperm.slane %v4698, 6
        %v5282 = vperm.slane %v4699, 2
        %v5283 = vperm.slane %v4699, 6
        %v5284 = vperm.slane %v4700, 2
        %v5285 = vperm.slane %v4700, 6
        %v5286 = vperm.slane %v4701, 2
        %v5287 = vperm.slane %v4701, 6
        %v5288 = vperm.slane %v4702, 2
        %v5316 = vperm.slane %v5262, 2
        %v5317 = vperm.slane %v5263, 2
        %v5318 = vperm.slane %v5264, 2
        %v5319 = vperm.slane %v5265, 2
        %v5320 = vperm.slane %v5266, 2
        %v5321 = vperm.slane %v5267, 2
        %v5322 = vperm.slane %v5268, 2
        %v5323 = vperm.slane %v5269, 2
        %v5324 = vperm.slane %v5270, 2
        %v5325 = vperm.slane %v5271, 2
        %v5326 = vperm.slane %v5272, 2
        %v5327 = vperm.slane %v5273, 2
        %v5328 = vperm.slane %v5274, 2
        %v5329 = vperm.slane %v5275, 2
        %v5330 = vperm.slane %v5276, 2
        %v5331 = vperm.slane %v5277, 2
        %v5332 = vperm.slane %v5278, 2
        %v5333 = vperm.slane %v5279, 2
        %v5334 = vperm.slane %v5280, 2
        %v5335 = vperm.slane %v5281, 2
        %v5336 = vperm.slane %v5282, 2
        %v5337 = vperm.slane %v5283, 2
        %v5338 = vperm.slane %v5284, 2
        %v5339 = vperm.slane %v5285, 2
        %v5340 = vperm.slane %v5286, 2
        %v5341 = vperm.slane %v5287, 2
        %v5342 = vperm.slane %v5288, 2
        %v5343 = vmul.f32 %v5316, %v4726
        %v5344 = vmul.f32 %v5317, %v4746
        %v5345 = vmul.f32 %v5318, %v4766
        %v5346 = vmul.f32 %v5319, %v4786
        %v5347 = vmul.f32 %v5320, %v4806
        %v5348 = vmul.f32 %v5321, %v4826
        %v5349 = vmul.f32 %v5322, %v4846
        %v5350 = vmul.f32 %v5323, %v4866
        %v5351 = vmul.f32 %v5324, %v4886
        %v5352 = vmul.f32 %v5325, %v4906
        %v5353 = vmul.f32 %v5326, %v4926
        %v5354 = vmul.f32 %v5327, %v4946
        %v5355 = vmul.f32 %v5328, %v4966
        %v5356 = vmul.f32 %v5329, %v4986
        %v5357 = vmul.f32 %v5330, %v5006
        %v5358 = vmul.f32 %v5331, %v5026
        %v5359 = vmul.f32 %v5332, %v5046
        %v5360 = vmul.f32 %v5333, %v5066
        %v5361 = vmul.f32 %v5334, %v5086
        %v5362 = vmul.f32 %v5335, %v5106
        %v5363 = vmul.f32 %v5336, %v5126
        %v5364 = vmul.f32 %v5337, %v5146
        %v5365 = vmul.f32 %v5338, %v5166
        %v5366 = vmul.f32 %v5339, %v5186
        %v5367 = vmul.f32 %v5340, %v5206
        %v5368 = vmul.f32 %v5341, %v5226
        %v5369 = vmul.f32 %v5342, %v5246
        %v5370 = vadd.f32 %v4620, %v5343
        %v5371 = vadd.f32 %v4621, %v5344
        %v5372 = vadd.f32 %v4622, %v5345
        %v5373 = vadd.f32 %v4623, %v5346
        %v5374 = vadd.f32 %v4624, %v5347
        %v5375 = vadd.f32 %v4625, %v5348
        %v5376 = vadd.f32 %v4626, %v5349
        %v5377 = vadd.f32 %v4627, %v5350
        %v5378 = vadd.f32 %v4628, %v5351
        %v5379 = vadd.f32 %v4629, %v5352
        %v5380 = vadd.f32 %v4630, %v5353
        %v5381 = vadd.f32 %v4631, %v5354
        %v5382 = vadd.f32 %v4632, %v5355
        %v5383 = vadd.f32 %v4633, %v5356
        %v5384 = vadd.f32 %v4634, %v5357
        %v5385 = vadd.f32 %v4635, %v5358
        %v5386 = vadd.f32 %v4636, %v5359
        %v5387 = vadd.f32 %v4637, %v5360
        %v5388 = vadd.f32 %v4638, %v5361
        %v5389 = vadd.f32 %v4639, %v5362
        %v5390 = vadd.f32 %v4640, %v5363
        %v5391 = vadd.f32 %v4641, %v5364
        %v5392 = vadd.f32 %v4642, %v5365
        %v5393 = vadd.f32 %v4643, %v5366
        %v5394 = vadd.f32 %v4644, %v5367
        %v5395 = vadd.f32 %v4645, %v5368
        %v5396 = vadd.f32 %v4646, %v5369
        %v5397 = vsub.f32 3.0, %v413
        %v5398 = vsub.f32 3.0, %v414
        %v5399 = vsub.f32 3.0, %v415
        %v5400 = vsub.f32 3.0, %v416
        %v5401 = vsub.f32 3.0, %v417
        %v5402 = vsub.f32 3.0, %v418
        %v5403 = vsub.f32 3.0, %v419
        %v5404 = vsub.f32 3.0, %v420
        %v5405 = vsub.f32 3.0, %v421
        %v5406 = vsub.f32 3.0, %v422
        %v5407 = vsub.f32 3.0, %v423
        %v5408 = vsub.f32 3.0, %v424
        %v5409 = vsub.f32 3.0, %v425
        %v5410 = vsub.f32 3.0, %v426
        %v5411 = vand.u32 2147483647, %v5397
        %v5412 = vand.u32 2147483647, %v5398
        %v5413 = vand.u32 2147483647, %v5399
        %v5414 = vand.u32 2147483647, %v5400
        %v5415 = vand.u32 2147483647, %v5401
        %v5416 = vand.u32 2147483647, %v5402
        %v5417 = vand.u32 2147483647, %v5403
        %v5418 = vand.u32 2147483647, %v5404
        %v5419 = vand.u32 2147483647, %v5405
        %v5420 = vand.u32 2147483647, %v5406
        %v5421 = vand.u32 2147483647, %v5407
        %v5422 = vand.u32 2147483647, %v5408
        %v5423 = vand.u32 2147483647, %v5409
        %v5424 = vand.u32 2147483647, %v5410
        %v5425 = vsub.f32 1.0, %v5411
        %v5426 = vsub.f32 1.0, %v5412
        %v5427 = vsub.f32 1.0, %v5413
        %v5428 = vsub.f32 1.0, %v5414
        %v5429 = vsub.f32 1.0, %v5415
        %v5430 = vsub.f32 1.0, %v5416
        %v5431 = vsub.f32 1.0, %v5417
        %v5432 = vsub.f32 1.0, %v5418
        %v5433 = vsub.f32 1.0, %v5419
        %v5434 = vsub.f32 1.0, %v5420
        %v5435 = vsub.f32 1.0, %v5421
        %v5436 = vsub.f32 1.0, %v5422
        %v5437 = vsub.f32 1.0, %v5423
        %v5438 = vsub.f32 1.0, %v5424
        %v5439 = vmax.f32 %v5425, 0.0
        %v5440 = vmax.f32 %v5426, 0.0
        %v5441 = vmax.f32 %v5427, 0.0
        %v5442 = vmax.f32 %v5428, 0.0
        %v5443 = vmax.f32 %v5429, 0.0
        %v5444 = vmax.f32 %v5430, 0.0
        %v5445 = vmax.f32 %v5431, 0.0
        %v5446 = vmax.f32 %v5432, 0.0
        %v5447 = vmax.f32 %v5433, 0.0
        %v5448 = vmax.f32 %v5434, 0.0
        %v5449 = vmax.f32 %v5435, 0.0
        %v5450 = vmax.f32 %v5436, 0.0
        %v5451 = vmax.f32 %v5437, 0.0
        %v5452 = vmax.f32 %v5438, 0.0
        %s5453 = scalar_lea.vmem %s272, 12
        %v5454 = vld [vmem:[%s5453] sm:$0xf]
        %v5456 = vsel %vm3204, %v5454, 0
        %5458 = vmatpush.msra.mxu0 0.0
        %5459 = vmatpush.msra.mxu0 0.0
        %5460 = vmatpush.msra.mxu0 0.0
        %5461 = vmatpush.msra.mxu0 0.0
        %5462 = vmatpush.msra.mxu0 0.0
        %5463 = vmatpush.msra.mxu0 0.0
        %5464 = vmatpush.msra.mxu0 %v3120
        %5465 = vmatpush.msra.mxu0 %v3093
        %5466 = vmatpush.msra.mxu0 %v3066
        %5467 = vmatpush.msra.mxu0 %v3039
        %5468 = vmatpush.msra.mxu0 %v3012
        %5469 = vmatpush.msra.mxu0 %v2985
        %5470 = vmatpush.msra.mxu0 %v2958
        %5471 = vmatpush.msra.mxu0 %v2931
        %5472 = vmatpush.msra.mxu0 %v2904
        %5473 = vmatpush.msra.mxu0 %v2877
        %5474 = vmatmul.f32.gmra.mxu0 %v5456
        %v5475 = vpop.f32.mrf.mxu0
        %v5476 = vadd.f32 0.0, %v5475
        %5477 = vdwg.mxu0
        %5478 = vmatpush.msra.mxu0 0.0
        %5479 = vmatpush.msra.mxu0 0.0
        %5480 = vmatpush.msra.mxu0 0.0
        %5481 = vmatpush.msra.mxu0 0.0
        %5482 = vmatpush.msra.mxu0 0.0
        %5483 = vmatpush.msra.mxu0 0.0
        %5484 = vmatpush.msra.mxu0 %v3121
        %5485 = vmatpush.msra.mxu0 %v3094
        %5486 = vmatpush.msra.mxu0 %v3067
        %5487 = vmatpush.msra.mxu0 %v3040
        %5488 = vmatpush.msra.mxu0 %v3013
        %5489 = vmatpush.msra.mxu0 %v2986
        %5490 = vmatpush.msra.mxu0 %v2959
        %5491 = vmatpush.msra.mxu0 %v2932
        %5492 = vmatpush.msra.mxu0 %v2905
        %5493 = vmatpush.msra.mxu0 %v2878
        %5494 = vmatmul.f32.gmra.mxu0 %v5456
        %v5495 = vpop.f32.mrf.mxu0
        %v5496 = vadd.f32 0.0, %v5495
        %5497 = vdwg.mxu0
        %5498 = vmatpush.msra.mxu0 0.0
        %5499 = vmatpush.msra.mxu0 0.0
        %5500 = vmatpush.msra.mxu0 0.0
        %5501 = vmatpush.msra.mxu0 0.0
        %5502 = vmatpush.msra.mxu0 0.0
        %5503 = vmatpush.msra.mxu0 0.0
        %5504 = vmatpush.msra.mxu0 %v3122
        %5505 = vmatpush.msra.mxu0 %v3095
        %5506 = vmatpush.msra.mxu0 %v3068
        %5507 = vmatpush.msra.mxu0 %v3041
        %5508 = vmatpush.msra.mxu0 %v3014
        %5509 = vmatpush.msra.mxu0 %v2987
        %5510 = vmatpush.msra.mxu0 %v2960
        %5511 = vmatpush.msra.mxu0 %v2933
        %5512 = vmatpush.msra.mxu0 %v2906
        %5513 = vmatpush.msra.mxu0 %v2879
        %5514 = vmatmul.f32.gmra.mxu0 %v5456
        %v5515 = vpop.f32.mrf.mxu0
        %v5516 = vadd.f32 0.0, %v5515
        %5517 = vdwg.mxu0
        %5518 = vmatpush.msra.mxu0 0.0
        %5519 = vmatpush.msra.mxu0 0.0
        %5520 = vmatpush.msra.mxu0 0.0
        %5521 = vmatpush.msra.mxu0 0.0
        %5522 = vmatpush.msra.mxu0 0.0
        %5523 = vmatpush.msra.mxu0 0.0
        %5524 = vmatpush.msra.mxu0 %v3123
        %5525 = vmatpush.msra.mxu0 %v3096
        %5526 = vmatpush.msra.mxu0 %v3069
        %5527 = vmatpush.msra.mxu0 %v3042
        %5528 = vmatpush.msra.mxu0 %v3015
        %5529 = vmatpush.msra.mxu0 %v2988
        %5530 = vmatpush.msra.mxu0 %v2961
        %5531 = vmatpush.msra.mxu0 %v2934
        %5532 = vmatpush.msra.mxu0 %v2907
        %5533 = vmatpush.msra.mxu0 %v2880
        %5534 = vmatmul.f32.gmra.mxu0 %v5456
        %v5535 = vpop.f32.mrf.mxu0
        %v5536 = vadd.f32 0.0, %v5535
        %5537 = vdwg.mxu0
        %5538 = vmatpush.msra.mxu0 0.0
        %5539 = vmatpush.msra.mxu0 0.0
        %5540 = vmatpush.msra.mxu0 0.0
        %5541 = vmatpush.msra.mxu0 0.0
        %5542 = vmatpush.msra.mxu0 0.0
        %5543 = vmatpush.msra.mxu0 0.0
        %5544 = vmatpush.msra.mxu0 %v3124
        %5545 = vmatpush.msra.mxu0 %v3097
        %5546 = vmatpush.msra.mxu0 %v3070
        %5547 = vmatpush.msra.mxu0 %v3043
        %5548 = vmatpush.msra.mxu0 %v3016
        %5549 = vmatpush.msra.mxu0 %v2989
        %5550 = vmatpush.msra.mxu0 %v2962
        %5551 = vmatpush.msra.mxu0 %v2935
        %5552 = vmatpush.msra.mxu0 %v2908
        %5553 = vmatpush.msra.mxu0 %v2881
        %5554 = vmatmul.f32.gmra.mxu0 %v5456
        %v5555 = vpop.f32.mrf.mxu0
        %v5556 = vadd.f32 0.0, %v5555
        %5557 = vdwg.mxu0
        %5558 = vmatpush.msra.mxu0 0.0
        %5559 = vmatpush.msra.mxu0 0.0
        %5560 = vmatpush.msra.mxu0 0.0
        %5561 = vmatpush.msra.mxu0 0.0
        %5562 = vmatpush.msra.mxu0 0.0
        %5563 = vmatpush.msra.mxu0 0.0
        %5564 = vmatpush.msra.mxu0 %v3125
        %5565 = vmatpush.msra.mxu0 %v3098
        %5566 = vmatpush.msra.mxu0 %v3071
        %5567 = vmatpush.msra.mxu0 %v3044
        %5568 = vmatpush.msra.mxu0 %v3017
        %5569 = vmatpush.msra.mxu0 %v2990
        %5570 = vmatpush.msra.mxu0 %v2963
        %5571 = vmatpush.msra.mxu0 %v2936
        %5572 = vmatpush.msra.mxu0 %v2909
        %5573 = vmatpush.msra.mxu0 %v2882
        %5574 = vmatmul.f32.gmra.mxu0 %v5456
        %v5575 = vpop.f32.mrf.mxu0
        %v5576 = vadd.f32 0.0, %v5575
        %5577 = vdwg.mxu0
        %5578 = vmatpush.msra.mxu0 0.0
        %5579 = vmatpush.msra.mxu0 0.0
        %5580 = vmatpush.msra.mxu0 0.0
        %5581 = vmatpush.msra.mxu0 0.0
        %5582 = vmatpush.msra.mxu0 0.0
        %5583 = vmatpush.msra.mxu0 0.0
        %5584 = vmatpush.msra.mxu0 %v3126
        %5585 = vmatpush.msra.mxu0 %v3099
        %5586 = vmatpush.msra.mxu0 %v3072
        %5587 = vmatpush.msra.mxu0 %v3045
        %5588 = vmatpush.msra.mxu0 %v3018
        %5589 = vmatpush.msra.mxu0 %v2991
        %5590 = vmatpush.msra.mxu0 %v2964
        %5591 = vmatpush.msra.mxu0 %v2937
        %5592 = vmatpush.msra.mxu0 %v2910
        %5593 = vmatpush.msra.mxu0 %v2883
        %5594 = vmatmul.f32.gmra.mxu0 %v5456
        %v5595 = vpop.f32.mrf.mxu0
        %v5596 = vadd.f32 0.0, %v5595
        %5597 = vdwg.mxu0
        %5598 = vmatpush.msra.mxu0 0.0
        %5599 = vmatpush.msra.mxu0 0.0
        %5600 = vmatpush.msra.mxu0 0.0
        %5601 = vmatpush.msra.mxu0 0.0
        %5602 = vmatpush.msra.mxu0 0.0
        %5603 = vmatpush.msra.mxu0 0.0
        %5604 = vmatpush.msra.mxu0 %v3127
        %5605 = vmatpush.msra.mxu0 %v3100
        %5606 = vmatpush.msra.mxu0 %v3073
        %5607 = vmatpush.msra.mxu0 %v3046
        %5608 = vmatpush.msra.mxu0 %v3019
        %5609 = vmatpush.msra.mxu0 %v2992
        %5610 = vmatpush.msra.mxu0 %v2965
        %5611 = vmatpush.msra.mxu0 %v2938
        %5612 = vmatpush.msra.mxu0 %v2911
        %5613 = vmatpush.msra.mxu0 %v2884
        %5614 = vmatmul.f32.gmra.mxu0 %v5456
        %v5615 = vpop.f32.mrf.mxu0
        %v5616 = vadd.f32 0.0, %v5615
        %5617 = vdwg.mxu0
        %5618 = vmatpush.msra.mxu0 0.0
        %5619 = vmatpush.msra.mxu0 0.0
        %5620 = vmatpush.msra.mxu0 0.0
        %5621 = vmatpush.msra.mxu0 0.0
        %5622 = vmatpush.msra.mxu0 0.0
        %5623 = vmatpush.msra.mxu0 0.0
        %5624 = vmatpush.msra.mxu0 %v3128
        %5625 = vmatpush.msra.mxu0 %v3101
        %5626 = vmatpush.msra.mxu0 %v3074
        %5627 = vmatpush.msra.mxu0 %v3047
        %5628 = vmatpush.msra.mxu0 %v3020
        %5629 = vmatpush.msra.mxu0 %v2993
        %5630 = vmatpush.msra.mxu0 %v2966
        %5631 = vmatpush.msra.mxu0 %v2939
        %5632 = vmatpush.msra.mxu0 %v2912
        %5633 = vmatpush.msra.mxu0 %v2885
        %5634 = vmatmul.f32.gmra.mxu0 %v5456
        %v5635 = vpop.f32.mrf.mxu0
        %v5636 = vadd.f32 0.0, %v5635
        %5637 = vdwg.mxu0
        %5638 = vmatpush.msra.mxu0 0.0
        %5639 = vmatpush.msra.mxu0 0.0
        %5640 = vmatpush.msra.mxu0 0.0
        %5641 = vmatpush.msra.mxu0 0.0
        %5642 = vmatpush.msra.mxu0 0.0
        %5643 = vmatpush.msra.mxu0 0.0
        %5644 = vmatpush.msra.mxu0 %v3129
        %5645 = vmatpush.msra.mxu0 %v3102
        %5646 = vmatpush.msra.mxu0 %v3075
        %5647 = vmatpush.msra.mxu0 %v3048
        %5648 = vmatpush.msra.mxu0 %v3021
        %5649 = vmatpush.msra.mxu0 %v2994
        %5650 = vmatpush.msra.mxu0 %v2967
        %5651 = vmatpush.msra.mxu0 %v2940
        %5652 = vmatpush.msra.mxu0 %v2913
        %5653 = vmatpush.msra.mxu0 %v2886
        %5654 = vmatmul.f32.gmra.mxu0 %v5456
        %v5655 = vpop.f32.mrf.mxu0
        %v5656 = vadd.f32 0.0, %v5655
        %5657 = vdwg.mxu0
        %5658 = vmatpush.msra.mxu0 0.0
        %5659 = vmatpush.msra.mxu0 0.0
        %5660 = vmatpush.msra.mxu0 0.0
        %5661 = vmatpush.msra.mxu0 0.0
        %5662 = vmatpush.msra.mxu0 0.0
        %5663 = vmatpush.msra.mxu0 0.0
        %5664 = vmatpush.msra.mxu0 %v3130
        %5665 = vmatpush.msra.mxu0 %v3103
        %5666 = vmatpush.msra.mxu0 %v3076
        %5667 = vmatpush.msra.mxu0 %v3049
        %5668 = vmatpush.msra.mxu0 %v3022
        %5669 = vmatpush.msra.mxu0 %v2995
        %5670 = vmatpush.msra.mxu0 %v2968
        %5671 = vmatpush.msra.mxu0 %v2941
        %5672 = vmatpush.msra.mxu0 %v2914
        %5673 = vmatpush.msra.mxu0 %v2887
        %5674 = vmatmul.f32.gmra.mxu0 %v5456
        %v5675 = vpop.f32.mrf.mxu0
        %v5676 = vadd.f32 0.0, %v5675
        %5677 = vdwg.mxu0
        %5678 = vmatpush.msra.mxu0 0.0
        %5679 = vmatpush.msra.mxu0 0.0
        %5680 = vmatpush.msra.mxu0 0.0
        %5681 = vmatpush.msra.mxu0 0.0
        %5682 = vmatpush.msra.mxu0 0.0
        %5683 = vmatpush.msra.mxu0 0.0
        %5684 = vmatpush.msra.mxu0 %v3131
        %5685 = vmatpush.msra.mxu0 %v3104
        %5686 = vmatpush.msra.mxu0 %v3077
        %5687 = vmatpush.msra.mxu0 %v3050
        %5688 = vmatpush.msra.mxu0 %v3023
        %5689 = vmatpush.msra.mxu0 %v2996
        %5690 = vmatpush.msra.mxu0 %v2969
        %5691 = vmatpush.msra.mxu0 %v2942
        %5692 = vmatpush.msra.mxu0 %v2915
        %5693 = vmatpush.msra.mxu0 %v2888
        %5694 = vmatmul.f32.gmra.mxu0 %v5456
        %v5695 = vpop.f32.mrf.mxu0
        %v5696 = vadd.f32 0.0, %v5695
        %5697 = vdwg.mxu0
        %5698 = vmatpush.msra.mxu0 0.0
        %5699 = vmatpush.msra.mxu0 0.0
        %5700 = vmatpush.msra.mxu0 0.0
        %5701 = vmatpush.msra.mxu0 0.0
        %5702 = vmatpush.msra.mxu0 0.0
        %5703 = vmatpush.msra.mxu0 0.0
        %5704 = vmatpush.msra.mxu0 %v3132
        %5705 = vmatpush.msra.mxu0 %v3105
        %5706 = vmatpush.msra.mxu0 %v3078
        %5707 = vmatpush.msra.mxu0 %v3051
        %5708 = vmatpush.msra.mxu0 %v3024
        %5709 = vmatpush.msra.mxu0 %v2997
        %5710 = vmatpush.msra.mxu0 %v2970
        %5711 = vmatpush.msra.mxu0 %v2943
        %5712 = vmatpush.msra.mxu0 %v2916
        %5713 = vmatpush.msra.mxu0 %v2889
        %5714 = vmatmul.f32.gmra.mxu0 %v5456
        %v5715 = vpop.f32.mrf.mxu0
        %v5716 = vadd.f32 0.0, %v5715
        %5717 = vdwg.mxu0
        %5718 = vmatpush.msra.mxu0 0.0
        %5719 = vmatpush.msra.mxu0 0.0
        %5720 = vmatpush.msra.mxu0 0.0
        %5721 = vmatpush.msra.mxu0 0.0
        %5722 = vmatpush.msra.mxu0 0.0
        %5723 = vmatpush.msra.mxu0 0.0
        %5724 = vmatpush.msra.mxu0 %v3133
        %5725 = vmatpush.msra.mxu0 %v3106
        %5726 = vmatpush.msra.mxu0 %v3079
        %5727 = vmatpush.msra.mxu0 %v3052
        %5728 = vmatpush.msra.mxu0 %v3025
        %5729 = vmatpush.msra.mxu0 %v2998
        %5730 = vmatpush.msra.mxu0 %v2971
        %5731 = vmatpush.msra.mxu0 %v2944
        %5732 = vmatpush.msra.mxu0 %v2917
        %5733 = vmatpush.msra.mxu0 %v2890
        %5734 = vmatmul.f32.gmra.mxu0 %v5456
        %v5735 = vpop.f32.mrf.mxu0
        %v5736 = vadd.f32 0.0, %v5735
        %5737 = vdwg.mxu0
        %5738 = vmatpush.msra.mxu0 0.0
        %5739 = vmatpush.msra.mxu0 0.0
        %5740 = vmatpush.msra.mxu0 0.0
        %5741 = vmatpush.msra.mxu0 0.0
        %5742 = vmatpush.msra.mxu0 0.0
        %5743 = vmatpush.msra.mxu0 0.0
        %5744 = vmatpush.msra.mxu0 %v3134
        %5745 = vmatpush.msra.mxu0 %v3107
        %5746 = vmatpush.msra.mxu0 %v3080
        %5747 = vmatpush.msra.mxu0 %v3053
        %5748 = vmatpush.msra.mxu0 %v3026
        %5749 = vmatpush.msra.mxu0 %v2999
        %5750 = vmatpush.msra.mxu0 %v2972
        %5751 = vmatpush.msra.mxu0 %v2945
        %5752 = vmatpush.msra.mxu0 %v2918
        %5753 = vmatpush.msra.mxu0 %v2891
        %5754 = vmatmul.f32.gmra.mxu0 %v5456
        %v5755 = vpop.f32.mrf.mxu0
        %v5756 = vadd.f32 0.0, %v5755
        %5757 = vdwg.mxu0
        %5758 = vmatpush.msra.mxu0 0.0
        %5759 = vmatpush.msra.mxu0 0.0
        %5760 = vmatpush.msra.mxu0 0.0
        %5761 = vmatpush.msra.mxu0 0.0
        %5762 = vmatpush.msra.mxu0 0.0
        %5763 = vmatpush.msra.mxu0 0.0
        %5764 = vmatpush.msra.mxu0 %v3135
        %5765 = vmatpush.msra.mxu0 %v3108
        %5766 = vmatpush.msra.mxu0 %v3081
        %5767 = vmatpush.msra.mxu0 %v3054
        %5768 = vmatpush.msra.mxu0 %v3027
        %5769 = vmatpush.msra.mxu0 %v3000
        %5770 = vmatpush.msra.mxu0 %v2973
        %5771 = vmatpush.msra.mxu0 %v2946
        %5772 = vmatpush.msra.mxu0 %v2919
        %5773 = vmatpush.msra.mxu0 %v2892
        %5774 = vmatmul.f32.gmra.mxu0 %v5456
        %v5775 = vpop.f32.mrf.mxu0
        %v5776 = vadd.f32 0.0, %v5775
        %5777 = vdwg.mxu0
        %5778 = vmatpush.msra.mxu0 0.0
        %5779 = vmatpush.msra.mxu0 0.0
        %5780 = vmatpush.msra.mxu0 0.0
        %5781 = vmatpush.msra.mxu0 0.0
        %5782 = vmatpush.msra.mxu0 0.0
        %5783 = vmatpush.msra.mxu0 0.0
        %5784 = vmatpush.msra.mxu0 %v3136
        %5785 = vmatpush.msra.mxu0 %v3109
        %5786 = vmatpush.msra.mxu0 %v3082
        %5787 = vmatpush.msra.mxu0 %v3055
        %5788 = vmatpush.msra.mxu0 %v3028
        %5789 = vmatpush.msra.mxu0 %v3001
        %5790 = vmatpush.msra.mxu0 %v2974
        %5791 = vmatpush.msra.mxu0 %v2947
        %5792 = vmatpush.msra.mxu0 %v2920
        %5793 = vmatpush.msra.mxu0 %v2893
        %5794 = vmatmul.f32.gmra.mxu0 %v5456
        %v5795 = vpop.f32.mrf.mxu0
        %v5796 = vadd.f32 0.0, %v5795
        %5797 = vdwg.mxu0
        %5798 = vmatpush.msra.mxu0 0.0
        %5799 = vmatpush.msra.mxu0 0.0
        %5800 = vmatpush.msra.mxu0 0.0
        %5801 = vmatpush.msra.mxu0 0.0
        %5802 = vmatpush.msra.mxu0 0.0
        %5803 = vmatpush.msra.mxu0 0.0
        %5804 = vmatpush.msra.mxu0 %v3137
        %5805 = vmatpush.msra.mxu0 %v3110
        %5806 = vmatpush.msra.mxu0 %v3083
        %5807 = vmatpush.msra.mxu0 %v3056
        %5808 = vmatpush.msra.mxu0 %v3029
        %5809 = vmatpush.msra.mxu0 %v3002
        %5810 = vmatpush.msra.mxu0 %v2975
        %5811 = vmatpush.msra.mxu0 %v2948
        %5812 = vmatpush.msra.mxu0 %v2921
        %5813 = vmatpush.msra.mxu0 %v2894
        %5814 = vmatmul.f32.gmra.mxu0 %v5456
        %v5815 = vpop.f32.mrf.mxu0
        %v5816 = vadd.f32 0.0, %v5815
        %5817 = vdwg.mxu0
        %5818 = vmatpush.msra.mxu0 0.0
        %5819 = vmatpush.msra.mxu0 0.0
        %5820 = vmatpush.msra.mxu0 0.0
        %5821 = vmatpush.msra.mxu0 0.0
        %5822 = vmatpush.msra.mxu0 0.0
        %5823 = vmatpush.msra.mxu0 0.0
        %5824 = vmatpush.msra.mxu0 %v3138
        %5825 = vmatpush.msra.mxu0 %v3111
        %5826 = vmatpush.msra.mxu0 %v3084
        %5827 = vmatpush.msra.mxu0 %v3057
        %5828 = vmatpush.msra.mxu0 %v3030
        %5829 = vmatpush.msra.mxu0 %v3003
        %5830 = vmatpush.msra.mxu0 %v2976
        %5831 = vmatpush.msra.mxu0 %v2949
        %5832 = vmatpush.msra.mxu0 %v2922
        %5833 = vmatpush.msra.mxu0 %v2895
        %5834 = vmatmul.f32.gmra.mxu0 %v5456
        %v5835 = vpop.f32.mrf.mxu0
        %v5836 = vadd.f32 0.0, %v5835
        %5837 = vdwg.mxu0
        %5838 = vmatpush.msra.mxu0 0.0
        %5839 = vmatpush.msra.mxu0 0.0
        %5840 = vmatpush.msra.mxu0 0.0
        %5841 = vmatpush.msra.mxu0 0.0
        %5842 = vmatpush.msra.mxu0 0.0
        %5843 = vmatpush.msra.mxu0 0.0
        %5844 = vmatpush.msra.mxu0 %v3139
        %5845 = vmatpush.msra.mxu0 %v3112
        %5846 = vmatpush.msra.mxu0 %v3085
        %5847 = vmatpush.msra.mxu0 %v3058
        %5848 = vmatpush.msra.mxu0 %v3031
        %5849 = vmatpush.msra.mxu0 %v3004
        %5850 = vmatpush.msra.mxu0 %v2977
        %5851 = vmatpush.msra.mxu0 %v2950
        %5852 = vmatpush.msra.mxu0 %v2923
        %5853 = vmatpush.msra.mxu0 %v2896
        %5854 = vmatmul.f32.gmra.mxu0 %v5456
        %v5855 = vpop.f32.mrf.mxu0
        %v5856 = vadd.f32 0.0, %v5855
        %5857 = vdwg.mxu0
        %5858 = vmatpush.msra.mxu0 0.0
        %5859 = vmatpush.msra.mxu0 0.0
        %5860 = vmatpush.msra.mxu0 0.0
        %5861 = vmatpush.msra.mxu0 0.0
        %5862 = vmatpush.msra.mxu0 0.0
        %5863 = vmatpush.msra.mxu0 0.0
        %5864 = vmatpush.msra.mxu0 %v3140
        %5865 = vmatpush.msra.mxu0 %v3113
        %5866 = vmatpush.msra.mxu0 %v3086
        %5867 = vmatpush.msra.mxu0 %v3059
        %5868 = vmatpush.msra.mxu0 %v3032
        %5869 = vmatpush.msra.mxu0 %v3005
        %5870 = vmatpush.msra.mxu0 %v2978
        %5871 = vmatpush.msra.mxu0 %v2951
        %5872 = vmatpush.msra.mxu0 %v2924
        %5873 = vmatpush.msra.mxu0 %v2897
        %5874 = vmatmul.f32.gmra.mxu0 %v5456
        %v5875 = vpop.f32.mrf.mxu0
        %v5876 = vadd.f32 0.0, %v5875
        %5877 = vdwg.mxu0
        %5878 = vmatpush.msra.mxu0 0.0
        %5879 = vmatpush.msra.mxu0 0.0
        %5880 = vmatpush.msra.mxu0 0.0
        %5881 = vmatpush.msra.mxu0 0.0
        %5882 = vmatpush.msra.mxu0 0.0
        %5883 = vmatpush.msra.mxu0 0.0
        %5884 = vmatpush.msra.mxu0 %v3141
        %5885 = vmatpush.msra.mxu0 %v3114
        %5886 = vmatpush.msra.mxu0 %v3087
        %5887 = vmatpush.msra.mxu0 %v3060
        %5888 = vmatpush.msra.mxu0 %v3033
        %5889 = vmatpush.msra.mxu0 %v3006
        %5890 = vmatpush.msra.mxu0 %v2979
        %5891 = vmatpush.msra.mxu0 %v2952
        %5892 = vmatpush.msra.mxu0 %v2925
        %5893 = vmatpush.msra.mxu0 %v2898
        %5894 = vmatmul.f32.gmra.mxu0 %v5456
        %v5895 = vpop.f32.mrf.mxu0
        %v5896 = vadd.f32 0.0, %v5895
        %5897 = vdwg.mxu0
        %5898 = vmatpush.msra.mxu0 0.0
        %5899 = vmatpush.msra.mxu0 0.0
        %5900 = vmatpush.msra.mxu0 0.0
        %5901 = vmatpush.msra.mxu0 0.0
        %5902 = vmatpush.msra.mxu0 0.0
        %5903 = vmatpush.msra.mxu0 0.0
        %5904 = vmatpush.msra.mxu0 %v3142
        %5905 = vmatpush.msra.mxu0 %v3115
        %5906 = vmatpush.msra.mxu0 %v3088
        %5907 = vmatpush.msra.mxu0 %v3061
        %5908 = vmatpush.msra.mxu0 %v3034
        %5909 = vmatpush.msra.mxu0 %v3007
        %5910 = vmatpush.msra.mxu0 %v2980
        %5911 = vmatpush.msra.mxu0 %v2953
        %5912 = vmatpush.msra.mxu0 %v2926
        %5913 = vmatpush.msra.mxu0 %v2899
        %5914 = vmatmul.f32.gmra.mxu0 %v5456
        %v5915 = vpop.f32.mrf.mxu0
        %v5916 = vadd.f32 0.0, %v5915
        %5917 = vdwg.mxu0
        %5918 = vmatpush.msra.mxu0 0.0
        %5919 = vmatpush.msra.mxu0 0.0
        %5920 = vmatpush.msra.mxu0 0.0
        %5921 = vmatpush.msra.mxu0 0.0
        %5922 = vmatpush.msra.mxu0 0.0
        %5923 = vmatpush.msra.mxu0 0.0
        %5924 = vmatpush.msra.mxu0 %v3143
        %5925 = vmatpush.msra.mxu0 %v3116
        %5926 = vmatpush.msra.mxu0 %v3089
        %5927 = vmatpush.msra.mxu0 %v3062
        %5928 = vmatpush.msra.mxu0 %v3035
        %5929 = vmatpush.msra.mxu0 %v3008
        %5930 = vmatpush.msra.mxu0 %v2981
        %5931 = vmatpush.msra.mxu0 %v2954
        %5932 = vmatpush.msra.mxu0 %v2927
        %5933 = vmatpush.msra.mxu0 %v2900
        %5934 = vmatmul.f32.gmra.mxu0 %v5456
        %v5935 = vpop.f32.mrf.mxu0
        %v5936 = vadd.f32 0.0, %v5935
        %5937 = vdwg.mxu0
        %5938 = vmatpush.msra.mxu0 0.0
        %5939 = vmatpush.msra.mxu0 0.0
        %5940 = vmatpush.msra.mxu0 0.0
        %5941 = vmatpush.msra.mxu0 0.0
        %5942 = vmatpush.msra.mxu0 0.0
        %5943 = vmatpush.msra.mxu0 0.0
        %5944 = vmatpush.msra.mxu0 %v3144
        %5945 = vmatpush.msra.mxu0 %v3117
        %5946 = vmatpush.msra.mxu0 %v3090
        %5947 = vmatpush.msra.mxu0 %v3063
        %5948 = vmatpush.msra.mxu0 %v3036
        %5949 = vmatpush.msra.mxu0 %v3009
        %5950 = vmatpush.msra.mxu0 %v2982
        %5951 = vmatpush.msra.mxu0 %v2955
        %5952 = vmatpush.msra.mxu0 %v2928
        %5953 = vmatpush.msra.mxu0 %v2901
        %5954 = vmatmul.f32.gmra.mxu0 %v5456
        %v5955 = vpop.f32.mrf.mxu0
        %v5956 = vadd.f32 0.0, %v5955
        %5957 = vdwg.mxu0
        %5958 = vmatpush.msra.mxu0 0.0
        %5959 = vmatpush.msra.mxu0 0.0
        %5960 = vmatpush.msra.mxu0 0.0
        %5961 = vmatpush.msra.mxu0 0.0
        %5962 = vmatpush.msra.mxu0 0.0
        %5963 = vmatpush.msra.mxu0 0.0
        %5964 = vmatpush.msra.mxu0 %v3145
        %5965 = vmatpush.msra.mxu0 %v3118
        %5966 = vmatpush.msra.mxu0 %v3091
        %5967 = vmatpush.msra.mxu0 %v3064
        %5968 = vmatpush.msra.mxu0 %v3037
        %5969 = vmatpush.msra.mxu0 %v3010
        %5970 = vmatpush.msra.mxu0 %v2983
        %5971 = vmatpush.msra.mxu0 %v2956
        %5972 = vmatpush.msra.mxu0 %v2929
        %5973 = vmatpush.msra.mxu0 %v2902
        %5974 = vmatmul.f32.gmra.mxu0 %v5456
        %v5975 = vpop.f32.mrf.mxu0
        %v5976 = vadd.f32 0.0, %v5975
        %5977 = vdwg.mxu0
        %5978 = vmatpush.msra.mxu0 0.0
        %5979 = vmatpush.msra.mxu0 0.0
        %5980 = vmatpush.msra.mxu0 0.0
        %5981 = vmatpush.msra.mxu0 0.0
        %5982 = vmatpush.msra.mxu0 0.0
        %5983 = vmatpush.msra.mxu0 0.0
        %5984 = vmatpush.msra.mxu0 %v3146
        %5985 = vmatpush.msra.mxu0 %v3119
        %5986 = vmatpush.msra.mxu0 %v3092
        %5987 = vmatpush.msra.mxu0 %v3065
        %5988 = vmatpush.msra.mxu0 %v3038
        %5989 = vmatpush.msra.mxu0 %v3011
        %5990 = vmatpush.msra.mxu0 %v2984
        %5991 = vmatpush.msra.mxu0 %v2957
        %5992 = vmatpush.msra.mxu0 %v2930
        %5993 = vmatpush.msra.mxu0 %v2903
        %5994 = vmatmul.f32.gmra.mxu0 %v5456
        %v5995 = vpop.f32.mrf.mxu0
        %v5996 = vadd.f32 0.0, %v5995
        %5997 = vdwg.mxu0
        %v6012 = vperm.slane %v5439, 2
        %v6013 = vperm.slane %v5439, 6
        %v6014 = vperm.slane %v5440, 2
        %v6015 = vperm.slane %v5440, 6
        %v6016 = vperm.slane %v5441, 2
        %v6017 = vperm.slane %v5441, 6
        %v6018 = vperm.slane %v5442, 2
        %v6019 = vperm.slane %v5442, 6
        %v6020 = vperm.slane %v5443, 2
        %v6021 = vperm.slane %v5443, 6
        %v6022 = vperm.slane %v5444, 2
        %v6023 = vperm.slane %v5444, 6
        %v6024 = vperm.slane %v5445, 2
        %v6025 = vperm.slane %v5445, 6
        %v6026 = vperm.slane %v5446, 2
        %v6027 = vperm.slane %v5446, 6
        %v6028 = vperm.slane %v5447, 2
        %v6029 = vperm.slane %v5447, 6
        %v6030 = vperm.slane %v5448, 2
        %v6031 = vperm.slane %v5448, 6
        %v6032 = vperm.slane %v5449, 2
        %v6033 = vperm.slane %v5449, 6
        %v6034 = vperm.slane %v5450, 2
        %v6035 = vperm.slane %v5450, 6
        %v6036 = vperm.slane %v5451, 2
        %v6037 = vperm.slane %v5451, 6
        %v6038 = vperm.slane %v5452, 2
        %v6066 = vperm.slane %v6012, 2
        %v6067 = vperm.slane %v6013, 2
        %v6068 = vperm.slane %v6014, 2
        %v6069 = vperm.slane %v6015, 2
        %v6070 = vperm.slane %v6016, 2
        %v6071 = vperm.slane %v6017, 2
        %v6072 = vperm.slane %v6018, 2
        %v6073 = vperm.slane %v6019, 2
        %v6074 = vperm.slane %v6020, 2
        %v6075 = vperm.slane %v6021, 2
        %v6076 = vperm.slane %v6022, 2
        %v6077 = vperm.slane %v6023, 2
        %v6078 = vperm.slane %v6024, 2
        %v6079 = vperm.slane %v6025, 2
        %v6080 = vperm.slane %v6026, 2
        %v6081 = vperm.slane %v6027, 2
        %v6082 = vperm.slane %v6028, 2
        %v6083 = vperm.slane %v6029, 2
        %v6084 = vperm.slane %v6030, 2
        %v6085 = vperm.slane %v6031, 2
        %v6086 = vperm.slane %v6032, 2
        %v6087 = vperm.slane %v6033, 2
        %v6088 = vperm.slane %v6034, 2
        %v6089 = vperm.slane %v6035, 2
        %v6090 = vperm.slane %v6036, 2
        %v6091 = vperm.slane %v6037, 2
        %v6092 = vperm.slane %v6038, 2
        %v6093 = vmul.f32 %v6066, %v5476
        %v6094 = vmul.f32 %v6067, %v5496
        %v6095 = vmul.f32 %v6068, %v5516
        %v6096 = vmul.f32 %v6069, %v5536
        %v6097 = vmul.f32 %v6070, %v5556
        %v6098 = vmul.f32 %v6071, %v5576
        %v6099 = vmul.f32 %v6072, %v5596
        %v6100 = vmul.f32 %v6073, %v5616
        %v6101 = vmul.f32 %v6074, %v5636
        %v6102 = vmul.f32 %v6075, %v5656
        %v6103 = vmul.f32 %v6076, %v5676
        %v6104 = vmul.f32 %v6077, %v5696
        %v6105 = vmul.f32 %v6078, %v5716
        %v6106 = vmul.f32 %v6079, %v5736
        %v6107 = vmul.f32 %v6080, %v5756
        %v6108 = vmul.f32 %v6081, %v5776
        %v6109 = vmul.f32 %v6082, %v5796
        %v6110 = vmul.f32 %v6083, %v5816
        %v6111 = vmul.f32 %v6084, %v5836
        %v6112 = vmul.f32 %v6085, %v5856
        %v6113 = vmul.f32 %v6086, %v5876
        %v6114 = vmul.f32 %v6087, %v5896
        %v6115 = vmul.f32 %v6088, %v5916
        %v6116 = vmul.f32 %v6089, %v5936
        %v6117 = vmul.f32 %v6090, %v5956
        %v6118 = vmul.f32 %v6091, %v5976
        %v6119 = vmul.f32 %v6092, %v5996
        %v6120 = vadd.f32 %v5370, %v6093
        %v6121 = vadd.f32 %v5371, %v6094
        %v6122 = vadd.f32 %v5372, %v6095
        %v6123 = vadd.f32 %v5373, %v6096
        %v6124 = vadd.f32 %v5374, %v6097
        %v6125 = vadd.f32 %v5375, %v6098
        %v6126 = vadd.f32 %v5376, %v6099
        %v6127 = vadd.f32 %v5377, %v6100
        %v6128 = vadd.f32 %v5378, %v6101
        %v6129 = vadd.f32 %v5379, %v6102
        %v6130 = vadd.f32 %v5380, %v6103
        %v6131 = vadd.f32 %v5381, %v6104
        %v6132 = vadd.f32 %v5382, %v6105
        %v6133 = vadd.f32 %v5383, %v6106
        %v6134 = vadd.f32 %v5384, %v6107
        %v6135 = vadd.f32 %v5385, %v6108
        %v6136 = vadd.f32 %v5386, %v6109
        %v6137 = vadd.f32 %v5387, %v6110
        %v6138 = vadd.f32 %v5388, %v6111
        %v6139 = vadd.f32 %v5389, %v6112
        %v6140 = vadd.f32 %v5390, %v6113
        %v6141 = vadd.f32 %v5391, %v6114
        %v6142 = vadd.f32 %v5392, %v6115
        %v6143 = vadd.f32 %v5393, %v6116
        %v6144 = vadd.f32 %v5394, %v6117
        %v6145 = vadd.f32 %v5395, %v6118
        %v6146 = vadd.f32 %v5396, %v6119
        %v6147 = vsub.f32 4.0, %v413
        %v6148 = vsub.f32 4.0, %v414
        %v6149 = vsub.f32 4.0, %v415
        %v6150 = vsub.f32 4.0, %v416
        %v6151 = vsub.f32 4.0, %v417
        %v6152 = vsub.f32 4.0, %v418
        %v6153 = vsub.f32 4.0, %v419
        %v6154 = vsub.f32 4.0, %v420
        %v6155 = vsub.f32 4.0, %v421
        %v6156 = vsub.f32 4.0, %v422
        %v6157 = vsub.f32 4.0, %v423
        %v6158 = vsub.f32 4.0, %v424
        %v6159 = vsub.f32 4.0, %v425
        %v6160 = vsub.f32 4.0, %v426
        %v6161 = vand.u32 2147483647, %v6147
        %v6162 = vand.u32 2147483647, %v6148
        %v6163 = vand.u32 2147483647, %v6149
        %v6164 = vand.u32 2147483647, %v6150
        %v6165 = vand.u32 2147483647, %v6151
        %v6166 = vand.u32 2147483647, %v6152
        %v6167 = vand.u32 2147483647, %v6153
        %v6168 = vand.u32 2147483647, %v6154
        %v6169 = vand.u32 2147483647, %v6155
        %v6170 = vand.u32 2147483647, %v6156
        %v6171 = vand.u32 2147483647, %v6157
        %v6172 = vand.u32 2147483647, %v6158
        %v6173 = vand.u32 2147483647, %v6159
        %v6174 = vand.u32 2147483647, %v6160
        %v6175 = vsub.f32 1.0, %v6161
        %v6176 = vsub.f32 1.0, %v6162
        %v6177 = vsub.f32 1.0, %v6163
        %v6178 = vsub.f32 1.0, %v6164
        %v6179 = vsub.f32 1.0, %v6165
        %v6180 = vsub.f32 1.0, %v6166
        %v6181 = vsub.f32 1.0, %v6167
        %v6182 = vsub.f32 1.0, %v6168
        %v6183 = vsub.f32 1.0, %v6169
        %v6184 = vsub.f32 1.0, %v6170
        %v6185 = vsub.f32 1.0, %v6171
        %v6186 = vsub.f32 1.0, %v6172
        %v6187 = vsub.f32 1.0, %v6173
        %v6188 = vsub.f32 1.0, %v6174
        %v6189 = vmax.f32 %v6175, 0.0
        %v6190 = vmax.f32 %v6176, 0.0
        %v6191 = vmax.f32 %v6177, 0.0
        %v6192 = vmax.f32 %v6178, 0.0
        %v6193 = vmax.f32 %v6179, 0.0
        %v6194 = vmax.f32 %v6180, 0.0
        %v6195 = vmax.f32 %v6181, 0.0
        %v6196 = vmax.f32 %v6182, 0.0
        %v6197 = vmax.f32 %v6183, 0.0
        %v6198 = vmax.f32 %v6184, 0.0
        %v6199 = vmax.f32 %v6185, 0.0
        %v6200 = vmax.f32 %v6186, 0.0
        %v6201 = vmax.f32 %v6187, 0.0
        %v6202 = vmax.f32 %v6188, 0.0
        %s6203 = scalar_lea.vmem %s272, 16
        %v6204 = vld [vmem:[%s6203] sm:$0xf]
        %v6206 = vsel %vm3204, %v6204, 0
        %6208 = vmatpush.msra.mxu0 0.0
        %6209 = vmatpush.msra.mxu0 0.0
        %6210 = vmatpush.msra.mxu0 0.0
        %6211 = vmatpush.msra.mxu0 0.0
        %6212 = vmatpush.msra.mxu0 0.0
        %6213 = vmatpush.msra.mxu0 0.0
        %6214 = vmatpush.msra.mxu0 %v3120
        %6215 = vmatpush.msra.mxu0 %v3093
        %6216 = vmatpush.msra.mxu0 %v3066
        %6217 = vmatpush.msra.mxu0 %v3039
        %6218 = vmatpush.msra.mxu0 %v3012
        %6219 = vmatpush.msra.mxu0 %v2985
        %6220 = vmatpush.msra.mxu0 %v2958
        %6221 = vmatpush.msra.mxu0 %v2931
        %6222 = vmatpush.msra.mxu0 %v2904
        %6223 = vmatpush.msra.mxu0 %v2877
        %6224 = vmatmul.f32.gmra.mxu0 %v6206
        %v6225 = vpop.f32.mrf.mxu0
        %v6226 = vadd.f32 0.0, %v6225
        %6227 = vdwg.mxu0
        %6228 = vmatpush.msra.mxu0 0.0
        %6229 = vmatpush.msra.mxu0 0.0
        %6230 = vmatpush.msra.mxu0 0.0
        %6231 = vmatpush.msra.mxu0 0.0
        %6232 = vmatpush.msra.mxu0 0.0
        %6233 = vmatpush.msra.mxu0 0.0
        %6234 = vmatpush.msra.mxu0 %v3121
        %6235 = vmatpush.msra.mxu0 %v3094
        %6236 = vmatpush.msra.mxu0 %v3067
        %6237 = vmatpush.msra.mxu0 %v3040
        %6238 = vmatpush.msra.mxu0 %v3013
        %6239 = vmatpush.msra.mxu0 %v2986
        %6240 = vmatpush.msra.mxu0 %v2959
        %6241 = vmatpush.msra.mxu0 %v2932
        %6242 = vmatpush.msra.mxu0 %v2905
        %6243 = vmatpush.msra.mxu0 %v2878
        %6244 = vmatmul.f32.gmra.mxu0 %v6206
        %v6245 = vpop.f32.mrf.mxu0
        %v6246 = vadd.f32 0.0, %v6245
        %6247 = vdwg.mxu0
        %6248 = vmatpush.msra.mxu0 0.0
        %6249 = vmatpush.msra.mxu0 0.0
        %6250 = vmatpush.msra.mxu0 0.0
        %6251 = vmatpush.msra.mxu0 0.0
        %6252 = vmatpush.msra.mxu0 0.0
        %6253 = vmatpush.msra.mxu0 0.0
        %6254 = vmatpush.msra.mxu0 %v3122
        %6255 = vmatpush.msra.mxu0 %v3095
        %6256 = vmatpush.msra.mxu0 %v3068
        %6257 = vmatpush.msra.mxu0 %v3041
        %6258 = vmatpush.msra.mxu0 %v3014
        %6259 = vmatpush.msra.mxu0 %v2987
        %6260 = vmatpush.msra.mxu0 %v2960
        %6261 = vmatpush.msra.mxu0 %v2933
        %6262 = vmatpush.msra.mxu0 %v2906
        %6263 = vmatpush.msra.mxu0 %v2879
        %6264 = vmatmul.f32.gmra.mxu0 %v6206
        %v6265 = vpop.f32.mrf.mxu0
        %v6266 = vadd.f32 0.0, %v6265
        %6267 = vdwg.mxu0
        %6268 = vmatpush.msra.mxu0 0.0
        %6269 = vmatpush.msra.mxu0 0.0
        %6270 = vmatpush.msra.mxu0 0.0
        %6271 = vmatpush.msra.mxu0 0.0
        %6272 = vmatpush.msra.mxu0 0.0
        %6273 = vmatpush.msra.mxu0 0.0
        %6274 = vmatpush.msra.mxu0 %v3123
        %6275 = vmatpush.msra.mxu0 %v3096
        %6276 = vmatpush.msra.mxu0 %v3069
        %6277 = vmatpush.msra.mxu0 %v3042
        %6278 = vmatpush.msra.mxu0 %v3015
        %6279 = vmatpush.msra.mxu0 %v2988
        %6280 = vmatpush.msra.mxu0 %v2961
        %6281 = vmatpush.msra.mxu0 %v2934
        %6282 = vmatpush.msra.mxu0 %v2907
        %6283 = vmatpush.msra.mxu0 %v2880
        %6284 = vmatmul.f32.gmra.mxu0 %v6206
        %v6285 = vpop.f32.mrf.mxu0
        %v6286 = vadd.f32 0.0, %v6285
        %6287 = vdwg.mxu0
        %6288 = vmatpush.msra.mxu0 0.0
        %6289 = vmatpush.msra.mxu0 0.0
        %6290 = vmatpush.msra.mxu0 0.0
        %6291 = vmatpush.msra.mxu0 0.0
        %6292 = vmatpush.msra.mxu0 0.0
        %6293 = vmatpush.msra.mxu0 0.0
        %6294 = vmatpush.msra.mxu0 %v3124
        %6295 = vmatpush.msra.mxu0 %v3097
        %6296 = vmatpush.msra.mxu0 %v3070
        %6297 = vmatpush.msra.mxu0 %v3043
        %6298 = vmatpush.msra.mxu0 %v3016
        %6299 = vmatpush.msra.mxu0 %v2989
        %6300 = vmatpush.msra.mxu0 %v2962
        %6301 = vmatpush.msra.mxu0 %v2935
        %6302 = vmatpush.msra.mxu0 %v2908
        %6303 = vmatpush.msra.mxu0 %v2881
        %6304 = vmatmul.f32.gmra.mxu0 %v6206
        %v6305 = vpop.f32.mrf.mxu0
        %v6306 = vadd.f32 0.0, %v6305
        %6307 = vdwg.mxu0
        %6308 = vmatpush.msra.mxu0 0.0
        %6309 = vmatpush.msra.mxu0 0.0
        %6310 = vmatpush.msra.mxu0 0.0
        %6311 = vmatpush.msra.mxu0 0.0
        %6312 = vmatpush.msra.mxu0 0.0
        %6313 = vmatpush.msra.mxu0 0.0
        %6314 = vmatpush.msra.mxu0 %v3125
        %6315 = vmatpush.msra.mxu0 %v3098
        %6316 = vmatpush.msra.mxu0 %v3071
        %6317 = vmatpush.msra.mxu0 %v3044
        %6318 = vmatpush.msra.mxu0 %v3017
        %6319 = vmatpush.msra.mxu0 %v2990
        %6320 = vmatpush.msra.mxu0 %v2963
        %6321 = vmatpush.msra.mxu0 %v2936
        %6322 = vmatpush.msra.mxu0 %v2909
        %6323 = vmatpush.msra.mxu0 %v2882
        %6324 = vmatmul.f32.gmra.mxu0 %v6206
        %v6325 = vpop.f32.mrf.mxu0
        %v6326 = vadd.f32 0.0, %v6325
        %6327 = vdwg.mxu0
        %6328 = vmatpush.msra.mxu0 0.0
        %6329 = vmatpush.msra.mxu0 0.0
        %6330 = vmatpush.msra.mxu0 0.0
        %6331 = vmatpush.msra.mxu0 0.0
        %6332 = vmatpush.msra.mxu0 0.0
        %6333 = vmatpush.msra.mxu0 0.0
        %6334 = vmatpush.msra.mxu0 %v3126
        %6335 = vmatpush.msra.mxu0 %v3099
        %6336 = vmatpush.msra.mxu0 %v3072
        %6337 = vmatpush.msra.mxu0 %v3045
        %6338 = vmatpush.msra.mxu0 %v3018
        %6339 = vmatpush.msra.mxu0 %v2991
        %6340 = vmatpush.msra.mxu0 %v2964
        %6341 = vmatpush.msra.mxu0 %v2937
        %6342 = vmatpush.msra.mxu0 %v2910
        %6343 = vmatpush.msra.mxu0 %v2883
        %6344 = vmatmul.f32.gmra.mxu0 %v6206
        %v6345 = vpop.f32.mrf.mxu0
        %v6346 = vadd.f32 0.0, %v6345
        %6347 = vdwg.mxu0
        %6348 = vmatpush.msra.mxu0 0.0
        %6349 = vmatpush.msra.mxu0 0.0
        %6350 = vmatpush.msra.mxu0 0.0
        %6351 = vmatpush.msra.mxu0 0.0
        %6352 = vmatpush.msra.mxu0 0.0
        %6353 = vmatpush.msra.mxu0 0.0
        %6354 = vmatpush.msra.mxu0 %v3127
        %6355 = vmatpush.msra.mxu0 %v3100
        %6356 = vmatpush.msra.mxu0 %v3073
        %6357 = vmatpush.msra.mxu0 %v3046
        %6358 = vmatpush.msra.mxu0 %v3019
        %6359 = vmatpush.msra.mxu0 %v2992
        %6360 = vmatpush.msra.mxu0 %v2965
        %6361 = vmatpush.msra.mxu0 %v2938
        %6362 = vmatpush.msra.mxu0 %v2911
        %6363 = vmatpush.msra.mxu0 %v2884
        %6364 = vmatmul.f32.gmra.mxu0 %v6206
        %v6365 = vpop.f32.mrf.mxu0
        %v6366 = vadd.f32 0.0, %v6365
        %6367 = vdwg.mxu0
        %6368 = vmatpush.msra.mxu0 0.0
        %6369 = vmatpush.msra.mxu0 0.0
        %6370 = vmatpush.msra.mxu0 0.0
        %6371 = vmatpush.msra.mxu0 0.0
        %6372 = vmatpush.msra.mxu0 0.0
        %6373 = vmatpush.msra.mxu0 0.0
        %6374 = vmatpush.msra.mxu0 %v3128
        %6375 = vmatpush.msra.mxu0 %v3101
        %6376 = vmatpush.msra.mxu0 %v3074
        %6377 = vmatpush.msra.mxu0 %v3047
        %6378 = vmatpush.msra.mxu0 %v3020
        %6379 = vmatpush.msra.mxu0 %v2993
        %6380 = vmatpush.msra.mxu0 %v2966
        %6381 = vmatpush.msra.mxu0 %v2939
        %6382 = vmatpush.msra.mxu0 %v2912
        %6383 = vmatpush.msra.mxu0 %v2885
        %6384 = vmatmul.f32.gmra.mxu0 %v6206
        %v6385 = vpop.f32.mrf.mxu0
        %v6386 = vadd.f32 0.0, %v6385
        %6387 = vdwg.mxu0
        %6388 = vmatpush.msra.mxu0 0.0
        %6389 = vmatpush.msra.mxu0 0.0
        %6390 = vmatpush.msra.mxu0 0.0
        %6391 = vmatpush.msra.mxu0 0.0
        %6392 = vmatpush.msra.mxu0 0.0
        %6393 = vmatpush.msra.mxu0 0.0
        %6394 = vmatpush.msra.mxu0 %v3129
        %6395 = vmatpush.msra.mxu0 %v3102
        %6396 = vmatpush.msra.mxu0 %v3075
        %6397 = vmatpush.msra.mxu0 %v3048
        %6398 = vmatpush.msra.mxu0 %v3021
        %6399 = vmatpush.msra.mxu0 %v2994
        %6400 = vmatpush.msra.mxu0 %v2967
        %6401 = vmatpush.msra.mxu0 %v2940
        %6402 = vmatpush.msra.mxu0 %v2913
        %6403 = vmatpush.msra.mxu0 %v2886
        %6404 = vmatmul.f32.gmra.mxu0 %v6206
        %v6405 = vpop.f32.mrf.mxu0
        %v6406 = vadd.f32 0.0, %v6405
        %6407 = vdwg.mxu0
        %6408 = vmatpush.msra.mxu0 0.0
        %6409 = vmatpush.msra.mxu0 0.0
        %6410 = vmatpush.msra.mxu0 0.0
        %6411 = vmatpush.msra.mxu0 0.0
        %6412 = vmatpush.msra.mxu0 0.0
        %6413 = vmatpush.msra.mxu0 0.0
        %6414 = vmatpush.msra.mxu0 %v3130
        %6415 = vmatpush.msra.mxu0 %v3103
        %6416 = vmatpush.msra.mxu0 %v3076
        %6417 = vmatpush.msra.mxu0 %v3049
        %6418 = vmatpush.msra.mxu0 %v3022
        %6419 = vmatpush.msra.mxu0 %v2995
        %6420 = vmatpush.msra.mxu0 %v2968
        %6421 = vmatpush.msra.mxu0 %v2941
        %6422 = vmatpush.msra.mxu0 %v2914
        %6423 = vmatpush.msra.mxu0 %v2887
        %6424 = vmatmul.f32.gmra.mxu0 %v6206
        %v6425 = vpop.f32.mrf.mxu0
        %v6426 = vadd.f32 0.0, %v6425
        %6427 = vdwg.mxu0
        %6428 = vmatpush.msra.mxu0 0.0
        %6429 = vmatpush.msra.mxu0 0.0
        %6430 = vmatpush.msra.mxu0 0.0
        %6431 = vmatpush.msra.mxu0 0.0
        %6432 = vmatpush.msra.mxu0 0.0
        %6433 = vmatpush.msra.mxu0 0.0
        %6434 = vmatpush.msra.mxu0 %v3131
        %6435 = vmatpush.msra.mxu0 %v3104
        %6436 = vmatpush.msra.mxu0 %v3077
        %6437 = vmatpush.msra.mxu0 %v3050
        %6438 = vmatpush.msra.mxu0 %v3023
        %6439 = vmatpush.msra.mxu0 %v2996
        %6440 = vmatpush.msra.mxu0 %v2969
        %6441 = vmatpush.msra.mxu0 %v2942
        %6442 = vmatpush.msra.mxu0 %v2915
        %6443 = vmatpush.msra.mxu0 %v2888
        %6444 = vmatmul.f32.gmra.mxu0 %v6206
        %v6445 = vpop.f32.mrf.mxu0
        %v6446 = vadd.f32 0.0, %v6445
        %6447 = vdwg.mxu0
        %6448 = vmatpush.msra.mxu0 0.0
        %6449 = vmatpush.msra.mxu0 0.0
        %6450 = vmatpush.msra.mxu0 0.0
        %6451 = vmatpush.msra.mxu0 0.0
        %6452 = vmatpush.msra.mxu0 0.0
        %6453 = vmatpush.msra.mxu0 0.0
        %6454 = vmatpush.msra.mxu0 %v3132
        %6455 = vmatpush.msra.mxu0 %v3105
        %6456 = vmatpush.msra.mxu0 %v3078
        %6457 = vmatpush.msra.mxu0 %v3051
        %6458 = vmatpush.msra.mxu0 %v3024
        %6459 = vmatpush.msra.mxu0 %v2997
        %6460 = vmatpush.msra.mxu0 %v2970
        %6461 = vmatpush.msra.mxu0 %v2943
        %6462 = vmatpush.msra.mxu0 %v2916
        %6463 = vmatpush.msra.mxu0 %v2889
        %6464 = vmatmul.f32.gmra.mxu0 %v6206
        %v6465 = vpop.f32.mrf.mxu0
        %v6466 = vadd.f32 0.0, %v6465
        %6467 = vdwg.mxu0
        %6468 = vmatpush.msra.mxu0 0.0
        %6469 = vmatpush.msra.mxu0 0.0
        %6470 = vmatpush.msra.mxu0 0.0
        %6471 = vmatpush.msra.mxu0 0.0
        %6472 = vmatpush.msra.mxu0 0.0
        %6473 = vmatpush.msra.mxu0 0.0
        %6474 = vmatpush.msra.mxu0 %v3133
        %6475 = vmatpush.msra.mxu0 %v3106
        %6476 = vmatpush.msra.mxu0 %v3079
        %6477 = vmatpush.msra.mxu0 %v3052
        %6478 = vmatpush.msra.mxu0 %v3025
        %6479 = vmatpush.msra.mxu0 %v2998
        %6480 = vmatpush.msra.mxu0 %v2971
        %6481 = vmatpush.msra.mxu0 %v2944
        %6482 = vmatpush.msra.mxu0 %v2917
        %6483 = vmatpush.msra.mxu0 %v2890
        %6484 = vmatmul.f32.gmra.mxu0 %v6206
        %v6485 = vpop.f32.mrf.mxu0
        %v6486 = vadd.f32 0.0, %v6485
        %6487 = vdwg.mxu0
        %6488 = vmatpush.msra.mxu0 0.0
        %6489 = vmatpush.msra.mxu0 0.0
        %6490 = vmatpush.msra.mxu0 0.0
        %6491 = vmatpush.msra.mxu0 0.0
        %6492 = vmatpush.msra.mxu0 0.0
        %6493 = vmatpush.msra.mxu0 0.0
        %6494 = vmatpush.msra.mxu0 %v3134
        %6495 = vmatpush.msra.mxu0 %v3107
        %6496 = vmatpush.msra.mxu0 %v3080
        %6497 = vmatpush.msra.mxu0 %v3053
        %6498 = vmatpush.msra.mxu0 %v3026
        %6499 = vmatpush.msra.mxu0 %v2999
        %6500 = vmatpush.msra.mxu0 %v2972
        %6501 = vmatpush.msra.mxu0 %v2945
        %6502 = vmatpush.msra.mxu0 %v2918
        %6503 = vmatpush.msra.mxu0 %v2891
        %6504 = vmatmul.f32.gmra.mxu0 %v6206
        %v6505 = vpop.f32.mrf.mxu0
        %v6506 = vadd.f32 0.0, %v6505
        %6507 = vdwg.mxu0
        %6508 = vmatpush.msra.mxu0 0.0
        %6509 = vmatpush.msra.mxu0 0.0
        %6510 = vmatpush.msra.mxu0 0.0
        %6511 = vmatpush.msra.mxu0 0.0
        %6512 = vmatpush.msra.mxu0 0.0
        %6513 = vmatpush.msra.mxu0 0.0
        %6514 = vmatpush.msra.mxu0 %v3135
        %6515 = vmatpush.msra.mxu0 %v3108
        %6516 = vmatpush.msra.mxu0 %v3081
        %6517 = vmatpush.msra.mxu0 %v3054
        %6518 = vmatpush.msra.mxu0 %v3027
        %6519 = vmatpush.msra.mxu0 %v3000
        %6520 = vmatpush.msra.mxu0 %v2973
        %6521 = vmatpush.msra.mxu0 %v2946
        %6522 = vmatpush.msra.mxu0 %v2919
        %6523 = vmatpush.msra.mxu0 %v2892
        %6524 = vmatmul.f32.gmra.mxu0 %v6206
        %v6525 = vpop.f32.mrf.mxu0
        %v6526 = vadd.f32 0.0, %v6525
        %6527 = vdwg.mxu0
        %6528 = vmatpush.msra.mxu0 0.0
        %6529 = vmatpush.msra.mxu0 0.0
        %6530 = vmatpush.msra.mxu0 0.0
        %6531 = vmatpush.msra.mxu0 0.0
        %6532 = vmatpush.msra.mxu0 0.0
        %6533 = vmatpush.msra.mxu0 0.0
        %6534 = vmatpush.msra.mxu0 %v3136
        %6535 = vmatpush.msra.mxu0 %v3109
        %6536 = vmatpush.msra.mxu0 %v3082
        %6537 = vmatpush.msra.mxu0 %v3055
        %6538 = vmatpush.msra.mxu0 %v3028
        %6539 = vmatpush.msra.mxu0 %v3001
        %6540 = vmatpush.msra.mxu0 %v2974
        %6541 = vmatpush.msra.mxu0 %v2947
        %6542 = vmatpush.msra.mxu0 %v2920
        %6543 = vmatpush.msra.mxu0 %v2893
        %6544 = vmatmul.f32.gmra.mxu0 %v6206
        %v6545 = vpop.f32.mrf.mxu0
        %v6546 = vadd.f32 0.0, %v6545
        %6547 = vdwg.mxu0
        %6548 = vmatpush.msra.mxu0 0.0
        %6549 = vmatpush.msra.mxu0 0.0
        %6550 = vmatpush.msra.mxu0 0.0
        %6551 = vmatpush.msra.mxu0 0.0
        %6552 = vmatpush.msra.mxu0 0.0
        %6553 = vmatpush.msra.mxu0 0.0
        %6554 = vmatpush.msra.mxu0 %v3137
        %6555 = vmatpush.msra.mxu0 %v3110
        %6556 = vmatpush.msra.mxu0 %v3083
        %6557 = vmatpush.msra.mxu0 %v3056
        %6558 = vmatpush.msra.mxu0 %v3029
        %6559 = vmatpush.msra.mxu0 %v3002
        %6560 = vmatpush.msra.mxu0 %v2975
        %6561 = vmatpush.msra.mxu0 %v2948
        %6562 = vmatpush.msra.mxu0 %v2921
        %6563 = vmatpush.msra.mxu0 %v2894
        %6564 = vmatmul.f32.gmra.mxu0 %v6206
        %v6565 = vpop.f32.mrf.mxu0
        %v6566 = vadd.f32 0.0, %v6565
        %6567 = vdwg.mxu0
        %6568 = vmatpush.msra.mxu0 0.0
        %6569 = vmatpush.msra.mxu0 0.0
        %6570 = vmatpush.msra.mxu0 0.0
        %6571 = vmatpush.msra.mxu0 0.0
        %6572 = vmatpush.msra.mxu0 0.0
        %6573 = vmatpush.msra.mxu0 0.0
        %6574 = vmatpush.msra.mxu0 %v3138
        %6575 = vmatpush.msra.mxu0 %v3111
        %6576 = vmatpush.msra.mxu0 %v3084
        %6577 = vmatpush.msra.mxu0 %v3057
        %6578 = vmatpush.msra.mxu0 %v3030
        %6579 = vmatpush.msra.mxu0 %v3003
        %6580 = vmatpush.msra.mxu0 %v2976
        %6581 = vmatpush.msra.mxu0 %v2949
        %6582 = vmatpush.msra.mxu0 %v2922
        %6583 = vmatpush.msra.mxu0 %v2895
        %6584 = vmatmul.f32.gmra.mxu0 %v6206
        %v6585 = vpop.f32.mrf.mxu0
        %v6586 = vadd.f32 0.0, %v6585
        %6587 = vdwg.mxu0
        %6588 = vmatpush.msra.mxu0 0.0
        %6589 = vmatpush.msra.mxu0 0.0
        %6590 = vmatpush.msra.mxu0 0.0
        %6591 = vmatpush.msra.mxu0 0.0
        %6592 = vmatpush.msra.mxu0 0.0
        %6593 = vmatpush.msra.mxu0 0.0
        %6594 = vmatpush.msra.mxu0 %v3139
        %6595 = vmatpush.msra.mxu0 %v3112
        %6596 = vmatpush.msra.mxu0 %v3085
        %6597 = vmatpush.msra.mxu0 %v3058
        %6598 = vmatpush.msra.mxu0 %v3031
        %6599 = vmatpush.msra.mxu0 %v3004
        %6600 = vmatpush.msra.mxu0 %v2977
        %6601 = vmatpush.msra.mxu0 %v2950
        %6602 = vmatpush.msra.mxu0 %v2923
        %6603 = vmatpush.msra.mxu0 %v2896
        %6604 = vmatmul.f32.gmra.mxu0 %v6206
        %v6605 = vpop.f32.mrf.mxu0
        %v6606 = vadd.f32 0.0, %v6605
        %6607 = vdwg.mxu0
        %6608 = vmatpush.msra.mxu0 0.0
        %6609 = vmatpush.msra.mxu0 0.0
        %6610 = vmatpush.msra.mxu0 0.0
        %6611 = vmatpush.msra.mxu0 0.0
        %6612 = vmatpush.msra.mxu0 0.0
        %6613 = vmatpush.msra.mxu0 0.0
        %6614 = vmatpush.msra.mxu0 %v3140
        %6615 = vmatpush.msra.mxu0 %v3113
        %6616 = vmatpush.msra.mxu0 %v3086
        %6617 = vmatpush.msra.mxu0 %v3059
        %6618 = vmatpush.msra.mxu0 %v3032
        %6619 = vmatpush.msra.mxu0 %v3005
        %6620 = vmatpush.msra.mxu0 %v2978
        %6621 = vmatpush.msra.mxu0 %v2951
        %6622 = vmatpush.msra.mxu0 %v2924
        %6623 = vmatpush.msra.mxu0 %v2897
        %6624 = vmatmul.f32.gmra.mxu0 %v6206
        %v6625 = vpop.f32.mrf.mxu0
        %v6626 = vadd.f32 0.0, %v6625
        %6627 = vdwg.mxu0
        %6628 = vmatpush.msra.mxu0 0.0
        %6629 = vmatpush.msra.mxu0 0.0
        %6630 = vmatpush.msra.mxu0 0.0
        %6631 = vmatpush.msra.mxu0 0.0
        %6632 = vmatpush.msra.mxu0 0.0
        %6633 = vmatpush.msra.mxu0 0.0
        %6634 = vmatpush.msra.mxu0 %v3141
        %6635 = vmatpush.msra.mxu0 %v3114
        %6636 = vmatpush.msra.mxu0 %v3087
        %6637 = vmatpush.msra.mxu0 %v3060
        %6638 = vmatpush.msra.mxu0 %v3033
        %6639 = vmatpush.msra.mxu0 %v3006
        %6640 = vmatpush.msra.mxu0 %v2979
        %6641 = vmatpush.msra.mxu0 %v2952
        %6642 = vmatpush.msra.mxu0 %v2925
        %6643 = vmatpush.msra.mxu0 %v2898
        %6644 = vmatmul.f32.gmra.mxu0 %v6206
        %v6645 = vpop.f32.mrf.mxu0
        %v6646 = vadd.f32 0.0, %v6645
        %6647 = vdwg.mxu0
        %6648 = vmatpush.msra.mxu0 0.0
        %6649 = vmatpush.msra.mxu0 0.0
        %6650 = vmatpush.msra.mxu0 0.0
        %6651 = vmatpush.msra.mxu0 0.0
        %6652 = vmatpush.msra.mxu0 0.0
        %6653 = vmatpush.msra.mxu0 0.0
        %6654 = vmatpush.msra.mxu0 %v3142
        %6655 = vmatpush.msra.mxu0 %v3115
        %6656 = vmatpush.msra.mxu0 %v3088
        %6657 = vmatpush.msra.mxu0 %v3061
        %6658 = vmatpush.msra.mxu0 %v3034
        %6659 = vmatpush.msra.mxu0 %v3007
        %6660 = vmatpush.msra.mxu0 %v2980
        %6661 = vmatpush.msra.mxu0 %v2953
        %6662 = vmatpush.msra.mxu0 %v2926
        %6663 = vmatpush.msra.mxu0 %v2899
        %6664 = vmatmul.f32.gmra.mxu0 %v6206
        %v6665 = vpop.f32.mrf.mxu0
        %v6666 = vadd.f32 0.0, %v6665
        %6667 = vdwg.mxu0
        %6668 = vmatpush.msra.mxu0 0.0
        %6669 = vmatpush.msra.mxu0 0.0
        %6670 = vmatpush.msra.mxu0 0.0
        %6671 = vmatpush.msra.mxu0 0.0
        %6672 = vmatpush.msra.mxu0 0.0
        %6673 = vmatpush.msra.mxu0 0.0
        %6674 = vmatpush.msra.mxu0 %v3143
        %6675 = vmatpush.msra.mxu0 %v3116
        %6676 = vmatpush.msra.mxu0 %v3089
        %6677 = vmatpush.msra.mxu0 %v3062
        %6678 = vmatpush.msra.mxu0 %v3035
        %6679 = vmatpush.msra.mxu0 %v3008
        %6680 = vmatpush.msra.mxu0 %v2981
        %6681 = vmatpush.msra.mxu0 %v2954
        %6682 = vmatpush.msra.mxu0 %v2927
        %6683 = vmatpush.msra.mxu0 %v2900
        %6684 = vmatmul.f32.gmra.mxu0 %v6206
        %v6685 = vpop.f32.mrf.mxu0
        %v6686 = vadd.f32 0.0, %v6685
        %6687 = vdwg.mxu0
        %6688 = vmatpush.msra.mxu0 0.0
        %6689 = vmatpush.msra.mxu0 0.0
        %6690 = vmatpush.msra.mxu0 0.0
        %6691 = vmatpush.msra.mxu0 0.0
        %6692 = vmatpush.msra.mxu0 0.0
        %6693 = vmatpush.msra.mxu0 0.0
        %6694 = vmatpush.msra.mxu0 %v3144
        %6695 = vmatpush.msra.mxu0 %v3117
        %6696 = vmatpush.msra.mxu0 %v3090
        %6697 = vmatpush.msra.mxu0 %v3063
        %6698 = vmatpush.msra.mxu0 %v3036
        %6699 = vmatpush.msra.mxu0 %v3009
        %6700 = vmatpush.msra.mxu0 %v2982
        %6701 = vmatpush.msra.mxu0 %v2955
        %6702 = vmatpush.msra.mxu0 %v2928
        %6703 = vmatpush.msra.mxu0 %v2901
        %6704 = vmatmul.f32.gmra.mxu0 %v6206
        %v6705 = vpop.f32.mrf.mxu0
        %v6706 = vadd.f32 0.0, %v6705
        %6707 = vdwg.mxu0
        %6708 = vmatpush.msra.mxu0 0.0
        %6709 = vmatpush.msra.mxu0 0.0
        %6710 = vmatpush.msra.mxu0 0.0
        %6711 = vmatpush.msra.mxu0 0.0
        %6712 = vmatpush.msra.mxu0 0.0
        %6713 = vmatpush.msra.mxu0 0.0
        %6714 = vmatpush.msra.mxu0 %v3145
        %6715 = vmatpush.msra.mxu0 %v3118
        %6716 = vmatpush.msra.mxu0 %v3091
        %6717 = vmatpush.msra.mxu0 %v3064
        %6718 = vmatpush.msra.mxu0 %v3037
        %6719 = vmatpush.msra.mxu0 %v3010
        %6720 = vmatpush.msra.mxu0 %v2983
        %6721 = vmatpush.msra.mxu0 %v2956
        %6722 = vmatpush.msra.mxu0 %v2929
        %6723 = vmatpush.msra.mxu0 %v2902
        %6724 = vmatmul.f32.gmra.mxu0 %v6206
        %v6725 = vpop.f32.mrf.mxu0
        %v6726 = vadd.f32 0.0, %v6725
        %6727 = vdwg.mxu0
        %6728 = vmatpush.msra.mxu0 0.0
        %6729 = vmatpush.msra.mxu0 0.0
        %6730 = vmatpush.msra.mxu0 0.0
        %6731 = vmatpush.msra.mxu0 0.0
        %6732 = vmatpush.msra.mxu0 0.0
        %6733 = vmatpush.msra.mxu0 0.0
        %6734 = vmatpush.msra.mxu0 %v3146
        %6735 = vmatpush.msra.mxu0 %v3119
        %6736 = vmatpush.msra.mxu0 %v3092
        %6737 = vmatpush.msra.mxu0 %v3065
        %6738 = vmatpush.msra.mxu0 %v3038
        %6739 = vmatpush.msra.mxu0 %v3011
        %6740 = vmatpush.msra.mxu0 %v2984
        %6741 = vmatpush.msra.mxu0 %v2957
        %6742 = vmatpush.msra.mxu0 %v2930
        %6743 = vmatpush.msra.mxu0 %v2903
        %6744 = vmatmul.f32.gmra.mxu0 %v6206
        %v6745 = vpop.f32.mrf.mxu0
        %v6746 = vadd.f32 0.0, %v6745
        %6747 = vdwg.mxu0
        %v6762 = vperm.slane %v6189, 2
        %v6763 = vperm.slane %v6189, 6
        %v6764 = vperm.slane %v6190, 2
        %v6765 = vperm.slane %v6190, 6
        %v6766 = vperm.slane %v6191, 2
        %v6767 = vperm.slane %v6191, 6
        %v6768 = vperm.slane %v6192, 2
        %v6769 = vperm.slane %v6192, 6
        %v6770 = vperm.slane %v6193, 2
        %v6771 = vperm.slane %v6193, 6
        %v6772 = vperm.slane %v6194, 2
        %v6773 = vperm.slane %v6194, 6
        %v6774 = vperm.slane %v6195, 2
        %v6775 = vperm.slane %v6195, 6
        %v6776 = vperm.slane %v6196, 2
        %v6777 = vperm.slane %v6196, 6
        %v6778 = vperm.slane %v6197, 2
        %v6779 = vperm.slane %v6197, 6
        %v6780 = vperm.slane %v6198, 2
        %v6781 = vperm.slane %v6198, 6
        %v6782 = vperm.slane %v6199, 2
        %v6783 = vperm.slane %v6199, 6
        %v6784 = vperm.slane %v6200, 2
        %v6785 = vperm.slane %v6200, 6
        %v6786 = vperm.slane %v6201, 2
        %v6787 = vperm.slane %v6201, 6
        %v6788 = vperm.slane %v6202, 2
        %v6816 = vperm.slane %v6762, 2
        %v6817 = vperm.slane %v6763, 2
        %v6818 = vperm.slane %v6764, 2
        %v6819 = vperm.slane %v6765, 2
        %v6820 = vperm.slane %v6766, 2
        %v6821 = vperm.slane %v6767, 2
        %v6822 = vperm.slane %v6768, 2
        %v6823 = vperm.slane %v6769, 2
        %v6824 = vperm.slane %v6770, 2
        %v6825 = vperm.slane %v6771, 2
        %v6826 = vperm.slane %v6772, 2
        %v6827 = vperm.slane %v6773, 2
        %v6828 = vperm.slane %v6774, 2
        %v6829 = vperm.slane %v6775, 2
        %v6830 = vperm.slane %v6776, 2
        %v6831 = vperm.slane %v6777, 2
        %v6832 = vperm.slane %v6778, 2
        %v6833 = vperm.slane %v6779, 2
        %v6834 = vperm.slane %v6780, 2
        %v6835 = vperm.slane %v6781, 2
        %v6836 = vperm.slane %v6782, 2
        %v6837 = vperm.slane %v6783, 2
        %v6838 = vperm.slane %v6784, 2
        %v6839 = vperm.slane %v6785, 2
        %v6840 = vperm.slane %v6786, 2
        %v6841 = vperm.slane %v6787, 2
        %v6842 = vperm.slane %v6788, 2
        %v6843 = vmul.f32 %v6816, %v6226
        %v6844 = vmul.f32 %v6817, %v6246
        %v6845 = vmul.f32 %v6818, %v6266
        %v6846 = vmul.f32 %v6819, %v6286
        %v6847 = vmul.f32 %v6820, %v6306
        %v6848 = vmul.f32 %v6821, %v6326
        %v6849 = vmul.f32 %v6822, %v6346
        %v6850 = vmul.f32 %v6823, %v6366
        %v6851 = vmul.f32 %v6824, %v6386
        %v6852 = vmul.f32 %v6825, %v6406
        %v6853 = vmul.f32 %v6826, %v6426
        %v6854 = vmul.f32 %v6827, %v6446
        %v6855 = vmul.f32 %v6828, %v6466
        %v6856 = vmul.f32 %v6829, %v6486
        %v6857 = vmul.f32 %v6830, %v6506
        %v6858 = vmul.f32 %v6831, %v6526
        %v6859 = vmul.f32 %v6832, %v6546
        %v6860 = vmul.f32 %v6833, %v6566
        %v6861 = vmul.f32 %v6834, %v6586
        %v6862 = vmul.f32 %v6835, %v6606
        %v6863 = vmul.f32 %v6836, %v6626
        %v6864 = vmul.f32 %v6837, %v6646
        %v6865 = vmul.f32 %v6838, %v6666
        %v6866 = vmul.f32 %v6839, %v6686
        %v6867 = vmul.f32 %v6840, %v6706
        %v6868 = vmul.f32 %v6841, %v6726
        %v6869 = vmul.f32 %v6842, %v6746
        %v6870 = vadd.f32 %v6120, %v6843
        %v6871 = vadd.f32 %v6121, %v6844
        %v6872 = vadd.f32 %v6122, %v6845
        %v6873 = vadd.f32 %v6123, %v6846
        %v6874 = vadd.f32 %v6124, %v6847
        %v6875 = vadd.f32 %v6125, %v6848
        %v6876 = vadd.f32 %v6126, %v6849
        %v6877 = vadd.f32 %v6127, %v6850
        %v6878 = vadd.f32 %v6128, %v6851
        %v6879 = vadd.f32 %v6129, %v6852
        %v6880 = vadd.f32 %v6130, %v6853
        %v6881 = vadd.f32 %v6131, %v6854
        %v6882 = vadd.f32 %v6132, %v6855
        %v6883 = vadd.f32 %v6133, %v6856
        %v6884 = vadd.f32 %v6134, %v6857
        %v6885 = vadd.f32 %v6135, %v6858
        %v6886 = vadd.f32 %v6136, %v6859
        %v6887 = vadd.f32 %v6137, %v6860
        %v6888 = vadd.f32 %v6138, %v6861
        %v6889 = vadd.f32 %v6139, %v6862
        %v6890 = vadd.f32 %v6140, %v6863
        %v6891 = vadd.f32 %v6141, %v6864
        %v6892 = vadd.f32 %v6142, %v6865
        %v6893 = vadd.f32 %v6143, %v6866
        %v6894 = vadd.f32 %v6144, %v6867
        %v6895 = vadd.f32 %v6145, %v6868
        %v6896 = vadd.f32 %v6146, %v6869
        %v6897 = vsub.f32 5.0, %v413
        %v6898 = vsub.f32 5.0, %v414
        %v6899 = vsub.f32 5.0, %v415
        %v6900 = vsub.f32 5.0, %v416
        %v6901 = vsub.f32 5.0, %v417
        %v6902 = vsub.f32 5.0, %v418
        %v6903 = vsub.f32 5.0, %v419
        %v6904 = vsub.f32 5.0, %v420
        %v6905 = vsub.f32 5.0, %v421
        %v6906 = vsub.f32 5.0, %v422
        %v6907 = vsub.f32 5.0, %v423
        %v6908 = vsub.f32 5.0, %v424
        %v6909 = vsub.f32 5.0, %v425
        %v6910 = vsub.f32 5.0, %v426
        %v6911 = vand.u32 2147483647, %v6897
        %v6912 = vand.u32 2147483647, %v6898
        %v6913 = vand.u32 2147483647, %v6899
        %v6914 = vand.u32 2147483647, %v6900
        %v6915 = vand.u32 2147483647, %v6901
        %v6916 = vand.u32 2147483647, %v6902
        %v6917 = vand.u32 2147483647, %v6903
        %v6918 = vand.u32 2147483647, %v6904
        %v6919 = vand.u32 2147483647, %v6905
        %v6920 = vand.u32 2147483647, %v6906
        %v6921 = vand.u32 2147483647, %v6907
        %v6922 = vand.u32 2147483647, %v6908
        %v6923 = vand.u32 2147483647, %v6909
        %v6924 = vand.u32 2147483647, %v6910
        %v6925 = vsub.f32 1.0, %v6911
        %v6926 = vsub.f32 1.0, %v6912
        %v6927 = vsub.f32 1.0, %v6913
        %v6928 = vsub.f32 1.0, %v6914
        %v6929 = vsub.f32 1.0, %v6915
        %v6930 = vsub.f32 1.0, %v6916
        %v6931 = vsub.f32 1.0, %v6917
        %v6932 = vsub.f32 1.0, %v6918
        %v6933 = vsub.f32 1.0, %v6919
        %v6934 = vsub.f32 1.0, %v6920
        %v6935 = vsub.f32 1.0, %v6921
        %v6936 = vsub.f32 1.0, %v6922
        %v6937 = vsub.f32 1.0, %v6923
        %v6938 = vsub.f32 1.0, %v6924
        %v6939 = vmax.f32 %v6925, 0.0
        %v6940 = vmax.f32 %v6926, 0.0
        %v6941 = vmax.f32 %v6927, 0.0
        %v6942 = vmax.f32 %v6928, 0.0
        %v6943 = vmax.f32 %v6929, 0.0
        %v6944 = vmax.f32 %v6930, 0.0
        %v6945 = vmax.f32 %v6931, 0.0
        %v6946 = vmax.f32 %v6932, 0.0
        %v6947 = vmax.f32 %v6933, 0.0
        %v6948 = vmax.f32 %v6934, 0.0
        %v6949 = vmax.f32 %v6935, 0.0
        %v6950 = vmax.f32 %v6936, 0.0
        %v6951 = vmax.f32 %v6937, 0.0
        %v6952 = vmax.f32 %v6938, 0.0
        %s6953 = scalar_lea.vmem %s272, 20
        %v6954 = vld [vmem:[%s6953] sm:$0xf]
        %v6956 = vsel %vm3204, %v6954, 0
        %6958 = vmatpush.msra.mxu0 0.0
        %6959 = vmatpush.msra.mxu0 0.0
        %6960 = vmatpush.msra.mxu0 0.0
        %6961 = vmatpush.msra.mxu0 0.0
        %6962 = vmatpush.msra.mxu0 0.0
        %6963 = vmatpush.msra.mxu0 0.0
        %6964 = vmatpush.msra.mxu0 %v3120
        %6965 = vmatpush.msra.mxu0 %v3093
        %6966 = vmatpush.msra.mxu0 %v3066
        %6967 = vmatpush.msra.mxu0 %v3039
        %6968 = vmatpush.msra.mxu0 %v3012
        %6969 = vmatpush.msra.mxu0 %v2985
        %6970 = vmatpush.msra.mxu0 %v2958
        %6971 = vmatpush.msra.mxu0 %v2931
        %6972 = vmatpush.msra.mxu0 %v2904
        %6973 = vmatpush.msra.mxu0 %v2877
        %6974 = vmatmul.f32.gmra.mxu0 %v6956
        %v6975 = vpop.f32.mrf.mxu0
        %v6976 = vadd.f32 0.0, %v6975
        %6977 = vdwg.mxu0
        %6978 = vmatpush.msra.mxu0 0.0
        %6979 = vmatpush.msra.mxu0 0.0
        %6980 = vmatpush.msra.mxu0 0.0
        %6981 = vmatpush.msra.mxu0 0.0
        %6982 = vmatpush.msra.mxu0 0.0
        %6983 = vmatpush.msra.mxu0 0.0
        %6984 = vmatpush.msra.mxu0 %v3121
        %6985 = vmatpush.msra.mxu0 %v3094
        %6986 = vmatpush.msra.mxu0 %v3067
        %6987 = vmatpush.msra.mxu0 %v3040
        %6988 = vmatpush.msra.mxu0 %v3013
        %6989 = vmatpush.msra.mxu0 %v2986
        %6990 = vmatpush.msra.mxu0 %v2959
        %6991 = vmatpush.msra.mxu0 %v2932
        %6992 = vmatpush.msra.mxu0 %v2905
        %6993 = vmatpush.msra.mxu0 %v2878
        %6994 = vmatmul.f32.gmra.mxu0 %v6956
        %v6995 = vpop.f32.mrf.mxu0
        %v6996 = vadd.f32 0.0, %v6995
        %6997 = vdwg.mxu0
        %6998 = vmatpush.msra.mxu0 0.0
        %6999 = vmatpush.msra.mxu0 0.0
        %7000 = vmatpush.msra.mxu0 0.0
        %7001 = vmatpush.msra.mxu0 0.0
        %7002 = vmatpush.msra.mxu0 0.0
        %7003 = vmatpush.msra.mxu0 0.0
        %7004 = vmatpush.msra.mxu0 %v3122
        %7005 = vmatpush.msra.mxu0 %v3095
        %7006 = vmatpush.msra.mxu0 %v3068
        %7007 = vmatpush.msra.mxu0 %v3041
        %7008 = vmatpush.msra.mxu0 %v3014
        %7009 = vmatpush.msra.mxu0 %v2987
        %7010 = vmatpush.msra.mxu0 %v2960
        %7011 = vmatpush.msra.mxu0 %v2933
        %7012 = vmatpush.msra.mxu0 %v2906
        %7013 = vmatpush.msra.mxu0 %v2879
        %7014 = vmatmul.f32.gmra.mxu0 %v6956
        %v7015 = vpop.f32.mrf.mxu0
        %v7016 = vadd.f32 0.0, %v7015
        %7017 = vdwg.mxu0
        %7018 = vmatpush.msra.mxu0 0.0
        %7019 = vmatpush.msra.mxu0 0.0
        %7020 = vmatpush.msra.mxu0 0.0
        %7021 = vmatpush.msra.mxu0 0.0
        %7022 = vmatpush.msra.mxu0 0.0
        %7023 = vmatpush.msra.mxu0 0.0
        %7024 = vmatpush.msra.mxu0 %v3123
        %7025 = vmatpush.msra.mxu0 %v3096
        %7026 = vmatpush.msra.mxu0 %v3069
        %7027 = vmatpush.msra.mxu0 %v3042
        %7028 = vmatpush.msra.mxu0 %v3015
        %7029 = vmatpush.msra.mxu0 %v2988
        %7030 = vmatpush.msra.mxu0 %v2961
        %7031 = vmatpush.msra.mxu0 %v2934
        %7032 = vmatpush.msra.mxu0 %v2907
        %7033 = vmatpush.msra.mxu0 %v2880
        %7034 = vmatmul.f32.gmra.mxu0 %v6956
        %v7035 = vpop.f32.mrf.mxu0
        %v7036 = vadd.f32 0.0, %v7035
        %7037 = vdwg.mxu0
        %7038 = vmatpush.msra.mxu0 0.0
        %7039 = vmatpush.msra.mxu0 0.0
        %7040 = vmatpush.msra.mxu0 0.0
        %7041 = vmatpush.msra.mxu0 0.0
        %7042 = vmatpush.msra.mxu0 0.0
        %7043 = vmatpush.msra.mxu0 0.0
        %7044 = vmatpush.msra.mxu0 %v3124
        %7045 = vmatpush.msra.mxu0 %v3097
        %7046 = vmatpush.msra.mxu0 %v3070
        %7047 = vmatpush.msra.mxu0 %v3043
        %7048 = vmatpush.msra.mxu0 %v3016
        %7049 = vmatpush.msra.mxu0 %v2989
        %7050 = vmatpush.msra.mxu0 %v2962
        %7051 = vmatpush.msra.mxu0 %v2935
        %7052 = vmatpush.msra.mxu0 %v2908
        %7053 = vmatpush.msra.mxu0 %v2881
        %7054 = vmatmul.f32.gmra.mxu0 %v6956
        %v7055 = vpop.f32.mrf.mxu0
        %v7056 = vadd.f32 0.0, %v7055
        %7057 = vdwg.mxu0
        %7058 = vmatpush.msra.mxu0 0.0
        %7059 = vmatpush.msra.mxu0 0.0
        %7060 = vmatpush.msra.mxu0 0.0
        %7061 = vmatpush.msra.mxu0 0.0
        %7062 = vmatpush.msra.mxu0 0.0
        %7063 = vmatpush.msra.mxu0 0.0
        %7064 = vmatpush.msra.mxu0 %v3125
        %7065 = vmatpush.msra.mxu0 %v3098
        %7066 = vmatpush.msra.mxu0 %v3071
        %7067 = vmatpush.msra.mxu0 %v3044
        %7068 = vmatpush.msra.mxu0 %v3017
        %7069 = vmatpush.msra.mxu0 %v2990
        %7070 = vmatpush.msra.mxu0 %v2963
        %7071 = vmatpush.msra.mxu0 %v2936
        %7072 = vmatpush.msra.mxu0 %v2909
        %7073 = vmatpush.msra.mxu0 %v2882
        %7074 = vmatmul.f32.gmra.mxu0 %v6956
        %v7075 = vpop.f32.mrf.mxu0
        %v7076 = vadd.f32 0.0, %v7075
        %7077 = vdwg.mxu0
        %7078 = vmatpush.msra.mxu0 0.0
        %7079 = vmatpush.msra.mxu0 0.0
        %7080 = vmatpush.msra.mxu0 0.0
        %7081 = vmatpush.msra.mxu0 0.0
        %7082 = vmatpush.msra.mxu0 0.0
        %7083 = vmatpush.msra.mxu0 0.0
        %7084 = vmatpush.msra.mxu0 %v3126
        %7085 = vmatpush.msra.mxu0 %v3099
        %7086 = vmatpush.msra.mxu0 %v3072
        %7087 = vmatpush.msra.mxu0 %v3045
        %7088 = vmatpush.msra.mxu0 %v3018
        %7089 = vmatpush.msra.mxu0 %v2991
        %7090 = vmatpush.msra.mxu0 %v2964
        %7091 = vmatpush.msra.mxu0 %v2937
        %7092 = vmatpush.msra.mxu0 %v2910
        %7093 = vmatpush.msra.mxu0 %v2883
        %7094 = vmatmul.f32.gmra.mxu0 %v6956
        %v7095 = vpop.f32.mrf.mxu0
        %v7096 = vadd.f32 0.0, %v7095
        %7097 = vdwg.mxu0
        %7098 = vmatpush.msra.mxu0 0.0
        %7099 = vmatpush.msra.mxu0 0.0
        %7100 = vmatpush.msra.mxu0 0.0
        %7101 = vmatpush.msra.mxu0 0.0
        %7102 = vmatpush.msra.mxu0 0.0
        %7103 = vmatpush.msra.mxu0 0.0
        %7104 = vmatpush.msra.mxu0 %v3127
        %7105 = vmatpush.msra.mxu0 %v3100
        %7106 = vmatpush.msra.mxu0 %v3073
        %7107 = vmatpush.msra.mxu0 %v3046
        %7108 = vmatpush.msra.mxu0 %v3019
        %7109 = vmatpush.msra.mxu0 %v2992
        %7110 = vmatpush.msra.mxu0 %v2965
        %7111 = vmatpush.msra.mxu0 %v2938
        %7112 = vmatpush.msra.mxu0 %v2911
        %7113 = vmatpush.msra.mxu0 %v2884
        %7114 = vmatmul.f32.gmra.mxu0 %v6956
        %v7115 = vpop.f32.mrf.mxu0
        %v7116 = vadd.f32 0.0, %v7115
        %7117 = vdwg.mxu0
        %7118 = vmatpush.msra.mxu0 0.0
        %7119 = vmatpush.msra.mxu0 0.0
        %7120 = vmatpush.msra.mxu0 0.0
        %7121 = vmatpush.msra.mxu0 0.0
        %7122 = vmatpush.msra.mxu0 0.0
        %7123 = vmatpush.msra.mxu0 0.0
        %7124 = vmatpush.msra.mxu0 %v3128
        %7125 = vmatpush.msra.mxu0 %v3101
        %7126 = vmatpush.msra.mxu0 %v3074
        %7127 = vmatpush.msra.mxu0 %v3047
        %7128 = vmatpush.msra.mxu0 %v3020
        %7129 = vmatpush.msra.mxu0 %v2993
        %7130 = vmatpush.msra.mxu0 %v2966
        %7131 = vmatpush.msra.mxu0 %v2939
        %7132 = vmatpush.msra.mxu0 %v2912
        %7133 = vmatpush.msra.mxu0 %v2885
        %7134 = vmatmul.f32.gmra.mxu0 %v6956
        %v7135 = vpop.f32.mrf.mxu0
        %v7136 = vadd.f32 0.0, %v7135
        %7137 = vdwg.mxu0
        %7138 = vmatpush.msra.mxu0 0.0
        %7139 = vmatpush.msra.mxu0 0.0
        %7140 = vmatpush.msra.mxu0 0.0
        %7141 = vmatpush.msra.mxu0 0.0
        %7142 = vmatpush.msra.mxu0 0.0
        %7143 = vmatpush.msra.mxu0 0.0
        %7144 = vmatpush.msra.mxu0 %v3129
        %7145 = vmatpush.msra.mxu0 %v3102
        %7146 = vmatpush.msra.mxu0 %v3075
        %7147 = vmatpush.msra.mxu0 %v3048
        %7148 = vmatpush.msra.mxu0 %v3021
        %7149 = vmatpush.msra.mxu0 %v2994
        %7150 = vmatpush.msra.mxu0 %v2967
        %7151 = vmatpush.msra.mxu0 %v2940
        %7152 = vmatpush.msra.mxu0 %v2913
        %7153 = vmatpush.msra.mxu0 %v2886
        %7154 = vmatmul.f32.gmra.mxu0 %v6956
        %v7155 = vpop.f32.mrf.mxu0
        %v7156 = vadd.f32 0.0, %v7155
        %7157 = vdwg.mxu0
        %7158 = vmatpush.msra.mxu0 0.0
        %7159 = vmatpush.msra.mxu0 0.0
        %7160 = vmatpush.msra.mxu0 0.0
        %7161 = vmatpush.msra.mxu0 0.0
        %7162 = vmatpush.msra.mxu0 0.0
        %7163 = vmatpush.msra.mxu0 0.0
        %7164 = vmatpush.msra.mxu0 %v3130
        %7165 = vmatpush.msra.mxu0 %v3103
        %7166 = vmatpush.msra.mxu0 %v3076
        %7167 = vmatpush.msra.mxu0 %v3049
        %7168 = vmatpush.msra.mxu0 %v3022
        %7169 = vmatpush.msra.mxu0 %v2995
        %7170 = vmatpush.msra.mxu0 %v2968
        %7171 = vmatpush.msra.mxu0 %v2941
        %7172 = vmatpush.msra.mxu0 %v2914
        %7173 = vmatpush.msra.mxu0 %v2887
        %7174 = vmatmul.f32.gmra.mxu0 %v6956
        %v7175 = vpop.f32.mrf.mxu0
        %v7176 = vadd.f32 0.0, %v7175
        %7177 = vdwg.mxu0
        %7178 = vmatpush.msra.mxu0 0.0
        %7179 = vmatpush.msra.mxu0 0.0
        %7180 = vmatpush.msra.mxu0 0.0
        %7181 = vmatpush.msra.mxu0 0.0
        %7182 = vmatpush.msra.mxu0 0.0
        %7183 = vmatpush.msra.mxu0 0.0
        %7184 = vmatpush.msra.mxu0 %v3131
        %7185 = vmatpush.msra.mxu0 %v3104
        %7186 = vmatpush.msra.mxu0 %v3077
        %7187 = vmatpush.msra.mxu0 %v3050
        %7188 = vmatpush.msra.mxu0 %v3023
        %7189 = vmatpush.msra.mxu0 %v2996
        %7190 = vmatpush.msra.mxu0 %v2969
        %7191 = vmatpush.msra.mxu0 %v2942
        %7192 = vmatpush.msra.mxu0 %v2915
        %7193 = vmatpush.msra.mxu0 %v2888
        %7194 = vmatmul.f32.gmra.mxu0 %v6956
        %v7195 = vpop.f32.mrf.mxu0
        %v7196 = vadd.f32 0.0, %v7195
        %7197 = vdwg.mxu0
        %7198 = vmatpush.msra.mxu0 0.0
        %7199 = vmatpush.msra.mxu0 0.0
        %7200 = vmatpush.msra.mxu0 0.0
        %7201 = vmatpush.msra.mxu0 0.0
        %7202 = vmatpush.msra.mxu0 0.0
        %7203 = vmatpush.msra.mxu0 0.0
        %7204 = vmatpush.msra.mxu0 %v3132
        %7205 = vmatpush.msra.mxu0 %v3105
        %7206 = vmatpush.msra.mxu0 %v3078
        %7207 = vmatpush.msra.mxu0 %v3051
        %7208 = vmatpush.msra.mxu0 %v3024
        %7209 = vmatpush.msra.mxu0 %v2997
        %7210 = vmatpush.msra.mxu0 %v2970
        %7211 = vmatpush.msra.mxu0 %v2943
        %7212 = vmatpush.msra.mxu0 %v2916
        %7213 = vmatpush.msra.mxu0 %v2889
        %7214 = vmatmul.f32.gmra.mxu0 %v6956
        %v7215 = vpop.f32.mrf.mxu0
        %v7216 = vadd.f32 0.0, %v7215
        %7217 = vdwg.mxu0
        %7218 = vmatpush.msra.mxu0 0.0
        %7219 = vmatpush.msra.mxu0 0.0
        %7220 = vmatpush.msra.mxu0 0.0
        %7221 = vmatpush.msra.mxu0 0.0
        %7222 = vmatpush.msra.mxu0 0.0
        %7223 = vmatpush.msra.mxu0 0.0
        %7224 = vmatpush.msra.mxu0 %v3133
        %7225 = vmatpush.msra.mxu0 %v3106
        %7226 = vmatpush.msra.mxu0 %v3079
        %7227 = vmatpush.msra.mxu0 %v3052
        %7228 = vmatpush.msra.mxu0 %v3025
        %7229 = vmatpush.msra.mxu0 %v2998
        %7230 = vmatpush.msra.mxu0 %v2971
        %7231 = vmatpush.msra.mxu0 %v2944
        %7232 = vmatpush.msra.mxu0 %v2917
        %7233 = vmatpush.msra.mxu0 %v2890
        %7234 = vmatmul.f32.gmra.mxu0 %v6956
        %v7235 = vpop.f32.mrf.mxu0
        %v7236 = vadd.f32 0.0, %v7235
        %7237 = vdwg.mxu0
        %7238 = vmatpush.msra.mxu0 0.0
        %7239 = vmatpush.msra.mxu0 0.0
        %7240 = vmatpush.msra.mxu0 0.0
        %7241 = vmatpush.msra.mxu0 0.0
        %7242 = vmatpush.msra.mxu0 0.0
        %7243 = vmatpush.msra.mxu0 0.0
        %7244 = vmatpush.msra.mxu0 %v3134
        %7245 = vmatpush.msra.mxu0 %v3107
        %7246 = vmatpush.msra.mxu0 %v3080
        %7247 = vmatpush.msra.mxu0 %v3053
        %7248 = vmatpush.msra.mxu0 %v3026
        %7249 = vmatpush.msra.mxu0 %v2999
        %7250 = vmatpush.msra.mxu0 %v2972
        %7251 = vmatpush.msra.mxu0 %v2945
        %7252 = vmatpush.msra.mxu0 %v2918
        %7253 = vmatpush.msra.mxu0 %v2891
        %7254 = vmatmul.f32.gmra.mxu0 %v6956
        %v7255 = vpop.f32.mrf.mxu0
        %v7256 = vadd.f32 0.0, %v7255
        %7257 = vdwg.mxu0
        %7258 = vmatpush.msra.mxu0 0.0
        %7259 = vmatpush.msra.mxu0 0.0
        %7260 = vmatpush.msra.mxu0 0.0
        %7261 = vmatpush.msra.mxu0 0.0
        %7262 = vmatpush.msra.mxu0 0.0
        %7263 = vmatpush.msra.mxu0 0.0
        %7264 = vmatpush.msra.mxu0 %v3135
        %7265 = vmatpush.msra.mxu0 %v3108
        %7266 = vmatpush.msra.mxu0 %v3081
        %7267 = vmatpush.msra.mxu0 %v3054
        %7268 = vmatpush.msra.mxu0 %v3027
        %7269 = vmatpush.msra.mxu0 %v3000
        %7270 = vmatpush.msra.mxu0 %v2973
        %7271 = vmatpush.msra.mxu0 %v2946
        %7272 = vmatpush.msra.mxu0 %v2919
        %7273 = vmatpush.msra.mxu0 %v2892
        %7274 = vmatmul.f32.gmra.mxu0 %v6956
        %v7275 = vpop.f32.mrf.mxu0
        %v7276 = vadd.f32 0.0, %v7275
        %7277 = vdwg.mxu0
        %7278 = vmatpush.msra.mxu0 0.0
        %7279 = vmatpush.msra.mxu0 0.0
        %7280 = vmatpush.msra.mxu0 0.0
        %7281 = vmatpush.msra.mxu0 0.0
        %7282 = vmatpush.msra.mxu0 0.0
        %7283 = vmatpush.msra.mxu0 0.0
        %7284 = vmatpush.msra.mxu0 %v3136
        %7285 = vmatpush.msra.mxu0 %v3109
        %7286 = vmatpush.msra.mxu0 %v3082
        %7287 = vmatpush.msra.mxu0 %v3055
        %7288 = vmatpush.msra.mxu0 %v3028
        %7289 = vmatpush.msra.mxu0 %v3001
        %7290 = vmatpush.msra.mxu0 %v2974
        %7291 = vmatpush.msra.mxu0 %v2947
        %7292 = vmatpush.msra.mxu0 %v2920
        %7293 = vmatpush.msra.mxu0 %v2893
        %7294 = vmatmul.f32.gmra.mxu0 %v6956
        %v7295 = vpop.f32.mrf.mxu0
        %v7296 = vadd.f32 0.0, %v7295
        %7297 = vdwg.mxu0
        %7298 = vmatpush.msra.mxu0 0.0
        %7299 = vmatpush.msra.mxu0 0.0
        %7300 = vmatpush.msra.mxu0 0.0
        %7301 = vmatpush.msra.mxu0 0.0
        %7302 = vmatpush.msra.mxu0 0.0
        %7303 = vmatpush.msra.mxu0 0.0
        %7304 = vmatpush.msra.mxu0 %v3137
        %7305 = vmatpush.msra.mxu0 %v3110
        %7306 = vmatpush.msra.mxu0 %v3083
        %7307 = vmatpush.msra.mxu0 %v3056
        %7308 = vmatpush.msra.mxu0 %v3029
        %7309 = vmatpush.msra.mxu0 %v3002
        %7310 = vmatpush.msra.mxu0 %v2975
        %7311 = vmatpush.msra.mxu0 %v2948
        %7312 = vmatpush.msra.mxu0 %v2921
        %7313 = vmatpush.msra.mxu0 %v2894
        %7314 = vmatmul.f32.gmra.mxu0 %v6956
        %v7315 = vpop.f32.mrf.mxu0
        %v7316 = vadd.f32 0.0, %v7315
        %7317 = vdwg.mxu0
        %7318 = vmatpush.msra.mxu0 0.0
        %7319 = vmatpush.msra.mxu0 0.0
        %7320 = vmatpush.msra.mxu0 0.0
        %7321 = vmatpush.msra.mxu0 0.0
        %7322 = vmatpush.msra.mxu0 0.0
        %7323 = vmatpush.msra.mxu0 0.0
        %7324 = vmatpush.msra.mxu0 %v3138
        %7325 = vmatpush.msra.mxu0 %v3111
        %7326 = vmatpush.msra.mxu0 %v3084
        %7327 = vmatpush.msra.mxu0 %v3057
        %7328 = vmatpush.msra.mxu0 %v3030
        %7329 = vmatpush.msra.mxu0 %v3003
        %7330 = vmatpush.msra.mxu0 %v2976
        %7331 = vmatpush.msra.mxu0 %v2949
        %7332 = vmatpush.msra.mxu0 %v2922
        %7333 = vmatpush.msra.mxu0 %v2895
        %7334 = vmatmul.f32.gmra.mxu0 %v6956
        %v7335 = vpop.f32.mrf.mxu0
        %v7336 = vadd.f32 0.0, %v7335
        %7337 = vdwg.mxu0
        %7338 = vmatpush.msra.mxu0 0.0
        %7339 = vmatpush.msra.mxu0 0.0
        %7340 = vmatpush.msra.mxu0 0.0
        %7341 = vmatpush.msra.mxu0 0.0
        %7342 = vmatpush.msra.mxu0 0.0
        %7343 = vmatpush.msra.mxu0 0.0
        %7344 = vmatpush.msra.mxu0 %v3139
        %7345 = vmatpush.msra.mxu0 %v3112
        %7346 = vmatpush.msra.mxu0 %v3085
        %7347 = vmatpush.msra.mxu0 %v3058
        %7348 = vmatpush.msra.mxu0 %v3031
        %7349 = vmatpush.msra.mxu0 %v3004
        %7350 = vmatpush.msra.mxu0 %v2977
        %7351 = vmatpush.msra.mxu0 %v2950
        %7352 = vmatpush.msra.mxu0 %v2923
        %7353 = vmatpush.msra.mxu0 %v2896
        %7354 = vmatmul.f32.gmra.mxu0 %v6956
        %v7355 = vpop.f32.mrf.mxu0
        %v7356 = vadd.f32 0.0, %v7355
        %7357 = vdwg.mxu0
        %7358 = vmatpush.msra.mxu0 0.0
        %7359 = vmatpush.msra.mxu0 0.0
        %7360 = vmatpush.msra.mxu0 0.0
        %7361 = vmatpush.msra.mxu0 0.0
        %7362 = vmatpush.msra.mxu0 0.0
        %7363 = vmatpush.msra.mxu0 0.0
        %7364 = vmatpush.msra.mxu0 %v3140
        %7365 = vmatpush.msra.mxu0 %v3113
        %7366 = vmatpush.msra.mxu0 %v3086
        %7367 = vmatpush.msra.mxu0 %v3059
        %7368 = vmatpush.msra.mxu0 %v3032
        %7369 = vmatpush.msra.mxu0 %v3005
        %7370 = vmatpush.msra.mxu0 %v2978
        %7371 = vmatpush.msra.mxu0 %v2951
        %7372 = vmatpush.msra.mxu0 %v2924
        %7373 = vmatpush.msra.mxu0 %v2897
        %7374 = vmatmul.f32.gmra.mxu0 %v6956
        %v7375 = vpop.f32.mrf.mxu0
        %v7376 = vadd.f32 0.0, %v7375
        %7377 = vdwg.mxu0
        %7378 = vmatpush.msra.mxu0 0.0
        %7379 = vmatpush.msra.mxu0 0.0
        %7380 = vmatpush.msra.mxu0 0.0
        %7381 = vmatpush.msra.mxu0 0.0
        %7382 = vmatpush.msra.mxu0 0.0
        %7383 = vmatpush.msra.mxu0 0.0
        %7384 = vmatpush.msra.mxu0 %v3141
        %7385 = vmatpush.msra.mxu0 %v3114
        %7386 = vmatpush.msra.mxu0 %v3087
        %7387 = vmatpush.msra.mxu0 %v3060
        %7388 = vmatpush.msra.mxu0 %v3033
        %7389 = vmatpush.msra.mxu0 %v3006
        %7390 = vmatpush.msra.mxu0 %v2979
        %7391 = vmatpush.msra.mxu0 %v2952
        %7392 = vmatpush.msra.mxu0 %v2925
        %7393 = vmatpush.msra.mxu0 %v2898
        %7394 = vmatmul.f32.gmra.mxu0 %v6956
        %v7395 = vpop.f32.mrf.mxu0
        %v7396 = vadd.f32 0.0, %v7395
        %7397 = vdwg.mxu0
        %7398 = vmatpush.msra.mxu0 0.0
        %7399 = vmatpush.msra.mxu0 0.0
        %7400 = vmatpush.msra.mxu0 0.0
        %7401 = vmatpush.msra.mxu0 0.0
        %7402 = vmatpush.msra.mxu0 0.0
        %7403 = vmatpush.msra.mxu0 0.0
        %7404 = vmatpush.msra.mxu0 %v3142
        %7405 = vmatpush.msra.mxu0 %v3115
        %7406 = vmatpush.msra.mxu0 %v3088
        %7407 = vmatpush.msra.mxu0 %v3061
        %7408 = vmatpush.msra.mxu0 %v3034
        %7409 = vmatpush.msra.mxu0 %v3007
        %7410 = vmatpush.msra.mxu0 %v2980
        %7411 = vmatpush.msra.mxu0 %v2953
        %7412 = vmatpush.msra.mxu0 %v2926
        %7413 = vmatpush.msra.mxu0 %v2899
        %7414 = vmatmul.f32.gmra.mxu0 %v6956
        %v7415 = vpop.f32.mrf.mxu0
        %v7416 = vadd.f32 0.0, %v7415
        %7417 = vdwg.mxu0
        %7418 = vmatpush.msra.mxu0 0.0
        %7419 = vmatpush.msra.mxu0 0.0
        %7420 = vmatpush.msra.mxu0 0.0
        %7421 = vmatpush.msra.mxu0 0.0
        %7422 = vmatpush.msra.mxu0 0.0
        %7423 = vmatpush.msra.mxu0 0.0
        %7424 = vmatpush.msra.mxu0 %v3143
        %7425 = vmatpush.msra.mxu0 %v3116
        %7426 = vmatpush.msra.mxu0 %v3089
        %7427 = vmatpush.msra.mxu0 %v3062
        %7428 = vmatpush.msra.mxu0 %v3035
        %7429 = vmatpush.msra.mxu0 %v3008
        %7430 = vmatpush.msra.mxu0 %v2981
        %7431 = vmatpush.msra.mxu0 %v2954
        %7432 = vmatpush.msra.mxu0 %v2927
        %7433 = vmatpush.msra.mxu0 %v2900
        %7434 = vmatmul.f32.gmra.mxu0 %v6956
        %v7435 = vpop.f32.mrf.mxu0
        %v7436 = vadd.f32 0.0, %v7435
        %7437 = vdwg.mxu0
        %7438 = vmatpush.msra.mxu0 0.0
        %7439 = vmatpush.msra.mxu0 0.0
        %7440 = vmatpush.msra.mxu0 0.0
        %7441 = vmatpush.msra.mxu0 0.0
        %7442 = vmatpush.msra.mxu0 0.0
        %7443 = vmatpush.msra.mxu0 0.0
        %7444 = vmatpush.msra.mxu0 %v3144
        %7445 = vmatpush.msra.mxu0 %v3117
        %7446 = vmatpush.msra.mxu0 %v3090
        %7447 = vmatpush.msra.mxu0 %v3063
        %7448 = vmatpush.msra.mxu0 %v3036
        %7449 = vmatpush.msra.mxu0 %v3009
        %7450 = vmatpush.msra.mxu0 %v2982
        %7451 = vmatpush.msra.mxu0 %v2955
        %7452 = vmatpush.msra.mxu0 %v2928
        %7453 = vmatpush.msra.mxu0 %v2901
        %7454 = vmatmul.f32.gmra.mxu0 %v6956
        %v7455 = vpop.f32.mrf.mxu0
        %v7456 = vadd.f32 0.0, %v7455
        %7457 = vdwg.mxu0
        %7458 = vmatpush.msra.mxu0 0.0
        %7459 = vmatpush.msra.mxu0 0.0
        %7460 = vmatpush.msra.mxu0 0.0
        %7461 = vmatpush.msra.mxu0 0.0
        %7462 = vmatpush.msra.mxu0 0.0
        %7463 = vmatpush.msra.mxu0 0.0
        %7464 = vmatpush.msra.mxu0 %v3145
        %7465 = vmatpush.msra.mxu0 %v3118
        %7466 = vmatpush.msra.mxu0 %v3091
        %7467 = vmatpush.msra.mxu0 %v3064
        %7468 = vmatpush.msra.mxu0 %v3037
        %7469 = vmatpush.msra.mxu0 %v3010
        %7470 = vmatpush.msra.mxu0 %v2983
        %7471 = vmatpush.msra.mxu0 %v2956
        %7472 = vmatpush.msra.mxu0 %v2929
        %7473 = vmatpush.msra.mxu0 %v2902
        %7474 = vmatmul.f32.gmra.mxu0 %v6956
        %v7475 = vpop.f32.mrf.mxu0
        %v7476 = vadd.f32 0.0, %v7475
        %7477 = vdwg.mxu0
        %7478 = vmatpush.msra.mxu0 0.0
        %7479 = vmatpush.msra.mxu0 0.0
        %7480 = vmatpush.msra.mxu0 0.0
        %7481 = vmatpush.msra.mxu0 0.0
        %7482 = vmatpush.msra.mxu0 0.0
        %7483 = vmatpush.msra.mxu0 0.0
        %7484 = vmatpush.msra.mxu0 %v3146
        %7485 = vmatpush.msra.mxu0 %v3119
        %7486 = vmatpush.msra.mxu0 %v3092
        %7487 = vmatpush.msra.mxu0 %v3065
        %7488 = vmatpush.msra.mxu0 %v3038
        %7489 = vmatpush.msra.mxu0 %v3011
        %7490 = vmatpush.msra.mxu0 %v2984
        %7491 = vmatpush.msra.mxu0 %v2957
        %7492 = vmatpush.msra.mxu0 %v2930
        %7493 = vmatpush.msra.mxu0 %v2903
        %7494 = vmatmul.f32.gmra.mxu0 %v6956
        %v7495 = vpop.f32.mrf.mxu0
        %v7496 = vadd.f32 0.0, %v7495
        %7497 = vdwg.mxu0
        %v7512 = vperm.slane %v6939, 2
        %v7513 = vperm.slane %v6939, 6
        %v7514 = vperm.slane %v6940, 2
        %v7515 = vperm.slane %v6940, 6
        %v7516 = vperm.slane %v6941, 2
        %v7517 = vperm.slane %v6941, 6
        %v7518 = vperm.slane %v6942, 2
        %v7519 = vperm.slane %v6942, 6
        %v7520 = vperm.slane %v6943, 2
        %v7521 = vperm.slane %v6943, 6
        %v7522 = vperm.slane %v6944, 2
        %v7523 = vperm.slane %v6944, 6
        %v7524 = vperm.slane %v6945, 2
        %v7525 = vperm.slane %v6945, 6
        %v7526 = vperm.slane %v6946, 2
        %v7527 = vperm.slane %v6946, 6
        %v7528 = vperm.slane %v6947, 2
        %v7529 = vperm.slane %v6947, 6
        %v7530 = vperm.slane %v6948, 2
        %v7531 = vperm.slane %v6948, 6
        %v7532 = vperm.slane %v6949, 2
        %v7533 = vperm.slane %v6949, 6
        %v7534 = vperm.slane %v6950, 2
        %v7535 = vperm.slane %v6950, 6
        %v7536 = vperm.slane %v6951, 2
        %v7537 = vperm.slane %v6951, 6
        %v7538 = vperm.slane %v6952, 2
        %v7566 = vperm.slane %v7512, 2
        %v7567 = vperm.slane %v7513, 2
        %v7568 = vperm.slane %v7514, 2
        %v7569 = vperm.slane %v7515, 2
        %v7570 = vperm.slane %v7516, 2
        %v7571 = vperm.slane %v7517, 2
        %v7572 = vperm.slane %v7518, 2
        %v7573 = vperm.slane %v7519, 2
        %v7574 = vperm.slane %v7520, 2
        %v7575 = vperm.slane %v7521, 2
        %v7576 = vperm.slane %v7522, 2
        %v7577 = vperm.slane %v7523, 2
        %v7578 = vperm.slane %v7524, 2
        %v7579 = vperm.slane %v7525, 2
        %v7580 = vperm.slane %v7526, 2
        %v7581 = vperm.slane %v7527, 2
        %v7582 = vperm.slane %v7528, 2
        %v7583 = vperm.slane %v7529, 2
        %v7584 = vperm.slane %v7530, 2
        %v7585 = vperm.slane %v7531, 2
        %v7586 = vperm.slane %v7532, 2
        %v7587 = vperm.slane %v7533, 2
        %v7588 = vperm.slane %v7534, 2
        %v7589 = vperm.slane %v7535, 2
        %v7590 = vperm.slane %v7536, 2
        %v7591 = vperm.slane %v7537, 2
        %v7592 = vperm.slane %v7538, 2
        %v7593 = vmul.f32 %v7566, %v6976
        %v7594 = vmul.f32 %v7567, %v6996
        %v7595 = vmul.f32 %v7568, %v7016
        %v7596 = vmul.f32 %v7569, %v7036
        %v7597 = vmul.f32 %v7570, %v7056
        %v7598 = vmul.f32 %v7571, %v7076
        %v7599 = vmul.f32 %v7572, %v7096
        %v7600 = vmul.f32 %v7573, %v7116
        %v7601 = vmul.f32 %v7574, %v7136
        %v7602 = vmul.f32 %v7575, %v7156
        %v7603 = vmul.f32 %v7576, %v7176
        %v7604 = vmul.f32 %v7577, %v7196
        %v7605 = vmul.f32 %v7578, %v7216
        %v7606 = vmul.f32 %v7579, %v7236
        %v7607 = vmul.f32 %v7580, %v7256
        %v7608 = vmul.f32 %v7581, %v7276
        %v7609 = vmul.f32 %v7582, %v7296
        %v7610 = vmul.f32 %v7583, %v7316
        %v7611 = vmul.f32 %v7584, %v7336
        %v7612 = vmul.f32 %v7585, %v7356
        %v7613 = vmul.f32 %v7586, %v7376
        %v7614 = vmul.f32 %v7587, %v7396
        %v7615 = vmul.f32 %v7588, %v7416
        %v7616 = vmul.f32 %v7589, %v7436
        %v7617 = vmul.f32 %v7590, %v7456
        %v7618 = vmul.f32 %v7591, %v7476
        %v7619 = vmul.f32 %v7592, %v7496
        %v7620 = vadd.f32 %v6870, %v7593
        %v7621 = vadd.f32 %v6871, %v7594
        %v7622 = vadd.f32 %v6872, %v7595
        %v7623 = vadd.f32 %v6873, %v7596
        %v7624 = vadd.f32 %v6874, %v7597
        %v7625 = vadd.f32 %v6875, %v7598
        %v7626 = vadd.f32 %v6876, %v7599
        %v7627 = vadd.f32 %v6877, %v7600
        %v7628 = vadd.f32 %v6878, %v7601
        %v7629 = vadd.f32 %v6879, %v7602
        %v7630 = vadd.f32 %v6880, %v7603
        %v7631 = vadd.f32 %v6881, %v7604
        %v7632 = vadd.f32 %v6882, %v7605
        %v7633 = vadd.f32 %v6883, %v7606
        %v7634 = vadd.f32 %v6884, %v7607
        %v7635 = vadd.f32 %v6885, %v7608
        %v7636 = vadd.f32 %v6886, %v7609
        %v7637 = vadd.f32 %v6887, %v7610
        %v7638 = vadd.f32 %v6888, %v7611
        %v7639 = vadd.f32 %v6889, %v7612
        %v7640 = vadd.f32 %v6890, %v7613
        %v7641 = vadd.f32 %v6891, %v7614
        %v7642 = vadd.f32 %v6892, %v7615
        %v7643 = vadd.f32 %v6893, %v7616
        %v7644 = vadd.f32 %v6894, %v7617
        %v7645 = vadd.f32 %v6895, %v7618
        %v7646 = vadd.f32 %v6896, %v7619
        %v7648 = vrot.slane %v7621, 4
        %v7651 = vrot.slane %v7623, 4
        %v7654 = vrot.slane %v7625, 4
        %v7657 = vrot.slane %v7627, 4
        %v7660 = vrot.slane %v7629, 4
        %v7663 = vrot.slane %v7631, 4
        %v7666 = vrot.slane %v7633, 4
        %v7669 = vrot.slane %v7635, 4
        %vm7671 = vcmask 1043456
        %v7672 = vsel %vm7671, %v7620, %v7648
        %v7673 = vsel %vm7671, %v7622, %v7651
        %v7674 = vsel %vm7671, %v7624, %v7654
        %v7675 = vsel %vm7671, %v7626, %v7657
        %v7676 = vsel %vm7671, %v7628, %v7660
        %v7677 = vsel %vm7671, %v7630, %v7663
        %v7678 = vsel %vm7671, %v7632, %v7666
        %v7679 = vsel %vm7671, %v7634, %v7669
        %v7681 = vrot.slane %v7637, 4
        %v7684 = vrot.slane %v7639, 4
        %v7687 = vrot.slane %v7641, 4
        %v7690 = vrot.slane %v7643, 4
        %v7693 = vrot.slane %v7645, 4
        %v7695 = vsel %vm7671, %v7636, %v7681
        %v7696 = vsel %vm7671, %v7638, %v7684
        %v7697 = vsel %vm7671, %v7640, %v7687
        %v7698 = vsel %vm7671, %v7642, %v7690
        %v7699 = vsel %vm7671, %v7644, %v7693
        %v7700 = vld [vmem:[%s3] sm:$0xf]
        %v7701 = vld [vmem:[%s4] sm:$0xf]
        %7703 = vset.pattern.permute.xlu0 0
        %7704 = vperm.xlu0 %7703, %v7701
        %v7705 = vpop.permute.xlu0 %7704
        %vm7707 = vcmask 883712
        %v7709 = vsel %vm7707, %v7700, 0
        %v7712 = vsel %vm7671, %v7646, 0
        %7714 = vmatpush.msra.mxu0 0.0
        %7715 = vmatpush.msra.mxu0 0.0
        %7716 = vmatpush.msra.mxu0 %v7712
        %7717 = vmatpush.msra.mxu0 %v7699
        %7718 = vmatpush.msra.mxu0 %v7698
        %7719 = vmatpush.msra.mxu0 %v7697
        %7720 = vmatpush.msra.mxu0 %v7696
        %7721 = vmatpush.msra.mxu0 %v7695
        %7722 = vmatpush.msra.mxu0 %v7679
        %7723 = vmatpush.msra.mxu0 %v7678
        %7724 = vmatpush.msra.mxu0 %v7677
        %7725 = vmatpush.msra.mxu0 %v7676
        %7726 = vmatpush.msra.mxu0 %v7675
        %7727 = vmatpush.msra.mxu0 %v7674
        %7728 = vmatpush.msra.mxu0 %v7673
        %7729 = vmatpush.msra.mxu0 %v7672
        %7730 = vmatmul.f32.gmra.mxu0 %v7709
        %v7731 = vpop.f32.mrf.mxu0
        %v7732 = vadd.f32 %v7705, %v7731
        %7733 = vdwg.mxu0
        %7734 = vst [vmem:[%s257] sm:$0xf] %v7732
        %s7735 = sand.u32 %s158, 1
        %s7736 = scalar_lea.sflag [#allocation3], %s7735
        %s7737 = sand.u32 %s158, 1
        %s7738 = smul.addr %s7737, 4
        %s7739 = scalar_lea.vmem [#allocation2], %s7738
        // Predicated region
        $region41: #{tpu_custom_call.1} parent=39 // pred_check
          %p7740 = pneg %p168
        $region42: #{tpu_custom_call.1} parent=39 // pred_check_branch
          %7742 = sbr.rel (%p7740) target = $region44
        $region43: #{tpu_custom_call.1} parent=39 // pred_region
          %7744 = vsyncadd %s7736, 0
          %s7745 = sadd.s32 %s24, %s23
          %s7746 = smul.addr %s7745, 4
          %s7747 = scalar_lea.hbm %s5, %s7746
          %s7749 = sshll.u32 %s7739, 4
          %s7750 = int_to_ptr.vmem [resolvable:$true] %s7749
          %s7751 = sshll.u32 %s7747, 4
          %s7752 = int_to_ptr.hbm [resolvable:$true] %s7751
          %7754 = dma.vmem_to_hbm [thread:$0]  %s7750, 64, %s7752, %s7736
        $region44: #{tpu_custom_call.1} parent=39 // pred_fallthru
          _
      $region40: #{tpu_custom_call.1} parent=5 // pred_fallthru
        _
      %p7755 = scmp.le.s32.totalorder 2, %s14
      // Predicated region
      $region45: #{tpu_custom_call.1} parent=5 // pred_check
        %p7756 = pneg %p7755
      $region46: #{tpu_custom_call.1} parent=5 // pred_check_branch
        %7758 = sbr.rel (%p7756) target = $region48
      $region47: #{tpu_custom_call.1} parent=5 // pred_region
        %s7759 = ssub.s32 %s14, 2
        // Predicated region
        $region49: #{tpu_custom_call.1} parent=47 // pred_check
          %p7760 = pneg %p174
        $region50: #{tpu_custom_call.1} parent=47 // pred_check_branch
          %7762 = sbr.rel (%p7760) target = $region52
        $region51: #{tpu_custom_call.1} parent=47 // pred_region
          %s7763 = sand.u32 %s159, 1
          %s7764 = scalar_lea.sflag [#allocation3], %s7763
          %s7765 = sand.u32 %s159, 1
          %s7766 = smul.addr %s7765, 4
          %s7767 = scalar_lea.vmem [#allocation2], %s7766
          %7769 = dma.done %s7764, 64
        $region52: #{tpu_custom_call.1} parent=47 // pred_fallthru
          _
      $region48: #{tpu_custom_call.1} parent=5 // pred_fallthru
        _
    $region6: #{tpu_custom_call.1} parent=1 // loop_footer
      %s18 = sadd.s32 1, %s14
    $region7: #{tpu_custom_call.1} parent=1 // loop_footer_branch
      %13 = sbr.rel target = $region3
    $region8: #{tpu_custom_call.1} parent=1 // loop_exit
      _
    %7770 = vsyncpa [#allocation3], 1
    %s7771 = scalar_lea.sflag [#allocation3], 1
    %7772 = vsyncpa %s7771, 1

</llo_original>
